<compile_context>
chip_gen: v7x
topology: tpu7x:2x2x1
jax: 0.10.0
libtpu: 0.0.40
codegen_flags: <defaults>
</compile_context>

<pallas_src>
import functools

import numpy as np
import jax
import jax.numpy as jnp
from jax.experimental import pallas as pl
from jax.experimental.pallas import tpu as pltpu


# ----------------------------------------------------------------------------
# 1-D bilinear transpose-conv operators (host-side, tiny, static shapes)
# ----------------------------------------------------------------------------
def _bilinear_up_matrix_np(n):
    """(2n, n) matrix of 1-D ConvTranspose(k=4, s=2, p=1) with bilinear taps."""
    w = np.array([0.25, 0.75, 0.75, 0.25], np.float32)
    u = np.zeros((2 * n, n), np.float32)
    for o in range(2 * n):
        for i in range(n):
            k = o + 1 - 2 * i
            if 0 <= k < 4:
                u[o, i] = w[k]
    return u


# ----------------------------------------------------------------------------
# Fused Pallas kernel: whole FCN head for `bps` batch elements per grid step
# ----------------------------------------------------------------------------
def _make_fcn_head_kernel(bps, h0, w0):
    h1, w1 = 2 * h0, 2 * w0
    h2, w2 = 4 * h0, 4 * w0

    def kernel(scal_ref,
               f0_ref, f1_ref, f2_ref, f3_ref, f4_ref,
               w0_ref, w1_ref, w2_ref, w3_ref, w4_ref,
               uh0_ref, uw0t_ref, uh1_ref, uw1t_ref,
               o_ref):
        # scal (SMEM, 12): [b0..b4, up1_bias, up2_bias, up1_weight, sw1..sw4]
        b0, b1, b2, b3, b4 = (scal_ref[0], scal_ref[1], scal_ref[2],
                              scal_ref[3], scal_ref[4])
        bu1, bu2 = scal_ref[5], scal_ref[6]
        wu1 = scal_ref[7]
        sw1, sw2, sw3, sw4 = (scal_ref[8], scal_ref[9],
                              scal_ref[10], scal_ref[11])

        # Tiny constants, loaded once per step (index maps are grid-invariant,
        # so Pallas DMAs them only once).
        wr = [w0_ref[...], w1_ref[...], w2_ref[...], w3_ref[...], w4_ref[...]]
        uh0, uw0t = uh0_ref[...], uw0t_ref[...]          # (h1,h0), (w0,w1)
        uh1, uw1t = uh1_ref[...], uw1t_ref[...]          # (h2,h1), (w1,w2)

        for b in range(bps):                             # static unrolled batch
            def conv(w_row, f_ref):
                # (1,C)bf16 @ (C,HW)bf16 -> (1,HW)f32, lane-dense, on the MXU
                return jnp.dot(w_row, f_ref[b],
                               preferred_element_type=jnp.float32)

            # ---- stages 0..2 (all at h0 x w0), flat & lane-dense ----------
            # Fold: conv1x1(feat + broadcast(u)) == conv1x1(feat) + sum(w)*u,
            # so the 1-channel map is never broadcast across C.
            p = conv(wr[0], f0_ref) + b0                           # (1, h0*w0)
            p = conv(wr[1], f1_ref) + sw1 * (wu1 * p + bu1) + b1
            p = conv(wr[2], f2_ref) + sw2 * (wu1 * p + bu1) + b2

            # ---- upsample 1: (h0,w0) -> (h1,w1), separable ----------------
            # q = Uh0 @ unflatten(p): outer-product accumulation over the h0
            # rows of the flat map (fuses the unflatten; no reshape needed).
            q = jnp.zeros((h1, w0), jnp.float32)
            for h in range(h0):
                q = q + uh0[:, h:h + 1] * p[:, h * w0:(h + 1) * w0]
            up1 = jnp.dot(q, uw0t, preferred_element_type=jnp.float32)

            # ---- stage 3 + row half (Uh1) of upsample 2 -------------------
            c3 = conv(wr[3], f3_ref)                               # (1, h1*w1)
            q = jnp.zeros((h2, w1), jnp.float32)
            for h in range(h1):
                row = (c3[:, h * w1:(h + 1) * w1]
                       + sw3 * (up1[h:h + 1, :] + bu2) + b3)       # (1, w1)
                q = q + uh1[:, h:h + 1] * row
            up2 = jnp.dot(q, uw1t, preferred_element_type=jnp.float32)

            # ---- stage 4: final conv + combine, stored row-by-row ---------
            c4 = conv(wr[4], f4_ref)                               # (1, h2*w2)
            for h in range(h2):
                row = (c4[:, h * w2:(h + 1) * w2]
                       + sw4 * (up2[h:h + 1, :] + bu2) + b4)       # (1, w2)
                o_ref[b, :, pl.ds(h * w2, w2)] = row

    return kernel


# ----------------------------------------------------------------------------
# Wrapper
# ----------------------------------------------------------------------------
def fcn_head_forward(feats, pred_ws, pred_bs, up1_weight, up1_bias, up2_bias,
                     *, batch_per_step=1):
    """FCN.forward after the backbone (inference). Returns (N, 1, Hout, Wout).

    feats: 5 NCHW maps, deepest first (already reversed), channels
           [512, 512, 256, 128, 64]; feats[1:3] share feats[0]'s spatial size,
           feats[3] is 2x and feats[4] is 4x that size.
    """
    N, _, H0, W0 = feats[0].shape
    assert feats[1].shape[2:] == (H0, W0) and feats[2].shape[2:] == (H0, W0)
    assert feats[3].shape[2:] == (2 * H0, 2 * W0)
    assert feats[4].shape[2:] == (4 * H0, 4 * W0)
    assert N % batch_per_step == 0

    cs = [int(f.shape[1]) for f in feats]
    hws = [int(f.shape[2] * f.shape[3]) for f in feats]
    hw_out = hws[4]

    # Free collapse NCHW -> (N, C, H*W); bf16 halves the HBM-bound read.
    f_flat = [f.astype(jnp.bfloat16).reshape(N, c, hw)
              for f, c, hw in zip(feats, cs, hws)]
    # 1x1-conv weights as (1, C) bf16 contraction rows (accumulation in f32).
    w_rows = [jnp.asarray(w, jnp.float32).reshape(1, c).astype(jnp.bfloat16)
              for w, c in zip(pred_ws, cs)]
    # Separable 2x bilinear operators, O(H^2 + W^2) (a few KiB total, f32).
    # TODO(synk): assumes the ConvTranspose2d(1,1,4,2,1) weights keep their
    # fixed separable bilinear init; a trained non-separable 4x4 kernel would
    # need a stencil formulation instead.
    uh0 = jnp.asarray(_bilinear_up_matrix_np(H0))             # (2H0, H0)
    uw0t = jnp.asarray(_bilinear_up_matrix_np(W0).T)          # (W0, 2W0)
    uh1 = jnp.asarray(_bilinear_up_matrix_np(2 * H0))         # (4H0, 2H0)
    uw1t = jnp.asarray(_bilinear_up_matrix_np(2 * W0).T)      # (2W0, 4W0)

    # Scalars: conv biases, shared upscale weight/biases, per-stage sum(w).
    sws = [jnp.sum(jnp.asarray(w, jnp.float32)) for w in pred_ws]
    scal = jnp.stack([jnp.asarray(b, jnp.float32) for b in pred_bs]
                     + [jnp.asarray(up1_bias, jnp.float32),
                        jnp.asarray(up2_bias, jnp.float32),
                        jnp.asarray(up1_weight, jnp.float32),
                        sws[1], sws[2], sws[3], sws[4]])

    bps = batch_per_step

    def feat_spec(c, hw):
        return pl.BlockSpec((bps, c, hw), lambda n: (n, 0, 0))

    def const_spec(r, c):
        return pl.BlockSpec((r, c), lambda n: (0, 0))

    out = pl.pallas_call(
        _make_fcn_head_kernel(bps, H0, W0),
        out_shape=jax.ShapeDtypeStruct((N, 1, hw_out), jnp.float32),
        grid=(N // bps,),
        in_specs=[
            pl.BlockSpec((12,), lambda n: (0,),
                         memory_space=pltpu.MemorySpace.SMEM),
            feat_spec(cs[0], hws[0]), feat_spec(cs[1], hws[1]),
            feat_spec(cs[2], hws[2]), feat_spec(cs[3], hws[3]),
            feat_spec(cs[4], hws[4]),
            const_spec(1, cs[0]), const_spec(1, cs[1]), const_spec(1, cs[2]),
            const_spec(1, cs[3]), const_spec(1, cs[4]),
            const_spec(2 * H0, H0), const_spec(W0, 2 * W0),
            const_spec(4 * H0, 2 * H0), const_spec(2 * W0, 4 * W0),
        ],
        out_specs=pl.BlockSpec((bps, 1, hw_out), lambda n: (n, 0, 0)),
        compiler_params=pltpu.CompilerParams(
            dimension_semantics=("parallel",),      # split grid across v7x TCs
            # Live VMEM ~2 MiB (bf16 features double-buffered + KiB constants);
            # 32 MiB is within v7x's 64 MiB physical and v5e/v6e's 128 MiB.
            vmem_limit_bytes=32 * 1024 * 1024),
    )(scal, *f_flat, *w_rows, uh0, uw0t, uh1, uw1t)

    return out.reshape(N, 1, 4 * H0, 4 * W0)        # free collapse back to NCHW


# ----------------------------------------------------------------------------
# Pure-JAX reference (validates the Pallas lowering against module semantics)
# ----------------------------------------------------------------------------
def _ref_forward(feats, pred_ws, pred_bs, up1_weight, up1_bias, up2_bias):
    hp = jax.lax.Precision.HIGHEST

    def conv1x1(f, w, b):
        return jnp.einsum('nchw,c->nhw', f, w, precision=hp) + b

    feats = [f.astype(jnp.float32) for f in feats]
    pred = conv1x1(feats[0], pred_ws[0], pred_bs[0])
    for i in range(4):
        if i < 2:
            up = up1_weight * pred + up1_bias
        else:
            _, h, w = pred.shape
            uh = jnp.asarray(_bilinear_up_matrix_np(h))
            uw = jnp.asarray(_bilinear_up_matrix_np(w))
            up = jnp.einsum('oh,nhw,pw->nop', uh, pred, uw,
                            precision=hp) + up2_bias
        f = feats[i + 1] + up[:, None, :, :]
        pred = conv1x1(f, pred_ws[i + 1], pred_bs[i + 1])
    return pred[:, None, :, :]


# ----------------------------------------------------------------------------
# Main
# ----------------------------------------------------------------------------
if __name__ == "__main__":
    key = jax.random.PRNGKey(0)

    # Reversed VGG dims, as in FCN.__init__: dims = [512, 512, 256, 128, 64]
    dims = [512, 512, 256, 128, 64]
    N, S = 4, 8
    spatial = [S, S, S, 2 * S, 4 * S]     # deepest feats first

    # Synthetic backbone feature maps (NCHW, bf16 as a bf16 backbone would
    # hand over), deepest first (already reversed).
    feats = []
    for d, s in zip(dims, spatial):
        key, sub = jax.random.split(key)
        feats.append(jax.random.normal(sub, (N, d, s, s),
                                       jnp.float32).astype(jnp.bfloat16))

    # Parameters mirroring FCN.__init__ (Conv2d w ~ N(0, 0.02)); biases /
    # up-weight perturbed slightly so every term is actually exercised.
    pred_ws, pred_bs = [], []
    for d in dims:
        key, sub = jax.random.split(key)
        pred_ws.append(0.02 * jax.random.normal(sub, (d,), jnp.float32))
        key, sub = jax.random.split(key)
        pred_bs.append(0.01 * jax.random.normal(sub, (), jnp.float32))
    up1_weight = jnp.float32(0.97)   # ConvTranspose2d(1,1,1,1,0) weight (shared x2)
    up1_bias = jnp.float32(0.05)     # ...and its bias (shared x2)
    up2_bias = jnp.float32(-0.03)    # ConvTranspose2d(1,1,4,2,1) bias (shared x2)

    fwd = jax.jit(functools.partial(fcn_head_forward, batch_per_step=2))
    out = fwd(feats, pred_ws, pred_bs, up1_weight, up1_bias, up2_bias)
    out = jax.block_until_ready(out)

    ref = _ref_forward(feats, pred_ws, pred_bs, up1_weight, up1_bias, up2_bias)
    ref = jax.block_until_ready(ref)

    assert out.shape == (N, 1, 4 * S, 4 * S), out.shape
    max_err = float(jnp.max(jnp.abs(out - ref)))
    assert jnp.allclose(out, ref, atol=2e-2, rtol=2e-2), max_err

    print("KERNEL_OK")
</pallas_src>

<mosaic_0001>
module attributes {stable_mosaic.version = 11 : i64} {
  func.func @kernel(%arg0: i32, %arg1: memref<12xf32, #tpu.memory_space<smem>>, %arg2: memref<2x512x64xbf16, #tpu.memory_space<vmem>>, %arg3: memref<2x512x64xbf16, #tpu.memory_space<vmem>>, %arg4: memref<2x256x64xbf16, #tpu.memory_space<vmem>>, %arg5: memref<2x128x256xbf16, #tpu.memory_space<vmem>>, %arg6: memref<2x64x1024xbf16, #tpu.memory_space<vmem>>, %arg7: memref<1x512xbf16, #tpu.memory_space<vmem>>, %arg8: memref<1x512xbf16, #tpu.memory_space<vmem>>, %arg9: memref<1x256xbf16, #tpu.memory_space<vmem>>, %arg10: memref<1x128xbf16, #tpu.memory_space<vmem>>, %arg11: memref<1x64xbf16, #tpu.memory_space<vmem>>, %arg12: memref<16x8xf32, #tpu.memory_space<vmem>>, %arg13: memref<8x16xf32, #tpu.memory_space<vmem>>, %arg14: memref<32x16xf32, #tpu.memory_space<vmem>>, %arg15: memref<16x32xf32, #tpu.memory_space<vmem>>, %arg16: memref<2x1x1024xf32, #tpu.memory_space<vmem>>) attributes {dimension_semantics = [#tpu.dimension_semantics<parallel>], iteration_bounds = array<i64: 2>, scalar_prefetch = 0 : i64, scratch_operands = 0 : i64, tpu.core_type = #tpu.core_type<tc>, window_params = [{transform_indices = @transform_0, window_bounds = array<i64: 12>}, {transform_indices = @transform_1, window_bounds = array<i64: 2, 512, 64>}, {transform_indices = @transform_2, window_bounds = array<i64: 2, 512, 64>}, {transform_indices = @transform_3, window_bounds = array<i64: 2, 256, 64>}, {transform_indices = @transform_4, window_bounds = array<i64: 2, 128, 256>}, {transform_indices = @transform_5, window_bounds = array<i64: 2, 64, 1024>}, {pipeline_mode = #tpu.pipeline_mode<synchronous>, transform_indices = @transform_6, window_bounds = array<i64: 1, 512>}, {pipeline_mode = #tpu.pipeline_mode<synchronous>, transform_indices = @transform_7, window_bounds = array<i64: 1, 512>}, {pipeline_mode = #tpu.pipeline_mode<synchronous>, transform_indices = @transform_8, window_bounds = array<i64: 1, 256>}, {pipeline_mode = #tpu.pipeline_mode<synchronous>, transform_indices = @transform_9, window_bounds = array<i64: 1, 128>}, {pipeline_mode = #tpu.pipeline_mode<synchronous>, transform_indices = @transform_10, window_bounds = array<i64: 1, 64>}, {pipeline_mode = #tpu.pipeline_mode<synchronous>, transform_indices = @transform_11, window_bounds = array<i64: 16, 8>}, {pipeline_mode = #tpu.pipeline_mode<synchronous>, transform_indices = @transform_12, window_bounds = array<i64: 8, 16>}, {pipeline_mode = #tpu.pipeline_mode<synchronous>, transform_indices = @transform_13, window_bounds = array<i64: 32, 16>}, {pipeline_mode = #tpu.pipeline_mode<synchronous>, transform_indices = @transform_14, window_bounds = array<i64: 16, 32>}, {transform_indices = @transform_15, window_bounds = array<i64: 2, 1, 1024>}]} {
    %c0 = arith.constant 0 : index
    %0 = memref.load %arg1[%c0] : memref<12xf32, #tpu.memory_space<smem>>
    %c1 = arith.constant 1 : index
    %1 = memref.load %arg1[%c1] : memref<12xf32, #tpu.memory_space<smem>>
    %c2 = arith.constant 2 : index
    %2 = memref.load %arg1[%c2] : memref<12xf32, #tpu.memory_space<smem>>
    %c3 = arith.constant 3 : index
    %3 = memref.load %arg1[%c3] : memref<12xf32, #tpu.memory_space<smem>>
    %c4 = arith.constant 4 : index
    %4 = memref.load %arg1[%c4] : memref<12xf32, #tpu.memory_space<smem>>
    %c5 = arith.constant 5 : index
    %5 = memref.load %arg1[%c5] : memref<12xf32, #tpu.memory_space<smem>>
    %c6 = arith.constant 6 : index
    %6 = memref.load %arg1[%c6] : memref<12xf32, #tpu.memory_space<smem>>
    %c7 = arith.constant 7 : index
    %7 = memref.load %arg1[%c7] : memref<12xf32, #tpu.memory_space<smem>>
    %c8 = arith.constant 8 : index
    %8 = memref.load %arg1[%c8] : memref<12xf32, #tpu.memory_space<smem>>
    %c9 = arith.constant 9 : index
    %9 = memref.load %arg1[%c9] : memref<12xf32, #tpu.memory_space<smem>>
    %c10 = arith.constant 10 : index
    %10 = memref.load %arg1[%c10] : memref<12xf32, #tpu.memory_space<smem>>
    %c11 = arith.constant 11 : index
    %11 = memref.load %arg1[%c11] : memref<12xf32, #tpu.memory_space<smem>>
    %c0_0 = arith.constant 0 : index
    %c0_1 = arith.constant 0 : index
    %12 = vector.load %arg7[%c0_0, %c0_1] : memref<1x512xbf16, #tpu.memory_space<vmem>>, vector<1x512xbf16>
    %c0_2 = arith.constant 0 : index
    %c0_3 = arith.constant 0 : index
    %13 = vector.load %arg8[%c0_2, %c0_3] : memref<1x512xbf16, #tpu.memory_space<vmem>>, vector<1x512xbf16>
    %c0_4 = arith.constant 0 : index
    %c0_5 = arith.constant 0 : index
    %14 = vector.load %arg9[%c0_4, %c0_5] : memref<1x256xbf16, #tpu.memory_space<vmem>>, vector<1x256xbf16>
    %c0_6 = arith.constant 0 : index
    %c0_7 = arith.constant 0 : index
    %15 = vector.load %arg10[%c0_6, %c0_7] : memref<1x128xbf16, #tpu.memory_space<vmem>>, vector<1x128xbf16>
    %c0_8 = arith.constant 0 : index
    %c0_9 = arith.constant 0 : index
    %16 = vector.load %arg11[%c0_8, %c0_9] : memref<1x64xbf16, #tpu.memory_space<vmem>>, vector<1x64xbf16>
    %c0_10 = arith.constant 0 : index
    %c0_11 = arith.constant 0 : index
    %17 = vector.load %arg12[%c0_10, %c0_11] : memref<16x8xf32, #tpu.memory_space<vmem>>, vector<16x8xf32>
    %c0_12 = arith.constant 0 : index
    %c0_13 = arith.constant 0 : index
    %18 = vector.load %arg13[%c0_12, %c0_13] : memref<8x16xf32, #tpu.memory_space<vmem>>, vector<8x16xf32>
    %c0_14 = arith.constant 0 : index
    %c0_15 = arith.constant 0 : index
    %19 = vector.load %arg14[%c0_14, %c0_15] : memref<32x16xf32, #tpu.memory_space<vmem>>, vector<32x16xf32>
    %c0_16 = arith.constant 0 : index
    %c0_17 = arith.constant 0 : index
    %20 = vector.load %arg15[%c0_16, %c0_17] : memref<16x32xf32, #tpu.memory_space<vmem>>, vector<16x32xf32>
    %c0_18 = arith.constant 0 : index
    %c0_19 = arith.constant 0 : index
    %c0_20 = arith.constant 0 : index
    %21 = vector.load %arg2[%c0_18, %c0_19, %c0_20] : memref<2x512x64xbf16, #tpu.memory_space<vmem>>, vector<1x512x64xbf16>
    %22 = vector.shape_cast %21 : vector<1x512x64xbf16> to vector<512x64xbf16>
    %cst = arith.constant dense<0.000000e+00> : vector<1x64xf32>
    %23 = tpu.matmul %12, %22, %cst {dimension_numbers = #tpu.dot_dimension_numbers<[1], [0], [0], [1], [0, 0, 1, 1], [], []>} : vector<1x512xbf16>, vector<512x64xbf16>, vector<1x64xf32> -> vector<1x64xf32>
    %24 = vector.broadcast %0 : f32 to vector<1x64xf32>
    %25 = arith.addf %23, %24 : vector<1x64xf32>
    %c0_21 = arith.constant 0 : index
    %c0_22 = arith.constant 0 : index
    %c0_23 = arith.constant 0 : index
    %26 = vector.load %arg3[%c0_21, %c0_22, %c0_23] : memref<2x512x64xbf16, #tpu.memory_space<vmem>>, vector<1x512x64xbf16>
    %27 = vector.shape_cast %26 : vector<1x512x64xbf16> to vector<512x64xbf16>
    %cst_24 = arith.constant dense<0.000000e+00> : vector<1x64xf32>
    %28 = tpu.matmul %13, %27, %cst_24 {dimension_numbers = #tpu.dot_dimension_numbers<[1], [0], [0], [1], [0, 0, 1, 1], [], []>} : vector<1x512xbf16>, vector<512x64xbf16>, vector<1x64xf32> -> vector<1x64xf32>
    %29 = vector.broadcast %7 : f32 to vector<1x64xf32>
    %30 = arith.mulf %29, %25 : vector<1x64xf32>
    %31 = vector.broadcast %5 : f32 to vector<1x64xf32>
    %32 = arith.addf %30, %31 : vector<1x64xf32>
    %33 = vector.broadcast %8 : f32 to vector<1x64xf32>
    %34 = arith.mulf %33, %32 : vector<1x64xf32>
    %35 = arith.addf %28, %34 : vector<1x64xf32>
    %36 = vector.broadcast %1 : f32 to vector<1x64xf32>
    %37 = arith.addf %35, %36 : vector<1x64xf32>
    %c0_25 = arith.constant 0 : index
    %c0_26 = arith.constant 0 : index
    %c0_27 = arith.constant 0 : index
    %38 = vector.load %arg4[%c0_25, %c0_26, %c0_27] : memref<2x256x64xbf16, #tpu.memory_space<vmem>>, vector<1x256x64xbf16>
    %39 = vector.shape_cast %38 : vector<1x256x64xbf16> to vector<256x64xbf16>
    %cst_28 = arith.constant dense<0.000000e+00> : vector<1x64xf32>
    %40 = tpu.matmul %14, %39, %cst_28 {dimension_numbers = #tpu.dot_dimension_numbers<[1], [0], [0], [1], [0, 0, 1, 1], [], []>} : vector<1x256xbf16>, vector<256x64xbf16>, vector<1x64xf32> -> vector<1x64xf32>
    %41 = vector.broadcast %7 : f32 to vector<1x64xf32>
    %42 = arith.mulf %41, %37 : vector<1x64xf32>
    %43 = vector.broadcast %5 : f32 to vector<1x64xf32>
    %44 = arith.addf %42, %43 : vector<1x64xf32>
    %45 = vector.broadcast %9 : f32 to vector<1x64xf32>
    %46 = arith.mulf %45, %44 : vector<1x64xf32>
    %47 = arith.addf %40, %46 : vector<1x64xf32>
    %48 = vector.broadcast %2 : f32 to vector<1x64xf32>
    %49 = arith.addf %47, %48 : vector<1x64xf32>
    %cst_29 = arith.constant 0.000000e+00 : f32
    %50 = vector.broadcast %cst_29 : f32 to vector<16x8xf32>
    %51 = vector.extract_strided_slice %17 {offsets = [0, 0], sizes = [16, 1], strides = [1, 1]} : vector<16x8xf32> to vector<16x1xf32>
    %52 = vector.extract_strided_slice %49 {offsets = [0, 0], sizes = [1, 8], strides = [1, 1]} : vector<1x64xf32> to vector<1x8xf32>
    %53 = vector.broadcast %51 : vector<16x1xf32> to vector<16x8xf32>
    %54 = vector.broadcast %52 : vector<1x8xf32> to vector<16x8xf32>
    %55 = arith.mulf %53, %54 : vector<16x8xf32>
    %56 = arith.addf %50, %55 : vector<16x8xf32>
    %57 = vector.extract_strided_slice %17 {offsets = [0, 1], sizes = [16, 1], strides = [1, 1]} : vector<16x8xf32> to vector<16x1xf32>
    %58 = vector.extract_strided_slice %49 {offsets = [0, 8], sizes = [1, 8], strides = [1, 1]} : vector<1x64xf32> to vector<1x8xf32>
    %59 = vector.broadcast %57 : vector<16x1xf32> to vector<16x8xf32>
    %60 = vector.broadcast %58 : vector<1x8xf32> to vector<16x8xf32>
    %61 = arith.mulf %59, %60 : vector<16x8xf32>
    %62 = arith.addf %56, %61 : vector<16x8xf32>
    %63 = vector.extract_strided_slice %17 {offsets = [0, 2], sizes = [16, 1], strides = [1, 1]} : vector<16x8xf32> to vector<16x1xf32>
    %64 = vector.extract_strided_slice %49 {offsets = [0, 16], sizes = [1, 8], strides = [1, 1]} : vector<1x64xf32> to vector<1x8xf32>
    %65 = vector.broadcast %63 : vector<16x1xf32> to vector<16x8xf32>
    %66 = vector.broadcast %64 : vector<1x8xf32> to vector<16x8xf32>
    %67 = arith.mulf %65, %66 : vector<16x8xf32>
    %68 = arith.addf %62, %67 : vector<16x8xf32>
    %69 = vector.extract_strided_slice %17 {offsets = [0, 3], sizes = [16, 1], strides = [1, 1]} : vector<16x8xf32> to vector<16x1xf32>
    %70 = vector.extract_strided_slice %49 {offsets = [0, 24], sizes = [1, 8], strides = [1, 1]} : vector<1x64xf32> to vector<1x8xf32>
    %71 = vector.broadcast %69 : vector<16x1xf32> to vector<16x8xf32>
    %72 = vector.broadcast %70 : vector<1x8xf32> to vector<16x8xf32>
    %73 = arith.mulf %71, %72 : vector<16x8xf32>
    %74 = arith.addf %68, %73 : vector<16x8xf32>
    %75 = vector.extract_strided_slice %17 {offsets = [0, 4], sizes = [16, 1], strides = [1, 1]} : vector<16x8xf32> to vector<16x1xf32>
    %76 = vector.extract_strided_slice %49 {offsets = [0, 32], sizes = [1, 8], strides = [1, 1]} : vector<1x64xf32> to vector<1x8xf32>
    %77 = vector.broadcast %75 : vector<16x1xf32> to vector<16x8xf32>
    %78 = vector.broadcast %76 : vector<1x8xf32> to vector<16x8xf32>
    %79 = arith.mulf %77, %78 : vector<16x8xf32>
    %80 = arith.addf %74, %79 : vector<16x8xf32>
    %81 = vector.extract_strided_slice %17 {offsets = [0, 5], sizes = [16, 1], strides = [1, 1]} : vector<16x8xf32> to vector<16x1xf32>
    %82 = vector.extract_strided_slice %49 {offsets = [0, 40], sizes = [1, 8], strides = [1, 1]} : vector<1x64xf32> to vector<1x8xf32>
    %83 = vector.broadcast %81 : vector<16x1xf32> to vector<16x8xf32>
    %84 = vector.broadcast %82 : vector<1x8xf32> to vector<16x8xf32>
    %85 = arith.mulf %83, %84 : vector<16x8xf32>
    %86 = arith.addf %80, %85 : vector<16x8xf32>
    %87 = vector.extract_strided_slice %17 {offsets = [0, 6], sizes = [16, 1], strides = [1, 1]} : vector<16x8xf32> to vector<16x1xf32>
    %88 = vector.extract_strided_slice %49 {offsets = [0, 48], sizes = [1, 8], strides = [1, 1]} : vector<1x64xf32> to vector<1x8xf32>
    %89 = vector.broadcast %87 : vector<16x1xf32> to vector<16x8xf32>
    %90 = vector.broadcast %88 : vector<1x8xf32> to vector<16x8xf32>
    %91 = arith.mulf %89, %90 : vector<16x8xf32>
    %92 = arith.addf %86, %91 : vector<16x8xf32>
    %93 = vector.extract_strided_slice %17 {offsets = [0, 7], sizes = [16, 1], strides = [1, 1]} : vector<16x8xf32> to vector<16x1xf32>
    %94 = vector.extract_strided_slice %49 {offsets = [0, 56], sizes = [1, 8], strides = [1, 1]} : vector<1x64xf32> to vector<1x8xf32>
    %95 = vector.broadcast %93 : vector<16x1xf32> to vector<16x8xf32>
    %96 = vector.broadcast %94 : vector<1x8xf32> to vector<16x8xf32>
    %97 = arith.mulf %95, %96 : vector<16x8xf32>
    %98 = arith.addf %92, %97 : vector<16x8xf32>
    %cst_30 = arith.constant dense<0.000000e+00> : vector<16x16xf32>
    %99 = tpu.matmul %98, %18, %cst_30 {dimension_numbers = #tpu.dot_dimension_numbers<[1], [0], [0], [1], [0, 0, 1, 1], [], []>} : vector<16x8xf32>, vector<8x16xf32>, vector<16x16xf32> -> vector<16x16xf32>
    %c0_31 = arith.constant 0 : index
    %c0_32 = arith.constant 0 : index
    %c0_33 = arith.constant 0 : index
    %100 = vector.load %arg5[%c0_31, %c0_32, %c0_33] : memref<2x128x256xbf16, #tpu.memory_space<vmem>>, vector<1x128x256xbf16>
    %101 = vector.shape_cast %100 : vector<1x128x256xbf16> to vector<128x256xbf16>
    %cst_34 = arith.constant dense<0.000000e+00> : vector<1x256xf32>
    %102 = tpu.matmul %15, %101, %cst_34 {dimension_numbers = #tpu.dot_dimension_numbers<[1], [0], [0], [1], [0, 0, 1, 1], [], []>} : vector<1x128xbf16>, vector<128x256xbf16>, vector<1x256xf32> -> vector<1x256xf32>
    %cst_35 = arith.constant 0.000000e+00 : f32
    %103 = vector.broadcast %cst_35 : f32 to vector<32x16xf32>
    %104 = vector.extract_strided_slice %102 {offsets = [0, 0], sizes = [1, 16], strides = [1, 1]} : vector<1x256xf32> to vector<1x16xf32>
    %105 = vector.extract_strided_slice %99 {offsets = [0, 0], sizes = [1, 16], strides = [1, 1]} : vector<16x16xf32> to vector<1x16xf32>
    %106 = vector.broadcast %6 : f32 to vector<1x16xf32>
    %107 = arith.addf %105, %106 : vector<1x16xf32>
    %108 = vector.broadcast %10 : f32 to vector<1x16xf32>
    %109 = arith.mulf %108, %107 : vector<1x16xf32>
    %110 = arith.addf %104, %109 : vector<1x16xf32>
    %111 = vector.broadcast %3 : f32 to vector<1x16xf32>
    %112 = arith.addf %110, %111 : vector<1x16xf32>
    %113 = vector.extract_strided_slice %19 {offsets = [0, 0], sizes = [32, 1], strides = [1, 1]} : vector<32x16xf32> to vector<32x1xf32>
    %114 = vector.broadcast %113 : vector<32x1xf32> to vector<32x16xf32>
    %115 = vector.broadcast %112 : vector<1x16xf32> to vector<32x16xf32>
    %116 = arith.mulf %114, %115 : vector<32x16xf32>
    %117 = arith.addf %103, %116 : vector<32x16xf32>
    %118 = vector.extract_strided_slice %102 {offsets = [0, 16], sizes = [1, 16], strides = [1, 1]} : vector<1x256xf32> to vector<1x16xf32>
    %119 = vector.extract_strided_slice %99 {offsets = [1, 0], sizes = [1, 16], strides = [1, 1]} : vector<16x16xf32> to vector<1x16xf32>
    %120 = vector.broadcast %6 : f32 to vector<1x16xf32>
    %121 = arith.addf %119, %120 : vector<1x16xf32>
    %122 = vector.broadcast %10 : f32 to vector<1x16xf32>
    %123 = arith.mulf %122, %121 : vector<1x16xf32>
    %124 = arith.addf %118, %123 : vector<1x16xf32>
    %125 = vector.broadcast %3 : f32 to vector<1x16xf32>
    %126 = arith.addf %124, %125 : vector<1x16xf32>
    %127 = vector.extract_strided_slice %19 {offsets = [0, 1], sizes = [32, 1], strides = [1, 1]} : vector<32x16xf32> to vector<32x1xf32>
    %128 = vector.broadcast %127 : vector<32x1xf32> to vector<32x16xf32>
    %129 = vector.broadcast %126 : vector<1x16xf32> to vector<32x16xf32>
    %130 = arith.mulf %128, %129 : vector<32x16xf32>
    %131 = arith.addf %117, %130 : vector<32x16xf32>
    %132 = vector.extract_strided_slice %102 {offsets = [0, 32], sizes = [1, 16], strides = [1, 1]} : vector<1x256xf32> to vector<1x16xf32>
    %133 = vector.extract_strided_slice %99 {offsets = [2, 0], sizes = [1, 16], strides = [1, 1]} : vector<16x16xf32> to vector<1x16xf32>
    %134 = vector.broadcast %6 : f32 to vector<1x16xf32>
    %135 = arith.addf %133, %134 : vector<1x16xf32>
    %136 = vector.broadcast %10 : f32 to vector<1x16xf32>
    %137 = arith.mulf %136, %135 : vector<1x16xf32>
    %138 = arith.addf %132, %137 : vector<1x16xf32>
    %139 = vector.broadcast %3 : f32 to vector<1x16xf32>
    %140 = arith.addf %138, %139 : vector<1x16xf32>
    %141 = vector.extract_strided_slice %19 {offsets = [0, 2], sizes = [32, 1], strides = [1, 1]} : vector<32x16xf32> to vector<32x1xf32>
    %142 = vector.broadcast %141 : vector<32x1xf32> to vector<32x16xf32>
    %143 = vector.broadcast %140 : vector<1x16xf32> to vector<32x16xf32>
    %144 = arith.mulf %142, %143 : vector<32x16xf32>
    %145 = arith.addf %131, %144 : vector<32x16xf32>
    %146 = vector.extract_strided_slice %102 {offsets = [0, 48], sizes = [1, 16], strides = [1, 1]} : vector<1x256xf32> to vector<1x16xf32>
    %147 = vector.extract_strided_slice %99 {offsets = [3, 0], sizes = [1, 16], strides = [1, 1]} : vector<16x16xf32> to vector<1x16xf32>
    %148 = vector.broadcast %6 : f32 to vector<1x16xf32>
    %149 = arith.addf %147, %148 : vector<1x16xf32>
    %150 = vector.broadcast %10 : f32 to vector<1x16xf32>
    %151 = arith.mulf %150, %149 : vector<1x16xf32>
    %152 = arith.addf %146, %151 : vector<1x16xf32>
    %153 = vector.broadcast %3 : f32 to vector<1x16xf32>
    %154 = arith.addf %152, %153 : vector<1x16xf32>
    %155 = vector.extract_strided_slice %19 {offsets = [0, 3], sizes = [32, 1], strides = [1, 1]} : vector<32x16xf32> to vector<32x1xf32>
    %156 = vector.broadcast %155 : vector<32x1xf32> to vector<32x16xf32>
    %157 = vector.broadcast %154 : vector<1x16xf32> to vector<32x16xf32>
    %158 = arith.mulf %156, %157 : vector<32x16xf32>
    %159 = arith.addf %145, %158 : vector<32x16xf32>
    %160 = vector.extract_strided_slice %102 {offsets = [0, 64], sizes = [1, 16], strides = [1, 1]} : vector<1x256xf32> to vector<1x16xf32>
    %161 = vector.extract_strided_slice %99 {offsets = [4, 0], sizes = [1, 16], strides = [1, 1]} : vector<16x16xf32> to vector<1x16xf32>
    %162 = vector.broadcast %6 : f32 to vector<1x16xf32>
    %163 = arith.addf %161, %162 : vector<1x16xf32>
    %164 = vector.broadcast %10 : f32 to vector<1x16xf32>
    %165 = arith.mulf %164, %163 : vector<1x16xf32>
    %166 = arith.addf %160, %165 : vector<1x16xf32>
    %167 = vector.broadcast %3 : f32 to vector<1x16xf32>
    %168 = arith.addf %166, %167 : vector<1x16xf32>
    %169 = vector.extract_strided_slice %19 {offsets = [0, 4], sizes = [32, 1], strides = [1, 1]} : vector<32x16xf32> to vector<32x1xf32>
    %170 = vector.broadcast %169 : vector<32x1xf32> to vector<32x16xf32>
    %171 = vector.broadcast %168 : vector<1x16xf32> to vector<32x16xf32>
    %172 = arith.mulf %170, %171 : vector<32x16xf32>
    %173 = arith.addf %159, %172 : vector<32x16xf32>
    %174 = vector.extract_strided_slice %102 {offsets = [0, 80], sizes = [1, 16], strides = [1, 1]} : vector<1x256xf32> to vector<1x16xf32>
    %175 = vector.extract_strided_slice %99 {offsets = [5, 0], sizes = [1, 16], strides = [1, 1]} : vector<16x16xf32> to vector<1x16xf32>
    %176 = vector.broadcast %6 : f32 to vector<1x16xf32>
    %177 = arith.addf %175, %176 : vector<1x16xf32>
    %178 = vector.broadcast %10 : f32 to vector<1x16xf32>
    %179 = arith.mulf %178, %177 : vector<1x16xf32>
    %180 = arith.addf %174, %179 : vector<1x16xf32>
    %181 = vector.broadcast %3 : f32 to vector<1x16xf32>
    %182 = arith.addf %180, %181 : vector<1x16xf32>
    %183 = vector.extract_strided_slice %19 {offsets = [0, 5], sizes = [32, 1], strides = [1, 1]} : vector<32x16xf32> to vector<32x1xf32>
    %184 = vector.broadcast %183 : vector<32x1xf32> to vector<32x16xf32>
    %185 = vector.broadcast %182 : vector<1x16xf32> to vector<32x16xf32>
    %186 = arith.mulf %184, %185 : vector<32x16xf32>
    %187 = arith.addf %173, %186 : vector<32x16xf32>
    %188 = vector.extract_strided_slice %102 {offsets = [0, 96], sizes = [1, 16], strides = [1, 1]} : vector<1x256xf32> to vector<1x16xf32>
    %189 = vector.extract_strided_slice %99 {offsets = [6, 0], sizes = [1, 16], strides = [1, 1]} : vector<16x16xf32> to vector<1x16xf32>
    %190 = vector.broadcast %6 : f32 to vector<1x16xf32>
    %191 = arith.addf %189, %190 : vector<1x16xf32>
    %192 = vector.broadcast %10 : f32 to vector<1x16xf32>
    %193 = arith.mulf %192, %191 : vector<1x16xf32>
    %194 = arith.addf %188, %193 : vector<1x16xf32>
    %195 = vector.broadcast %3 : f32 to vector<1x16xf32>
    %196 = arith.addf %194, %195 : vector<1x16xf32>
    %197 = vector.extract_strided_slice %19 {offsets = [0, 6], sizes = [32, 1], strides = [1, 1]} : vector<32x16xf32> to vector<32x1xf32>
    %198 = vector.broadcast %197 : vector<32x1xf32> to vector<32x16xf32>
    %199 = vector.broadcast %196 : vector<1x16xf32> to vector<32x16xf32>
    %200 = arith.mulf %198, %199 : vector<32x16xf32>
    %201 = arith.addf %187, %200 : vector<32x16xf32>
    %202 = vector.extract_strided_slice %102 {offsets = [0, 112], sizes = [1, 16], strides = [1, 1]} : vector<1x256xf32> to vector<1x16xf32>
    %203 = vector.extract_strided_slice %99 {offsets = [7, 0], sizes = [1, 16], strides = [1, 1]} : vector<16x16xf32> to vector<1x16xf32>
    %204 = vector.broadcast %6 : f32 to vector<1x16xf32>
    %205 = arith.addf %203, %204 : vector<1x16xf32>
    %206 = vector.broadcast %10 : f32 to vector<1x16xf32>
    %207 = arith.mulf %206, %205 : vector<1x16xf32>
    %208 = arith.addf %202, %207 : vector<1x16xf32>
    %209 = vector.broadcast %3 : f32 to vector<1x16xf32>
    %210 = arith.addf %208, %209 : vector<1x16xf32>
    %211 = vector.extract_strided_slice %19 {offsets = [0, 7], sizes = [32, 1], strides = [1, 1]} : vector<32x16xf32> to vector<32x1xf32>
    %212 = vector.broadcast %211 : vector<32x1xf32> to vector<32x16xf32>
    %213 = vector.broadcast %210 : vector<1x16xf32> to vector<32x16xf32>
    %214 = arith.mulf %212, %213 : vector<32x16xf32>
    %215 = arith.addf %201, %214 : vector<32x16xf32>
    %216 = vector.extract_strided_slice %102 {offsets = [0, 128], sizes = [1, 16], strides = [1, 1]} : vector<1x256xf32> to vector<1x16xf32>
    %217 = vector.extract_strided_slice %99 {offsets = [8, 0], sizes = [1, 16], strides = [1, 1]} : vector<16x16xf32> to vector<1x16xf32>
    %218 = vector.broadcast %6 : f32 to vector<1x16xf32>
    %219 = arith.addf %217, %218 : vector<1x16xf32>
    %220 = vector.broadcast %10 : f32 to vector<1x16xf32>
    %221 = arith.mulf %220, %219 : vector<1x16xf32>
    %222 = arith.addf %216, %221 : vector<1x16xf32>
    %223 = vector.broadcast %3 : f32 to vector<1x16xf32>
    %224 = arith.addf %222, %223 : vector<1x16xf32>
    %225 = vector.extract_strided_slice %19 {offsets = [0, 8], sizes = [32, 1], strides = [1, 1]} : vector<32x16xf32> to vector<32x1xf32>
    %226 = vector.broadcast %225 : vector<32x1xf32> to vector<32x16xf32>
    %227 = vector.broadcast %224 : vector<1x16xf32> to vector<32x16xf32>
    %228 = arith.mulf %226, %227 : vector<32x16xf32>
    %229 = arith.addf %215, %228 : vector<32x16xf32>
    %230 = vector.extract_strided_slice %102 {offsets = [0, 144], sizes = [1, 16], strides = [1, 1]} : vector<1x256xf32> to vector<1x16xf32>
    %231 = vector.extract_strided_slice %99 {offsets = [9, 0], sizes = [1, 16], strides = [1, 1]} : vector<16x16xf32> to vector<1x16xf32>
    %232 = vector.broadcast %6 : f32 to vector<1x16xf32>
    %233 = arith.addf %231, %232 : vector<1x16xf32>
    %234 = vector.broadcast %10 : f32 to vector<1x16xf32>
    %235 = arith.mulf %234, %233 : vector<1x16xf32>
    %236 = arith.addf %230, %235 : vector<1x16xf32>
    %237 = vector.broadcast %3 : f32 to vector<1x16xf32>
    %238 = arith.addf %236, %237 : vector<1x16xf32>
    %239 = vector.extract_strided_slice %19 {offsets = [0, 9], sizes = [32, 1], strides = [1, 1]} : vector<32x16xf32> to vector<32x1xf32>
    %240 = vector.broadcast %239 : vector<32x1xf32> to vector<32x16xf32>
    %241 = vector.broadcast %238 : vector<1x16xf32> to vector<32x16xf32>
    %242 = arith.mulf %240, %241 : vector<32x16xf32>
    %243 = arith.addf %229, %242 : vector<32x16xf32>
    %244 = vector.extract_strided_slice %102 {offsets = [0, 160], sizes = [1, 16], strides = [1, 1]} : vector<1x256xf32> to vector<1x16xf32>
    %245 = vector.extract_strided_slice %99 {offsets = [10, 0], sizes = [1, 16], strides = [1, 1]} : vector<16x16xf32> to vector<1x16xf32>
    %246 = vector.broadcast %6 : f32 to vector<1x16xf32>
    %247 = arith.addf %245, %246 : vector<1x16xf32>
    %248 = vector.broadcast %10 : f32 to vector<1x16xf32>
    %249 = arith.mulf %248, %247 : vector<1x16xf32>
    %250 = arith.addf %244, %249 : vector<1x16xf32>
    %251 = vector.broadcast %3 : f32 to vector<1x16xf32>
    %252 = arith.addf %250, %251 : vector<1x16xf32>
    %253 = vector.extract_strided_slice %19 {offsets = [0, 10], sizes = [32, 1], strides = [1, 1]} : vector<32x16xf32> to vector<32x1xf32>
    %254 = vector.broadcast %253 : vector<32x1xf32> to vector<32x16xf32>
    %255 = vector.broadcast %252 : vector<1x16xf32> to vector<32x16xf32>
    %256 = arith.mulf %254, %255 : vector<32x16xf32>
    %257 = arith.addf %243, %256 : vector<32x16xf32>
    %258 = vector.extract_strided_slice %102 {offsets = [0, 176], sizes = [1, 16], strides = [1, 1]} : vector<1x256xf32> to vector<1x16xf32>
    %259 = vector.extract_strided_slice %99 {offsets = [11, 0], sizes = [1, 16], strides = [1, 1]} : vector<16x16xf32> to vector<1x16xf32>
    %260 = vector.broadcast %6 : f32 to vector<1x16xf32>
    %261 = arith.addf %259, %260 : vector<1x16xf32>
    %262 = vector.broadcast %10 : f32 to vector<1x16xf32>
    %263 = arith.mulf %262, %261 : vector<1x16xf32>
    %264 = arith.addf %258, %263 : vector<1x16xf32>
    %265 = vector.broadcast %3 : f32 to vector<1x16xf32>
    %266 = arith.addf %264, %265 : vector<1x16xf32>
    %267 = vector.extract_strided_slice %19 {offsets = [0, 11], sizes = [32, 1], strides = [1, 1]} : vector<32x16xf32> to vector<32x1xf32>
    %268 = vector.broadcast %267 : vector<32x1xf32> to vector<32x16xf32>
    %269 = vector.broadcast %266 : vector<1x16xf32> to vector<32x16xf32>
    %270 = arith.mulf %268, %269 : vector<32x16xf32>
    %271 = arith.addf %257, %270 : vector<32x16xf32>
    %272 = vector.extract_strided_slice %102 {offsets = [0, 192], sizes = [1, 16], strides = [1, 1]} : vector<1x256xf32> to vector<1x16xf32>
    %273 = vector.extract_strided_slice %99 {offsets = [12, 0], sizes = [1, 16], strides = [1, 1]} : vector<16x16xf32> to vector<1x16xf32>
    %274 = vector.broadcast %6 : f32 to vector<1x16xf32>
    %275 = arith.addf %273, %274 : vector<1x16xf32>
    %276 = vector.broadcast %10 : f32 to vector<1x16xf32>
    %277 = arith.mulf %276, %275 : vector<1x16xf32>
    %278 = arith.addf %272, %277 : vector<1x16xf32>
    %279 = vector.broadcast %3 : f32 to vector<1x16xf32>
    %280 = arith.addf %278, %279 : vector<1x16xf32>
    %281 = vector.extract_strided_slice %19 {offsets = [0, 12], sizes = [32, 1], strides = [1, 1]} : vector<32x16xf32> to vector<32x1xf32>
    %282 = vector.broadcast %281 : vector<32x1xf32> to vector<32x16xf32>
    %283 = vector.broadcast %280 : vector<1x16xf32> to vector<32x16xf32>
    %284 = arith.mulf %282, %283 : vector<32x16xf32>
    %285 = arith.addf %271, %284 : vector<32x16xf32>
    %286 = vector.extract_strided_slice %102 {offsets = [0, 208], sizes = [1, 16], strides = [1, 1]} : vector<1x256xf32> to vector<1x16xf32>
    %287 = vector.extract_strided_slice %99 {offsets = [13, 0], sizes = [1, 16], strides = [1, 1]} : vector<16x16xf32> to vector<1x16xf32>
    %288 = vector.broadcast %6 : f32 to vector<1x16xf32>
    %289 = arith.addf %287, %288 : vector<1x16xf32>
    %290 = vector.broadcast %10 : f32 to vector<1x16xf32>
    %291 = arith.mulf %290, %289 : vector<1x16xf32>
    %292 = arith.addf %286, %291 : vector<1x16xf32>
    %293 = vector.broadcast %3 : f32 to vector<1x16xf32>
    %294 = arith.addf %292, %293 : vector<1x16xf32>
    %295 = vector.extract_strided_slice %19 {offsets = [0, 13], sizes = [32, 1], strides = [1, 1]} : vector<32x16xf32> to vector<32x1xf32>
    %296 = vector.broadcast %295 : vector<32x1xf32> to vector<32x16xf32>
    %297 = vector.broadcast %294 : vector<1x16xf32> to vector<32x16xf32>
    %298 = arith.mulf %296, %297 : vector<32x16xf32>
    %299 = arith.addf %285, %298 : vector<32x16xf32>
    %300 = vector.extract_strided_slice %102 {offsets = [0, 224], sizes = [1, 16], strides = [1, 1]} : vector<1x256xf32> to vector<1x16xf32>
    %301 = vector.extract_strided_slice %99 {offsets = [14, 0], sizes = [1, 16], strides = [1, 1]} : vector<16x16xf32> to vector<1x16xf32>
    %302 = vector.broadcast %6 : f32 to vector<1x16xf32>
    %303 = arith.addf %301, %302 : vector<1x16xf32>
    %304 = vector.broadcast %10 : f32 to vector<1x16xf32>
    %305 = arith.mulf %304, %303 : vector<1x16xf32>
    %306 = arith.addf %300, %305 : vector<1x16xf32>
    %307 = vector.broadcast %3 : f32 to vector<1x16xf32>
    %308 = arith.addf %306, %307 : vector<1x16xf32>
    %309 = vector.extract_strided_slice %19 {offsets = [0, 14], sizes = [32, 1], strides = [1, 1]} : vector<32x16xf32> to vector<32x1xf32>
    %310 = vector.broadcast %309 : vector<32x1xf32> to vector<32x16xf32>
    %311 = vector.broadcast %308 : vector<1x16xf32> to vector<32x16xf32>
    %312 = arith.mulf %310, %311 : vector<32x16xf32>
    %313 = arith.addf %299, %312 : vector<32x16xf32>
    %314 = vector.extract_strided_slice %102 {offsets = [0, 240], sizes = [1, 16], strides = [1, 1]} : vector<1x256xf32> to vector<1x16xf32>
    %315 = vector.extract_strided_slice %99 {offsets = [15, 0], sizes = [1, 16], strides = [1, 1]} : vector<16x16xf32> to vector<1x16xf32>
    %316 = vector.broadcast %6 : f32 to vector<1x16xf32>
    %317 = arith.addf %315, %316 : vector<1x16xf32>
    %318 = vector.broadcast %10 : f32 to vector<1x16xf32>
    %319 = arith.mulf %318, %317 : vector<1x16xf32>
    %320 = arith.addf %314, %319 : vector<1x16xf32>
    %321 = vector.broadcast %3 : f32 to vector<1x16xf32>
    %322 = arith.addf %320, %321 : vector<1x16xf32>
    %323 = vector.extract_strided_slice %19 {offsets = [0, 15], sizes = [32, 1], strides = [1, 1]} : vector<32x16xf32> to vector<32x1xf32>
    %324 = vector.broadcast %323 : vector<32x1xf32> to vector<32x16xf32>
    %325 = vector.broadcast %322 : vector<1x16xf32> to vector<32x16xf32>
    %326 = arith.mulf %324, %325 : vector<32x16xf32>
    %327 = arith.addf %313, %326 : vector<32x16xf32>
    %cst_36 = arith.constant dense<0.000000e+00> : vector<32x32xf32>
    %328 = tpu.matmul %327, %20, %cst_36 {dimension_numbers = #tpu.dot_dimension_numbers<[1], [0], [0], [1], [0, 0, 1, 1], [], []>} : vector<32x16xf32>, vector<16x32xf32>, vector<32x32xf32> -> vector<32x32xf32>
    %c0_37 = arith.constant 0 : index
    %c0_38 = arith.constant 0 : index
    %c0_39 = arith.constant 0 : index
    %329 = vector.load %arg6[%c0_37, %c0_38, %c0_39] : memref<2x64x1024xbf16, #tpu.memory_space<vmem>>, vector<1x64x1024xbf16>
    %330 = vector.shape_cast %329 : vector<1x64x1024xbf16> to vector<64x1024xbf16>
    %cst_40 = arith.constant dense<0.000000e+00> : vector<1x1024xf32>
    %331 = tpu.matmul %16, %330, %cst_40 {dimension_numbers = #tpu.dot_dimension_numbers<[1], [0], [0], [1], [0, 0, 1, 1], [], []>} : vector<1x64xbf16>, vector<64x1024xbf16>, vector<1x1024xf32> -> vector<1x1024xf32>
    %332 = vector.extract_strided_slice %331 {offsets = [0, 0], sizes = [1, 32], strides = [1, 1]} : vector<1x1024xf32> to vector<1x32xf32>
    %333 = vector.extract_strided_slice %328 {offsets = [0, 0], sizes = [1, 32], strides = [1, 1]} : vector<32x32xf32> to vector<1x32xf32>
    %334 = vector.broadcast %6 : f32 to vector<1x32xf32>
    %335 = arith.addf %333, %334 : vector<1x32xf32>
    %336 = vector.broadcast %11 : f32 to vector<1x32xf32>
    %337 = arith.mulf %336, %335 : vector<1x32xf32>
    %338 = arith.addf %332, %337 : vector<1x32xf32>
    %339 = vector.broadcast %4 : f32 to vector<1x32xf32>
    %340 = arith.addf %338, %339 : vector<1x32xf32>
    %c0_41 = arith.constant 0 : index
    %c0_42 = arith.constant 0 : index
    %c0_43 = arith.constant 0 : index
    %341 = vector.load %arg16[%c0_41, %c0_42, %c0_43] : memref<2x1x1024xf32, #tpu.memory_space<vmem>>, vector<1x1x32xf32>
    %342 = vector.shape_cast %341 : vector<1x1x32xf32> to vector<1x32xf32>
    %343 = vector.shape_cast %340 : vector<1x32xf32> to vector<1x1x32xf32>
    tpu.vector_store %arg16[%c0_41, %c0_42, %c0_43], %343 {strides = array<i32>} : memref<2x1x1024xf32, #tpu.memory_space<vmem>>, vector<1x1x32xf32>,
    %344 = vector.extract_strided_slice %331 {offsets = [0, 32], sizes = [1, 32], strides = [1, 1]} : vector<1x1024xf32> to vector<1x32xf32>
    %345 = vector.extract_strided_slice %328 {offsets = [1, 0], sizes = [1, 32], strides = [1, 1]} : vector<32x32xf32> to vector<1x32xf32>
    %346 = vector.broadcast %6 : f32 to vector<1x32xf32>
    %347 = arith.addf %345, %346 : vector<1x32xf32>
    %348 = vector.broadcast %11 : f32 to vector<1x32xf32>
    %349 = arith.mulf %348, %347 : vector<1x32xf32>
    %350 = arith.addf %344, %349 : vector<1x32xf32>
    %351 = vector.broadcast %4 : f32 to vector<1x32xf32>
    %352 = arith.addf %350, %351 : vector<1x32xf32>
    %c0_44 = arith.constant 0 : index
    %c0_45 = arith.constant 0 : index
    %c32 = arith.constant 32 : index
    %353 = vector.load %arg16[%c0_44, %c0_45, %c32] : memref<2x1x1024xf32, #tpu.memory_space<vmem>>, vector<1x1x32xf32>
    %354 = vector.shape_cast %353 : vector<1x1x32xf32> to vector<1x32xf32>
    %355 = vector.shape_cast %352 : vector<1x32xf32> to vector<1x1x32xf32>
    tpu.vector_store %arg16[%c0_44, %c0_45, %c32], %355 {strides = array<i32>} : memref<2x1x1024xf32, #tpu.memory_space<vmem>>, vector<1x1x32xf32>,
    %356 = vector.extract_strided_slice %331 {offsets = [0, 64], sizes = [1, 32], strides = [1, 1]} : vector<1x1024xf32> to vector<1x32xf32>
    %357 = vector.extract_strided_slice %328 {offsets = [2, 0], sizes = [1, 32], strides = [1, 1]} : vector<32x32xf32> to vector<1x32xf32>
    %358 = vector.broadcast %6 : f32 to vector<1x32xf32>
    %359 = arith.addf %357, %358 : vector<1x32xf32>
    %360 = vector.broadcast %11 : f32 to vector<1x32xf32>
    %361 = arith.mulf %360, %359 : vector<1x32xf32>
    %362 = arith.addf %356, %361 : vector<1x32xf32>
    %363 = vector.broadcast %4 : f32 to vector<1x32xf32>
    %364 = arith.addf %362, %363 : vector<1x32xf32>
    %c0_46 = arith.constant 0 : index
    %c0_47 = arith.constant 0 : index
    %c64 = arith.constant 64 : index
    %365 = vector.load %arg16[%c0_46, %c0_47, %c64] : memref<2x1x1024xf32, #tpu.memory_space<vmem>>, vector<1x1x32xf32>
    %366 = vector.shape_cast %365 : vector<1x1x32xf32> to vector<1x32xf32>
    %367 = vector.shape_cast %364 : vector<1x32xf32> to vector<1x1x32xf32>
    tpu.vector_store %arg16[%c0_46, %c0_47, %c64], %367 {strides = array<i32>} : memref<2x1x1024xf32, #tpu.memory_space<vmem>>, vector<1x1x32xf32>,
    %368 = vector.extract_strided_slice %331 {offsets = [0, 96], sizes = [1, 32], strides = [1, 1]} : vector<1x1024xf32> to vector<1x32xf32>
    %369 = vector.extract_strided_slice %328 {offsets = [3, 0], sizes = [1, 32], strides = [1, 1]} : vector<32x32xf32> to vector<1x32xf32>
    %370 = vector.broadcast %6 : f32 to vector<1x32xf32>
    %371 = arith.addf %369, %370 : vector<1x32xf32>
    %372 = vector.broadcast %11 : f32 to vector<1x32xf32>
    %373 = arith.mulf %372, %371 : vector<1x32xf32>
    %374 = arith.addf %368, %373 : vector<1x32xf32>
    %375 = vector.broadcast %4 : f32 to vector<1x32xf32>
    %376 = arith.addf %374, %375 : vector<1x32xf32>
    %c0_48 = arith.constant 0 : index
    %c0_49 = arith.constant 0 : index
    %c96 = arith.constant 96 : index
    %377 = vector.load %arg16[%c0_48, %c0_49, %c96] : memref<2x1x1024xf32, #tpu.memory_space<vmem>>, vector<1x1x32xf32>
    %378 = vector.shape_cast %377 : vector<1x1x32xf32> to vector<1x32xf32>
    %379 = vector.shape_cast %376 : vector<1x32xf32> to vector<1x1x32xf32>
    tpu.vector_store %arg16[%c0_48, %c0_49, %c96], %379 {strides = array<i32>} : memref<2x1x1024xf32, #tpu.memory_space<vmem>>, vector<1x1x32xf32>,
    %380 = vector.extract_strided_slice %331 {offsets = [0, 128], sizes = [1, 32], strides = [1, 1]} : vector<1x1024xf32> to vector<1x32xf32>
    %381 = vector.extract_strided_slice %328 {offsets = [4, 0], sizes = [1, 32], strides = [1, 1]} : vector<32x32xf32> to vector<1x32xf32>
    %382 = vector.broadcast %6 : f32 to vector<1x32xf32>
    %383 = arith.addf %381, %382 : vector<1x32xf32>
    %384 = vector.broadcast %11 : f32 to vector<1x32xf32>
    %385 = arith.mulf %384, %383 : vector<1x32xf32>
    %386 = arith.addf %380, %385 : vector<1x32xf32>
    %387 = vector.broadcast %4 : f32 to vector<1x32xf32>
    %388 = arith.addf %386, %387 : vector<1x32xf32>
    %c0_50 = arith.constant 0 : index
    %c0_51 = arith.constant 0 : index
    %c128 = arith.constant 128 : index
    %389 = vector.load %arg16[%c0_50, %c0_51, %c128] : memref<2x1x1024xf32, #tpu.memory_space<vmem>>, vector<1x1x32xf32>
    %390 = vector.shape_cast %389 : vector<1x1x32xf32> to vector<1x32xf32>
    %391 = vector.shape_cast %388 : vector<1x32xf32> to vector<1x1x32xf32>
    tpu.vector_store %arg16[%c0_50, %c0_51, %c128], %391 {strides = array<i32>} : memref<2x1x1024xf32, #tpu.memory_space<vmem>>, vector<1x1x32xf32>,
    %392 = vector.extract_strided_slice %331 {offsets = [0, 160], sizes = [1, 32], strides = [1, 1]} : vector<1x1024xf32> to vector<1x32xf32>
    %393 = vector.extract_strided_slice %328 {offsets = [5, 0], sizes = [1, 32], strides = [1, 1]} : vector<32x32xf32> to vector<1x32xf32>
    %394 = vector.broadcast %6 : f32 to vector<1x32xf32>
    %395 = arith.addf %393, %394 : vector<1x32xf32>
    %396 = vector.broadcast %11 : f32 to vector<1x32xf32>
    %397 = arith.mulf %396, %395 : vector<1x32xf32>
    %398 = arith.addf %392, %397 : vector<1x32xf32>
    %399 = vector.broadcast %4 : f32 to vector<1x32xf32>
    %400 = arith.addf %398, %399 : vector<1x32xf32>
    %c0_52 = arith.constant 0 : index
    %c0_53 = arith.constant 0 : index
    %c160 = arith.constant 160 : index
    %401 = vector.load %arg16[%c0_52, %c0_53, %c160] : memref<2x1x1024xf32, #tpu.memory_space<vmem>>, vector<1x1x32xf32>
    %402 = vector.shape_cast %401 : vector<1x1x32xf32> to vector<1x32xf32>
    %403 = vector.shape_cast %400 : vector<1x32xf32> to vector<1x1x32xf32>
    tpu.vector_store %arg16[%c0_52, %c0_53, %c160], %403 {strides = array<i32>} : memref<2x1x1024xf32, #tpu.memory_space<vmem>>, vector<1x1x32xf32>,
    %404 = vector.extract_strided_slice %331 {offsets = [0, 192], sizes = [1, 32], strides = [1, 1]} : vector<1x1024xf32> to vector<1x32xf32>
    %405 = vector.extract_strided_slice %328 {offsets = [6, 0], sizes = [1, 32], strides = [1, 1]} : vector<32x32xf32> to vector<1x32xf32>
    %406 = vector.broadcast %6 : f32 to vector<1x32xf32>
    %407 = arith.addf %405, %406 : vector<1x32xf32>
    %408 = vector.broadcast %11 : f32 to vector<1x32xf32>
    %409 = arith.mulf %408, %407 : vector<1x32xf32>
    %410 = arith.addf %404, %409 : vector<1x32xf32>
    %411 = vector.broadcast %4 : f32 to vector<1x32xf32>
    %412 = arith.addf %410, %411 : vector<1x32xf32>
    %c0_54 = arith.constant 0 : index
    %c0_55 = arith.constant 0 : index
    %c192 = arith.constant 192 : index
    %413 = vector.load %arg16[%c0_54, %c0_55, %c192] : memref<2x1x1024xf32, #tpu.memory_space<vmem>>, vector<1x1x32xf32>
    %414 = vector.shape_cast %413 : vector<1x1x32xf32> to vector<1x32xf32>
    %415 = vector.shape_cast %412 : vector<1x32xf32> to vector<1x1x32xf32>
    tpu.vector_store %arg16[%c0_54, %c0_55, %c192], %415 {strides = array<i32>} : memref<2x1x1024xf32, #tpu.memory_space<vmem>>, vector<1x1x32xf32>,
    %416 = vector.extract_strided_slice %331 {offsets = [0, 224], sizes = [1, 32], strides = [1, 1]} : vector<1x1024xf32> to vector<1x32xf32>
    %417 = vector.extract_strided_slice %328 {offsets = [7, 0], sizes = [1, 32], strides = [1, 1]} : vector<32x32xf32> to vector<1x32xf32>
    %418 = vector.broadcast %6 : f32 to vector<1x32xf32>
    %419 = arith.addf %417, %418 : vector<1x32xf32>
    %420 = vector.broadcast %11 : f32 to vector<1x32xf32>
    %421 = arith.mulf %420, %419 : vector<1x32xf32>
    %422 = arith.addf %416, %421 : vector<1x32xf32>
    %423 = vector.broadcast %4 : f32 to vector<1x32xf32>
    %424 = arith.addf %422, %423 : vector<1x32xf32>
    %c0_56 = arith.constant 0 : index
    %c0_57 = arith.constant 0 : index
    %c224 = arith.constant 224 : index
    %425 = vector.load %arg16[%c0_56, %c0_57, %c224] : memref<2x1x1024xf32, #tpu.memory_space<vmem>>, vector<1x1x32xf32>
    %426 = vector.shape_cast %425 : vector<1x1x32xf32> to vector<1x32xf32>
    %427 = vector.shape_cast %424 : vector<1x32xf32> to vector<1x1x32xf32>
    tpu.vector_store %arg16[%c0_56, %c0_57, %c224], %427 {strides = array<i32>} : memref<2x1x1024xf32, #tpu.memory_space<vmem>>, vector<1x1x32xf32>,
    %428 = vector.extract_strided_slice %331 {offsets = [0, 256], sizes = [1, 32], strides = [1, 1]} : vector<1x1024xf32> to vector<1x32xf32>
    %429 = vector.extract_strided_slice %328 {offsets = [8, 0], sizes = [1, 32], strides = [1, 1]} : vector<32x32xf32> to vector<1x32xf32>
    %430 = vector.broadcast %6 : f32 to vector<1x32xf32>
    %431 = arith.addf %429, %430 : vector<1x32xf32>
    %432 = vector.broadcast %11 : f32 to vector<1x32xf32>
    %433 = arith.mulf %432, %431 : vector<1x32xf32>
    %434 = arith.addf %428, %433 : vector<1x32xf32>
    %435 = vector.broadcast %4 : f32 to vector<1x32xf32>
    %436 = arith.addf %434, %435 : vector<1x32xf32>
    %c0_58 = arith.constant 0 : index
    %c0_59 = arith.constant 0 : index
    %c256 = arith.constant 256 : index
    %437 = vector.load %arg16[%c0_58, %c0_59, %c256] : memref<2x1x1024xf32, #tpu.memory_space<vmem>>, vector<1x1x32xf32>
    %438 = vector.shape_cast %437 : vector<1x1x32xf32> to vector<1x32xf32>
    %439 = vector.shape_cast %436 : vector<1x32xf32> to vector<1x1x32xf32>
    tpu.vector_store %arg16[%c0_58, %c0_59, %c256], %439 {strides = array<i32>} : memref<2x1x1024xf32, #tpu.memory_space<vmem>>, vector<1x1x32xf32>,
    %440 = vector.extract_strided_slice %331 {offsets = [0, 288], sizes = [1, 32], strides = [1, 1]} : vector<1x1024xf32> to vector<1x32xf32>
    %441 = vector.extract_strided_slice %328 {offsets = [9, 0], sizes = [1, 32], strides = [1, 1]} : vector<32x32xf32> to vector<1x32xf32>
    %442 = vector.broadcast %6 : f32 to vector<1x32xf32>
    %443 = arith.addf %441, %442 : vector<1x32xf32>
    %444 = vector.broadcast %11 : f32 to vector<1x32xf32>
    %445 = arith.mulf %444, %443 : vector<1x32xf32>
    %446 = arith.addf %440, %445 : vector<1x32xf32>
    %447 = vector.broadcast %4 : f32 to vector<1x32xf32>
    %448 = arith.addf %446, %447 : vector<1x32xf32>
    %c0_60 = arith.constant 0 : index
    %c0_61 = arith.constant 0 : index
    %c288 = arith.constant 288 : index
    %449 = vector.load %arg16[%c0_60, %c0_61, %c288] : memref<2x1x1024xf32, #tpu.memory_space<vmem>>, vector<1x1x32xf32>
    %450 = vector.shape_cast %449 : vector<1x1x32xf32> to vector<1x32xf32>
    %451 = vector.shape_cast %448 : vector<1x32xf32> to vector<1x1x32xf32>
    tpu.vector_store %arg16[%c0_60, %c0_61, %c288], %451 {strides = array<i32>} : memref<2x1x1024xf32, #tpu.memory_space<vmem>>, vector<1x1x32xf32>,
    %452 = vector.extract_strided_slice %331 {offsets = [0, 320], sizes = [1, 32], strides = [1, 1]} : vector<1x1024xf32> to vector<1x32xf32>
    %453 = vector.extract_strided_slice %328 {offsets = [10, 0], sizes = [1, 32], strides = [1, 1]} : vector<32x32xf32> to vector<1x32xf32>
    %454 = vector.broadcast %6 : f32 to vector<1x32xf32>
    %455 = arith.addf %453, %454 : vector<1x32xf32>
    %456 = vector.broadcast %11 : f32 to vector<1x32xf32>
    %457 = arith.mulf %456, %455 : vector<1x32xf32>
    %458 = arith.addf %452, %457 : vector<1x32xf32>
    %459 = vector.broadcast %4 : f32 to vector<1x32xf32>
    %460 = arith.addf %458, %459 : vector<1x32xf32>
    %c0_62 = arith.constant 0 : index
    %c0_63 = arith.constant 0 : index
    %c320 = arith.constant 320 : index
    %461 = vector.load %arg16[%c0_62, %c0_63, %c320] : memref<2x1x1024xf32, #tpu.memory_space<vmem>>, vector<1x1x32xf32>
    %462 = vector.shape_cast %461 : vector<1x1x32xf32> to vector<1x32xf32>
    %463 = vector.shape_cast %460 : vector<1x32xf32> to vector<1x1x32xf32>
    tpu.vector_store %arg16[%c0_62, %c0_63, %c320], %463 {strides = array<i32>} : memref<2x1x1024xf32, #tpu.memory_space<vmem>>, vector<1x1x32xf32>,
    %464 = vector.extract_strided_slice %331 {offsets = [0, 352], sizes = [1, 32], strides = [1, 1]} : vector<1x1024xf32> to vector<1x32xf32>
    %465 = vector.extract_strided_slice %328 {offsets = [11, 0], sizes = [1, 32], strides = [1, 1]} : vector<32x32xf32> to vector<1x32xf32>
    %466 = vector.broadcast %6 : f32 to vector<1x32xf32>
    %467 = arith.addf %465, %466 : vector<1x32xf32>
    %468 = vector.broadcast %11 : f32 to vector<1x32xf32>
    %469 = arith.mulf %468, %467 : vector<1x32xf32>
    %470 = arith.addf %464, %469 : vector<1x32xf32>
    %471 = vector.broadcast %4 : f32 to vector<1x32xf32>
    %472 = arith.addf %470, %471 : vector<1x32xf32>
    %c0_64 = arith.constant 0 : index
    %c0_65 = arith.constant 0 : index
    %c352 = arith.constant 352 : index
    %473 = vector.load %arg16[%c0_64, %c0_65, %c352] : memref<2x1x1024xf32, #tpu.memory_space<vmem>>, vector<1x1x32xf32>
    %474 = vector.shape_cast %473 : vector<1x1x32xf32> to vector<1x32xf32>
    %475 = vector.shape_cast %472 : vector<1x32xf32> to vector<1x1x32xf32>
    tpu.vector_store %arg16[%c0_64, %c0_65, %c352], %475 {strides = array<i32>} : memref<2x1x1024xf32, #tpu.memory_space<vmem>>, vector<1x1x32xf32>,
    %476 = vector.extract_strided_slice %331 {offsets = [0, 384], sizes = [1, 32], strides = [1, 1]} : vector<1x1024xf32> to vector<1x32xf32>
    %477 = vector.extract_strided_slice %328 {offsets = [12, 0], sizes = [1, 32], strides = [1, 1]} : vector<32x32xf32> to vector<1x32xf32>
    %478 = vector.broadcast %6 : f32 to vector<1x32xf32>
    %479 = arith.addf %477, %478 : vector<1x32xf32>
    %480 = vector.broadcast %11 : f32 to vector<1x32xf32>
    %481 = arith.mulf %480, %479 : vector<1x32xf32>
    %482 = arith.addf %476, %481 : vector<1x32xf32>
    %483 = vector.broadcast %4 : f32 to vector<1x32xf32>
    %484 = arith.addf %482, %483 : vector<1x32xf32>
    %c0_66 = arith.constant 0 : index
    %c0_67 = arith.constant 0 : index
    %c384 = arith.constant 384 : index
    %485 = vector.load %arg16[%c0_66, %c0_67, %c384] : memref<2x1x1024xf32, #tpu.memory_space<vmem>>, vector<1x1x32xf32>
    %486 = vector.shape_cast %485 : vector<1x1x32xf32> to vector<1x32xf32>
    %487 = vector.shape_cast %484 : vector<1x32xf32> to vector<1x1x32xf32>
    tpu.vector_store %arg16[%c0_66, %c0_67, %c384], %487 {strides = array<i32>} : memref<2x1x1024xf32, #tpu.memory_space<vmem>>, vector<1x1x32xf32>,
    %488 = vector.extract_strided_slice %331 {offsets = [0, 416], sizes = [1, 32], strides = [1, 1]} : vector<1x1024xf32> to vector<1x32xf32>
    %489 = vector.extract_strided_slice %328 {offsets = [13, 0], sizes = [1, 32], strides = [1, 1]} : vector<32x32xf32> to vector<1x32xf32>
    %490 = vector.broadcast %6 : f32 to vector<1x32xf32>
    %491 = arith.addf %489, %490 : vector<1x32xf32>
    %492 = vector.broadcast %11 : f32 to vector<1x32xf32>
    %493 = arith.mulf %492, %491 : vector<1x32xf32>
    %494 = arith.addf %488, %493 : vector<1x32xf32>
    %495 = vector.broadcast %4 : f32 to vector<1x32xf32>
    %496 = arith.addf %494, %495 : vector<1x32xf32>
    %c0_68 = arith.constant 0 : index
    %c0_69 = arith.constant 0 : index
    %c416 = arith.constant 416 : index
    %497 = vector.load %arg16[%c0_68, %c0_69, %c416] : memref<2x1x1024xf32, #tpu.memory_space<vmem>>, vector<1x1x32xf32>
    %498 = vector.shape_cast %497 : vector<1x1x32xf32> to vector<1x32xf32>
    %499 = vector.shape_cast %496 : vector<1x32xf32> to vector<1x1x32xf32>
    tpu.vector_store %arg16[%c0_68, %c0_69, %c416], %499 {strides = array<i32>} : memref<2x1x1024xf32, #tpu.memory_space<vmem>>, vector<1x1x32xf32>,
    %500 = vector.extract_strided_slice %331 {offsets = [0, 448], sizes = [1, 32], strides = [1, 1]} : vector<1x1024xf32> to vector<1x32xf32>
    %501 = vector.extract_strided_slice %328 {offsets = [14, 0], sizes = [1, 32], strides = [1, 1]} : vector<32x32xf32> to vector<1x32xf32>
    %502 = vector.broadcast %6 : f32 to vector<1x32xf32>
    %503 = arith.addf %501, %502 : vector<1x32xf32>
    %504 = vector.broadcast %11 : f32 to vector<1x32xf32>
    %505 = arith.mulf %504, %503 : vector<1x32xf32>
    %506 = arith.addf %500, %505 : vector<1x32xf32>
    %507 = vector.broadcast %4 : f32 to vector<1x32xf32>
    %508 = arith.addf %506, %507 : vector<1x32xf32>
    %c0_70 = arith.constant 0 : index
    %c0_71 = arith.constant 0 : index
    %c448 = arith.constant 448 : index
    %509 = vector.load %arg16[%c0_70, %c0_71, %c448] : memref<2x1x1024xf32, #tpu.memory_space<vmem>>, vector<1x1x32xf32>
    %510 = vector.shape_cast %509 : vector<1x1x32xf32> to vector<1x32xf32>
    %511 = vector.shape_cast %508 : vector<1x32xf32> to vector<1x1x32xf32>
    tpu.vector_store %arg16[%c0_70, %c0_71, %c448], %511 {strides = array<i32>} : memref<2x1x1024xf32, #tpu.memory_space<vmem>>, vector<1x1x32xf32>,
    %512 = vector.extract_strided_slice %331 {offsets = [0, 480], sizes = [1, 32], strides = [1, 1]} : vector<1x1024xf32> to vector<1x32xf32>
    %513 = vector.extract_strided_slice %328 {offsets = [15, 0], sizes = [1, 32], strides = [1, 1]} : vector<32x32xf32> to vector<1x32xf32>
    %514 = vector.broadcast %6 : f32 to vector<1x32xf32>
    %515 = arith.addf %513, %514 : vector<1x32xf32>
    %516 = vector.broadcast %11 : f32 to vector<1x32xf32>
    %517 = arith.mulf %516, %515 : vector<1x32xf32>
    %518 = arith.addf %512, %517 : vector<1x32xf32>
    %519 = vector.broadcast %4 : f32 to vector<1x32xf32>
    %520 = arith.addf %518, %519 : vector<1x32xf32>
    %c0_72 = arith.constant 0 : index
    %c0_73 = arith.constant 0 : index
    %c480 = arith.constant 480 : index
    %521 = vector.load %arg16[%c0_72, %c0_73, %c480] : memref<2x1x1024xf32, #tpu.memory_space<vmem>>, vector<1x1x32xf32>
    %522 = vector.shape_cast %521 : vector<1x1x32xf32> to vector<1x32xf32>
    %523 = vector.shape_cast %520 : vector<1x32xf32> to vector<1x1x32xf32>
    tpu.vector_store %arg16[%c0_72, %c0_73, %c480], %523 {strides = array<i32>} : memref<2x1x1024xf32, #tpu.memory_space<vmem>>, vector<1x1x32xf32>,
    %524 = vector.extract_strided_slice %331 {offsets = [0, 512], sizes = [1, 32], strides = [1, 1]} : vector<1x1024xf32> to vector<1x32xf32>
    %525 = vector.extract_strided_slice %328 {offsets = [16, 0], sizes = [1, 32], strides = [1, 1]} : vector<32x32xf32> to vector<1x32xf32>
    %526 = vector.broadcast %6 : f32 to vector<1x32xf32>
    %527 = arith.addf %525, %526 : vector<1x32xf32>
    %528 = vector.broadcast %11 : f32 to vector<1x32xf32>
    %529 = arith.mulf %528, %527 : vector<1x32xf32>
    %530 = arith.addf %524, %529 : vector<1x32xf32>
    %531 = vector.broadcast %4 : f32 to vector<1x32xf32>
    %532 = arith.addf %530, %531 : vector<1x32xf32>
    %c0_74 = arith.constant 0 : index
    %c0_75 = arith.constant 0 : index
    %c512 = arith.constant 512 : index
    %533 = vector.load %arg16[%c0_74, %c0_75, %c512] : memref<2x1x1024xf32, #tpu.memory_space<vmem>>, vector<1x1x32xf32>
    %534 = vector.shape_cast %533 : vector<1x1x32xf32> to vector<1x32xf32>
    %535 = vector.shape_cast %532 : vector<1x32xf32> to vector<1x1x32xf32>
    tpu.vector_store %arg16[%c0_74, %c0_75, %c512], %535 {strides = array<i32>} : memref<2x1x1024xf32, #tpu.memory_space<vmem>>, vector<1x1x32xf32>,
    %536 = vector.extract_strided_slice %331 {offsets = [0, 544], sizes = [1, 32], strides = [1, 1]} : vector<1x1024xf32> to vector<1x32xf32>
    %537 = vector.extract_strided_slice %328 {offsets = [17, 0], sizes = [1, 32], strides = [1, 1]} : vector<32x32xf32> to vector<1x32xf32>
    %538 = vector.broadcast %6 : f32 to vector<1x32xf32>
    %539 = arith.addf %537, %538 : vector<1x32xf32>
    %540 = vector.broadcast %11 : f32 to vector<1x32xf32>
    %541 = arith.mulf %540, %539 : vector<1x32xf32>
    %542 = arith.addf %536, %541 : vector<1x32xf32>
    %543 = vector.broadcast %4 : f32 to vector<1x32xf32>
    %544 = arith.addf %542, %543 : vector<1x32xf32>
    %c0_76 = arith.constant 0 : index
    %c0_77 = arith.constant 0 : index
    %c544 = arith.constant 544 : index
    %545 = vector.load %arg16[%c0_76, %c0_77, %c544] : memref<2x1x1024xf32, #tpu.memory_space<vmem>>, vector<1x1x32xf32>
    %546 = vector.shape_cast %545 : vector<1x1x32xf32> to vector<1x32xf32>
    %547 = vector.shape_cast %544 : vector<1x32xf32> to vector<1x1x32xf32>
    tpu.vector_store %arg16[%c0_76, %c0_77, %c544], %547 {strides = array<i32>} : memref<2x1x1024xf32, #tpu.memory_space<vmem>>, vector<1x1x32xf32>,
    %548 = vector.extract_strided_slice %331 {offsets = [0, 576], sizes = [1, 32], strides = [1, 1]} : vector<1x1024xf32> to vector<1x32xf32>
    %549 = vector.extract_strided_slice %328 {offsets = [18, 0], sizes = [1, 32], strides = [1, 1]} : vector<32x32xf32> to vector<1x32xf32>
    %550 = vector.broadcast %6 : f32 to vector<1x32xf32>
    %551 = arith.addf %549, %550 : vector<1x32xf32>
    %552 = vector.broadcast %11 : f32 to vector<1x32xf32>
    %553 = arith.mulf %552, %551 : vector<1x32xf32>
    %554 = arith.addf %548, %553 : vector<1x32xf32>
    %555 = vector.broadcast %4 : f32 to vector<1x32xf32>
    %556 = arith.addf %554, %555 : vector<1x32xf32>
    %c0_78 = arith.constant 0 : index
    %c0_79 = arith.constant 0 : index
    %c576 = arith.constant 576 : index
    %557 = vector.load %arg16[%c0_78, %c0_79, %c576] : memref<2x1x1024xf32, #tpu.memory_space<vmem>>, vector<1x1x32xf32>
    %558 = vector.shape_cast %557 : vector<1x1x32xf32> to vector<1x32xf32>
    %559 = vector.shape_cast %556 : vector<1x32xf32> to vector<1x1x32xf32>
    tpu.vector_store %arg16[%c0_78, %c0_79, %c576], %559 {strides = array<i32>} : memref<2x1x1024xf32, #tpu.memory_space<vmem>>, vector<1x1x32xf32>,
    %560 = vector.extract_strided_slice %331 {offsets = [0, 608], sizes = [1, 32], strides = [1, 1]} : vector<1x1024xf32> to vector<1x32xf32>
    %561 = vector.extract_strided_slice %328 {offsets = [19, 0], sizes = [1, 32], strides = [1, 1]} : vector<32x32xf32> to vector<1x32xf32>
    %562 = vector.broadcast %6 : f32 to vector<1x32xf32>
    %563 = arith.addf %561, %562 : vector<1x32xf32>
    %564 = vector.broadcast %11 : f32 to vector<1x32xf32>
    %565 = arith.mulf %564, %563 : vector<1x32xf32>
    %566 = arith.addf %560, %565 : vector<1x32xf32>
    %567 = vector.broadcast %4 : f32 to vector<1x32xf32>
    %568 = arith.addf %566, %567 : vector<1x32xf32>
    %c0_80 = arith.constant 0 : index
    %c0_81 = arith.constant 0 : index
    %c608 = arith.constant 608 : index
    %569 = vector.load %arg16[%c0_80, %c0_81, %c608] : memref<2x1x1024xf32, #tpu.memory_space<vmem>>, vector<1x1x32xf32>
    %570 = vector.shape_cast %569 : vector<1x1x32xf32> to vector<1x32xf32>
    %571 = vector.shape_cast %568 : vector<1x32xf32> to vector<1x1x32xf32>
    tpu.vector_store %arg16[%c0_80, %c0_81, %c608], %571 {strides = array<i32>} : memref<2x1x1024xf32, #tpu.memory_space<vmem>>, vector<1x1x32xf32>,
    %572 = vector.extract_strided_slice %331 {offsets = [0, 640], sizes = [1, 32], strides = [1, 1]} : vector<1x1024xf32> to vector<1x32xf32>
    %573 = vector.extract_strided_slice %328 {offsets = [20, 0], sizes = [1, 32], strides = [1, 1]} : vector<32x32xf32> to vector<1x32xf32>
    %574 = vector.broadcast %6 : f32 to vector<1x32xf32>
    %575 = arith.addf %573, %574 : vector<1x32xf32>
    %576 = vector.broadcast %11 : f32 to vector<1x32xf32>
    %577 = arith.mulf %576, %575 : vector<1x32xf32>
    %578 = arith.addf %572, %577 : vector<1x32xf32>
    %579 = vector.broadcast %4 : f32 to vector<1x32xf32>
    %580 = arith.addf %578, %579 : vector<1x32xf32>
    %c0_82 = arith.constant 0 : index
    %c0_83 = arith.constant 0 : index
    %c640 = arith.constant 640 : index
    %581 = vector.load %arg16[%c0_82, %c0_83, %c640] : memref<2x1x1024xf32, #tpu.memory_space<vmem>>, vector<1x1x32xf32>
    %582 = vector.shape_cast %581 : vector<1x1x32xf32> to vector<1x32xf32>
    %583 = vector.shape_cast %580 : vector<1x32xf32> to vector<1x1x32xf32>
    tpu.vector_store %arg16[%c0_82, %c0_83, %c640], %583 {strides = array<i32>} : memref<2x1x1024xf32, #tpu.memory_space<vmem>>, vector<1x1x32xf32>,
    %584 = vector.extract_strided_slice %331 {offsets = [0, 672], sizes = [1, 32], strides = [1, 1]} : vector<1x1024xf32> to vector<1x32xf32>
    %585 = vector.extract_strided_slice %328 {offsets = [21, 0], sizes = [1, 32], strides = [1, 1]} : vector<32x32xf32> to vector<1x32xf32>
    %586 = vector.broadcast %6 : f32 to vector<1x32xf32>
    %587 = arith.addf %585, %586 : vector<1x32xf32>
    %588 = vector.broadcast %11 : f32 to vector<1x32xf32>
    %589 = arith.mulf %588, %587 : vector<1x32xf32>
    %590 = arith.addf %584, %589 : vector<1x32xf32>
    %591 = vector.broadcast %4 : f32 to vector<1x32xf32>
    %592 = arith.addf %590, %591 : vector<1x32xf32>
    %c0_84 = arith.constant 0 : index
    %c0_85 = arith.constant 0 : index
    %c672 = arith.constant 672 : index
    %593 = vector.load %arg16[%c0_84, %c0_85, %c672] : memref<2x1x1024xf32, #tpu.memory_space<vmem>>, vector<1x1x32xf32>
    %594 = vector.shape_cast %593 : vector<1x1x32xf32> to vector<1x32xf32>
    %595 = vector.shape_cast %592 : vector<1x32xf32> to vector<1x1x32xf32>
    tpu.vector_store %arg16[%c0_84, %c0_85, %c672], %595 {strides = array<i32>} : memref<2x1x1024xf32, #tpu.memory_space<vmem>>, vector<1x1x32xf32>,
    %596 = vector.extract_strided_slice %331 {offsets = [0, 704], sizes = [1, 32], strides = [1, 1]} : vector<1x1024xf32> to vector<1x32xf32>
    %597 = vector.extract_strided_slice %328 {offsets = [22, 0], sizes = [1, 32], strides = [1, 1]} : vector<32x32xf32> to vector<1x32xf32>
    %598 = vector.broadcast %6 : f32 to vector<1x32xf32>
    %599 = arith.addf %597, %598 : vector<1x32xf32>
    %600 = vector.broadcast %11 : f32 to vector<1x32xf32>
    %601 = arith.mulf %600, %599 : vector<1x32xf32>
    %602 = arith.addf %596, %601 : vector<1x32xf32>
    %603 = vector.broadcast %4 : f32 to vector<1x32xf32>
    %604 = arith.addf %602, %603 : vector<1x32xf32>
    %c0_86 = arith.constant 0 : index
    %c0_87 = arith.constant 0 : index
    %c704 = arith.constant 704 : index
    %605 = vector.load %arg16[%c0_86, %c0_87, %c704] : memref<2x1x1024xf32, #tpu.memory_space<vmem>>, vector<1x1x32xf32>
    %606 = vector.shape_cast %605 : vector<1x1x32xf32> to vector<1x32xf32>
    %607 = vector.shape_cast %604 : vector<1x32xf32> to vector<1x1x32xf32>
    tpu.vector_store %arg16[%c0_86, %c0_87, %c704], %607 {strides = array<i32>} : memref<2x1x1024xf32, #tpu.memory_space<vmem>>, vector<1x1x32xf32>,
    %608 = vector.extract_strided_slice %331 {offsets = [0, 736], sizes = [1, 32], strides = [1, 1]} : vector<1x1024xf32> to vector<1x32xf32>
    %609 = vector.extract_strided_slice %328 {offsets = [23, 0], sizes = [1, 32], strides = [1, 1]} : vector<32x32xf32> to vector<1x32xf32>
    %610 = vector.broadcast %6 : f32 to vector<1x32xf32>
    %611 = arith.addf %609, %610 : vector<1x32xf32>
    %612 = vector.broadcast %11 : f32 to vector<1x32xf32>
    %613 = arith.mulf %612, %611 : vector<1x32xf32>
    %614 = arith.addf %608, %613 : vector<1x32xf32>
    %615 = vector.broadcast %4 : f32 to vector<1x32xf32>
    %616 = arith.addf %614, %615 : vector<1x32xf32>
    %c0_88 = arith.constant 0 : index
    %c0_89 = arith.constant 0 : index
    %c736 = arith.constant 736 : index
    %617 = vector.load %arg16[%c0_88, %c0_89, %c736] : memref<2x1x1024xf32, #tpu.memory_space<vmem>>, vector<1x1x32xf32>
    %618 = vector.shape_cast %617 : vector<1x1x32xf32> to vector<1x32xf32>
    %619 = vector.shape_cast %616 : vector<1x32xf32> to vector<1x1x32xf32>
    tpu.vector_store %arg16[%c0_88, %c0_89, %c736], %619 {strides = array<i32>} : memref<2x1x1024xf32, #tpu.memory_space<vmem>>, vector<1x1x32xf32>,
    %620 = vector.extract_strided_slice %331 {offsets = [0, 768], sizes = [1, 32], strides = [1, 1]} : vector<1x1024xf32> to vector<1x32xf32>
    %621 = vector.extract_strided_slice %328 {offsets = [24, 0], sizes = [1, 32], strides = [1, 1]} : vector<32x32xf32> to vector<1x32xf32>
    %622 = vector.broadcast %6 : f32 to vector<1x32xf32>
    %623 = arith.addf %621, %622 : vector<1x32xf32>
    %624 = vector.broadcast %11 : f32 to vector<1x32xf32>
    %625 = arith.mulf %624, %623 : vector<1x32xf32>
    %626 = arith.addf %620, %625 : vector<1x32xf32>
    %627 = vector.broadcast %4 : f32 to vector<1x32xf32>
    %628 = arith.addf %626, %627 : vector<1x32xf32>
    %c0_90 = arith.constant 0 : index
    %c0_91 = arith.constant 0 : index
    %c768 = arith.constant 768 : index
    %629 = vector.load %arg16[%c0_90, %c0_91, %c768] : memref<2x1x1024xf32, #tpu.memory_space<vmem>>, vector<1x1x32xf32>
    %630 = vector.shape_cast %629 : vector<1x1x32xf32> to vector<1x32xf32>
    %631 = vector.shape_cast %628 : vector<1x32xf32> to vector<1x1x32xf32>
    tpu.vector_store %arg16[%c0_90, %c0_91, %c768], %631 {strides = array<i32>} : memref<2x1x1024xf32, #tpu.memory_space<vmem>>, vector<1x1x32xf32>,
    %632 = vector.extract_strided_slice %331 {offsets = [0, 800], sizes = [1, 32], strides = [1, 1]} : vector<1x1024xf32> to vector<1x32xf32>
    %633 = vector.extract_strided_slice %328 {offsets = [25, 0], sizes = [1, 32], strides = [1, 1]} : vector<32x32xf32> to vector<1x32xf32>
    %634 = vector.broadcast %6 : f32 to vector<1x32xf32>
    %635 = arith.addf %633, %634 : vector<1x32xf32>
    %636 = vector.broadcast %11 : f32 to vector<1x32xf32>
    %637 = arith.mulf %636, %635 : vector<1x32xf32>
    %638 = arith.addf %632, %637 : vector<1x32xf32>
    %639 = vector.broadcast %4 : f32 to vector<1x32xf32>
    %640 = arith.addf %638, %639 : vector<1x32xf32>
    %c0_92 = arith.constant 0 : index
    %c0_93 = arith.constant 0 : index
    %c800 = arith.constant 800 : index
    %641 = vector.load %arg16[%c0_92, %c0_93, %c800] : memref<2x1x1024xf32, #tpu.memory_space<vmem>>, vector<1x1x32xf32>
    %642 = vector.shape_cast %641 : vector<1x1x32xf32> to vector<1x32xf32>
    %643 = vector.shape_cast %640 : vector<1x32xf32> to vector<1x1x32xf32>
    tpu.vector_store %arg16[%c0_92, %c0_93, %c800], %643 {strides = array<i32>} : memref<2x1x1024xf32, #tpu.memory_space<vmem>>, vector<1x1x32xf32>,
    %644 = vector.extract_strided_slice %331 {offsets = [0, 832], sizes = [1, 32], strides = [1, 1]} : vector<1x1024xf32> to vector<1x32xf32>
    %645 = vector.extract_strided_slice %328 {offsets = [26, 0], sizes = [1, 32], strides = [1, 1]} : vector<32x32xf32> to vector<1x32xf32>
    %646 = vector.broadcast %6 : f32 to vector<1x32xf32>
    %647 = arith.addf %645, %646 : vector<1x32xf32>
    %648 = vector.broadcast %11 : f32 to vector<1x32xf32>
    %649 = arith.mulf %648, %647 : vector<1x32xf32>
    %650 = arith.addf %644, %649 : vector<1x32xf32>
    %651 = vector.broadcast %4 : f32 to vector<1x32xf32>
    %652 = arith.addf %650, %651 : vector<1x32xf32>
    %c0_94 = arith.constant 0 : index
    %c0_95 = arith.constant 0 : index
    %c832 = arith.constant 832 : index
    %653 = vector.load %arg16[%c0_94, %c0_95, %c832] : memref<2x1x1024xf32, #tpu.memory_space<vmem>>, vector<1x1x32xf32>
    %654 = vector.shape_cast %653 : vector<1x1x32xf32> to vector<1x32xf32>
    %655 = vector.shape_cast %652 : vector<1x32xf32> to vector<1x1x32xf32>
    tpu.vector_store %arg16[%c0_94, %c0_95, %c832], %655 {strides = array<i32>} : memref<2x1x1024xf32, #tpu.memory_space<vmem>>, vector<1x1x32xf32>,
    %656 = vector.extract_strided_slice %331 {offsets = [0, 864], sizes = [1, 32], strides = [1, 1]} : vector<1x1024xf32> to vector<1x32xf32>
    %657 = vector.extract_strided_slice %328 {offsets = [27, 0], sizes = [1, 32], strides = [1, 1]} : vector<32x32xf32> to vector<1x32xf32>
    %658 = vector.broadcast %6 : f32 to vector<1x32xf32>
    %659 = arith.addf %657, %658 : vector<1x32xf32>
    %660 = vector.broadcast %11 : f32 to vector<1x32xf32>
    %661 = arith.mulf %660, %659 : vector<1x32xf32>
    %662 = arith.addf %656, %661 : vector<1x32xf32>
    %663 = vector.broadcast %4 : f32 to vector<1x32xf32>
    %664 = arith.addf %662, %663 : vector<1x32xf32>
    %c0_96 = arith.constant 0 : index
    %c0_97 = arith.constant 0 : index
    %c864 = arith.constant 864 : index
    %665 = vector.load %arg16[%c0_96, %c0_97, %c864] : memref<2x1x1024xf32, #tpu.memory_space<vmem>>, vector<1x1x32xf32>
    %666 = vector.shape_cast %665 : vector<1x1x32xf32> to vector<1x32xf32>
    %667 = vector.shape_cast %664 : vector<1x32xf32> to vector<1x1x32xf32>
    tpu.vector_store %arg16[%c0_96, %c0_97, %c864], %667 {strides = array<i32>} : memref<2x1x1024xf32, #tpu.memory_space<vmem>>, vector<1x1x32xf32>,
    %668 = vector.extract_strided_slice %331 {offsets = [0, 896], sizes = [1, 32], strides = [1, 1]} : vector<1x1024xf32> to vector<1x32xf32>
    %669 = vector.extract_strided_slice %328 {offsets = [28, 0], sizes = [1, 32], strides = [1, 1]} : vector<32x32xf32> to vector<1x32xf32>
    %670 = vector.broadcast %6 : f32 to vector<1x32xf32>
    %671 = arith.addf %669, %670 : vector<1x32xf32>
    %672 = vector.broadcast %11 : f32 to vector<1x32xf32>
    %673 = arith.mulf %672, %671 : vector<1x32xf32>
    %674 = arith.addf %668, %673 : vector<1x32xf32>
    %675 = vector.broadcast %4 : f32 to vector<1x32xf32>
    %676 = arith.addf %674, %675 : vector<1x32xf32>
    %c0_98 = arith.constant 0 : index
    %c0_99 = arith.constant 0 : index
    %c896 = arith.constant 896 : index
    %677 = vector.load %arg16[%c0_98, %c0_99, %c896] : memref<2x1x1024xf32, #tpu.memory_space<vmem>>, vector<1x1x32xf32>
    %678 = vector.shape_cast %677 : vector<1x1x32xf32> to vector<1x32xf32>
    %679 = vector.shape_cast %676 : vector<1x32xf32> to vector<1x1x32xf32>
    tpu.vector_store %arg16[%c0_98, %c0_99, %c896], %679 {strides = array<i32>} : memref<2x1x1024xf32, #tpu.memory_space<vmem>>, vector<1x1x32xf32>,
    %680 = vector.extract_strided_slice %331 {offsets = [0, 928], sizes = [1, 32], strides = [1, 1]} : vector<1x1024xf32> to vector<1x32xf32>
    %681 = vector.extract_strided_slice %328 {offsets = [29, 0], sizes = [1, 32], strides = [1, 1]} : vector<32x32xf32> to vector<1x32xf32>
    %682 = vector.broadcast %6 : f32 to vector<1x32xf32>
    %683 = arith.addf %681, %682 : vector<1x32xf32>
    %684 = vector.broadcast %11 : f32 to vector<1x32xf32>
    %685 = arith.mulf %684, %683 : vector<1x32xf32>
    %686 = arith.addf %680, %685 : vector<1x32xf32>
    %687 = vector.broadcast %4 : f32 to vector<1x32xf32>
    %688 = arith.addf %686, %687 : vector<1x32xf32>
    %c0_100 = arith.constant 0 : index
    %c0_101 = arith.constant 0 : index
    %c928 = arith.constant 928 : index
    %689 = vector.load %arg16[%c0_100, %c0_101, %c928] : memref<2x1x1024xf32, #tpu.memory_space<vmem>>, vector<1x1x32xf32>
    %690 = vector.shape_cast %689 : vector<1x1x32xf32> to vector<1x32xf32>
    %691 = vector.shape_cast %688 : vector<1x32xf32> to vector<1x1x32xf32>
    tpu.vector_store %arg16[%c0_100, %c0_101, %c928], %691 {strides = array<i32>} : memref<2x1x1024xf32, #tpu.memory_space<vmem>>, vector<1x1x32xf32>,
    %692 = vector.extract_strided_slice %331 {offsets = [0, 960], sizes = [1, 32], strides = [1, 1]} : vector<1x1024xf32> to vector<1x32xf32>
    %693 = vector.extract_strided_slice %328 {offsets = [30, 0], sizes = [1, 32], strides = [1, 1]} : vector<32x32xf32> to vector<1x32xf32>
    %694 = vector.broadcast %6 : f32 to vector<1x32xf32>
    %695 = arith.addf %693, %694 : vector<1x32xf32>
    %696 = vector.broadcast %11 : f32 to vector<1x32xf32>
    %697 = arith.mulf %696, %695 : vector<1x32xf32>
    %698 = arith.addf %692, %697 : vector<1x32xf32>
    %699 = vector.broadcast %4 : f32 to vector<1x32xf32>
    %700 = arith.addf %698, %699 : vector<1x32xf32>
    %c0_102 = arith.constant 0 : index
    %c0_103 = arith.constant 0 : index
    %c960 = arith.constant 960 : index
    %701 = vector.load %arg16[%c0_102, %c0_103, %c960] : memref<2x1x1024xf32, #tpu.memory_space<vmem>>, vector<1x1x32xf32>
    %702 = vector.shape_cast %701 : vector<1x1x32xf32> to vector<1x32xf32>
    %703 = vector.shape_cast %700 : vector<1x32xf32> to vector<1x1x32xf32>
    tpu.vector_store %arg16[%c0_102, %c0_103, %c960], %703 {strides = array<i32>} : memref<2x1x1024xf32, #tpu.memory_space<vmem>>, vector<1x1x32xf32>,
    %704 = vector.extract_strided_slice %331 {offsets = [0, 992], sizes = [1, 32], strides = [1, 1]} : vector<1x1024xf32> to vector<1x32xf32>
    %705 = vector.extract_strided_slice %328 {offsets = [31, 0], sizes = [1, 32], strides = [1, 1]} : vector<32x32xf32> to vector<1x32xf32>
    %706 = vector.broadcast %6 : f32 to vector<1x32xf32>
    %707 = arith.addf %705, %706 : vector<1x32xf32>
    %708 = vector.broadcast %11 : f32 to vector<1x32xf32>
    %709 = arith.mulf %708, %707 : vector<1x32xf32>
    %710 = arith.addf %704, %709 : vector<1x32xf32>
    %711 = vector.broadcast %4 : f32 to vector<1x32xf32>
    %712 = arith.addf %710, %711 : vector<1x32xf32>
    %c0_104 = arith.constant 0 : index
    %c0_105 = arith.constant 0 : index
    %c992 = arith.constant 992 : index
    %713 = vector.load %arg16[%c0_104, %c0_105, %c992] : memref<2x1x1024xf32, #tpu.memory_space<vmem>>, vector<1x1x32xf32>
    %714 = vector.shape_cast %713 : vector<1x1x32xf32> to vector<1x32xf32>
    %715 = vector.shape_cast %712 : vector<1x32xf32> to vector<1x1x32xf32>
    tpu.vector_store %arg16[%c0_104, %c0_105, %c992], %715 {strides = array<i32>} : memref<2x1x1024xf32, #tpu.memory_space<vmem>>, vector<1x1x32xf32>,
    %c1_106 = arith.constant 1 : index
    %c0_107 = arith.constant 0 : index
    %c0_108 = arith.constant 0 : index
    %716 = vector.load %arg2[%c1_106, %c0_107, %c0_108] : memref<2x512x64xbf16, #tpu.memory_space<vmem>>, vector<1x512x64xbf16>
    %717 = vector.shape_cast %716 : vector<1x512x64xbf16> to vector<512x64xbf16>
    %cst_109 = arith.constant dense<0.000000e+00> : vector<1x64xf32>
    %718 = tpu.matmul %12, %717, %cst_109 {dimension_numbers = #tpu.dot_dimension_numbers<[1], [0], [0], [1], [0, 0, 1, 1], [], []>} : vector<1x512xbf16>, vector<512x64xbf16>, vector<1x64xf32> -> vector<1x64xf32>
    %719 = vector.broadcast %0 : f32 to vector<1x64xf32>
    %720 = arith.addf %718, %719 : vector<1x64xf32>
    %c1_110 = arith.constant 1 : index
    %c0_111 = arith.constant 0 : index
    %c0_112 = arith.constant 0 : index
    %721 = vector.load %arg3[%c1_110, %c0_111, %c0_112] : memref<2x512x64xbf16, #tpu.memory_space<vmem>>, vector<1x512x64xbf16>
    %722 = vector.shape_cast %721 : vector<1x512x64xbf16> to vector<512x64xbf16>
    %cst_113 = arith.constant dense<0.000000e+00> : vector<1x64xf32>
    %723 = tpu.matmul %13, %722, %cst_113 {dimension_numbers = #tpu.dot_dimension_numbers<[1], [0], [0], [1], [0, 0, 1, 1], [], []>} : vector<1x512xbf16>, vector<512x64xbf16>, vector<1x64xf32> -> vector<1x64xf32>
    %724 = vector.broadcast %7 : f32 to vector<1x64xf32>
    %725 = arith.mulf %724, %720 : vector<1x64xf32>
    %726 = vector.broadcast %5 : f32 to vector<1x64xf32>
    %727 = arith.addf %725, %726 : vector<1x64xf32>
    %728 = vector.broadcast %8 : f32 to vector<1x64xf32>
    %729 = arith.mulf %728, %727 : vector<1x64xf32>
    %730 = arith.addf %723, %729 : vector<1x64xf32>
    %731 = vector.broadcast %1 : f32 to vector<1x64xf32>
    %732 = arith.addf %730, %731 : vector<1x64xf32>
    %c1_114 = arith.constant 1 : index
    %c0_115 = arith.constant 0 : index
    %c0_116 = arith.constant 0 : index
    %733 = vector.load %arg4[%c1_114, %c0_115, %c0_116] : memref<2x256x64xbf16, #tpu.memory_space<vmem>>, vector<1x256x64xbf16>
    %734 = vector.shape_cast %733 : vector<1x256x64xbf16> to vector<256x64xbf16>
    %cst_117 = arith.constant dense<0.000000e+00> : vector<1x64xf32>
    %735 = tpu.matmul %14, %734, %cst_117 {dimension_numbers = #tpu.dot_dimension_numbers<[1], [0], [0], [1], [0, 0, 1, 1], [], []>} : vector<1x256xbf16>, vector<256x64xbf16>, vector<1x64xf32> -> vector<1x64xf32>
    %736 = vector.broadcast %7 : f32 to vector<1x64xf32>
    %737 = arith.mulf %736, %732 : vector<1x64xf32>
    %738 = vector.broadcast %5 : f32 to vector<1x64xf32>
    %739 = arith.addf %737, %738 : vector<1x64xf32>
    %740 = vector.broadcast %9 : f32 to vector<1x64xf32>
    %741 = arith.mulf %740, %739 : vector<1x64xf32>
    %742 = arith.addf %735, %741 : vector<1x64xf32>
    %743 = vector.broadcast %2 : f32 to vector<1x64xf32>
    %744 = arith.addf %742, %743 : vector<1x64xf32>
    %cst_118 = arith.constant 0.000000e+00 : f32
    %745 = vector.broadcast %cst_118 : f32 to vector<16x8xf32>
    %746 = vector.extract_strided_slice %17 {offsets = [0, 0], sizes = [16, 1], strides = [1, 1]} : vector<16x8xf32> to vector<16x1xf32>
    %747 = vector.extract_strided_slice %744 {offsets = [0, 0], sizes = [1, 8], strides = [1, 1]} : vector<1x64xf32> to vector<1x8xf32>
    %748 = vector.broadcast %746 : vector<16x1xf32> to vector<16x8xf32>
    %749 = vector.broadcast %747 : vector<1x8xf32> to vector<16x8xf32>
    %750 = arith.mulf %748, %749 : vector<16x8xf32>
    %751 = arith.addf %745, %750 : vector<16x8xf32>
    %752 = vector.extract_strided_slice %17 {offsets = [0, 1], sizes = [16, 1], strides = [1, 1]} : vector<16x8xf32> to vector<16x1xf32>
    %753 = vector.extract_strided_slice %744 {offsets = [0, 8], sizes = [1, 8], strides = [1, 1]} : vector<1x64xf32> to vector<1x8xf32>
    %754 = vector.broadcast %752 : vector<16x1xf32> to vector<16x8xf32>
    %755 = vector.broadcast %753 : vector<1x8xf32> to vector<16x8xf32>
    %756 = arith.mulf %754, %755 : vector<16x8xf32>
    %757 = arith.addf %751, %756 : vector<16x8xf32>
    %758 = vector.extract_strided_slice %17 {offsets = [0, 2], sizes = [16, 1], strides = [1, 1]} : vector<16x8xf32> to vector<16x1xf32>
    %759 = vector.extract_strided_slice %744 {offsets = [0, 16], sizes = [1, 8], strides = [1, 1]} : vector<1x64xf32> to vector<1x8xf32>
    %760 = vector.broadcast %758 : vector<16x1xf32> to vector<16x8xf32>
    %761 = vector.broadcast %759 : vector<1x8xf32> to vector<16x8xf32>
    %762 = arith.mulf %760, %761 : vector<16x8xf32>
    %763 = arith.addf %757, %762 : vector<16x8xf32>
    %764 = vector.extract_strided_slice %17 {offsets = [0, 3], sizes = [16, 1], strides = [1, 1]} : vector<16x8xf32> to vector<16x1xf32>
    %765 = vector.extract_strided_slice %744 {offsets = [0, 24], sizes = [1, 8], strides = [1, 1]} : vector<1x64xf32> to vector<1x8xf32>
    %766 = vector.broadcast %764 : vector<16x1xf32> to vector<16x8xf32>
    %767 = vector.broadcast %765 : vector<1x8xf32> to vector<16x8xf32>
    %768 = arith.mulf %766, %767 : vector<16x8xf32>
    %769 = arith.addf %763, %768 : vector<16x8xf32>
    %770 = vector.extract_strided_slice %17 {offsets = [0, 4], sizes = [16, 1], strides = [1, 1]} : vector<16x8xf32> to vector<16x1xf32>
    %771 = vector.extract_strided_slice %744 {offsets = [0, 32], sizes = [1, 8], strides = [1, 1]} : vector<1x64xf32> to vector<1x8xf32>
    %772 = vector.broadcast %770 : vector<16x1xf32> to vector<16x8xf32>
    %773 = vector.broadcast %771 : vector<1x8xf32> to vector<16x8xf32>
    %774 = arith.mulf %772, %773 : vector<16x8xf32>
    %775 = arith.addf %769, %774 : vector<16x8xf32>
    %776 = vector.extract_strided_slice %17 {offsets = [0, 5], sizes = [16, 1], strides = [1, 1]} : vector<16x8xf32> to vector<16x1xf32>
    %777 = vector.extract_strided_slice %744 {offsets = [0, 40], sizes = [1, 8], strides = [1, 1]} : vector<1x64xf32> to vector<1x8xf32>
    %778 = vector.broadcast %776 : vector<16x1xf32> to vector<16x8xf32>
    %779 = vector.broadcast %777 : vector<1x8xf32> to vector<16x8xf32>
    %780 = arith.mulf %778, %779 : vector<16x8xf32>
    %781 = arith.addf %775, %780 : vector<16x8xf32>
    %782 = vector.extract_strided_slice %17 {offsets = [0, 6], sizes = [16, 1], strides = [1, 1]} : vector<16x8xf32> to vector<16x1xf32>
    %783 = vector.extract_strided_slice %744 {offsets = [0, 48], sizes = [1, 8], strides = [1, 1]} : vector<1x64xf32> to vector<1x8xf32>
    %784 = vector.broadcast %782 : vector<16x1xf32> to vector<16x8xf32>
    %785 = vector.broadcast %783 : vector<1x8xf32> to vector<16x8xf32>
    %786 = arith.mulf %784, %785 : vector<16x8xf32>
    %787 = arith.addf %781, %786 : vector<16x8xf32>
    %788 = vector.extract_strided_slice %17 {offsets = [0, 7], sizes = [16, 1], strides = [1, 1]} : vector<16x8xf32> to vector<16x1xf32>
    %789 = vector.extract_strided_slice %744 {offsets = [0, 56], sizes = [1, 8], strides = [1, 1]} : vector<1x64xf32> to vector<1x8xf32>
    %790 = vector.broadcast %788 : vector<16x1xf32> to vector<16x8xf32>
    %791 = vector.broadcast %789 : vector<1x8xf32> to vector<16x8xf32>
    %792 = arith.mulf %790, %791 : vector<16x8xf32>
    %793 = arith.addf %787, %792 : vector<16x8xf32>
    %cst_119 = arith.constant dense<0.000000e+00> : vector<16x16xf32>
    %794 = tpu.matmul %793, %18, %cst_119 {dimension_numbers = #tpu.dot_dimension_numbers<[1], [0], [0], [1], [0, 0, 1, 1], [], []>} : vector<16x8xf32>, vector<8x16xf32>, vector<16x16xf32> -> vector<16x16xf32>
    %c1_120 = arith.constant 1 : index
    %c0_121 = arith.constant 0 : index
    %c0_122 = arith.constant 0 : index
    %795 = vector.load %arg5[%c1_120, %c0_121, %c0_122] : memref<2x128x256xbf16, #tpu.memory_space<vmem>>, vector<1x128x256xbf16>
    %796 = vector.shape_cast %795 : vector<1x128x256xbf16> to vector<128x256xbf16>
    %cst_123 = arith.constant dense<0.000000e+00> : vector<1x256xf32>
    %797 = tpu.matmul %15, %796, %cst_123 {dimension_numbers = #tpu.dot_dimension_numbers<[1], [0], [0], [1], [0, 0, 1, 1], [], []>} : vector<1x128xbf16>, vector<128x256xbf16>, vector<1x256xf32> -> vector<1x256xf32>
    %cst_124 = arith.constant 0.000000e+00 : f32
    %798 = vector.broadcast %cst_124 : f32 to vector<32x16xf32>
    %799 = vector.extract_strided_slice %797 {offsets = [0, 0], sizes = [1, 16], strides = [1, 1]} : vector<1x256xf32> to vector<1x16xf32>
    %800 = vector.extract_strided_slice %794 {offsets = [0, 0], sizes = [1, 16], strides = [1, 1]} : vector<16x16xf32> to vector<1x16xf32>
    %801 = vector.broadcast %6 : f32 to vector<1x16xf32>
    %802 = arith.addf %800, %801 : vector<1x16xf32>
    %803 = vector.broadcast %10 : f32 to vector<1x16xf32>
    %804 = arith.mulf %803, %802 : vector<1x16xf32>
    %805 = arith.addf %799, %804 : vector<1x16xf32>
    %806 = vector.broadcast %3 : f32 to vector<1x16xf32>
    %807 = arith.addf %805, %806 : vector<1x16xf32>
    %808 = vector.extract_strided_slice %19 {offsets = [0, 0], sizes = [32, 1], strides = [1, 1]} : vector<32x16xf32> to vector<32x1xf32>
    %809 = vector.broadcast %808 : vector<32x1xf32> to vector<32x16xf32>
    %810 = vector.broadcast %807 : vector<1x16xf32> to vector<32x16xf32>
    %811 = arith.mulf %809, %810 : vector<32x16xf32>
    %812 = arith.addf %798, %811 : vector<32x16xf32>
    %813 = vector.extract_strided_slice %797 {offsets = [0, 16], sizes = [1, 16], strides = [1, 1]} : vector<1x256xf32> to vector<1x16xf32>
    %814 = vector.extract_strided_slice %794 {offsets = [1, 0], sizes = [1, 16], strides = [1, 1]} : vector<16x16xf32> to vector<1x16xf32>
    %815 = vector.broadcast %6 : f32 to vector<1x16xf32>
    %816 = arith.addf %814, %815 : vector<1x16xf32>
    %817 = vector.broadcast %10 : f32 to vector<1x16xf32>
    %818 = arith.mulf %817, %816 : vector<1x16xf32>
    %819 = arith.addf %813, %818 : vector<1x16xf32>
    %820 = vector.broadcast %3 : f32 to vector<1x16xf32>
    %821 = arith.addf %819, %820 : vector<1x16xf32>
    %822 = vector.extract_strided_slice %19 {offsets = [0, 1], sizes = [32, 1], strides = [1, 1]} : vector<32x16xf32> to vector<32x1xf32>
    %823 = vector.broadcast %822 : vector<32x1xf32> to vector<32x16xf32>
    %824 = vector.broadcast %821 : vector<1x16xf32> to vector<32x16xf32>
    %825 = arith.mulf %823, %824 : vector<32x16xf32>
    %826 = arith.addf %812, %825 : vector<32x16xf32>
    %827 = vector.extract_strided_slice %797 {offsets = [0, 32], sizes = [1, 16], strides = [1, 1]} : vector<1x256xf32> to vector<1x16xf32>
    %828 = vector.extract_strided_slice %794 {offsets = [2, 0], sizes = [1, 16], strides = [1, 1]} : vector<16x16xf32> to vector<1x16xf32>
    %829 = vector.broadcast %6 : f32 to vector<1x16xf32>
    %830 = arith.addf %828, %829 : vector<1x16xf32>
    %831 = vector.broadcast %10 : f32 to vector<1x16xf32>
    %832 = arith.mulf %831, %830 : vector<1x16xf32>
    %833 = arith.addf %827, %832 : vector<1x16xf32>
    %834 = vector.broadcast %3 : f32 to vector<1x16xf32>
    %835 = arith.addf %833, %834 : vector<1x16xf32>
    %836 = vector.extract_strided_slice %19 {offsets = [0, 2], sizes = [32, 1], strides = [1, 1]} : vector<32x16xf32> to vector<32x1xf32>
    %837 = vector.broadcast %836 : vector<32x1xf32> to vector<32x16xf32>
    %838 = vector.broadcast %835 : vector<1x16xf32> to vector<32x16xf32>
    %839 = arith.mulf %837, %838 : vector<32x16xf32>
    %840 = arith.addf %826, %839 : vector<32x16xf32>
    %841 = vector.extract_strided_slice %797 {offsets = [0, 48], sizes = [1, 16], strides = [1, 1]} : vector<1x256xf32> to vector<1x16xf32>
    %842 = vector.extract_strided_slice %794 {offsets = [3, 0], sizes = [1, 16], strides = [1, 1]} : vector<16x16xf32> to vector<1x16xf32>
    %843 = vector.broadcast %6 : f32 to vector<1x16xf32>
    %844 = arith.addf %842, %843 : vector<1x16xf32>
    %845 = vector.broadcast %10 : f32 to vector<1x16xf32>
    %846 = arith.mulf %845, %844 : vector<1x16xf32>
    %847 = arith.addf %841, %846 : vector<1x16xf32>
    %848 = vector.broadcast %3 : f32 to vector<1x16xf32>
    %849 = arith.addf %847, %848 : vector<1x16xf32>
    %850 = vector.extract_strided_slice %19 {offsets = [0, 3], sizes = [32, 1], strides = [1, 1]} : vector<32x16xf32> to vector<32x1xf32>
    %851 = vector.broadcast %850 : vector<32x1xf32> to vector<32x16xf32>
    %852 = vector.broadcast %849 : vector<1x16xf32> to vector<32x16xf32>
    %853 = arith.mulf %851, %852 : vector<32x16xf32>
    %854 = arith.addf %840, %853 : vector<32x16xf32>
    %855 = vector.extract_strided_slice %797 {offsets = [0, 64], sizes = [1, 16], strides = [1, 1]} : vector<1x256xf32> to vector<1x16xf32>
    %856 = vector.extract_strided_slice %794 {offsets = [4, 0], sizes = [1, 16], strides = [1, 1]} : vector<16x16xf32> to vector<1x16xf32>
    %857 = vector.broadcast %6 : f32 to vector<1x16xf32>
    %858 = arith.addf %856, %857 : vector<1x16xf32>
    %859 = vector.broadcast %10 : f32 to vector<1x16xf32>
    %860 = arith.mulf %859, %858 : vector<1x16xf32>
    %861 = arith.addf %855, %860 : vector<1x16xf32>
    %862 = vector.broadcast %3 : f32 to vector<1x16xf32>
    %863 = arith.addf %861, %862 : vector<1x16xf32>
    %864 = vector.extract_strided_slice %19 {offsets = [0, 4], sizes = [32, 1], strides = [1, 1]} : vector<32x16xf32> to vector<32x1xf32>
    %865 = vector.broadcast %864 : vector<32x1xf32> to vector<32x16xf32>
    %866 = vector.broadcast %863 : vector<1x16xf32> to vector<32x16xf32>
    %867 = arith.mulf %865, %866 : vector<32x16xf32>
    %868 = arith.addf %854, %867 : vector<32x16xf32>
    %869 = vector.extract_strided_slice %797 {offsets = [0, 80], sizes = [1, 16], strides = [1, 1]} : vector<1x256xf32> to vector<1x16xf32>
    %870 = vector.extract_strided_slice %794 {offsets = [5, 0], sizes = [1, 16], strides = [1, 1]} : vector<16x16xf32> to vector<1x16xf32>
    %871 = vector.broadcast %6 : f32 to vector<1x16xf32>
    %872 = arith.addf %870, %871 : vector<1x16xf32>
    %873 = vector.broadcast %10 : f32 to vector<1x16xf32>
    %874 = arith.mulf %873, %872 : vector<1x16xf32>
    %875 = arith.addf %869, %874 : vector<1x16xf32>
    %876 = vector.broadcast %3 : f32 to vector<1x16xf32>
    %877 = arith.addf %875, %876 : vector<1x16xf32>
    %878 = vector.extract_strided_slice %19 {offsets = [0, 5], sizes = [32, 1], strides = [1, 1]} : vector<32x16xf32> to vector<32x1xf32>
    %879 = vector.broadcast %878 : vector<32x1xf32> to vector<32x16xf32>
    %880 = vector.broadcast %877 : vector<1x16xf32> to vector<32x16xf32>
    %881 = arith.mulf %879, %880 : vector<32x16xf32>
    %882 = arith.addf %868, %881 : vector<32x16xf32>
    %883 = vector.extract_strided_slice %797 {offsets = [0, 96], sizes = [1, 16], strides = [1, 1]} : vector<1x256xf32> to vector<1x16xf32>
    %884 = vector.extract_strided_slice %794 {offsets = [6, 0], sizes = [1, 16], strides = [1, 1]} : vector<16x16xf32> to vector<1x16xf32>
    %885 = vector.broadcast %6 : f32 to vector<1x16xf32>
    %886 = arith.addf %884, %885 : vector<1x16xf32>
    %887 = vector.broadcast %10 : f32 to vector<1x16xf32>
    %888 = arith.mulf %887, %886 : vector<1x16xf32>
    %889 = arith.addf %883, %888 : vector<1x16xf32>
    %890 = vector.broadcast %3 : f32 to vector<1x16xf32>
    %891 = arith.addf %889, %890 : vector<1x16xf32>
    %892 = vector.extract_strided_slice %19 {offsets = [0, 6], sizes = [32, 1], strides = [1, 1]} : vector<32x16xf32> to vector<32x1xf32>
    %893 = vector.broadcast %892 : vector<32x1xf32> to vector<32x16xf32>
    %894 = vector.broadcast %891 : vector<1x16xf32> to vector<32x16xf32>
    %895 = arith.mulf %893, %894 : vector<32x16xf32>
    %896 = arith.addf %882, %895 : vector<32x16xf32>
    %897 = vector.extract_strided_slice %797 {offsets = [0, 112], sizes = [1, 16], strides = [1, 1]} : vector<1x256xf32> to vector<1x16xf32>
    %898 = vector.extract_strided_slice %794 {offsets = [7, 0], sizes = [1, 16], strides = [1, 1]} : vector<16x16xf32> to vector<1x16xf32>
    %899 = vector.broadcast %6 : f32 to vector<1x16xf32>
    %900 = arith.addf %898, %899 : vector<1x16xf32>
    %901 = vector.broadcast %10 : f32 to vector<1x16xf32>
    %902 = arith.mulf %901, %900 : vector<1x16xf32>
    %903 = arith.addf %897, %902 : vector<1x16xf32>
    %904 = vector.broadcast %3 : f32 to vector<1x16xf32>
    %905 = arith.addf %903, %904 : vector<1x16xf32>
    %906 = vector.extract_strided_slice %19 {offsets = [0, 7], sizes = [32, 1], strides = [1, 1]} : vector<32x16xf32> to vector<32x1xf32>
    %907 = vector.broadcast %906 : vector<32x1xf32> to vector<32x16xf32>
    %908 = vector.broadcast %905 : vector<1x16xf32> to vector<32x16xf32>
    %909 = arith.mulf %907, %908 : vector<32x16xf32>
    %910 = arith.addf %896, %909 : vector<32x16xf32>
    %911 = vector.extract_strided_slice %797 {offsets = [0, 128], sizes = [1, 16], strides = [1, 1]} : vector<1x256xf32> to vector<1x16xf32>
    %912 = vector.extract_strided_slice %794 {offsets = [8, 0], sizes = [1, 16], strides = [1, 1]} : vector<16x16xf32> to vector<1x16xf32>
    %913 = vector.broadcast %6 : f32 to vector<1x16xf32>
    %914 = arith.addf %912, %913 : vector<1x16xf32>
    %915 = vector.broadcast %10 : f32 to vector<1x16xf32>
    %916 = arith.mulf %915, %914 : vector<1x16xf32>
    %917 = arith.addf %911, %916 : vector<1x16xf32>
    %918 = vector.broadcast %3 : f32 to vector<1x16xf32>
    %919 = arith.addf %917, %918 : vector<1x16xf32>
    %920 = vector.extract_strided_slice %19 {offsets = [0, 8], sizes = [32, 1], strides = [1, 1]} : vector<32x16xf32> to vector<32x1xf32>
    %921 = vector.broadcast %920 : vector<32x1xf32> to vector<32x16xf32>
    %922 = vector.broadcast %919 : vector<1x16xf32> to vector<32x16xf32>
    %923 = arith.mulf %921, %922 : vector<32x16xf32>
    %924 = arith.addf %910, %923 : vector<32x16xf32>
    %925 = vector.extract_strided_slice %797 {offsets = [0, 144], sizes = [1, 16], strides = [1, 1]} : vector<1x256xf32> to vector<1x16xf32>
    %926 = vector.extract_strided_slice %794 {offsets = [9, 0], sizes = [1, 16], strides = [1, 1]} : vector<16x16xf32> to vector<1x16xf32>
    %927 = vector.broadcast %6 : f32 to vector<1x16xf32>
    %928 = arith.addf %926, %927 : vector<1x16xf32>
    %929 = vector.broadcast %10 : f32 to vector<1x16xf32>
    %930 = arith.mulf %929, %928 : vector<1x16xf32>
    %931 = arith.addf %925, %930 : vector<1x16xf32>
    %932 = vector.broadcast %3 : f32 to vector<1x16xf32>
    %933 = arith.addf %931, %932 : vector<1x16xf32>
    %934 = vector.extract_strided_slice %19 {offsets = [0, 9], sizes = [32, 1], strides = [1, 1]} : vector<32x16xf32> to vector<32x1xf32>
    %935 = vector.broadcast %934 : vector<32x1xf32> to vector<32x16xf32>
    %936 = vector.broadcast %933 : vector<1x16xf32> to vector<32x16xf32>
    %937 = arith.mulf %935, %936 : vector<32x16xf32>
    %938 = arith.addf %924, %937 : vector<32x16xf32>
    %939 = vector.extract_strided_slice %797 {offsets = [0, 160], sizes = [1, 16], strides = [1, 1]} : vector<1x256xf32> to vector<1x16xf32>
    %940 = vector.extract_strided_slice %794 {offsets = [10, 0], sizes = [1, 16], strides = [1, 1]} : vector<16x16xf32> to vector<1x16xf32>
    %941 = vector.broadcast %6 : f32 to vector<1x16xf32>
    %942 = arith.addf %940, %941 : vector<1x16xf32>
    %943 = vector.broadcast %10 : f32 to vector<1x16xf32>
    %944 = arith.mulf %943, %942 : vector<1x16xf32>
    %945 = arith.addf %939, %944 : vector<1x16xf32>
    %946 = vector.broadcast %3 : f32 to vector<1x16xf32>
    %947 = arith.addf %945, %946 : vector<1x16xf32>
    %948 = vector.extract_strided_slice %19 {offsets = [0, 10], sizes = [32, 1], strides = [1, 1]} : vector<32x16xf32> to vector<32x1xf32>
    %949 = vector.broadcast %948 : vector<32x1xf32> to vector<32x16xf32>
    %950 = vector.broadcast %947 : vector<1x16xf32> to vector<32x16xf32>
    %951 = arith.mulf %949, %950 : vector<32x16xf32>
    %952 = arith.addf %938, %951 : vector<32x16xf32>
    %953 = vector.extract_strided_slice %797 {offsets = [0, 176], sizes = [1, 16], strides = [1, 1]} : vector<1x256xf32> to vector<1x16xf32>
    %954 = vector.extract_strided_slice %794 {offsets = [11, 0], sizes = [1, 16], strides = [1, 1]} : vector<16x16xf32> to vector<1x16xf32>
    %955 = vector.broadcast %6 : f32 to vector<1x16xf32>
    %956 = arith.addf %954, %955 : vector<1x16xf32>
    %957 = vector.broadcast %10 : f32 to vector<1x16xf32>
    %958 = arith.mulf %957, %956 : vector<1x16xf32>
    %959 = arith.addf %953, %958 : vector<1x16xf32>
    %960 = vector.broadcast %3 : f32 to vector<1x16xf32>
    %961 = arith.addf %959, %960 : vector<1x16xf32>
    %962 = vector.extract_strided_slice %19 {offsets = [0, 11], sizes = [32, 1], strides = [1, 1]} : vector<32x16xf32> to vector<32x1xf32>
    %963 = vector.broadcast %962 : vector<32x1xf32> to vector<32x16xf32>
    %964 = vector.broadcast %961 : vector<1x16xf32> to vector<32x16xf32>
    %965 = arith.mulf %963, %964 : vector<32x16xf32>
    %966 = arith.addf %952, %965 : vector<32x16xf32>
    %967 = vector.extract_strided_slice %797 {offsets = [0, 192], sizes = [1, 16], strides = [1, 1]} : vector<1x256xf32> to vector<1x16xf32>
    %968 = vector.extract_strided_slice %794 {offsets = [12, 0], sizes = [1, 16], strides = [1, 1]} : vector<16x16xf32> to vector<1x16xf32>
    %969 = vector.broadcast %6 : f32 to vector<1x16xf32>
    %970 = arith.addf %968, %969 : vector<1x16xf32>
    %971 = vector.broadcast %10 : f32 to vector<1x16xf32>
    %972 = arith.mulf %971, %970 : vector<1x16xf32>
    %973 = arith.addf %967, %972 : vector<1x16xf32>
    %974 = vector.broadcast %3 : f32 to vector<1x16xf32>
    %975 = arith.addf %973, %974 : vector<1x16xf32>
    %976 = vector.extract_strided_slice %19 {offsets = [0, 12], sizes = [32, 1], strides = [1, 1]} : vector<32x16xf32> to vector<32x1xf32>
    %977 = vector.broadcast %976 : vector<32x1xf32> to vector<32x16xf32>
    %978 = vector.broadcast %975 : vector<1x16xf32> to vector<32x16xf32>
    %979 = arith.mulf %977, %978 : vector<32x16xf32>
    %980 = arith.addf %966, %979 : vector<32x16xf32>
    %981 = vector.extract_strided_slice %797 {offsets = [0, 208], sizes = [1, 16], strides = [1, 1]} : vector<1x256xf32> to vector<1x16xf32>
    %982 = vector.extract_strided_slice %794 {offsets = [13, 0], sizes = [1, 16], strides = [1, 1]} : vector<16x16xf32> to vector<1x16xf32>
    %983 = vector.broadcast %6 : f32 to vector<1x16xf32>
    %984 = arith.addf %982, %983 : vector<1x16xf32>
    %985 = vector.broadcast %10 : f32 to vector<1x16xf32>
    %986 = arith.mulf %985, %984 : vector<1x16xf32>
    %987 = arith.addf %981, %986 : vector<1x16xf32>
    %988 = vector.broadcast %3 : f32 to vector<1x16xf32>
    %989 = arith.addf %987, %988 : vector<1x16xf32>
    %990 = vector.extract_strided_slice %19 {offsets = [0, 13], sizes = [32, 1], strides = [1, 1]} : vector<32x16xf32> to vector<32x1xf32>
    %991 = vector.broadcast %990 : vector<32x1xf32> to vector<32x16xf32>
    %992 = vector.broadcast %989 : vector<1x16xf32> to vector<32x16xf32>
    %993 = arith.mulf %991, %992 : vector<32x16xf32>
    %994 = arith.addf %980, %993 : vector<32x16xf32>
    %995 = vector.extract_strided_slice %797 {offsets = [0, 224], sizes = [1, 16], strides = [1, 1]} : vector<1x256xf32> to vector<1x16xf32>
    %996 = vector.extract_strided_slice %794 {offsets = [14, 0], sizes = [1, 16], strides = [1, 1]} : vector<16x16xf32> to vector<1x16xf32>
    %997 = vector.broadcast %6 : f32 to vector<1x16xf32>
    %998 = arith.addf %996, %997 : vector<1x16xf32>
    %999 = vector.broadcast %10 : f32 to vector<1x16xf32>
    %1000 = arith.mulf %999, %998 : vector<1x16xf32>
    %1001 = arith.addf %995, %1000 : vector<1x16xf32>
    %1002 = vector.broadcast %3 : f32 to vector<1x16xf32>
    %1003 = arith.addf %1001, %1002 : vector<1x16xf32>
    %1004 = vector.extract_strided_slice %19 {offsets = [0, 14], sizes = [32, 1], strides = [1, 1]} : vector<32x16xf32> to vector<32x1xf32>
    %1005 = vector.broadcast %1004 : vector<32x1xf32> to vector<32x16xf32>
    %1006 = vector.broadcast %1003 : vector<1x16xf32> to vector<32x16xf32>
    %1007 = arith.mulf %1005, %1006 : vector<32x16xf32>
    %1008 = arith.addf %994, %1007 : vector<32x16xf32>
    %1009 = vector.extract_strided_slice %797 {offsets = [0, 240], sizes = [1, 16], strides = [1, 1]} : vector<1x256xf32> to vector<1x16xf32>
    %1010 = vector.extract_strided_slice %794 {offsets = [15, 0], sizes = [1, 16], strides = [1, 1]} : vector<16x16xf32> to vector<1x16xf32>
    %1011 = vector.broadcast %6 : f32 to vector<1x16xf32>
    %1012 = arith.addf %1010, %1011 : vector<1x16xf32>
    %1013 = vector.broadcast %10 : f32 to vector<1x16xf32>
    %1014 = arith.mulf %1013, %1012 : vector<1x16xf32>
    %1015 = arith.addf %1009, %1014 : vector<1x16xf32>
    %1016 = vector.broadcast %3 : f32 to vector<1x16xf32>
    %1017 = arith.addf %1015, %1016 : vector<1x16xf32>
    %1018 = vector.extract_strided_slice %19 {offsets = [0, 15], sizes = [32, 1], strides = [1, 1]} : vector<32x16xf32> to vector<32x1xf32>
    %1019 = vector.broadcast %1018 : vector<32x1xf32> to vector<32x16xf32>
    %1020 = vector.broadcast %1017 : vector<1x16xf32> to vector<32x16xf32>
    %1021 = arith.mulf %1019, %1020 : vector<32x16xf32>
    %1022 = arith.addf %1008, %1021 : vector<32x16xf32>
    %cst_125 = arith.constant dense<0.000000e+00> : vector<32x32xf32>
    %1023 = tpu.matmul %1022, %20, %cst_125 {dimension_numbers = #tpu.dot_dimension_numbers<[1], [0], [0], [1], [0, 0, 1, 1], [], []>} : vector<32x16xf32>, vector<16x32xf32>, vector<32x32xf32> -> vector<32x32xf32>
    %c1_126 = arith.constant 1 : index
    %c0_127 = arith.constant 0 : index
    %c0_128 = arith.constant 0 : index
    %1024 = vector.load %arg6[%c1_126, %c0_127, %c0_128] : memref<2x64x1024xbf16, #tpu.memory_space<vmem>>, vector<1x64x1024xbf16>
    %1025 = vector.shape_cast %1024 : vector<1x64x1024xbf16> to vector<64x1024xbf16>
    %cst_129 = arith.constant dense<0.000000e+00> : vector<1x1024xf32>
    %1026 = tpu.matmul %16, %1025, %cst_129 {dimension_numbers = #tpu.dot_dimension_numbers<[1], [0], [0], [1], [0, 0, 1, 1], [], []>} : vector<1x64xbf16>, vector<64x1024xbf16>, vector<1x1024xf32> -> vector<1x1024xf32>
    %1027 = vector.extract_strided_slice %1026 {offsets = [0, 0], sizes = [1, 32], strides = [1, 1]} : vector<1x1024xf32> to vector<1x32xf32>
    %1028 = vector.extract_strided_slice %1023 {offsets = [0, 0], sizes = [1, 32], strides = [1, 1]} : vector<32x32xf32> to vector<1x32xf32>
    %1029 = vector.broadcast %6 : f32 to vector<1x32xf32>
    %1030 = arith.addf %1028, %1029 : vector<1x32xf32>
    %1031 = vector.broadcast %11 : f32 to vector<1x32xf32>
    %1032 = arith.mulf %1031, %1030 : vector<1x32xf32>
    %1033 = arith.addf %1027, %1032 : vector<1x32xf32>
    %1034 = vector.broadcast %4 : f32 to vector<1x32xf32>
    %1035 = arith.addf %1033, %1034 : vector<1x32xf32>
    %c1_130 = arith.constant 1 : index
    %c0_131 = arith.constant 0 : index
    %c0_132 = arith.constant 0 : index
    %1036 = vector.load %arg16[%c1_130, %c0_131, %c0_132] : memref<2x1x1024xf32, #tpu.memory_space<vmem>>, vector<1x1x32xf32>
    %1037 = vector.shape_cast %1036 : vector<1x1x32xf32> to vector<1x32xf32>
    %1038 = vector.shape_cast %1035 : vector<1x32xf32> to vector<1x1x32xf32>
    tpu.vector_store %arg16[%c1_130, %c0_131, %c0_132], %1038 {strides = array<i32>} : memref<2x1x1024xf32, #tpu.memory_space<vmem>>, vector<1x1x32xf32>,
    %1039 = vector.extract_strided_slice %1026 {offsets = [0, 32], sizes = [1, 32], strides = [1, 1]} : vector<1x1024xf32> to vector<1x32xf32>
    %1040 = vector.extract_strided_slice %1023 {offsets = [1, 0], sizes = [1, 32], strides = [1, 1]} : vector<32x32xf32> to vector<1x32xf32>
    %1041 = vector.broadcast %6 : f32 to vector<1x32xf32>
    %1042 = arith.addf %1040, %1041 : vector<1x32xf32>
    %1043 = vector.broadcast %11 : f32 to vector<1x32xf32>
    %1044 = arith.mulf %1043, %1042 : vector<1x32xf32>
    %1045 = arith.addf %1039, %1044 : vector<1x32xf32>
    %1046 = vector.broadcast %4 : f32 to vector<1x32xf32>
    %1047 = arith.addf %1045, %1046 : vector<1x32xf32>
    %c1_133 = arith.constant 1 : index
    %c0_134 = arith.constant 0 : index
    %c32_135 = arith.constant 32 : index
    %1048 = vector.load %arg16[%c1_133, %c0_134, %c32_135] : memref<2x1x1024xf32, #tpu.memory_space<vmem>>, vector<1x1x32xf32>
    %1049 = vector.shape_cast %1048 : vector<1x1x32xf32> to vector<1x32xf32>
    %1050 = vector.shape_cast %1047 : vector<1x32xf32> to vector<1x1x32xf32>
    tpu.vector_store %arg16[%c1_133, %c0_134, %c32_135], %1050 {strides = array<i32>} : memref<2x1x1024xf32, #tpu.memory_space<vmem>>, vector<1x1x32xf32>,
    %1051 = vector.extract_strided_slice %1026 {offsets = [0, 64], sizes = [1, 32], strides = [1, 1]} : vector<1x1024xf32> to vector<1x32xf32>
    %1052 = vector.extract_strided_slice %1023 {offsets = [2, 0], sizes = [1, 32], strides = [1, 1]} : vector<32x32xf32> to vector<1x32xf32>
    %1053 = vector.broadcast %6 : f32 to vector<1x32xf32>
    %1054 = arith.addf %1052, %1053 : vector<1x32xf32>
    %1055 = vector.broadcast %11 : f32 to vector<1x32xf32>
    %1056 = arith.mulf %1055, %1054 : vector<1x32xf32>
    %1057 = arith.addf %1051, %1056 : vector<1x32xf32>
    %1058 = vector.broadcast %4 : f32 to vector<1x32xf32>
    %1059 = arith.addf %1057, %1058 : vector<1x32xf32>
    %c1_136 = arith.constant 1 : index
    %c0_137 = arith.constant 0 : index
    %c64_138 = arith.constant 64 : index
    %1060 = vector.load %arg16[%c1_136, %c0_137, %c64_138] : memref<2x1x1024xf32, #tpu.memory_space<vmem>>, vector<1x1x32xf32>
    %1061 = vector.shape_cast %1060 : vector<1x1x32xf32> to vector<1x32xf32>
    %1062 = vector.shape_cast %1059 : vector<1x32xf32> to vector<1x1x32xf32>
    tpu.vector_store %arg16[%c1_136, %c0_137, %c64_138], %1062 {strides = array<i32>} : memref<2x1x1024xf32, #tpu.memory_space<vmem>>, vector<1x1x32xf32>,
    %1063 = vector.extract_strided_slice %1026 {offsets = [0, 96], sizes = [1, 32], strides = [1, 1]} : vector<1x1024xf32> to vector<1x32xf32>
    %1064 = vector.extract_strided_slice %1023 {offsets = [3, 0], sizes = [1, 32], strides = [1, 1]} : vector<32x32xf32> to vector<1x32xf32>
    %1065 = vector.broadcast %6 : f32 to vector<1x32xf32>
    %1066 = arith.addf %1064, %1065 : vector<1x32xf32>
    %1067 = vector.broadcast %11 : f32 to vector<1x32xf32>
    %1068 = arith.mulf %1067, %1066 : vector<1x32xf32>
    %1069 = arith.addf %1063, %1068 : vector<1x32xf32>
    %1070 = vector.broadcast %4 : f32 to vector<1x32xf32>
    %1071 = arith.addf %1069, %1070 : vector<1x32xf32>
    %c1_139 = arith.constant 1 : index
    %c0_140 = arith.constant 0 : index
    %c96_141 = arith.constant 96 : index
    %1072 = vector.load %arg16[%c1_139, %c0_140, %c96_141] : memref<2x1x1024xf32, #tpu.memory_space<vmem>>, vector<1x1x32xf32>
    %1073 = vector.shape_cast %1072 : vector<1x1x32xf32> to vector<1x32xf32>
    %1074 = vector.shape_cast %1071 : vector<1x32xf32> to vector<1x1x32xf32>
    tpu.vector_store %arg16[%c1_139, %c0_140, %c96_141], %1074 {strides = array<i32>} : memref<2x1x1024xf32, #tpu.memory_space<vmem>>, vector<1x1x32xf32>,
    %1075 = vector.extract_strided_slice %1026 {offsets = [0, 128], sizes = [1, 32], strides = [1, 1]} : vector<1x1024xf32> to vector<1x32xf32>
    %1076 = vector.extract_strided_slice %1023 {offsets = [4, 0], sizes = [1, 32], strides = [1, 1]} : vector<32x32xf32> to vector<1x32xf32>
    %1077 = vector.broadcast %6 : f32 to vector<1x32xf32>
    %1078 = arith.addf %1076, %1077 : vector<1x32xf32>
    %1079 = vector.broadcast %11 : f32 to vector<1x32xf32>
    %1080 = arith.mulf %1079, %1078 : vector<1x32xf32>
    %1081 = arith.addf %1075, %1080 : vector<1x32xf32>
    %1082 = vector.broadcast %4 : f32 to vector<1x32xf32>
    %1083 = arith.addf %1081, %1082 : vector<1x32xf32>
    %c1_142 = arith.constant 1 : index
    %c0_143 = arith.constant 0 : index
    %c128_144 = arith.constant 128 : index
    %1084 = vector.load %arg16[%c1_142, %c0_143, %c128_144] : memref<2x1x1024xf32, #tpu.memory_space<vmem>>, vector<1x1x32xf32>
    %1085 = vector.shape_cast %1084 : vector<1x1x32xf32> to vector<1x32xf32>
    %1086 = vector.shape_cast %1083 : vector<1x32xf32> to vector<1x1x32xf32>
    tpu.vector_store %arg16[%c1_142, %c0_143, %c128_144], %1086 {strides = array<i32>} : memref<2x1x1024xf32, #tpu.memory_space<vmem>>, vector<1x1x32xf32>,
    %1087 = vector.extract_strided_slice %1026 {offsets = [0, 160], sizes = [1, 32], strides = [1, 1]} : vector<1x1024xf32> to vector<1x32xf32>
    %1088 = vector.extract_strided_slice %1023 {offsets = [5, 0], sizes = [1, 32], strides = [1, 1]} : vector<32x32xf32> to vector<1x32xf32>
    %1089 = vector.broadcast %6 : f32 to vector<1x32xf32>
    %1090 = arith.addf %1088, %1089 : vector<1x32xf32>
    %1091 = vector.broadcast %11 : f32 to vector<1x32xf32>
    %1092 = arith.mulf %1091, %1090 : vector<1x32xf32>
    %1093 = arith.addf %1087, %1092 : vector<1x32xf32>
    %1094 = vector.broadcast %4 : f32 to vector<1x32xf32>
    %1095 = arith.addf %1093, %1094 : vector<1x32xf32>
    %c1_145 = arith.constant 1 : index
    %c0_146 = arith.constant 0 : index
    %c160_147 = arith.constant 160 : index
    %1096 = vector.load %arg16[%c1_145, %c0_146, %c160_147] : memref<2x1x1024xf32, #tpu.memory_space<vmem>>, vector<1x1x32xf32>
    %1097 = vector.shape_cast %1096 : vector<1x1x32xf32> to vector<1x32xf32>
    %1098 = vector.shape_cast %1095 : vector<1x32xf32> to vector<1x1x32xf32>
    tpu.vector_store %arg16[%c1_145, %c0_146, %c160_147], %1098 {strides = array<i32>} : memref<2x1x1024xf32, #tpu.memory_space<vmem>>, vector<1x1x32xf32>,
    %1099 = vector.extract_strided_slice %1026 {offsets = [0, 192], sizes = [1, 32], strides = [1, 1]} : vector<1x1024xf32> to vector<1x32xf32>
    %1100 = vector.extract_strided_slice %1023 {offsets = [6, 0], sizes = [1, 32], strides = [1, 1]} : vector<32x32xf32> to vector<1x32xf32>
    %1101 = vector.broadcast %6 : f32 to vector<1x32xf32>
    %1102 = arith.addf %1100, %1101 : vector<1x32xf32>
    %1103 = vector.broadcast %11 : f32 to vector<1x32xf32>
    %1104 = arith.mulf %1103, %1102 : vector<1x32xf32>
    %1105 = arith.addf %1099, %1104 : vector<1x32xf32>
    %1106 = vector.broadcast %4 : f32 to vector<1x32xf32>
    %1107 = arith.addf %1105, %1106 : vector<1x32xf32>
    %c1_148 = arith.constant 1 : index
    %c0_149 = arith.constant 0 : index
    %c192_150 = arith.constant 192 : index
    %1108 = vector.load %arg16[%c1_148, %c0_149, %c192_150] : memref<2x1x1024xf32, #tpu.memory_space<vmem>>, vector<1x1x32xf32>
    %1109 = vector.shape_cast %1108 : vector<1x1x32xf32> to vector<1x32xf32>
    %1110 = vector.shape_cast %1107 : vector<1x32xf32> to vector<1x1x32xf32>
    tpu.vector_store %arg16[%c1_148, %c0_149, %c192_150], %1110 {strides = array<i32>} : memref<2x1x1024xf32, #tpu.memory_space<vmem>>, vector<1x1x32xf32>,
    %1111 = vector.extract_strided_slice %1026 {offsets = [0, 224], sizes = [1, 32], strides = [1, 1]} : vector<1x1024xf32> to vector<1x32xf32>
    %1112 = vector.extract_strided_slice %1023 {offsets = [7, 0], sizes = [1, 32], strides = [1, 1]} : vector<32x32xf32> to vector<1x32xf32>
    %1113 = vector.broadcast %6 : f32 to vector<1x32xf32>
    %1114 = arith.addf %1112, %1113 : vector<1x32xf32>
    %1115 = vector.broadcast %11 : f32 to vector<1x32xf32>
    %1116 = arith.mulf %1115, %1114 : vector<1x32xf32>
    %1117 = arith.addf %1111, %1116 : vector<1x32xf32>
    %1118 = vector.broadcast %4 : f32 to vector<1x32xf32>
    %1119 = arith.addf %1117, %1118 : vector<1x32xf32>
    %c1_151 = arith.constant 1 : index
    %c0_152 = arith.constant 0 : index
    %c224_153 = arith.constant 224 : index
    %1120 = vector.load %arg16[%c1_151, %c0_152, %c224_153] : memref<2x1x1024xf32, #tpu.memory_space<vmem>>, vector<1x1x32xf32>
    %1121 = vector.shape_cast %1120 : vector<1x1x32xf32> to vector<1x32xf32>
    %1122 = vector.shape_cast %1119 : vector<1x32xf32> to vector<1x1x32xf32>
    tpu.vector_store %arg16[%c1_151, %c0_152, %c224_153], %1122 {strides = array<i32>} : memref<2x1x1024xf32, #tpu.memory_space<vmem>>, vector<1x1x32xf32>,
    %1123 = vector.extract_strided_slice %1026 {offsets = [0, 256], sizes = [1, 32], strides = [1, 1]} : vector<1x1024xf32> to vector<1x32xf32>
    %1124 = vector.extract_strided_slice %1023 {offsets = [8, 0], sizes = [1, 32], strides = [1, 1]} : vector<32x32xf32> to vector<1x32xf32>
    %1125 = vector.broadcast %6 : f32 to vector<1x32xf32>
    %1126 = arith.addf %1124, %1125 : vector<1x32xf32>
    %1127 = vector.broadcast %11 : f32 to vector<1x32xf32>
    %1128 = arith.mulf %1127, %1126 : vector<1x32xf32>
    %1129 = arith.addf %1123, %1128 : vector<1x32xf32>
    %1130 = vector.broadcast %4 : f32 to vector<1x32xf32>
    %1131 = arith.addf %1129, %1130 : vector<1x32xf32>
    %c1_154 = arith.constant 1 : index
    %c0_155 = arith.constant 0 : index
    %c256_156 = arith.constant 256 : index
    %1132 = vector.load %arg16[%c1_154, %c0_155, %c256_156] : memref<2x1x1024xf32, #tpu.memory_space<vmem>>, vector<1x1x32xf32>
    %1133 = vector.shape_cast %1132 : vector<1x1x32xf32> to vector<1x32xf32>
    %1134 = vector.shape_cast %1131 : vector<1x32xf32> to vector<1x1x32xf32>
    tpu.vector_store %arg16[%c1_154, %c0_155, %c256_156], %1134 {strides = array<i32>} : memref<2x1x1024xf32, #tpu.memory_space<vmem>>, vector<1x1x32xf32>,
    %1135 = vector.extract_strided_slice %1026 {offsets = [0, 288], sizes = [1, 32], strides = [1, 1]} : vector<1x1024xf32> to vector<1x32xf32>
    %1136 = vector.extract_strided_slice %1023 {offsets = [9, 0], sizes = [1, 32], strides = [1, 1]} : vector<32x32xf32> to vector<1x32xf32>
    %1137 = vector.broadcast %6 : f32 to vector<1x32xf32>
    %1138 = arith.addf %1136, %1137 : vector<1x32xf32>
    %1139 = vector.broadcast %11 : f32 to vector<1x32xf32>
    %1140 = arith.mulf %1139, %1138 : vector<1x32xf32>
    %1141 = arith.addf %1135, %1140 : vector<1x32xf32>
    %1142 = vector.broadcast %4 : f32 to vector<1x32xf32>
    %1143 = arith.addf %1141, %1142 : vector<1x32xf32>
    %c1_157 = arith.constant 1 : index
    %c0_158 = arith.constant 0 : index
    %c288_159 = arith.constant 288 : index
    %1144 = vector.load %arg16[%c1_157, %c0_158, %c288_159] : memref<2x1x1024xf32, #tpu.memory_space<vmem>>, vector<1x1x32xf32>
    %1145 = vector.shape_cast %1144 : vector<1x1x32xf32> to vector<1x32xf32>
    %1146 = vector.shape_cast %1143 : vector<1x32xf32> to vector<1x1x32xf32>
    tpu.vector_store %arg16[%c1_157, %c0_158, %c288_159], %1146 {strides = array<i32>} : memref<2x1x1024xf32, #tpu.memory_space<vmem>>, vector<1x1x32xf32>,
    %1147 = vector.extract_strided_slice %1026 {offsets = [0, 320], sizes = [1, 32], strides = [1, 1]} : vector<1x1024xf32> to vector<1x32xf32>
    %1148 = vector.extract_strided_slice %1023 {offsets = [10, 0], sizes = [1, 32], strides = [1, 1]} : vector<32x32xf32> to vector<1x32xf32>
    %1149 = vector.broadcast %6 : f32 to vector<1x32xf32>
    %1150 = arith.addf %1148, %1149 : vector<1x32xf32>
    %1151 = vector.broadcast %11 : f32 to vector<1x32xf32>
    %1152 = arith.mulf %1151, %1150 : vector<1x32xf32>
    %1153 = arith.addf %1147, %1152 : vector<1x32xf32>
    %1154 = vector.broadcast %4 : f32 to vector<1x32xf32>
    %1155 = arith.addf %1153, %1154 : vector<1x32xf32>
    %c1_160 = arith.constant 1 : index
    %c0_161 = arith.constant 0 : index
    %c320_162 = arith.constant 320 : index
    %1156 = vector.load %arg16[%c1_160, %c0_161, %c320_162] : memref<2x1x1024xf32, #tpu.memory_space<vmem>>, vector<1x1x32xf32>
    %1157 = vector.shape_cast %1156 : vector<1x1x32xf32> to vector<1x32xf32>
    %1158 = vector.shape_cast %1155 : vector<1x32xf32> to vector<1x1x32xf32>
    tpu.vector_store %arg16[%c1_160, %c0_161, %c320_162], %1158 {strides = array<i32>} : memref<2x1x1024xf32, #tpu.memory_space<vmem>>, vector<1x1x32xf32>,
    %1159 = vector.extract_strided_slice %1026 {offsets = [0, 352], sizes = [1, 32], strides = [1, 1]} : vector<1x1024xf32> to vector<1x32xf32>
    %1160 = vector.extract_strided_slice %1023 {offsets = [11, 0], sizes = [1, 32], strides = [1, 1]} : vector<32x32xf32> to vector<1x32xf32>
    %1161 = vector.broadcast %6 : f32 to vector<1x32xf32>
    %1162 = arith.addf %1160, %1161 : vector<1x32xf32>
    %1163 = vector.broadcast %11 : f32 to vector<1x32xf32>
    %1164 = arith.mulf %1163, %1162 : vector<1x32xf32>
    %1165 = arith.addf %1159, %1164 : vector<1x32xf32>
    %1166 = vector.broadcast %4 : f32 to vector<1x32xf32>
    %1167 = arith.addf %1165, %1166 : vector<1x32xf32>
    %c1_163 = arith.constant 1 : index
    %c0_164 = arith.constant 0 : index
    %c352_165 = arith.constant 352 : index
    %1168 = vector.load %arg16[%c1_163, %c0_164, %c352_165] : memref<2x1x1024xf32, #tpu.memory_space<vmem>>, vector<1x1x32xf32>
    %1169 = vector.shape_cast %1168 : vector<1x1x32xf32> to vector<1x32xf32>
    %1170 = vector.shape_cast %1167 : vector<1x32xf32> to vector<1x1x32xf32>
    tpu.vector_store %arg16[%c1_163, %c0_164, %c352_165], %1170 {strides = array<i32>} : memref<2x1x1024xf32, #tpu.memory_space<vmem>>, vector<1x1x32xf32>,
    %1171 = vector.extract_strided_slice %1026 {offsets = [0, 384], sizes = [1, 32], strides = [1, 1]} : vector<1x1024xf32> to vector<1x32xf32>
    %1172 = vector.extract_strided_slice %1023 {offsets = [12, 0], sizes = [1, 32], strides = [1, 1]} : vector<32x32xf32> to vector<1x32xf32>
    %1173 = vector.broadcast %6 : f32 to vector<1x32xf32>
    %1174 = arith.addf %1172, %1173 : vector<1x32xf32>
    %1175 = vector.broadcast %11 : f32 to vector<1x32xf32>
    %1176 = arith.mulf %1175, %1174 : vector<1x32xf32>
    %1177 = arith.addf %1171, %1176 : vector<1x32xf32>
    %1178 = vector.broadcast %4 : f32 to vector<1x32xf32>
    %1179 = arith.addf %1177, %1178 : vector<1x32xf32>
    %c1_166 = arith.constant 1 : index
    %c0_167 = arith.constant 0 : index
    %c384_168 = arith.constant 384 : index
    %1180 = vector.load %arg16[%c1_166, %c0_167, %c384_168] : memref<2x1x1024xf32, #tpu.memory_space<vmem>>, vector<1x1x32xf32>
    %1181 = vector.shape_cast %1180 : vector<1x1x32xf32> to vector<1x32xf32>
    %1182 = vector.shape_cast %1179 : vector<1x32xf32> to vector<1x1x32xf32>
    tpu.vector_store %arg16[%c1_166, %c0_167, %c384_168], %1182 {strides = array<i32>} : memref<2x1x1024xf32, #tpu.memory_space<vmem>>, vector<1x1x32xf32>,
    %1183 = vector.extract_strided_slice %1026 {offsets = [0, 416], sizes = [1, 32], strides = [1, 1]} : vector<1x1024xf32> to vector<1x32xf32>
    %1184 = vector.extract_strided_slice %1023 {offsets = [13, 0], sizes = [1, 32], strides = [1, 1]} : vector<32x32xf32> to vector<1x32xf32>
    %1185 = vector.broadcast %6 : f32 to vector<1x32xf32>
    %1186 = arith.addf %1184, %1185 : vector<1x32xf32>
    %1187 = vector.broadcast %11 : f32 to vector<1x32xf32>
    %1188 = arith.mulf %1187, %1186 : vector<1x32xf32>
    %1189 = arith.addf %1183, %1188 : vector<1x32xf32>
    %1190 = vector.broadcast %4 : f32 to vector<1x32xf32>
    %1191 = arith.addf %1189, %1190 : vector<1x32xf32>
    %c1_169 = arith.constant 1 : index
    %c0_170 = arith.constant 0 : index
    %c416_171 = arith.constant 416 : index
    %1192 = vector.load %arg16[%c1_169, %c0_170, %c416_171] : memref<2x1x1024xf32, #tpu.memory_space<vmem>>, vector<1x1x32xf32>
    %1193 = vector.shape_cast %1192 : vector<1x1x32xf32> to vector<1x32xf32>
    %1194 = vector.shape_cast %1191 : vector<1x32xf32> to vector<1x1x32xf32>
    tpu.vector_store %arg16[%c1_169, %c0_170, %c416_171], %1194 {strides = array<i32>} : memref<2x1x1024xf32, #tpu.memory_space<vmem>>, vector<1x1x32xf32>,
    %1195 = vector.extract_strided_slice %1026 {offsets = [0, 448], sizes = [1, 32], strides = [1, 1]} : vector<1x1024xf32> to vector<1x32xf32>
    %1196 = vector.extract_strided_slice %1023 {offsets = [14, 0], sizes = [1, 32], strides = [1, 1]} : vector<32x32xf32> to vector<1x32xf32>
    %1197 = vector.broadcast %6 : f32 to vector<1x32xf32>
    %1198 = arith.addf %1196, %1197 : vector<1x32xf32>
    %1199 = vector.broadcast %11 : f32 to vector<1x32xf32>
    %1200 = arith.mulf %1199, %1198 : vector<1x32xf32>
    %1201 = arith.addf %1195, %1200 : vector<1x32xf32>
    %1202 = vector.broadcast %4 : f32 to vector<1x32xf32>
    %1203 = arith.addf %1201, %1202 : vector<1x32xf32>
    %c1_172 = arith.constant 1 : index
    %c0_173 = arith.constant 0 : index
    %c448_174 = arith.constant 448 : index
    %1204 = vector.load %arg16[%c1_172, %c0_173, %c448_174] : memref<2x1x1024xf32, #tpu.memory_space<vmem>>, vector<1x1x32xf32>
    %1205 = vector.shape_cast %1204 : vector<1x1x32xf32> to vector<1x32xf32>
    %1206 = vector.shape_cast %1203 : vector<1x32xf32> to vector<1x1x32xf32>
    tpu.vector_store %arg16[%c1_172, %c0_173, %c448_174], %1206 {strides = array<i32>} : memref<2x1x1024xf32, #tpu.memory_space<vmem>>, vector<1x1x32xf32>,
    %1207 = vector.extract_strided_slice %1026 {offsets = [0, 480], sizes = [1, 32], strides = [1, 1]} : vector<1x1024xf32> to vector<1x32xf32>
    %1208 = vector.extract_strided_slice %1023 {offsets = [15, 0], sizes = [1, 32], strides = [1, 1]} : vector<32x32xf32> to vector<1x32xf32>
    %1209 = vector.broadcast %6 : f32 to vector<1x32xf32>
    %1210 = arith.addf %1208, %1209 : vector<1x32xf32>
    %1211 = vector.broadcast %11 : f32 to vector<1x32xf32>
    %1212 = arith.mulf %1211, %1210 : vector<1x32xf32>
    %1213 = arith.addf %1207, %1212 : vector<1x32xf32>
    %1214 = vector.broadcast %4 : f32 to vector<1x32xf32>
    %1215 = arith.addf %1213, %1214 : vector<1x32xf32>
    %c1_175 = arith.constant 1 : index
    %c0_176 = arith.constant 0 : index
    %c480_177 = arith.constant 480 : index
    %1216 = vector.load %arg16[%c1_175, %c0_176, %c480_177] : memref<2x1x1024xf32, #tpu.memory_space<vmem>>, vector<1x1x32xf32>
    %1217 = vector.shape_cast %1216 : vector<1x1x32xf32> to vector<1x32xf32>
    %1218 = vector.shape_cast %1215 : vector<1x32xf32> to vector<1x1x32xf32>
    tpu.vector_store %arg16[%c1_175, %c0_176, %c480_177], %1218 {strides = array<i32>} : memref<2x1x1024xf32, #tpu.memory_space<vmem>>, vector<1x1x32xf32>,
    %1219 = vector.extract_strided_slice %1026 {offsets = [0, 512], sizes = [1, 32], strides = [1, 1]} : vector<1x1024xf32> to vector<1x32xf32>
    %1220 = vector.extract_strided_slice %1023 {offsets = [16, 0], sizes = [1, 32], strides = [1, 1]} : vector<32x32xf32> to vector<1x32xf32>
    %1221 = vector.broadcast %6 : f32 to vector<1x32xf32>
    %1222 = arith.addf %1220, %1221 : vector<1x32xf32>
    %1223 = vector.broadcast %11 : f32 to vector<1x32xf32>
    %1224 = arith.mulf %1223, %1222 : vector<1x32xf32>
    %1225 = arith.addf %1219, %1224 : vector<1x32xf32>
    %1226 = vector.broadcast %4 : f32 to vector<1x32xf32>
    %1227 = arith.addf %1225, %1226 : vector<1x32xf32>
    %c1_178 = arith.constant 1 : index
    %c0_179 = arith.constant 0 : index
    %c512_180 = arith.constant 512 : index
    %1228 = vector.load %arg16[%c1_178, %c0_179, %c512_180] : memref<2x1x1024xf32, #tpu.memory_space<vmem>>, vector<1x1x32xf32>
    %1229 = vector.shape_cast %1228 : vector<1x1x32xf32> to vector<1x32xf32>
    %1230 = vector.shape_cast %1227 : vector<1x32xf32> to vector<1x1x32xf32>
    tpu.vector_store %arg16[%c1_178, %c0_179, %c512_180], %1230 {strides = array<i32>} : memref<2x1x1024xf32, #tpu.memory_space<vmem>>, vector<1x1x32xf32>,
    %1231 = vector.extract_strided_slice %1026 {offsets = [0, 544], sizes = [1, 32], strides = [1, 1]} : vector<1x1024xf32> to vector<1x32xf32>
    %1232 = vector.extract_strided_slice %1023 {offsets = [17, 0], sizes = [1, 32], strides = [1, 1]} : vector<32x32xf32> to vector<1x32xf32>
    %1233 = vector.broadcast %6 : f32 to vector<1x32xf32>
    %1234 = arith.addf %1232, %1233 : vector<1x32xf32>
    %1235 = vector.broadcast %11 : f32 to vector<1x32xf32>
    %1236 = arith.mulf %1235, %1234 : vector<1x32xf32>
    %1237 = arith.addf %1231, %1236 : vector<1x32xf32>
    %1238 = vector.broadcast %4 : f32 to vector<1x32xf32>
    %1239 = arith.addf %1237, %1238 : vector<1x32xf32>
    %c1_181 = arith.constant 1 : index
    %c0_182 = arith.constant 0 : index
    %c544_183 = arith.constant 544 : index
    %1240 = vector.load %arg16[%c1_181, %c0_182, %c544_183] : memref<2x1x1024xf32, #tpu.memory_space<vmem>>, vector<1x1x32xf32>
    %1241 = vector.shape_cast %1240 : vector<1x1x32xf32> to vector<1x32xf32>
    %1242 = vector.shape_cast %1239 : vector<1x32xf32> to vector<1x1x32xf32>
    tpu.vector_store %arg16[%c1_181, %c0_182, %c544_183], %1242 {strides = array<i32>} : memref<2x1x1024xf32, #tpu.memory_space<vmem>>, vector<1x1x32xf32>,
    %1243 = vector.extract_strided_slice %1026 {offsets = [0, 576], sizes = [1, 32], strides = [1, 1]} : vector<1x1024xf32> to vector<1x32xf32>
    %1244 = vector.extract_strided_slice %1023 {offsets = [18, 0], sizes = [1, 32], strides = [1, 1]} : vector<32x32xf32> to vector<1x32xf32>
    %1245 = vector.broadcast %6 : f32 to vector<1x32xf32>
    %1246 = arith.addf %1244, %1245 : vector<1x32xf32>
    %1247 = vector.broadcast %11 : f32 to vector<1x32xf32>
    %1248 = arith.mulf %1247, %1246 : vector<1x32xf32>
    %1249 = arith.addf %1243, %1248 : vector<1x32xf32>
    %1250 = vector.broadcast %4 : f32 to vector<1x32xf32>
    %1251 = arith.addf %1249, %1250 : vector<1x32xf32>
    %c1_184 = arith.constant 1 : index
    %c0_185 = arith.constant 0 : index
    %c576_186 = arith.constant 576 : index
    %1252 = vector.load %arg16[%c1_184, %c0_185, %c576_186] : memref<2x1x1024xf32, #tpu.memory_space<vmem>>, vector<1x1x32xf32>
    %1253 = vector.shape_cast %1252 : vector<1x1x32xf32> to vector<1x32xf32>
    %1254 = vector.shape_cast %1251 : vector<1x32xf32> to vector<1x1x32xf32>
    tpu.vector_store %arg16[%c1_184, %c0_185, %c576_186], %1254 {strides = array<i32>} : memref<2x1x1024xf32, #tpu.memory_space<vmem>>, vector<1x1x32xf32>,
    %1255 = vector.extract_strided_slice %1026 {offsets = [0, 608], sizes = [1, 32], strides = [1, 1]} : vector<1x1024xf32> to vector<1x32xf32>
    %1256 = vector.extract_strided_slice %1023 {offsets = [19, 0], sizes = [1, 32], strides = [1, 1]} : vector<32x32xf32> to vector<1x32xf32>
    %1257 = vector.broadcast %6 : f32 to vector<1x32xf32>
    %1258 = arith.addf %1256, %1257 : vector<1x32xf32>
    %1259 = vector.broadcast %11 : f32 to vector<1x32xf32>
    %1260 = arith.mulf %1259, %1258 : vector<1x32xf32>
    %1261 = arith.addf %1255, %1260 : vector<1x32xf32>
    %1262 = vector.broadcast %4 : f32 to vector<1x32xf32>
    %1263 = arith.addf %1261, %1262 : vector<1x32xf32>
    %c1_187 = arith.constant 1 : index
    %c0_188 = arith.constant 0 : index
    %c608_189 = arith.constant 608 : index
    %1264 = vector.load %arg16[%c1_187, %c0_188, %c608_189] : memref<2x1x1024xf32, #tpu.memory_space<vmem>>, vector<1x1x32xf32>
    %1265 = vector.shape_cast %1264 : vector<1x1x32xf32> to vector<1x32xf32>
    %1266 = vector.shape_cast %1263 : vector<1x32xf32> to vector<1x1x32xf32>
    tpu.vector_store %arg16[%c1_187, %c0_188, %c608_189], %1266 {strides = array<i32>} : memref<2x1x1024xf32, #tpu.memory_space<vmem>>, vector<1x1x32xf32>,
    %1267 = vector.extract_strided_slice %1026 {offsets = [0, 640], sizes = [1, 32], strides = [1, 1]} : vector<1x1024xf32> to vector<1x32xf32>
    %1268 = vector.extract_strided_slice %1023 {offsets = [20, 0], sizes = [1, 32], strides = [1, 1]} : vector<32x32xf32> to vector<1x32xf32>
    %1269 = vector.broadcast %6 : f32 to vector<1x32xf32>
    %1270 = arith.addf %1268, %1269 : vector<1x32xf32>
    %1271 = vector.broadcast %11 : f32 to vector<1x32xf32>
    %1272 = arith.mulf %1271, %1270 : vector<1x32xf32>
    %1273 = arith.addf %1267, %1272 : vector<1x32xf32>
    %1274 = vector.broadcast %4 : f32 to vector<1x32xf32>
    %1275 = arith.addf %1273, %1274 : vector<1x32xf32>
    %c1_190 = arith.constant 1 : index
    %c0_191 = arith.constant 0 : index
    %c640_192 = arith.constant 640 : index
    %1276 = vector.load %arg16[%c1_190, %c0_191, %c640_192] : memref<2x1x1024xf32, #tpu.memory_space<vmem>>, vector<1x1x32xf32>
    %1277 = vector.shape_cast %1276 : vector<1x1x32xf32> to vector<1x32xf32>
    %1278 = vector.shape_cast %1275 : vector<1x32xf32> to vector<1x1x32xf32>
    tpu.vector_store %arg16[%c1_190, %c0_191, %c640_192], %1278 {strides = array<i32>} : memref<2x1x1024xf32, #tpu.memory_space<vmem>>, vector<1x1x32xf32>,
    %1279 = vector.extract_strided_slice %1026 {offsets = [0, 672], sizes = [1, 32], strides = [1, 1]} : vector<1x1024xf32> to vector<1x32xf32>
    %1280 = vector.extract_strided_slice %1023 {offsets = [21, 0], sizes = [1, 32], strides = [1, 1]} : vector<32x32xf32> to vector<1x32xf32>
    %1281 = vector.broadcast %6 : f32 to vector<1x32xf32>
    %1282 = arith.addf %1280, %1281 : vector<1x32xf32>
    %1283 = vector.broadcast %11 : f32 to vector<1x32xf32>
    %1284 = arith.mulf %1283, %1282 : vector<1x32xf32>
    %1285 = arith.addf %1279, %1284 : vector<1x32xf32>
    %1286 = vector.broadcast %4 : f32 to vector<1x32xf32>
    %1287 = arith.addf %1285, %1286 : vector<1x32xf32>
    %c1_193 = arith.constant 1 : index
    %c0_194 = arith.constant 0 : index
    %c672_195 = arith.constant 672 : index
    %1288 = vector.load %arg16[%c1_193, %c0_194, %c672_195] : memref<2x1x1024xf32, #tpu.memory_space<vmem>>, vector<1x1x32xf32>
    %1289 = vector.shape_cast %1288 : vector<1x1x32xf32> to vector<1x32xf32>
    %1290 = vector.shape_cast %1287 : vector<1x32xf32> to vector<1x1x32xf32>
    tpu.vector_store %arg16[%c1_193, %c0_194, %c672_195], %1290 {strides = array<i32>} : memref<2x1x1024xf32, #tpu.memory_space<vmem>>, vector<1x1x32xf32>,
    %1291 = vector.extract_strided_slice %1026 {offsets = [0, 704], sizes = [1, 32], strides = [1, 1]} : vector<1x1024xf32> to vector<1x32xf32>
    %1292 = vector.extract_strided_slice %1023 {offsets = [22, 0], sizes = [1, 32], strides = [1, 1]} : vector<32x32xf32> to vector<1x32xf32>
    %1293 = vector.broadcast %6 : f32 to vector<1x32xf32>
    %1294 = arith.addf %1292, %1293 : vector<1x32xf32>
    %1295 = vector.broadcast %11 : f32 to vector<1x32xf32>
    %1296 = arith.mulf %1295, %1294 : vector<1x32xf32>
    %1297 = arith.addf %1291, %1296 : vector<1x32xf32>
    %1298 = vector.broadcast %4 : f32 to vector<1x32xf32>
    %1299 = arith.addf %1297, %1298 : vector<1x32xf32>
    %c1_196 = arith.constant 1 : index
    %c0_197 = arith.constant 0 : index
    %c704_198 = arith.constant 704 : index
    %1300 = vector.load %arg16[%c1_196, %c0_197, %c704_198] : memref<2x1x1024xf32, #tpu.memory_space<vmem>>, vector<1x1x32xf32>
    %1301 = vector.shape_cast %1300 : vector<1x1x32xf32> to vector<1x32xf32>
    %1302 = vector.shape_cast %1299 : vector<1x32xf32> to vector<1x1x32xf32>
    tpu.vector_store %arg16[%c1_196, %c0_197, %c704_198], %1302 {strides = array<i32>} : memref<2x1x1024xf32, #tpu.memory_space<vmem>>, vector<1x1x32xf32>,
    %1303 = vector.extract_strided_slice %1026 {offsets = [0, 736], sizes = [1, 32], strides = [1, 1]} : vector<1x1024xf32> to vector<1x32xf32>
    %1304 = vector.extract_strided_slice %1023 {offsets = [23, 0], sizes = [1, 32], strides = [1, 1]} : vector<32x32xf32> to vector<1x32xf32>
    %1305 = vector.broadcast %6 : f32 to vector<1x32xf32>
    %1306 = arith.addf %1304, %1305 : vector<1x32xf32>
    %1307 = vector.broadcast %11 : f32 to vector<1x32xf32>
    %1308 = arith.mulf %1307, %1306 : vector<1x32xf32>
    %1309 = arith.addf %1303, %1308 : vector<1x32xf32>
    %1310 = vector.broadcast %4 : f32 to vector<1x32xf32>
    %1311 = arith.addf %1309, %1310 : vector<1x32xf32>
    %c1_199 = arith.constant 1 : index
    %c0_200 = arith.constant 0 : index
    %c736_201 = arith.constant 736 : index
    %1312 = vector.load %arg16[%c1_199, %c0_200, %c736_201] : memref<2x1x1024xf32, #tpu.memory_space<vmem>>, vector<1x1x32xf32>
    %1313 = vector.shape_cast %1312 : vector<1x1x32xf32> to vector<1x32xf32>
    %1314 = vector.shape_cast %1311 : vector<1x32xf32> to vector<1x1x32xf32>
    tpu.vector_store %arg16[%c1_199, %c0_200, %c736_201], %1314 {strides = array<i32>} : memref<2x1x1024xf32, #tpu.memory_space<vmem>>, vector<1x1x32xf32>,
    %1315 = vector.extract_strided_slice %1026 {offsets = [0, 768], sizes = [1, 32], strides = [1, 1]} : vector<1x1024xf32> to vector<1x32xf32>
    %1316 = vector.extract_strided_slice %1023 {offsets = [24, 0], sizes = [1, 32], strides = [1, 1]} : vector<32x32xf32> to vector<1x32xf32>
    %1317 = vector.broadcast %6 : f32 to vector<1x32xf32>
    %1318 = arith.addf %1316, %1317 : vector<1x32xf32>
    %1319 = vector.broadcast %11 : f32 to vector<1x32xf32>
    %1320 = arith.mulf %1319, %1318 : vector<1x32xf32>
    %1321 = arith.addf %1315, %1320 : vector<1x32xf32>
    %1322 = vector.broadcast %4 : f32 to vector<1x32xf32>
    %1323 = arith.addf %1321, %1322 : vector<1x32xf32>
    %c1_202 = arith.constant 1 : index
    %c0_203 = arith.constant 0 : index
    %c768_204 = arith.constant 768 : index
    %1324 = vector.load %arg16[%c1_202, %c0_203, %c768_204] : memref<2x1x1024xf32, #tpu.memory_space<vmem>>, vector<1x1x32xf32>
    %1325 = vector.shape_cast %1324 : vector<1x1x32xf32> to vector<1x32xf32>
    %1326 = vector.shape_cast %1323 : vector<1x32xf32> to vector<1x1x32xf32>
    tpu.vector_store %arg16[%c1_202, %c0_203, %c768_204], %1326 {strides = array<i32>} : memref<2x1x1024xf32, #tpu.memory_space<vmem>>, vector<1x1x32xf32>,
    %1327 = vector.extract_strided_slice %1026 {offsets = [0, 800], sizes = [1, 32], strides = [1, 1]} : vector<1x1024xf32> to vector<1x32xf32>
    %1328 = vector.extract_strided_slice %1023 {offsets = [25, 0], sizes = [1, 32], strides = [1, 1]} : vector<32x32xf32> to vector<1x32xf32>
    %1329 = vector.broadcast %6 : f32 to vector<1x32xf32>
    %1330 = arith.addf %1328, %1329 : vector<1x32xf32>
    %1331 = vector.broadcast %11 : f32 to vector<1x32xf32>
    %1332 = arith.mulf %1331, %1330 : vector<1x32xf32>
    %1333 = arith.addf %1327, %1332 : vector<1x32xf32>
    %1334 = vector.broadcast %4 : f32 to vector<1x32xf32>
    %1335 = arith.addf %1333, %1334 : vector<1x32xf32>
    %c1_205 = arith.constant 1 : index
    %c0_206 = arith.constant 0 : index
    %c800_207 = arith.constant 800 : index
    %1336 = vector.load %arg16[%c1_205, %c0_206, %c800_207] : memref<2x1x1024xf32, #tpu.memory_space<vmem>>, vector<1x1x32xf32>
    %1337 = vector.shape_cast %1336 : vector<1x1x32xf32> to vector<1x32xf32>
    %1338 = vector.shape_cast %1335 : vector<1x32xf32> to vector<1x1x32xf32>
    tpu.vector_store %arg16[%c1_205, %c0_206, %c800_207], %1338 {strides = array<i32>} : memref<2x1x1024xf32, #tpu.memory_space<vmem>>, vector<1x1x32xf32>,
    %1339 = vector.extract_strided_slice %1026 {offsets = [0, 832], sizes = [1, 32], strides = [1, 1]} : vector<1x1024xf32> to vector<1x32xf32>
    %1340 = vector.extract_strided_slice %1023 {offsets = [26, 0], sizes = [1, 32], strides = [1, 1]} : vector<32x32xf32> to vector<1x32xf32>
    %1341 = vector.broadcast %6 : f32 to vector<1x32xf32>
    %1342 = arith.addf %1340, %1341 : vector<1x32xf32>
    %1343 = vector.broadcast %11 : f32 to vector<1x32xf32>
    %1344 = arith.mulf %1343, %1342 : vector<1x32xf32>
    %1345 = arith.addf %1339, %1344 : vector<1x32xf32>
    %1346 = vector.broadcast %4 : f32 to vector<1x32xf32>
    %1347 = arith.addf %1345, %1346 : vector<1x32xf32>
    %c1_208 = arith.constant 1 : index
    %c0_209 = arith.constant 0 : index
    %c832_210 = arith.constant 832 : index
    %1348 = vector.load %arg16[%c1_208, %c0_209, %c832_210] : memref<2x1x1024xf32, #tpu.memory_space<vmem>>, vector<1x1x32xf32>
    %1349 = vector.shape_cast %1348 : vector<1x1x32xf32> to vector<1x32xf32>
    %1350 = vector.shape_cast %1347 : vector<1x32xf32> to vector<1x1x32xf32>
    tpu.vector_store %arg16[%c1_208, %c0_209, %c832_210], %1350 {strides = array<i32>} : memref<2x1x1024xf32, #tpu.memory_space<vmem>>, vector<1x1x32xf32>,
    %1351 = vector.extract_strided_slice %1026 {offsets = [0, 864], sizes = [1, 32], strides = [1, 1]} : vector<1x1024xf32> to vector<1x32xf32>
    %1352 = vector.extract_strided_slice %1023 {offsets = [27, 0], sizes = [1, 32], strides = [1, 1]} : vector<32x32xf32> to vector<1x32xf32>
    %1353 = vector.broadcast %6 : f32 to vector<1x32xf32>
    %1354 = arith.addf %1352, %1353 : vector<1x32xf32>
    %1355 = vector.broadcast %11 : f32 to vector<1x32xf32>
    %1356 = arith.mulf %1355, %1354 : vector<1x32xf32>
    %1357 = arith.addf %1351, %1356 : vector<1x32xf32>
    %1358 = vector.broadcast %4 : f32 to vector<1x32xf32>
    %1359 = arith.addf %1357, %1358 : vector<1x32xf32>
    %c1_211 = arith.constant 1 : index
    %c0_212 = arith.constant 0 : index
    %c864_213 = arith.constant 864 : index
    %1360 = vector.load %arg16[%c1_211, %c0_212, %c864_213] : memref<2x1x1024xf32, #tpu.memory_space<vmem>>, vector<1x1x32xf32>
    %1361 = vector.shape_cast %1360 : vector<1x1x32xf32> to vector<1x32xf32>
    %1362 = vector.shape_cast %1359 : vector<1x32xf32> to vector<1x1x32xf32>
    tpu.vector_store %arg16[%c1_211, %c0_212, %c864_213], %1362 {strides = array<i32>} : memref<2x1x1024xf32, #tpu.memory_space<vmem>>, vector<1x1x32xf32>,
    %1363 = vector.extract_strided_slice %1026 {offsets = [0, 896], sizes = [1, 32], strides = [1, 1]} : vector<1x1024xf32> to vector<1x32xf32>
    %1364 = vector.extract_strided_slice %1023 {offsets = [28, 0], sizes = [1, 32], strides = [1, 1]} : vector<32x32xf32> to vector<1x32xf32>
    %1365 = vector.broadcast %6 : f32 to vector<1x32xf32>
    %1366 = arith.addf %1364, %1365 : vector<1x32xf32>
    %1367 = vector.broadcast %11 : f32 to vector<1x32xf32>
    %1368 = arith.mulf %1367, %1366 : vector<1x32xf32>
    %1369 = arith.addf %1363, %1368 : vector<1x32xf32>
    %1370 = vector.broadcast %4 : f32 to vector<1x32xf32>
    %1371 = arith.addf %1369, %1370 : vector<1x32xf32>
    %c1_214 = arith.constant 1 : index
    %c0_215 = arith.constant 0 : index
    %c896_216 = arith.constant 896 : index
    %1372 = vector.load %arg16[%c1_214, %c0_215, %c896_216] : memref<2x1x1024xf32, #tpu.memory_space<vmem>>, vector<1x1x32xf32>
    %1373 = vector.shape_cast %1372 : vector<1x1x32xf32> to vector<1x32xf32>
    %1374 = vector.shape_cast %1371 : vector<1x32xf32> to vector<1x1x32xf32>
    tpu.vector_store %arg16[%c1_214, %c0_215, %c896_216], %1374 {strides = array<i32>} : memref<2x1x1024xf32, #tpu.memory_space<vmem>>, vector<1x1x32xf32>,
    %1375 = vector.extract_strided_slice %1026 {offsets = [0, 928], sizes = [1, 32], strides = [1, 1]} : vector<1x1024xf32> to vector<1x32xf32>
    %1376 = vector.extract_strided_slice %1023 {offsets = [29, 0], sizes = [1, 32], strides = [1, 1]} : vector<32x32xf32> to vector<1x32xf32>
    %1377 = vector.broadcast %6 : f32 to vector<1x32xf32>
    %1378 = arith.addf %1376, %1377 : vector<1x32xf32>
    %1379 = vector.broadcast %11 : f32 to vector<1x32xf32>
    %1380 = arith.mulf %1379, %1378 : vector<1x32xf32>
    %1381 = arith.addf %1375, %1380 : vector<1x32xf32>
    %1382 = vector.broadcast %4 : f32 to vector<1x32xf32>
    %1383 = arith.addf %1381, %1382 : vector<1x32xf32>
    %c1_217 = arith.constant 1 : index
    %c0_218 = arith.constant 0 : index
    %c928_219 = arith.constant 928 : index
    %1384 = vector.load %arg16[%c1_217, %c0_218, %c928_219] : memref<2x1x1024xf32, #tpu.memory_space<vmem>>, vector<1x1x32xf32>
    %1385 = vector.shape_cast %1384 : vector<1x1x32xf32> to vector<1x32xf32>
    %1386 = vector.shape_cast %1383 : vector<1x32xf32> to vector<1x1x32xf32>
    tpu.vector_store %arg16[%c1_217, %c0_218, %c928_219], %1386 {strides = array<i32>} : memref<2x1x1024xf32, #tpu.memory_space<vmem>>, vector<1x1x32xf32>,
    %1387 = vector.extract_strided_slice %1026 {offsets = [0, 960], sizes = [1, 32], strides = [1, 1]} : vector<1x1024xf32> to vector<1x32xf32>
    %1388 = vector.extract_strided_slice %1023 {offsets = [30, 0], sizes = [1, 32], strides = [1, 1]} : vector<32x32xf32> to vector<1x32xf32>
    %1389 = vector.broadcast %6 : f32 to vector<1x32xf32>
    %1390 = arith.addf %1388, %1389 : vector<1x32xf32>
    %1391 = vector.broadcast %11 : f32 to vector<1x32xf32>
    %1392 = arith.mulf %1391, %1390 : vector<1x32xf32>
    %1393 = arith.addf %1387, %1392 : vector<1x32xf32>
    %1394 = vector.broadcast %4 : f32 to vector<1x32xf32>
    %1395 = arith.addf %1393, %1394 : vector<1x32xf32>
    %c1_220 = arith.constant 1 : index
    %c0_221 = arith.constant 0 : index
    %c960_222 = arith.constant 960 : index
    %1396 = vector.load %arg16[%c1_220, %c0_221, %c960_222] : memref<2x1x1024xf32, #tpu.memory_space<vmem>>, vector<1x1x32xf32>
    %1397 = vector.shape_cast %1396 : vector<1x1x32xf32> to vector<1x32xf32>
    %1398 = vector.shape_cast %1395 : vector<1x32xf32> to vector<1x1x32xf32>
    tpu.vector_store %arg16[%c1_220, %c0_221, %c960_222], %1398 {strides = array<i32>} : memref<2x1x1024xf32, #tpu.memory_space<vmem>>, vector<1x1x32xf32>,
    %1399 = vector.extract_strided_slice %1026 {offsets = [0, 992], sizes = [1, 32], strides = [1, 1]} : vector<1x1024xf32> to vector<1x32xf32>
    %1400 = vector.extract_strided_slice %1023 {offsets = [31, 0], sizes = [1, 32], strides = [1, 1]} : vector<32x32xf32> to vector<1x32xf32>
    %1401 = vector.broadcast %6 : f32 to vector<1x32xf32>
    %1402 = arith.addf %1400, %1401 : vector<1x32xf32>
    %1403 = vector.broadcast %11 : f32 to vector<1x32xf32>
    %1404 = arith.mulf %1403, %1402 : vector<1x32xf32>
    %1405 = arith.addf %1399, %1404 : vector<1x32xf32>
    %1406 = vector.broadcast %4 : f32 to vector<1x32xf32>
    %1407 = arith.addf %1405, %1406 : vector<1x32xf32>
    %c1_223 = arith.constant 1 : index
    %c0_224 = arith.constant 0 : index
    %c992_225 = arith.constant 992 : index
    %1408 = vector.load %arg16[%c1_223, %c0_224, %c992_225] : memref<2x1x1024xf32, #tpu.memory_space<vmem>>, vector<1x1x32xf32>
    %1409 = vector.shape_cast %1408 : vector<1x1x32xf32> to vector<1x32xf32>
    %1410 = vector.shape_cast %1407 : vector<1x32xf32> to vector<1x1x32xf32>
    tpu.vector_store %arg16[%c1_223, %c0_224, %c992_225], %1410 {strides = array<i32>} : memref<2x1x1024xf32, #tpu.memory_space<vmem>>, vector<1x1x32xf32>,
    return
  }
  func.func @transform_0(%arg0: i32) -> i32 {
    %c0_i32 = arith.constant 0 : i32
    %c0_i32_0 = arith.constant 0 : i32
    return %c0_i32 : i32
  }
  func.func @transform_1(%arg0: i32) -> (i32, i32, i32) {
    %c0_i32 = arith.constant 0 : i32
    %c0_i32_0 = arith.constant 0 : i32
    %c0_i32_1 = arith.constant 0 : i32
    return %arg0, %c0_i32, %c0_i32_0 : i32, i32, i32
  }
  func.func @transform_2(%arg0: i32) -> (i32, i32, i32) {
    %c0_i32 = arith.constant 0 : i32
    %c0_i32_0 = arith.constant 0 : i32
    %c0_i32_1 = arith.constant 0 : i32
    return %arg0, %c0_i32, %c0_i32_0 : i32, i32, i32
  }
  func.func @transform_3(%arg0: i32) -> (i32, i32, i32) {
    %c0_i32 = arith.constant 0 : i32
    %c0_i32_0 = arith.constant 0 : i32
    %c0_i32_1 = arith.constant 0 : i32
    return %arg0, %c0_i32, %c0_i32_0 : i32, i32, i32
  }
  func.func @transform_4(%arg0: i32) -> (i32, i32, i32) {
    %c0_i32 = arith.constant 0 : i32
    %c0_i32_0 = arith.constant 0 : i32
    %c0_i32_1 = arith.constant 0 : i32
    return %arg0, %c0_i32, %c0_i32_0 : i32, i32, i32
  }
  func.func @transform_5(%arg0: i32) -> (i32, i32, i32) {
    %c0_i32 = arith.constant 0 : i32
    %c0_i32_0 = arith.constant 0 : i32
    %c0_i32_1 = arith.constant 0 : i32
    return %arg0, %c0_i32, %c0_i32_0 : i32, i32, i32
  }
  func.func @transform_6(%arg0: i32) -> (i32, i32) {
    %c0_i32 = arith.constant 0 : i32
    %c0_i32_0 = arith.constant 0 : i32
    %c0_i32_1 = arith.constant 0 : i32
    return %c0_i32, %c0_i32_0 : i32, i32
  }
  func.func @transform_7(%arg0: i32) -> (i32, i32) {
    %c0_i32 = arith.constant 0 : i32
    %c0_i32_0 = arith.constant 0 : i32
    %c0_i32_1 = arith.constant 0 : i32
    return %c0_i32, %c0_i32_0 : i32, i32
  }
  func.func @transform_8(%arg0: i32) -> (i32, i32) {
    %c0_i32 = arith.constant 0 : i32
    %c0_i32_0 = arith.constant 0 : i32
    %c0_i32_1 = arith.constant 0 : i32
    return %c0_i32, %c0_i32_0 : i32, i32
  }
  func.func @transform_9(%arg0: i32) -> (i32, i32) {
    %c0_i32 = arith.constant 0 : i32
    %c0_i32_0 = arith.constant 0 : i32
    %c0_i32_1 = arith.constant 0 : i32
    return %c0_i32, %c0_i32_0 : i32, i32
  }
  func.func @transform_10(%arg0: i32) -> (i32, i32) {
    %c0_i32 = arith.constant 0 : i32
    %c0_i32_0 = arith.constant 0 : i32
    %c0_i32_1 = arith.constant 0 : i32
    return %c0_i32, %c0_i32_0 : i32, i32
  }
  func.func @transform_11(%arg0: i32) -> (i32, i32) {
    %c0_i32 = arith.constant 0 : i32
    %c0_i32_0 = arith.constant 0 : i32
    %c0_i32_1 = arith.constant 0 : i32
    return %c0_i32, %c0_i32_0 : i32, i32
  }
  func.func @transform_12(%arg0: i32) -> (i32, i32) {
    %c0_i32 = arith.constant 0 : i32
    %c0_i32_0 = arith.constant 0 : i32
    %c0_i32_1 = arith.constant 0 : i32
    return %c0_i32, %c0_i32_0 : i32, i32
  }
  func.func @transform_13(%arg0: i32) -> (i32, i32) {
    %c0_i32 = arith.constant 0 : i32
    %c0_i32_0 = arith.constant 0 : i32
    %c0_i32_1 = arith.constant 0 : i32
    return %c0_i32, %c0_i32_0 : i32, i32
  }
  func.func @transform_14(%arg0: i32) -> (i32, i32) {
    %c0_i32 = arith.constant 0 : i32
    %c0_i32_0 = arith.constant 0 : i32
    %c0_i32_1 = arith.constant 0 : i32
    return %c0_i32, %c0_i32_0 : i32, i32
  }
  func.func @transform_15(%arg0: i32) -> (i32, i32, i32) {
    %c0_i32 = arith.constant 0 : i32
    %c0_i32_0 = arith.constant 0 : i32
    %c0_i32_1 = arith.constant 0 : i32
    return %arg0, %c0_i32, %c0_i32_0 : i32, i32, i32
  }
}

</mosaic_0001>

<llo_original>
// kernel: fcn_head_forward.1
$region0: #{fcn_head_forward.1}
  #allocation0 [shape = 'u32[]', space=smem, size = 0x4, offset = 0x4, fixed_abs, tag = 'smem constant byte address 0x4 - core index']
  #allocation1 [shape = 'u32[144,128]{1,0:T(1,128)}', space=vmem, size = 0x12000, scoped, tag = 'internal scratch']
  %s0 = inlined_call_operand.vmem [shape: f32[12], index: 0, kind: input, shape index: {}]
  %s1 = inlined_call_operand.vmem [shape: bf16[4,512,64], index: 1, kind: input, shape index: {}]
  %s2 = inlined_call_operand.vmem [shape: bf16[4,512,64], index: 2, kind: input, shape index: {}]
  %s3 = inlined_call_operand.vmem [shape: bf16[4,256,64], index: 3, kind: input, shape index: {}]
  %s4 = inlined_call_operand.vmem [shape: bf16[4,128,256], index: 4, kind: input, shape index: {}]
  %s5 = inlined_call_operand.vmem [shape: bf16[4,64,1024], index: 5, kind: input, shape index: {}]
  %s6 = inlined_call_operand.vmem [shape: bf16[1,512], index: 6, kind: input, shape index: {}]
  %s7 = inlined_call_operand.vmem [shape: bf16[1,512], index: 7, kind: input, shape index: {}]
  %s8 = inlined_call_operand.vmem [shape: bf16[1,256], index: 8, kind: input, shape index: {}]
  %s9 = inlined_call_operand.vmem [shape: bf16[1,128], index: 9, kind: input, shape index: {}]
  %s10 = inlined_call_operand.vmem [shape: bf16[1,64], index: 10, kind: input, shape index: {}]
  %s11 = inlined_call_operand.vmem [shape: f32[16,8], index: 11, kind: input, shape index: {}]
  %s12 = inlined_call_operand.vmem [shape: f32[8,16], index: 12, kind: input, shape index: {}]
  %s13 = inlined_call_operand.vmem [shape: f32[32,16], index: 13, kind: input, shape index: {}]
  %s14 = inlined_call_operand.vmem [shape: f32[16,32], index: 14, kind: input, shape index: {}]
  %s15 = inlined_call_operand.vmem [shape: f32[4,1,1024], index: 15, kind: output, shape index: {}]
  %s16 = sld [smem:[#allocation0]]
  $region97: #{fcn_head_forward.1} parent=0
    _
  %s18 = ssub.s32 1, %s16
  %s19 = scalar_select 0, %s18, %s16
  $region1: #{fcn_head_forward.1} parent=0
    #allocation2 [shape = 'u8[512]{0}', space=smem, size = 0x200, scoped, tag = 'input window, operand 0, single buffered']
    #allocation3 [shape = 's32[2]{0}', space=sflag, size = 0x8, scoped, tag = 'scoped memory for fcn_head_forward.1']
    %20 = vsyncpa [#allocation3], 0
    loop: start=0, step=1, limit=4
    $region2: #{fcn_head_forward.1} parent=1 // loop_pre_header
      _
    $region3: #{fcn_head_forward.1} parent=1 // loop_header
      %s22 = sphi 0, %s26
      %p23 = scmp.ge.s32.totalorder %s22, 4
      %s30 = sphi 0, %s30
      %s32 = sphi 0, %s30
      %s33 = sphi 0, %s32
      %s47 = sphi 0, %s33
      %s53 = sphi 0, %s55
      %s56 = sphi 0, %s53
      %s57 = sphi 0, %s56
      %s73 = sphi 0, %s57
      %s79 = sphi 0, %s81
      %s82 = sphi 0, %s79
      %s83 = sphi 0, %s82
      %s99 = sphi 0, %s83
      %s105 = sphi 0, %s107
      %s108 = sphi 0, %s105
      %s109 = sphi 0, %s108
      %s125 = sphi 0, %s109
      %s131 = sphi 0, %s133
      %s134 = sphi 0, %s131
      %s135 = sphi 0, %s134
      %s151 = sphi 0, %s135
      %s157 = sphi 0, %s159
      %s160 = sphi 0, %s157
      %s161 = sphi 0, %s160
      %s177 = sphi 0, %s161
      %s181 = sphi 0, %s181
      %s183 = sphi 0, %s181
      %s184 = sphi 0, %s183
      %s198 = sphi 0, %s184
      %s202 = sphi 0, %s202
      %s204 = sphi 0, %s202
      %s205 = sphi 0, %s204
      %s219 = sphi 0, %s205
      %s223 = sphi 0, %s223
      %s225 = sphi 0, %s223
      %s226 = sphi 0, %s225
      %s240 = sphi 0, %s226
      %s244 = sphi 0, %s244
      %s246 = sphi 0, %s244
      %s247 = sphi 0, %s246
      %s261 = sphi 0, %s247
      %s265 = sphi 0, %s265
      %s267 = sphi 0, %s265
      %s268 = sphi 0, %s267
      %s282 = sphi 0, %s268
      %s286 = sphi 0, %s286
      %s288 = sphi 0, %s286
      %s289 = sphi 0, %s288
      %s303 = sphi 0, %s289
      %s307 = sphi 0, %s307
      %s309 = sphi 0, %s307
      %s310 = sphi 0, %s309
      %s324 = sphi 0, %s310
      %s328 = sphi 0, %s328
      %s330 = sphi 0, %s328
      %s331 = sphi 0, %s330
      %s345 = sphi 0, %s331
      %s349 = sphi 0, %s349
      %s351 = sphi 0, %s349
      %s352 = sphi 0, %s351
      %s366 = sphi 0, %s352
      %s372 = sphi 0, %s374
      %s375 = sphi 0, %s372
      %s376 = sphi 0, %s375
      %s392 = sphi 0, %s376
    $region4: #{fcn_head_forward.1} parent=1 // loop_header_branch
      %25 = sbr.rel (%p23) target = $region8
    $region5: #{fcn_head_forward.1} parent=1 // loop_body
      %s27 = ssub.s32 %s22, 1
      %s28 = ssub.s32 %s22, 2
      %s29 = sadd.s32 %s22, 1
      %s31 = sadd.s32 %s30, 1
      %p34 = scmp.eq.s32.totalorder %s22, 1
      %p35 = scmp.ne.s32.totalorder %s30, %s32
      %p36 = scmp.eq.s32.totalorder %s22, 0
      %p37 = por %p35, %p36
      %p38 = scmp.ne.s32.totalorder %s30, %s32
      %p39 = scmp.eq.s32.totalorder %s27, 1
      %p40 = por %p38, %p39
      %p41 = scmp.ne.s32.totalorder %s32, %s33
      %p42 = scmp.eq.s32.totalorder %s27, 0
      %p43 = por %p41, %p42
      %p44 = scmp.ne.s32.totalorder %s32, %s33
      %p45 = scmp.eq.s32.totalorder %s28, 1
      %p46 = por %p44, %p45
      %p48 = scmp.ne.s32.totalorder %s33, %s47
      %p49 = scmp.eq.s32.totalorder %s28, 0
      %p50 = por %p48, %p49
      %s51 = ssub.s32 %s22, %s29
      %p52 = scmp.eq.s32.totalorder %s51, 0
      %s54 = sadd.s32 %s53, 1
      %s55 = scalar_select %p52, %s53, %s54
      %p58 = pneg %p52
      %p59 = scmp.eq.s32.totalorder %s22, 1
      %p60 = por %p58, %p59
      %p61 = scmp.ne.s32.totalorder %s53, %s56
      %p62 = scmp.eq.s32.totalorder %s22, 0
      %p63 = por %p61, %p62
      %p64 = scmp.ne.s32.totalorder %s53, %s56
      %p65 = scmp.eq.s32.totalorder %s27, 1
      %p66 = por %p64, %p65
      %p67 = scmp.ne.s32.totalorder %s56, %s57
      %p68 = scmp.eq.s32.totalorder %s27, 0
      %p69 = por %p67, %p68
      %p70 = scmp.ne.s32.totalorder %s56, %s57
      %p71 = scmp.eq.s32.totalorder %s28, 1
      %p72 = por %p70, %p71
      %p74 = scmp.ne.s32.totalorder %s57, %s73
      %p75 = scmp.eq.s32.totalorder %s28, 0
      %p76 = por %p74, %p75
      %s77 = ssub.s32 %s22, %s29
      %p78 = scmp.eq.s32.totalorder %s77, 0
      %s80 = sadd.s32 %s79, 1
      %s81 = scalar_select %p78, %s79, %s80
      %p84 = pneg %p78
      %p85 = scmp.eq.s32.totalorder %s22, 1
      %p86 = por %p84, %p85
      %p87 = scmp.ne.s32.totalorder %s79, %s82
      %p88 = scmp.eq.s32.totalorder %s22, 0
      %p89 = por %p87, %p88
      %p90 = scmp.ne.s32.totalorder %s79, %s82
      %p91 = scmp.eq.s32.totalorder %s27, 1
      %p92 = por %p90, %p91
      %p93 = scmp.ne.s32.totalorder %s82, %s83
      %p94 = scmp.eq.s32.totalorder %s27, 0
      %p95 = por %p93, %p94
      %p96 = scmp.ne.s32.totalorder %s82, %s83
      %p97 = scmp.eq.s32.totalorder %s28, 1
      %p98 = por %p96, %p97
      %p100 = scmp.ne.s32.totalorder %s83, %s99
      %p101 = scmp.eq.s32.totalorder %s28, 0
      %p102 = por %p100, %p101
      %s103 = ssub.s32 %s22, %s29
      %p104 = scmp.eq.s32.totalorder %s103, 0
      %s106 = sadd.s32 %s105, 1
      %s107 = scalar_select %p104, %s105, %s106
      %p110 = pneg %p104
      %p111 = scmp.eq.s32.totalorder %s22, 1
      %p112 = por %p110, %p111
      %p113 = scmp.ne.s32.totalorder %s105, %s108
      %p114 = scmp.eq.s32.totalorder %s22, 0
      %p115 = por %p113, %p114
      %p116 = scmp.ne.s32.totalorder %s105, %s108
      %p117 = scmp.eq.s32.totalorder %s27, 1
      %p118 = por %p116, %p117
      %p119 = scmp.ne.s32.totalorder %s108, %s109
      %p120 = scmp.eq.s32.totalorder %s27, 0
      %p121 = por %p119, %p120
      %p122 = scmp.ne.s32.totalorder %s108, %s109
      %p123 = scmp.eq.s32.totalorder %s28, 1
      %p124 = por %p122, %p123
      %p126 = scmp.ne.s32.totalorder %s109, %s125
      %p127 = scmp.eq.s32.totalorder %s28, 0
      %p128 = por %p126, %p127
      %s129 = ssub.s32 %s22, %s29
      %p130 = scmp.eq.s32.totalorder %s129, 0
      %s132 = sadd.s32 %s131, 1
      %s133 = scalar_select %p130, %s131, %s132
      %p136 = pneg %p130
      %p137 = scmp.eq.s32.totalorder %s22, 1
      %p138 = por %p136, %p137
      %p139 = scmp.ne.s32.totalorder %s131, %s134
      %p140 = scmp.eq.s32.totalorder %s22, 0
      %p141 = por %p139, %p140
      %p142 = scmp.ne.s32.totalorder %s131, %s134
      %p143 = scmp.eq.s32.totalorder %s27, 1
      %p144 = por %p142, %p143
      %p145 = scmp.ne.s32.totalorder %s134, %s135
      %p146 = scmp.eq.s32.totalorder %s27, 0
      %p147 = por %p145, %p146
      %p148 = scmp.ne.s32.totalorder %s134, %s135
      %p149 = scmp.eq.s32.totalorder %s28, 1
      %p150 = por %p148, %p149
      %p152 = scmp.ne.s32.totalorder %s135, %s151
      %p153 = scmp.eq.s32.totalorder %s28, 0
      %p154 = por %p152, %p153
      %s155 = ssub.s32 %s22, %s29
      %p156 = scmp.eq.s32.totalorder %s155, 0
      %s158 = sadd.s32 %s157, 1
      %s159 = scalar_select %p156, %s157, %s158
      %p162 = pneg %p156
      %p163 = scmp.eq.s32.totalorder %s22, 1
      %p164 = por %p162, %p163
      %p165 = scmp.ne.s32.totalorder %s157, %s160
      %p166 = scmp.eq.s32.totalorder %s22, 0
      %p167 = por %p165, %p166
      %p168 = scmp.ne.s32.totalorder %s157, %s160
      %p169 = scmp.eq.s32.totalorder %s27, 1
      %p170 = por %p168, %p169
      %p171 = scmp.ne.s32.totalorder %s160, %s161
      %p172 = scmp.eq.s32.totalorder %s27, 0
      %p173 = por %p171, %p172
      %p174 = scmp.ne.s32.totalorder %s160, %s161
      %p175 = scmp.eq.s32.totalorder %s28, 1
      %p176 = por %p174, %p175
      %p178 = scmp.ne.s32.totalorder %s161, %s177
      %p179 = scmp.eq.s32.totalorder %s28, 0
      %p180 = por %p178, %p179
      %s182 = sadd.s32 %s181, 1
      %p185 = scmp.eq.s32.totalorder %s22, 1
      %p186 = scmp.ne.s32.totalorder %s181, %s183
      %p187 = scmp.eq.s32.totalorder %s22, 0
      %p188 = por %p186, %p187
      %p189 = scmp.ne.s32.totalorder %s181, %s183
      %p190 = scmp.eq.s32.totalorder %s27, 1
      %p191 = por %p189, %p190
      %p192 = scmp.ne.s32.totalorder %s183, %s184
      %p193 = scmp.eq.s32.totalorder %s27, 0
      %p194 = por %p192, %p193
      %p195 = scmp.ne.s32.totalorder %s183, %s184
      %p196 = scmp.eq.s32.totalorder %s28, 1
      %p197 = por %p195, %p196
      %p199 = scmp.ne.s32.totalorder %s184, %s198
      %p200 = scmp.eq.s32.totalorder %s28, 0
      %p201 = por %p199, %p200
      %s203 = sadd.s32 %s202, 1
      %p206 = scmp.eq.s32.totalorder %s22, 1
      %p207 = scmp.ne.s32.totalorder %s202, %s204
      %p208 = scmp.eq.s32.totalorder %s22, 0
      %p209 = por %p207, %p208
      %p210 = scmp.ne.s32.totalorder %s202, %s204
      %p211 = scmp.eq.s32.totalorder %s27, 1
      %p212 = por %p210, %p211
      %p213 = scmp.ne.s32.totalorder %s204, %s205
      %p214 = scmp.eq.s32.totalorder %s27, 0
      %p215 = por %p213, %p214
      %p216 = scmp.ne.s32.totalorder %s204, %s205
      %p217 = scmp.eq.s32.totalorder %s28, 1
      %p218 = por %p216, %p217
      %p220 = scmp.ne.s32.totalorder %s205, %s219
      %p221 = scmp.eq.s32.totalorder %s28, 0
      %p222 = por %p220, %p221
      %s224 = sadd.s32 %s223, 1
      %p227 = scmp.eq.s32.totalorder %s22, 1
      %p228 = scmp.ne.s32.totalorder %s223, %s225
      %p229 = scmp.eq.s32.totalorder %s22, 0
      %p230 = por %p228, %p229
      %p231 = scmp.ne.s32.totalorder %s223, %s225
      %p232 = scmp.eq.s32.totalorder %s27, 1
      %p233 = por %p231, %p232
      %p234 = scmp.ne.s32.totalorder %s225, %s226
      %p235 = scmp.eq.s32.totalorder %s27, 0
      %p236 = por %p234, %p235
      %p237 = scmp.ne.s32.totalorder %s225, %s226
      %p238 = scmp.eq.s32.totalorder %s28, 1
      %p239 = por %p237, %p238
      %p241 = scmp.ne.s32.totalorder %s226, %s240
      %p242 = scmp.eq.s32.totalorder %s28, 0
      %p243 = por %p241, %p242
      %s245 = sadd.s32 %s244, 1
      %p248 = scmp.eq.s32.totalorder %s22, 1
      %p249 = scmp.ne.s32.totalorder %s244, %s246
      %p250 = scmp.eq.s32.totalorder %s22, 0
      %p251 = por %p249, %p250
      %p252 = scmp.ne.s32.totalorder %s244, %s246
      %p253 = scmp.eq.s32.totalorder %s27, 1
      %p254 = por %p252, %p253
      %p255 = scmp.ne.s32.totalorder %s246, %s247
      %p256 = scmp.eq.s32.totalorder %s27, 0
      %p257 = por %p255, %p256
      %p258 = scmp.ne.s32.totalorder %s246, %s247
      %p259 = scmp.eq.s32.totalorder %s28, 1
      %p260 = por %p258, %p259
      %p262 = scmp.ne.s32.totalorder %s247, %s261
      %p263 = scmp.eq.s32.totalorder %s28, 0
      %p264 = por %p262, %p263
      %s266 = sadd.s32 %s265, 1
      %p269 = scmp.eq.s32.totalorder %s22, 1
      %p270 = scmp.ne.s32.totalorder %s265, %s267
      %p271 = scmp.eq.s32.totalorder %s22, 0
      %p272 = por %p270, %p271
      %p273 = scmp.ne.s32.totalorder %s265, %s267
      %p274 = scmp.eq.s32.totalorder %s27, 1
      %p275 = por %p273, %p274
      %p276 = scmp.ne.s32.totalorder %s267, %s268
      %p277 = scmp.eq.s32.totalorder %s27, 0
      %p278 = por %p276, %p277
      %p279 = scmp.ne.s32.totalorder %s267, %s268
      %p280 = scmp.eq.s32.totalorder %s28, 1
      %p281 = por %p279, %p280
      %p283 = scmp.ne.s32.totalorder %s268, %s282
      %p284 = scmp.eq.s32.totalorder %s28, 0
      %p285 = por %p283, %p284
      %s287 = sadd.s32 %s286, 1
      %p290 = scmp.eq.s32.totalorder %s22, 1
      %p291 = scmp.ne.s32.totalorder %s286, %s288
      %p292 = scmp.eq.s32.totalorder %s22, 0
      %p293 = por %p291, %p292
      %p294 = scmp.ne.s32.totalorder %s286, %s288
      %p295 = scmp.eq.s32.totalorder %s27, 1
      %p296 = por %p294, %p295
      %p297 = scmp.ne.s32.totalorder %s288, %s289
      %p298 = scmp.eq.s32.totalorder %s27, 0
      %p299 = por %p297, %p298
      %p300 = scmp.ne.s32.totalorder %s288, %s289
      %p301 = scmp.eq.s32.totalorder %s28, 1
      %p302 = por %p300, %p301
      %p304 = scmp.ne.s32.totalorder %s289, %s303
      %p305 = scmp.eq.s32.totalorder %s28, 0
      %p306 = por %p304, %p305
      %s308 = sadd.s32 %s307, 1
      %p311 = scmp.eq.s32.totalorder %s22, 1
      %p312 = scmp.ne.s32.totalorder %s307, %s309
      %p313 = scmp.eq.s32.totalorder %s22, 0
      %p314 = por %p312, %p313
      %p315 = scmp.ne.s32.totalorder %s307, %s309
      %p316 = scmp.eq.s32.totalorder %s27, 1
      %p317 = por %p315, %p316
      %p318 = scmp.ne.s32.totalorder %s309, %s310
      %p319 = scmp.eq.s32.totalorder %s27, 0
      %p320 = por %p318, %p319
      %p321 = scmp.ne.s32.totalorder %s309, %s310
      %p322 = scmp.eq.s32.totalorder %s28, 1
      %p323 = por %p321, %p322
      %p325 = scmp.ne.s32.totalorder %s310, %s324
      %p326 = scmp.eq.s32.totalorder %s28, 0
      %p327 = por %p325, %p326
      %s329 = sadd.s32 %s328, 1
      %p332 = scmp.eq.s32.totalorder %s22, 1
      %p333 = scmp.ne.s32.totalorder %s328, %s330
      %p334 = scmp.eq.s32.totalorder %s22, 0
      %p335 = por %p333, %p334
      %p336 = scmp.ne.s32.totalorder %s328, %s330
      %p337 = scmp.eq.s32.totalorder %s27, 1
      %p338 = por %p336, %p337
      %p339 = scmp.ne.s32.totalorder %s330, %s331
      %p340 = scmp.eq.s32.totalorder %s27, 0
      %p341 = por %p339, %p340
      %p342 = scmp.ne.s32.totalorder %s330, %s331
      %p343 = scmp.eq.s32.totalorder %s28, 1
      %p344 = por %p342, %p343
      %p346 = scmp.ne.s32.totalorder %s331, %s345
      %p347 = scmp.eq.s32.totalorder %s28, 0
      %p348 = por %p346, %p347
      %s350 = sadd.s32 %s349, 1
      %p353 = scmp.eq.s32.totalorder %s22, 1
      %p354 = scmp.ne.s32.totalorder %s349, %s351
      %p355 = scmp.eq.s32.totalorder %s22, 0
      %p356 = por %p354, %p355
      %p357 = scmp.ne.s32.totalorder %s349, %s351
      %p358 = scmp.eq.s32.totalorder %s27, 1
      %p359 = por %p357, %p358
      %p360 = scmp.ne.s32.totalorder %s351, %s352
      %p361 = scmp.eq.s32.totalorder %s27, 0
      %p362 = por %p360, %p361
      %p363 = scmp.ne.s32.totalorder %s351, %s352
      %p364 = scmp.eq.s32.totalorder %s28, 1
      %p365 = por %p363, %p364
      %p367 = scmp.ne.s32.totalorder %s352, %s366
      %p368 = scmp.eq.s32.totalorder %s28, 0
      %p369 = por %p367, %p368
      %s370 = ssub.s32 %s22, %s29
      %p371 = scmp.eq.s32.totalorder %s370, 0
      %s373 = sadd.s32 %s372, 1
      %s374 = scalar_select %p371, %s372, %s373
      %p377 = pneg %p371
      %p378 = scmp.eq.s32.totalorder %s22, 1
      %p379 = por %p377, %p378
      %p380 = scmp.ne.s32.totalorder %s372, %s375
      %p381 = scmp.eq.s32.totalorder %s22, 0
      %p382 = por %p380, %p381
      %p383 = scmp.ne.s32.totalorder %s372, %s375
      %p384 = scmp.eq.s32.totalorder %s27, 1
      %p385 = por %p383, %p384
      %p386 = scmp.ne.s32.totalorder %s375, %s376
      %p387 = scmp.eq.s32.totalorder %s27, 0
      %p388 = por %p386, %p387
      %p389 = scmp.ne.s32.totalorder %s375, %s376
      %p390 = scmp.eq.s32.totalorder %s28, 1
      %p391 = por %p389, %p390
      %p393 = scmp.ne.s32.totalorder %s376, %s392
      %p394 = scmp.eq.s32.totalorder %s28, 0
      %p395 = por %p393, %p394
      %p396 = scmp.le.s32.totalorder 1, %s22
      %p397 = scmp.lt.s32.totalorder %s22, 3
      %p398 = pnand %p396, %p397
      %p399 = pneg %p398
      // Predicated region
      $region9: #{fcn_head_forward.1} parent=5 // pred_check
        _
      $region10: #{fcn_head_forward.1} parent=5 // pred_check_branch
        %401 = sbr.rel (%p398) target = $region12
      $region11: #{fcn_head_forward.1} parent=5 // pred_region
        %s402 = ssub.s32 %s22, 1
        // Predicated region
        $region13: #{fcn_head_forward.1} parent=11 // pred_check
          %p403 = pneg %p43
        $region14: #{fcn_head_forward.1} parent=11 // pred_check_branch
          %405 = sbr.rel (%p403) target = $region16
        $region15: #{fcn_head_forward.1} parent=11 // pred_region
          %s407 = ssub.s32 16, 16
          %408 = vsyncadd [#allocation3], %s407
          %s410 = sshll.u32 %s0, 4
          %s411 = int_to_ptr.vmem [resolvable:$true] %s410
          %413 = dma.vmem_to_smem %s411, 16, [#allocation2], [#allocation3]
        $region16: #{fcn_head_forward.1} parent=11 // pred_fallthru
          _
        // Predicated region
        $region17: #{fcn_head_forward.1} parent=11 // pred_check
          %p414 = pneg %p194
        $region18: #{fcn_head_forward.1} parent=11 // pred_check_branch
          %416 = sbr.rel (%p414) target = $region20
        $region19: #{fcn_head_forward.1} parent=11 // pred_region
          _
        $region20: #{fcn_head_forward.1} parent=11 // pred_fallthru
          _
        // Predicated region
        $region21: #{fcn_head_forward.1} parent=11 // pred_check
          %p417 = pneg %p215
        $region22: #{fcn_head_forward.1} parent=11 // pred_check_branch
          %419 = sbr.rel (%p417) target = $region24
        $region23: #{fcn_head_forward.1} parent=11 // pred_region
          _
        $region24: #{fcn_head_forward.1} parent=11 // pred_fallthru
          _
        // Predicated region
        $region25: #{fcn_head_forward.1} parent=11 // pred_check
          %p420 = pneg %p236
        $region26: #{fcn_head_forward.1} parent=11 // pred_check_branch
          %422 = sbr.rel (%p420) target = $region28
        $region27: #{fcn_head_forward.1} parent=11 // pred_region
          _
        $region28: #{fcn_head_forward.1} parent=11 // pred_fallthru
          _
        // Predicated region
        $region29: #{fcn_head_forward.1} parent=11 // pred_check
          %p423 = pneg %p257
        $region30: #{fcn_head_forward.1} parent=11 // pred_check_branch
          %425 = sbr.rel (%p423) target = $region32
        $region31: #{fcn_head_forward.1} parent=11 // pred_region
          _
        $region32: #{fcn_head_forward.1} parent=11 // pred_fallthru
          _
        // Predicated region
        $region33: #{fcn_head_forward.1} parent=11 // pred_check
          %p426 = pneg %p278
        $region34: #{fcn_head_forward.1} parent=11 // pred_check_branch
          %428 = sbr.rel (%p426) target = $region36
        $region35: #{fcn_head_forward.1} parent=11 // pred_region
          _
        $region36: #{fcn_head_forward.1} parent=11 // pred_fallthru
          _
        // Predicated region
        $region37: #{fcn_head_forward.1} parent=11 // pred_check
          %p429 = pneg %p299
        $region38: #{fcn_head_forward.1} parent=11 // pred_check_branch
          %431 = sbr.rel (%p429) target = $region40
        $region39: #{fcn_head_forward.1} parent=11 // pred_region
          _
        $region40: #{fcn_head_forward.1} parent=11 // pred_fallthru
          _
        // Predicated region
        $region41: #{fcn_head_forward.1} parent=11 // pred_check
          %p432 = pneg %p320
        $region42: #{fcn_head_forward.1} parent=11 // pred_check_branch
          %434 = sbr.rel (%p432) target = $region44
        $region43: #{fcn_head_forward.1} parent=11 // pred_region
          _
        $region44: #{fcn_head_forward.1} parent=11 // pred_fallthru
          _
        // Predicated region
        $region45: #{fcn_head_forward.1} parent=11 // pred_check
          %p435 = pneg %p341
        $region46: #{fcn_head_forward.1} parent=11 // pred_check_branch
          %437 = sbr.rel (%p435) target = $region48
        $region47: #{fcn_head_forward.1} parent=11 // pred_region
          _
        $region48: #{fcn_head_forward.1} parent=11 // pred_fallthru
          _
        // Predicated region
        $region49: #{fcn_head_forward.1} parent=11 // pred_check
          %p438 = pneg %p362
        $region50: #{fcn_head_forward.1} parent=11 // pred_check_branch
          %440 = sbr.rel (%p438) target = $region52
        $region51: #{fcn_head_forward.1} parent=11 // pred_region
          _
        $region52: #{fcn_head_forward.1} parent=11 // pred_fallthru
          _
      $region12: #{fcn_head_forward.1} parent=5 // pred_fallthru
        _
      %p441 = scmp.lt.s32.totalorder %s22, 2
      // Predicated region
      $region53: #{fcn_head_forward.1} parent=5 // pred_check
        %p442 = pneg %p441
      $region54: #{fcn_head_forward.1} parent=5 // pred_check_branch
        %444 = sbr.rel (%p442) target = $region56
      $region55: #{fcn_head_forward.1} parent=5 // pred_region
        // Predicated region
        $region57: #{fcn_head_forward.1} parent=55 // pred_check
          %p445 = pneg %p63
        $region58: #{fcn_head_forward.1} parent=55 // pred_check_branch
          %447 = sbr.rel (%p445) target = $region60
        $region59: #{fcn_head_forward.1} parent=55 // pred_region
          %s448 = smul.u32 2, %s22
          %p449 = scmp.lt.s32.totalorder %s448, 3
          %s450 = scalar_select %p449, %s448, 3
          %s451 = smul.addr %s450, 64
          %s452 = smul.addr %s451, 4
          %s453 = scalar_lea.vmem %s1, %s452
          %s454 = smul.u32 2, %s22
        $region60: #{fcn_head_forward.1} parent=55 // pred_fallthru
          _
        // Predicated region
        $region61: #{fcn_head_forward.1} parent=55 // pred_check
          %p455 = pneg %p89
        $region62: #{fcn_head_forward.1} parent=55 // pred_check_branch
          %457 = sbr.rel (%p455) target = $region64
        $region63: #{fcn_head_forward.1} parent=55 // pred_region
          %s458 = smul.u32 2, %s22
          %p459 = scmp.lt.s32.totalorder %s458, 3
          %s460 = scalar_select %p459, %s458, 3
          %s461 = smul.addr %s460, 64
          %s462 = smul.addr %s461, 4
          %s463 = scalar_lea.vmem %s2, %s462
          %s464 = smul.u32 2, %s22
        $region64: #{fcn_head_forward.1} parent=55 // pred_fallthru
          _
        // Predicated region
        $region65: #{fcn_head_forward.1} parent=55 // pred_check
          %p465 = pneg %p115
        $region66: #{fcn_head_forward.1} parent=55 // pred_check_branch
          %467 = sbr.rel (%p465) target = $region68
        $region67: #{fcn_head_forward.1} parent=55 // pred_region
          %s468 = smul.u32 2, %s22
          %p469 = scmp.lt.s32.totalorder %s468, 3
          %s470 = scalar_select %p469, %s468, 3
          %s471 = smul.addr %s470, 32
          %s472 = smul.addr %s471, 4
          %s473 = scalar_lea.vmem %s3, %s472
          %s474 = smul.u32 2, %s22
        $region68: #{fcn_head_forward.1} parent=55 // pred_fallthru
          _
        // Predicated region
        $region69: #{fcn_head_forward.1} parent=55 // pred_check
          %p475 = pneg %p141
        $region70: #{fcn_head_forward.1} parent=55 // pred_check_branch
          %477 = sbr.rel (%p475) target = $region72
        $region71: #{fcn_head_forward.1} parent=55 // pred_region
          %s478 = smul.u32 2, %s22
          %p479 = scmp.lt.s32.totalorder %s478, 3
          %s480 = scalar_select %p479, %s478, 3
          %s481 = smul.addr %s480, 32
          %s482 = smul.addr %s481, 4
          %s483 = scalar_lea.vmem %s4, %s482
          %s484 = smul.u32 2, %s22
        $region72: #{fcn_head_forward.1} parent=55 // pred_fallthru
          _
        // Predicated region
        $region73: #{fcn_head_forward.1} parent=55 // pred_check
          %p485 = pneg %p167
        $region74: #{fcn_head_forward.1} parent=55 // pred_check_branch
          %487 = sbr.rel (%p485) target = $region76
        $region75: #{fcn_head_forward.1} parent=55 // pred_region
          %s488 = smul.u32 2, %s22
          %p489 = scmp.lt.s32.totalorder %s488, 3
          %s490 = scalar_select %p489, %s488, 3
          %s491 = smul.addr %s490, 64
          %s492 = smul.addr %s491, 4
          %s493 = scalar_lea.vmem %s5, %s492
          %s494 = smul.u32 2, %s22
        $region76: #{fcn_head_forward.1} parent=55 // pred_fallthru
          _
      $region56: #{fcn_head_forward.1} parent=5 // pred_fallthru
        _
      %p495 = scmp.le.s32.totalorder 1, %s22
      %p496 = scmp.lt.s32.totalorder %s22, 3
      %p497 = pnand %p495, %p496
      %p498 = pneg %p497
      // Predicated region
      $region77: #{fcn_head_forward.1} parent=5 // pred_check
        _
      $region78: #{fcn_head_forward.1} parent=5 // pred_check_branch
        %500 = sbr.rel (%p497) target = $region80
      $region79: #{fcn_head_forward.1} parent=5 // pred_region
        %s501 = ssub.s32 %s22, 1
        // Predicated region
        $region81: #{fcn_head_forward.1} parent=79 // pred_check
          %p502 = pneg %p43
        $region82: #{fcn_head_forward.1} parent=79 // pred_check_branch
          %504 = sbr.rel (%p502) target = $region84
        $region83: #{fcn_head_forward.1} parent=79 // pred_region
          %505 = dma.done [#allocation3], 16
        $region84: #{fcn_head_forward.1} parent=79 // pred_fallthru
          _
        %506 = sfence
        %p507 = pneg %p43
        %p508 = pneg %p40
        %s509 = smul.u32 2, %s27
        %p510 = scmp.lt.s32.totalorder %s509, 3
        %s511 = scalar_select %p510, %s509, 3
        %s512 = smul.addr %s511, 64
        %s513 = smul.addr %s512, 4
        %s514 = scalar_lea.vmem %s1, %s513
        %p515 = pneg %p69
        %p516 = pneg %p66
        %s517 = smul.u32 2, %s27
        %p518 = scmp.lt.s32.totalorder %s517, 3
        %s519 = scalar_select %p518, %s517, 3
        %s520 = smul.addr %s519, 64
        %s521 = smul.addr %s520, 4
        %s522 = scalar_lea.vmem %s2, %s521
        %p523 = pneg %p95
        %p524 = pneg %p92
        %s525 = smul.u32 2, %s27
        %p526 = scmp.lt.s32.totalorder %s525, 3
        %s527 = scalar_select %p526, %s525, 3
        %s528 = smul.addr %s527, 32
        %s529 = smul.addr %s528, 4
        %s530 = scalar_lea.vmem %s3, %s529
        %p531 = pneg %p121
        %p532 = pneg %p118
        %s533 = smul.u32 2, %s27
        %p534 = scmp.lt.s32.totalorder %s533, 3
        %s535 = scalar_select %p534, %s533, 3
        %s536 = smul.addr %s535, 32
        %s537 = smul.addr %s536, 4
        %s538 = scalar_lea.vmem %s4, %s537
        %p539 = pneg %p147
        %p540 = pneg %p144
        %s541 = smul.u32 2, %s27
        %p542 = scmp.lt.s32.totalorder %s541, 3
        %s543 = scalar_select %p542, %s541, 3
        %s544 = smul.addr %s543, 64
        %s545 = smul.addr %s544, 4
        %s546 = scalar_lea.vmem %s5, %s545
        %p547 = pneg %p173
        %p548 = pneg %p170
        %p549 = pneg %p194
        %p550 = pneg %p191
        %p551 = pneg %p215
        %p552 = pneg %p212
        %p553 = pneg %p236
        %p554 = pneg %p233
        %p555 = pneg %p257
        %p556 = pneg %p254
        %p557 = pneg %p278
        %p558 = pneg %p275
        %p559 = pneg %p299
        %p560 = pneg %p296
        %p561 = pneg %p320
        %p562 = pneg %p317
        %p563 = pneg %p341
        %p564 = pneg %p338
        %p565 = pneg %p362
        %p566 = pneg %p359
        %p567 = pneg %p388
        %p568 = pneg %p385
        %s569 = smul.u32 2, %s27
        %p570 = scmp.lt.s32.totalorder %s569, 3
        %s571 = scalar_select %p570, %s569, 3
        %s572 = smul.addr %s571, 8
        %s573 = scalar_lea.vmem %s15, %s572
        %s574 = smul.u32 2, %s27
        %p575 = scmp.lt.s32.totalorder %s574, 3
        %s576 = scalar_select %p575, %s574, 3
        %s577 = smul.addr %s576, 64
        %s578 = smul.addr %s577, 4
        %s579 = scalar_lea.vmem %s1, %s578
        %s580 = smul.u32 2, %s27
        %s581 = smul.u32 2, %s27
        %p582 = scmp.lt.s32.totalorder %s581, 3
        %s583 = scalar_select %p582, %s581, 3
        %s584 = smul.addr %s583, 64
        %s585 = smul.addr %s584, 4
        %s586 = scalar_lea.vmem %s2, %s585
        %s587 = smul.u32 2, %s27
        %s588 = smul.u32 2, %s27
        %p589 = scmp.lt.s32.totalorder %s588, 3
        %s590 = scalar_select %p589, %s588, 3
        %s591 = smul.addr %s590, 32
        %s592 = smul.addr %s591, 4
        %s593 = scalar_lea.vmem %s3, %s592
        %s594 = smul.u32 2, %s27
        %s595 = smul.u32 2, %s27
        %p596 = scmp.lt.s32.totalorder %s595, 3
        %s597 = scalar_select %p596, %s595, 3
        %s598 = smul.addr %s597, 32
        %s599 = smul.addr %s598, 4
        %s600 = scalar_lea.vmem %s4, %s599
        %s601 = smul.u32 2, %s27
        %s602 = smul.u32 2, %s27
        %p603 = scmp.lt.s32.totalorder %s602, 3
        %s604 = scalar_select %p603, %s602, 3
        %s605 = smul.addr %s604, 64
        %s606 = smul.addr %s605, 4
        %s607 = scalar_lea.vmem %s5, %s606
        %s608 = smul.u32 2, %s27
        %s609 = smul.u32 2, %s27
        %p610 = scmp.lt.s32.totalorder %s609, 3
        %s611 = scalar_select %p610, %s609, 3
        %s612 = smul.addr %s611, 8
        %s613 = scalar_lea.vmem %s15, %s612
        %s614 = smul.u32 2, %s27
        %s616 = sld [smem:[#allocation2]]
        %s617 = sld [smem:[#allocation2 + $0x1]]
        %s618 = sld [smem:[#allocation2 + $0x2]]
        %s619 = sld [smem:[#allocation2 + $0x3]]
        %s620 = sld [smem:[#allocation2 + $0x4]]
        %s621 = sld [smem:[#allocation2 + $0x5]]
        %s622 = sld [smem:[#allocation2 + $0x6]]
        %s623 = sld [smem:[#allocation2 + $0x7]]
        %s624 = sld [smem:[#allocation2 + $0x8]]
        %s625 = sld [smem:[#allocation2 + $0x9]]
        %s626 = sld [smem:[#allocation2 + $0xa]]
        %s627 = sld [smem:[#allocation2 + $0xb]]
        %v628 = vld [vmem:[%s6] sm:$0xf]
        %v629 = vld [vmem:[%s7] sm:$0xf]
        %v630 = vld [vmem:[%s8] sm:$0x3]
        %v631 = vld [vmem:[%s9] sm:$0x1]
        %v632 = vld [vmem:[%s10] sm:$0x1]
        %v633 = vld [vmem:[%s11] sm:$0xff]
        %v634 = vld [vmem:[%s11 + $0x8] sm:$0xff]
        %v635 = vld [vmem:[%s12] sm:$0xff]
        %v636 = vld [vmem:[%s13] sm:$0xff]
        %v637 = vld [vmem:[%s13 + $0x8] sm:$0xff]
        %v638 = vld [vmem:[%s13 + $0x10] sm:$0xff]
        %v639 = vld [vmem:[%s13 + $0x18] sm:$0xff]
        %v640 = vld [vmem:[%s14] sm:$0xff]
        %v641 = vld [vmem:[%s14 + $0x8] sm:$0xff]
        %v642 = vld [vmem:[%s579] sm:$0xf]
        %v643 = vld [vmem:[%s579 + $0x4] sm:$0xf]
        %v644 = vld [vmem:[%s579 + $0x8] sm:$0xf]
        %v645 = vld [vmem:[%s579 + $0xc] sm:$0xf]
        %v646 = vld [vmem:[%s579 + $0x10] sm:$0xf]
        %v647 = vld [vmem:[%s579 + $0x14] sm:$0xf]
        %v648 = vld [vmem:[%s579 + $0x18] sm:$0xf]
        %v649 = vld [vmem:[%s579 + $0x1c] sm:$0xf]
        %v650 = vld [vmem:[%s579 + $0x20] sm:$0xf]
        %v651 = vld [vmem:[%s579 + $0x24] sm:$0xf]
        %v652 = vld [vmem:[%s579 + $0x28] sm:$0xf]
        %v653 = vld [vmem:[%s579 + $0x2c] sm:$0xf]
        %v654 = vld [vmem:[%s579 + $0x30] sm:$0xf]
        %v655 = vld [vmem:[%s579 + $0x34] sm:$0xf]
        %v656 = vld [vmem:[%s579 + $0x38] sm:$0xf]
        %v657 = vld [vmem:[%s579 + $0x3c] sm:$0xf]
        %v658 = vld [vmem:[%s579 + $0x40] sm:$0xf]
        %v659 = vld [vmem:[%s579 + $0x44] sm:$0xf]
        %v660 = vld [vmem:[%s579 + $0x48] sm:$0xf]
        %v661 = vld [vmem:[%s579 + $0x4c] sm:$0xf]
        %v662 = vld [vmem:[%s579 + $0x50] sm:$0xf]
        %v663 = vld [vmem:[%s579 + $0x54] sm:$0xf]
        %v664 = vld [vmem:[%s579 + $0x58] sm:$0xf]
        %v665 = vld [vmem:[%s579 + $0x5c] sm:$0xf]
        %v666 = vld [vmem:[%s579 + $0x60] sm:$0xf]
        %v667 = vld [vmem:[%s579 + $0x64] sm:$0xf]
        %v668 = vld [vmem:[%s579 + $0x68] sm:$0xf]
        %v669 = vld [vmem:[%s579 + $0x6c] sm:$0xf]
        %v670 = vld [vmem:[%s579 + $0x70] sm:$0xf]
        %v671 = vld [vmem:[%s579 + $0x74] sm:$0xf]
        %v672 = vld [vmem:[%s579 + $0x78] sm:$0xf]
        %v673 = vld [vmem:[%s579 + $0x7c] sm:$0xf]
        %v674 = vld [vmem:[%s579 + $0x80] sm:$0xf]
        %v675 = vld [vmem:[%s579 + $0x84] sm:$0xf]
        %v676 = vld [vmem:[%s579 + $0x88] sm:$0xf]
        %v677 = vld [vmem:[%s579 + $0x8c] sm:$0xf]
        %v678 = vld [vmem:[%s579 + $0x90] sm:$0xf]
        %v679 = vld [vmem:[%s579 + $0x94] sm:$0xf]
        %v680 = vld [vmem:[%s579 + $0x98] sm:$0xf]
        %v681 = vld [vmem:[%s579 + $0x9c] sm:$0xf]
        %v682 = vld [vmem:[%s579 + $0xa0] sm:$0xf]
        %v683 = vld [vmem:[%s579 + $0xa4] sm:$0xf]
        %v684 = vld [vmem:[%s579 + $0xa8] sm:$0xf]
        %v685 = vld [vmem:[%s579 + $0xac] sm:$0xf]
        %v686 = vld [vmem:[%s579 + $0xb0] sm:$0xf]
        %v687 = vld [vmem:[%s579 + $0xb4] sm:$0xf]
        %v688 = vld [vmem:[%s579 + $0xb8] sm:$0xf]
        %v689 = vld [vmem:[%s579 + $0xbc] sm:$0xf]
        %v690 = vld [vmem:[%s579 + $0xc0] sm:$0xf]
        %v691 = vld [vmem:[%s579 + $0xc4] sm:$0xf]
        %v692 = vld [vmem:[%s579 + $0xc8] sm:$0xf]
        %v693 = vld [vmem:[%s579 + $0xcc] sm:$0xf]
        %v694 = vld [vmem:[%s579 + $0xd0] sm:$0xf]
        %v695 = vld [vmem:[%s579 + $0xd4] sm:$0xf]
        %v696 = vld [vmem:[%s579 + $0xd8] sm:$0xf]
        %v697 = vld [vmem:[%s579 + $0xdc] sm:$0xf]
        %v698 = vld [vmem:[%s579 + $0xe0] sm:$0xf]
        %v699 = vld [vmem:[%s579 + $0xe4] sm:$0xf]
        %v700 = vld [vmem:[%s579 + $0xe8] sm:$0xf]
        %v701 = vld [vmem:[%s579 + $0xec] sm:$0xf]
        %v702 = vld [vmem:[%s579 + $0xf0] sm:$0xf]
        %v703 = vld [vmem:[%s579 + $0xf4] sm:$0xf]
        %v704 = vld [vmem:[%s579 + $0xf8] sm:$0xf]
        %v705 = vld [vmem:[%s579 + $0xfc] sm:$0xf]
        %v706 = vstv %s616
        %v709 = vunpack.c.l.s4 1966171168
        %v710 = vunpack.c.0.s8 %v709
        %v711 = vlaneseq
        %v712 = vshrl.u32 %v711, 7
        %v713 = vsub.s32 %v710, %v712
        %v714 = vrot.slane %v628, %v713
        %v715 = vcombine.high %v714, %v714
        %v717 = vunpack.c.l.s4 1966171168
        %v718 = vunpack.c.0.s8 %v717
        %v719 = vlaneseq
        %v720 = vshrl.u32 %v719, 7
        %v721 = vsub.s32 %v718, %v720
        %v722 = vrot.slane %v714, %v721
        %v724 = vunpack.c.l.s4 1966171168
        %v725 = vunpack.c.0.s8 %v724
        %v726 = vlaneseq
        %v727 = vshrl.u32 %v726, 7
        %v728 = vsub.s32 %v725, %v727
        %v729 = vrot.slane %v715, %v728
        %v730 = vcombine.high %v722, %v722
        %v731 = vcombine.high %v729, %v729
        %v800 = vunpack.c.l.b16 %v642
        %v801 = vunpack.c.l.b16 %v643
        %v802 = vunpack.c.l.b16 %v644
        %v803 = vunpack.c.l.b16 %v645
        %v804 = vunpack.c.l.b16 %v646
        %v805 = vunpack.c.l.b16 %v647
        %v806 = vunpack.c.l.b16 %v648
        %v807 = vunpack.c.l.b16 %v649
        %v808 = vunpack.c.l.b16 %v650
        %v809 = vunpack.c.l.b16 %v651
        %v810 = vunpack.c.l.b16 %v652
        %v811 = vunpack.c.l.b16 %v653
        %v812 = vunpack.c.l.b16 %v654
        %v813 = vunpack.c.l.b16 %v655
        %v814 = vunpack.c.l.b16 %v656
        %v815 = vunpack.c.l.b16 %v657
        %v816 = vunpack.c.l.b16 %v658
        %v817 = vunpack.c.l.b16 %v659
        %v818 = vunpack.c.l.b16 %v660
        %v819 = vunpack.c.l.b16 %v661
        %v820 = vunpack.c.l.b16 %v662
        %v821 = vunpack.c.l.b16 %v663
        %v822 = vunpack.c.l.b16 %v664
        %v823 = vunpack.c.l.b16 %v665
        %v824 = vunpack.c.l.b16 %v666
        %v825 = vunpack.c.l.b16 %v667
        %v826 = vunpack.c.l.b16 %v668
        %v827 = vunpack.c.l.b16 %v669
        %v828 = vunpack.c.l.b16 %v670
        %v829 = vunpack.c.l.b16 %v671
        %v830 = vunpack.c.l.b16 %v672
        %v831 = vunpack.c.l.b16 %v673
        %v832 = vunpack.c.l.b16 %v674
        %v833 = vunpack.c.l.b16 %v675
        %v834 = vunpack.c.l.b16 %v676
        %v835 = vunpack.c.l.b16 %v677
        %v836 = vunpack.c.l.b16 %v678
        %v837 = vunpack.c.l.b16 %v679
        %v838 = vunpack.c.l.b16 %v680
        %v839 = vunpack.c.l.b16 %v681
        %v840 = vunpack.c.l.b16 %v682
        %v841 = vunpack.c.l.b16 %v683
        %v842 = vunpack.c.l.b16 %v684
        %v843 = vunpack.c.l.b16 %v685
        %v844 = vunpack.c.l.b16 %v686
        %v845 = vunpack.c.l.b16 %v687
        %v846 = vunpack.c.l.b16 %v688
        %v847 = vunpack.c.l.b16 %v689
        %v848 = vunpack.c.l.b16 %v690
        %v849 = vunpack.c.l.b16 %v691
        %v850 = vunpack.c.l.b16 %v692
        %v851 = vunpack.c.l.b16 %v693
        %v852 = vunpack.c.l.b16 %v694
        %v853 = vunpack.c.l.b16 %v695
        %v854 = vunpack.c.l.b16 %v696
        %v855 = vunpack.c.l.b16 %v697
        %v856 = vunpack.c.l.b16 %v698
        %v857 = vunpack.c.l.b16 %v699
        %v858 = vunpack.c.l.b16 %v700
        %v859 = vunpack.c.l.b16 %v701
        %v860 = vunpack.c.l.b16 %v702
        %v861 = vunpack.c.l.b16 %v703
        %v862 = vunpack.c.l.b16 %v704
        %v863 = vunpack.c.l.b16 %v705
        %v864 = vpack.c.b16 %v801, %v800
        %v865 = vpack.c.b16 %v803, %v802
        %v866 = vpack.c.b16 %v805, %v804
        %v867 = vpack.c.b16 %v807, %v806
        %v868 = vpack.c.b16 %v809, %v808
        %v869 = vpack.c.b16 %v811, %v810
        %v870 = vpack.c.b16 %v813, %v812
        %v871 = vpack.c.b16 %v815, %v814
        %v872 = vpack.c.b16 %v817, %v816
        %v873 = vpack.c.b16 %v819, %v818
        %v874 = vpack.c.b16 %v821, %v820
        %v875 = vpack.c.b16 %v823, %v822
        %v876 = vpack.c.b16 %v825, %v824
        %v877 = vpack.c.b16 %v827, %v826
        %v878 = vpack.c.b16 %v829, %v828
        %v879 = vpack.c.b16 %v831, %v830
        %v880 = vpack.c.b16 %v833, %v832
        %v881 = vpack.c.b16 %v835, %v834
        %v882 = vpack.c.b16 %v837, %v836
        %v883 = vpack.c.b16 %v839, %v838
        %v884 = vpack.c.b16 %v841, %v840
        %v885 = vpack.c.b16 %v843, %v842
        %v886 = vpack.c.b16 %v845, %v844
        %v887 = vpack.c.b16 %v847, %v846
        %v888 = vpack.c.b16 %v849, %v848
        %v889 = vpack.c.b16 %v851, %v850
        %v890 = vpack.c.b16 %v853, %v852
        %v891 = vpack.c.b16 %v855, %v854
        %v892 = vpack.c.b16 %v857, %v856
        %v893 = vpack.c.b16 %v859, %v858
        %v894 = vpack.c.b16 %v861, %v860
        %v895 = vpack.c.b16 %v863, %v862
        %928 = vmatprep.subr.bf16.mxu0 0
        %929 = vmatpush1.bf16.msra.mxu0 %v864
        %930 = vmatprep.subr.bf16.mxu0 0
        %931 = vmatpush1.bf16.msra.mxu0 %v865
        %932 = vmatprep.subr.bf16.mxu0 0
        %933 = vmatpush1.bf16.msra.mxu0 %v866
        %934 = vmatprep.subr.bf16.mxu0 0
        %935 = vmatpush1.bf16.msra.mxu0 %v867
        %936 = vmatprep.subr.bf16.mxu0 0
        %937 = vmatpush1.bf16.msra.mxu0 %v868
        %938 = vmatprep.subr.bf16.mxu0 0
        %939 = vmatpush1.bf16.msra.mxu0 %v869
        %940 = vmatprep.subr.bf16.mxu0 0
        %941 = vmatpush1.bf16.msra.mxu0 %v870
        %942 = vmatprep.subr.bf16.mxu0 0
        %943 = vmatpush1.bf16.msra.mxu0 %v871
        %944 = vmatprep.subr.bf16.mxu0 0
        %945 = vmatpush1.bf16.msra.mxu0 %v872
        %946 = vmatprep.subr.bf16.mxu0 0
        %947 = vmatpush1.bf16.msra.mxu0 %v873
        %948 = vmatprep.subr.bf16.mxu0 0
        %949 = vmatpush1.bf16.msra.mxu0 %v874
        %950 = vmatprep.subr.bf16.mxu0 0
        %951 = vmatpush1.bf16.msra.mxu0 %v875
        %952 = vmatprep.subr.bf16.mxu0 0
        %953 = vmatpush1.bf16.msra.mxu0 %v876
        %954 = vmatprep.subr.bf16.mxu0 0
        %955 = vmatpush1.bf16.msra.mxu0 %v877
        %956 = vmatprep.subr.bf16.mxu0 0
        %957 = vmatpush1.bf16.msra.mxu0 %v878
        %958 = vmatprep.subr.bf16.mxu0 0
        %959 = vmatpush1.bf16.msra.mxu0 %v879
        %960 = vmatprep.mubr.bf16.mxu0 %v729
        %961 = vmatmul.mubr.bf16.gmra.mrb[0].mxu0 %v722
        %v962 = vpop.f32.mrb[0].mxu0
        %v963 = vadd.f32 %v706, %v962
        %v964 = vpop.f32.mrb[0].mxu0
        %v965 = vpop.f32.mrb[0].mxu0
        %v966 = vpop.f32.mrb[0].mxu0
        %967 = vdwg.mxu0
        %968 = vmatprep.subr.bf16.mxu0 0
        %969 = vmatpush1.bf16.msra.mxu0 %v880
        %970 = vmatprep.subr.bf16.mxu0 0
        %971 = vmatpush1.bf16.msra.mxu0 %v881
        %972 = vmatprep.subr.bf16.mxu0 0
        %973 = vmatpush1.bf16.msra.mxu0 %v882
        %974 = vmatprep.subr.bf16.mxu0 0
        %975 = vmatpush1.bf16.msra.mxu0 %v883
        %976 = vmatprep.subr.bf16.mxu0 0
        %977 = vmatpush1.bf16.msra.mxu0 %v884
        %978 = vmatprep.subr.bf16.mxu0 0
        %979 = vmatpush1.bf16.msra.mxu0 %v885
        %980 = vmatprep.subr.bf16.mxu0 0
        %981 = vmatpush1.bf16.msra.mxu0 %v886
        %982 = vmatprep.subr.bf16.mxu0 0
        %983 = vmatpush1.bf16.msra.mxu0 %v887
        %984 = vmatprep.subr.bf16.mxu0 0
        %985 = vmatpush1.bf16.msra.mxu0 %v888
        %986 = vmatprep.subr.bf16.mxu0 0
        %987 = vmatpush1.bf16.msra.mxu0 %v889
        %988 = vmatprep.subr.bf16.mxu0 0
        %989 = vmatpush1.bf16.msra.mxu0 %v890
        %990 = vmatprep.subr.bf16.mxu0 0
        %991 = vmatpush1.bf16.msra.mxu0 %v891
        %992 = vmatprep.subr.bf16.mxu0 0
        %993 = vmatpush1.bf16.msra.mxu0 %v892
        %994 = vmatprep.subr.bf16.mxu0 0
        %995 = vmatpush1.bf16.msra.mxu0 %v893
        %996 = vmatprep.subr.bf16.mxu0 0
        %997 = vmatpush1.bf16.msra.mxu0 %v894
        %998 = vmatprep.subr.bf16.mxu0 0
        %999 = vmatpush1.bf16.msra.mxu0 %v895
        %1000 = vmatprep.mubr.bf16.mxu0 %v731
        %1001 = vmatmul.mubr.bf16.gmra.mrb[0].mxu0 %v730
        %v1002 = vpop.f32.mrb[0].mxu0
        %v1003 = vadd.f32 %v963, %v1002
        %v1004 = vpop.f32.mrb[0].mxu0
        %v1005 = vpop.f32.mrb[0].mxu0
        %v1006 = vpop.f32.mrb[0].mxu0
        %1007 = vdwg.mxu0
        %v1008 = vld [vmem:[%s586] sm:$0xf]
        %v1009 = vld [vmem:[%s586 + $0x4] sm:$0xf]
        %v1010 = vld [vmem:[%s586 + $0x8] sm:$0xf]
        %v1011 = vld [vmem:[%s586 + $0xc] sm:$0xf]
        %v1012 = vld [vmem:[%s586 + $0x10] sm:$0xf]
        %v1013 = vld [vmem:[%s586 + $0x14] sm:$0xf]
        %v1014 = vld [vmem:[%s586 + $0x18] sm:$0xf]
        %v1015 = vld [vmem:[%s586 + $0x1c] sm:$0xf]
        %v1016 = vld [vmem:[%s586 + $0x20] sm:$0xf]
        %v1017 = vld [vmem:[%s586 + $0x24] sm:$0xf]
        %v1018 = vld [vmem:[%s586 + $0x28] sm:$0xf]
        %v1019 = vld [vmem:[%s586 + $0x2c] sm:$0xf]
        %v1020 = vld [vmem:[%s586 + $0x30] sm:$0xf]
        %v1021 = vld [vmem:[%s586 + $0x34] sm:$0xf]
        %v1022 = vld [vmem:[%s586 + $0x38] sm:$0xf]
        %v1023 = vld [vmem:[%s586 + $0x3c] sm:$0xf]
        %v1024 = vld [vmem:[%s586 + $0x40] sm:$0xf]
        %v1025 = vld [vmem:[%s586 + $0x44] sm:$0xf]
        %v1026 = vld [vmem:[%s586 + $0x48] sm:$0xf]
        %v1027 = vld [vmem:[%s586 + $0x4c] sm:$0xf]
        %v1028 = vld [vmem:[%s586 + $0x50] sm:$0xf]
        %v1029 = vld [vmem:[%s586 + $0x54] sm:$0xf]
        %v1030 = vld [vmem:[%s586 + $0x58] sm:$0xf]
        %v1031 = vld [vmem:[%s586 + $0x5c] sm:$0xf]
        %v1032 = vld [vmem:[%s586 + $0x60] sm:$0xf]
        %v1033 = vld [vmem:[%s586 + $0x64] sm:$0xf]
        %v1034 = vld [vmem:[%s586 + $0x68] sm:$0xf]
        %v1035 = vld [vmem:[%s586 + $0x6c] sm:$0xf]
        %v1036 = vld [vmem:[%s586 + $0x70] sm:$0xf]
        %v1037 = vld [vmem:[%s586 + $0x74] sm:$0xf]
        %v1038 = vld [vmem:[%s586 + $0x78] sm:$0xf]
        %v1039 = vld [vmem:[%s586 + $0x7c] sm:$0xf]
        %v1040 = vld [vmem:[%s586 + $0x80] sm:$0xf]
        %v1041 = vld [vmem:[%s586 + $0x84] sm:$0xf]
        %v1042 = vld [vmem:[%s586 + $0x88] sm:$0xf]
        %v1043 = vld [vmem:[%s586 + $0x8c] sm:$0xf]
        %v1044 = vld [vmem:[%s586 + $0x90] sm:$0xf]
        %v1045 = vld [vmem:[%s586 + $0x94] sm:$0xf]
        %v1046 = vld [vmem:[%s586 + $0x98] sm:$0xf]
        %v1047 = vld [vmem:[%s586 + $0x9c] sm:$0xf]
        %v1048 = vld [vmem:[%s586 + $0xa0] sm:$0xf]
        %v1049 = vld [vmem:[%s586 + $0xa4] sm:$0xf]
        %v1050 = vld [vmem:[%s586 + $0xa8] sm:$0xf]
        %v1051 = vld [vmem:[%s586 + $0xac] sm:$0xf]
        %v1052 = vld [vmem:[%s586 + $0xb0] sm:$0xf]
        %v1053 = vld [vmem:[%s586 + $0xb4] sm:$0xf]
        %v1054 = vld [vmem:[%s586 + $0xb8] sm:$0xf]
        %v1055 = vld [vmem:[%s586 + $0xbc] sm:$0xf]
        %v1056 = vld [vmem:[%s586 + $0xc0] sm:$0xf]
        %v1057 = vld [vmem:[%s586 + $0xc4] sm:$0xf]
        %v1058 = vld [vmem:[%s586 + $0xc8] sm:$0xf]
        %v1059 = vld [vmem:[%s586 + $0xcc] sm:$0xf]
        %v1060 = vld [vmem:[%s586 + $0xd0] sm:$0xf]
        %v1061 = vld [vmem:[%s586 + $0xd4] sm:$0xf]
        %v1062 = vld [vmem:[%s586 + $0xd8] sm:$0xf]
        %v1063 = vld [vmem:[%s586 + $0xdc] sm:$0xf]
        %v1064 = vld [vmem:[%s586 + $0xe0] sm:$0xf]
        %v1065 = vld [vmem:[%s586 + $0xe4] sm:$0xf]
        %v1066 = vld [vmem:[%s586 + $0xe8] sm:$0xf]
        %v1067 = vld [vmem:[%s586 + $0xec] sm:$0xf]
        %v1068 = vld [vmem:[%s586 + $0xf0] sm:$0xf]
        %v1069 = vld [vmem:[%s586 + $0xf4] sm:$0xf]
        %v1070 = vld [vmem:[%s586 + $0xf8] sm:$0xf]
        %v1071 = vld [vmem:[%s586 + $0xfc] sm:$0xf]
        %v1072 = vstv %s623
        %v1073 = vmul.f32 %v1072, %v1003
        %v1074 = vstv %s621
        %v1075 = vadd.f32 %v1073, %v1074
        %v1076 = vstv %s624
        %v1077 = vmul.f32 %v1076, %v1075
        %v1080 = vunpack.c.l.s4 1966171168
        %v1081 = vunpack.c.0.s8 %v1080
        %v1082 = vlaneseq
        %v1083 = vshrl.u32 %v1082, 7
        %v1084 = vsub.s32 %v1081, %v1083
        %v1085 = vrot.slane %v629, %v1084
        %v1086 = vcombine.high %v1085, %v1085
        %v1088 = vunpack.c.l.s4 1966171168
        %v1089 = vunpack.c.0.s8 %v1088
        %v1090 = vlaneseq
        %v1091 = vshrl.u32 %v1090, 7
        %v1092 = vsub.s32 %v1089, %v1091
        %v1093 = vrot.slane %v1085, %v1092
        %v1095 = vunpack.c.l.s4 1966171168
        %v1096 = vunpack.c.0.s8 %v1095
        %v1097 = vlaneseq
        %v1098 = vshrl.u32 %v1097, 7
        %v1099 = vsub.s32 %v1096, %v1098
        %v1100 = vrot.slane %v1086, %v1099
        %v1101 = vcombine.high %v1093, %v1093
        %v1102 = vcombine.high %v1100, %v1100
        %v1171 = vunpack.c.l.b16 %v1008
        %v1172 = vunpack.c.l.b16 %v1009
        %v1173 = vunpack.c.l.b16 %v1010
        %v1174 = vunpack.c.l.b16 %v1011
        %v1175 = vunpack.c.l.b16 %v1012
        %v1176 = vunpack.c.l.b16 %v1013
        %v1177 = vunpack.c.l.b16 %v1014
        %v1178 = vunpack.c.l.b16 %v1015
        %v1179 = vunpack.c.l.b16 %v1016
        %v1180 = vunpack.c.l.b16 %v1017
        %v1181 = vunpack.c.l.b16 %v1018
        %v1182 = vunpack.c.l.b16 %v1019
        %v1183 = vunpack.c.l.b16 %v1020
        %v1184 = vunpack.c.l.b16 %v1021
        %v1185 = vunpack.c.l.b16 %v1022
        %v1186 = vunpack.c.l.b16 %v1023
        %v1187 = vunpack.c.l.b16 %v1024
        %v1188 = vunpack.c.l.b16 %v1025
        %v1189 = vunpack.c.l.b16 %v1026
        %v1190 = vunpack.c.l.b16 %v1027
        %v1191 = vunpack.c.l.b16 %v1028
        %v1192 = vunpack.c.l.b16 %v1029
        %v1193 = vunpack.c.l.b16 %v1030
        %v1194 = vunpack.c.l.b16 %v1031
        %v1195 = vunpack.c.l.b16 %v1032
        %v1196 = vunpack.c.l.b16 %v1033
        %v1197 = vunpack.c.l.b16 %v1034
        %v1198 = vunpack.c.l.b16 %v1035
        %v1199 = vunpack.c.l.b16 %v1036
        %v1200 = vunpack.c.l.b16 %v1037
        %v1201 = vunpack.c.l.b16 %v1038
        %v1202 = vunpack.c.l.b16 %v1039
        %v1203 = vunpack.c.l.b16 %v1040
        %v1204 = vunpack.c.l.b16 %v1041
        %v1205 = vunpack.c.l.b16 %v1042
        %v1206 = vunpack.c.l.b16 %v1043
        %v1207 = vunpack.c.l.b16 %v1044
        %v1208 = vunpack.c.l.b16 %v1045
        %v1209 = vunpack.c.l.b16 %v1046
        %v1210 = vunpack.c.l.b16 %v1047
        %v1211 = vunpack.c.l.b16 %v1048
        %v1212 = vunpack.c.l.b16 %v1049
        %v1213 = vunpack.c.l.b16 %v1050
        %v1214 = vunpack.c.l.b16 %v1051
        %v1215 = vunpack.c.l.b16 %v1052
        %v1216 = vunpack.c.l.b16 %v1053
        %v1217 = vunpack.c.l.b16 %v1054
        %v1218 = vunpack.c.l.b16 %v1055
        %v1219 = vunpack.c.l.b16 %v1056
        %v1220 = vunpack.c.l.b16 %v1057
        %v1221 = vunpack.c.l.b16 %v1058
        %v1222 = vunpack.c.l.b16 %v1059
        %v1223 = vunpack.c.l.b16 %v1060
        %v1224 = vunpack.c.l.b16 %v1061
        %v1225 = vunpack.c.l.b16 %v1062
        %v1226 = vunpack.c.l.b16 %v1063
        %v1227 = vunpack.c.l.b16 %v1064
        %v1228 = vunpack.c.l.b16 %v1065
        %v1229 = vunpack.c.l.b16 %v1066
        %v1230 = vunpack.c.l.b16 %v1067
        %v1231 = vunpack.c.l.b16 %v1068
        %v1232 = vunpack.c.l.b16 %v1069
        %v1233 = vunpack.c.l.b16 %v1070
        %v1234 = vunpack.c.l.b16 %v1071
        %v1235 = vpack.c.b16 %v1172, %v1171
        %v1236 = vpack.c.b16 %v1174, %v1173
        %v1237 = vpack.c.b16 %v1176, %v1175
        %v1238 = vpack.c.b16 %v1178, %v1177
        %v1239 = vpack.c.b16 %v1180, %v1179
        %v1240 = vpack.c.b16 %v1182, %v1181
        %v1241 = vpack.c.b16 %v1184, %v1183
        %v1242 = vpack.c.b16 %v1186, %v1185
        %v1243 = vpack.c.b16 %v1188, %v1187
        %v1244 = vpack.c.b16 %v1190, %v1189
        %v1245 = vpack.c.b16 %v1192, %v1191
        %v1246 = vpack.c.b16 %v1194, %v1193
        %v1247 = vpack.c.b16 %v1196, %v1195
        %v1248 = vpack.c.b16 %v1198, %v1197
        %v1249 = vpack.c.b16 %v1200, %v1199
        %v1250 = vpack.c.b16 %v1202, %v1201
        %v1251 = vpack.c.b16 %v1204, %v1203
        %v1252 = vpack.c.b16 %v1206, %v1205
        %v1253 = vpack.c.b16 %v1208, %v1207
        %v1254 = vpack.c.b16 %v1210, %v1209
        %v1255 = vpack.c.b16 %v1212, %v1211
        %v1256 = vpack.c.b16 %v1214, %v1213
        %v1257 = vpack.c.b16 %v1216, %v1215
        %v1258 = vpack.c.b16 %v1218, %v1217
        %v1259 = vpack.c.b16 %v1220, %v1219
        %v1260 = vpack.c.b16 %v1222, %v1221
        %v1261 = vpack.c.b16 %v1224, %v1223
        %v1262 = vpack.c.b16 %v1226, %v1225
        %v1263 = vpack.c.b16 %v1228, %v1227
        %v1264 = vpack.c.b16 %v1230, %v1229
        %v1265 = vpack.c.b16 %v1232, %v1231
        %v1266 = vpack.c.b16 %v1234, %v1233
        %1299 = vmatprep.subr.bf16.mxu0 0
        %1300 = vmatpush1.bf16.msra.mxu0 %v1235
        %1301 = vmatprep.subr.bf16.mxu0 0
        %1302 = vmatpush1.bf16.msra.mxu0 %v1236
        %1303 = vmatprep.subr.bf16.mxu0 0
        %1304 = vmatpush1.bf16.msra.mxu0 %v1237
        %1305 = vmatprep.subr.bf16.mxu0 0
        %1306 = vmatpush1.bf16.msra.mxu0 %v1238
        %1307 = vmatprep.subr.bf16.mxu0 0
        %1308 = vmatpush1.bf16.msra.mxu0 %v1239
        %1309 = vmatprep.subr.bf16.mxu0 0
        %1310 = vmatpush1.bf16.msra.mxu0 %v1240
        %1311 = vmatprep.subr.bf16.mxu0 0
        %1312 = vmatpush1.bf16.msra.mxu0 %v1241
        %1313 = vmatprep.subr.bf16.mxu0 0
        %1314 = vmatpush1.bf16.msra.mxu0 %v1242
        %1315 = vmatprep.subr.bf16.mxu0 0
        %1316 = vmatpush1.bf16.msra.mxu0 %v1243
        %1317 = vmatprep.subr.bf16.mxu0 0
        %1318 = vmatpush1.bf16.msra.mxu0 %v1244
        %1319 = vmatprep.subr.bf16.mxu0 0
        %1320 = vmatpush1.bf16.msra.mxu0 %v1245
        %1321 = vmatprep.subr.bf16.mxu0 0
        %1322 = vmatpush1.bf16.msra.mxu0 %v1246
        %1323 = vmatprep.subr.bf16.mxu0 0
        %1324 = vmatpush1.bf16.msra.mxu0 %v1247
        %1325 = vmatprep.subr.bf16.mxu0 0
        %1326 = vmatpush1.bf16.msra.mxu0 %v1248
        %1327 = vmatprep.subr.bf16.mxu0 0
        %1328 = vmatpush1.bf16.msra.mxu0 %v1249
        %1329 = vmatprep.subr.bf16.mxu0 0
        %1330 = vmatpush1.bf16.msra.mxu0 %v1250
        %1331 = vmatprep.mubr.bf16.mxu0 %v1100
        %1332 = vmatmul.mubr.bf16.gmra.mrb[0].mxu0 %v1093
        %v1333 = vpop.f32.mrb[0].mxu0
        %v1334 = vadd.f32 %v1077, %v1333
        %v1335 = vpop.f32.mrb[0].mxu0
        %v1336 = vpop.f32.mrb[0].mxu0
        %v1337 = vpop.f32.mrb[0].mxu0
        %1338 = vdwg.mxu0
        %1339 = vmatprep.subr.bf16.mxu0 0
        %1340 = vmatpush1.bf16.msra.mxu0 %v1251
        %1341 = vmatprep.subr.bf16.mxu0 0
        %1342 = vmatpush1.bf16.msra.mxu0 %v1252
        %1343 = vmatprep.subr.bf16.mxu0 0
        %1344 = vmatpush1.bf16.msra.mxu0 %v1253
        %1345 = vmatprep.subr.bf16.mxu0 0
        %1346 = vmatpush1.bf16.msra.mxu0 %v1254
        %1347 = vmatprep.subr.bf16.mxu0 0
        %1348 = vmatpush1.bf16.msra.mxu0 %v1255
        %1349 = vmatprep.subr.bf16.mxu0 0
        %1350 = vmatpush1.bf16.msra.mxu0 %v1256
        %1351 = vmatprep.subr.bf16.mxu0 0
        %1352 = vmatpush1.bf16.msra.mxu0 %v1257
        %1353 = vmatprep.subr.bf16.mxu0 0
        %1354 = vmatpush1.bf16.msra.mxu0 %v1258
        %1355 = vmatprep.subr.bf16.mxu0 0
        %1356 = vmatpush1.bf16.msra.mxu0 %v1259
        %1357 = vmatprep.subr.bf16.mxu0 0
        %1358 = vmatpush1.bf16.msra.mxu0 %v1260
        %1359 = vmatprep.subr.bf16.mxu0 0
        %1360 = vmatpush1.bf16.msra.mxu0 %v1261
        %1361 = vmatprep.subr.bf16.mxu0 0
        %1362 = vmatpush1.bf16.msra.mxu0 %v1262
        %1363 = vmatprep.subr.bf16.mxu0 0
        %1364 = vmatpush1.bf16.msra.mxu0 %v1263
        %1365 = vmatprep.subr.bf16.mxu0 0
        %1366 = vmatpush1.bf16.msra.mxu0 %v1264
        %1367 = vmatprep.subr.bf16.mxu0 0
        %1368 = vmatpush1.bf16.msra.mxu0 %v1265
        %1369 = vmatprep.subr.bf16.mxu0 0
        %1370 = vmatpush1.bf16.msra.mxu0 %v1266
        %1371 = vmatprep.mubr.bf16.mxu0 %v1102
        %1372 = vmatmul.mubr.bf16.gmra.mrb[0].mxu0 %v1101
        %v1373 = vpop.f32.mrb[0].mxu0
        %v1374 = vadd.f32 %v1334, %v1373
        %v1375 = vpop.f32.mrb[0].mxu0
        %v1376 = vpop.f32.mrb[0].mxu0
        %v1377 = vpop.f32.mrb[0].mxu0
        %1378 = vdwg.mxu0
        %v1379 = vstv %s617
        %v1380 = vadd.f32 %v1374, %v1379
        %v1381 = vld [vmem:[%s593] sm:$0xf]
        %v1382 = vld [vmem:[%s593 + $0x4] sm:$0xf]
        %v1383 = vld [vmem:[%s593 + $0x8] sm:$0xf]
        %v1384 = vld [vmem:[%s593 + $0xc] sm:$0xf]
        %v1385 = vld [vmem:[%s593 + $0x10] sm:$0xf]
        %v1386 = vld [vmem:[%s593 + $0x14] sm:$0xf]
        %v1387 = vld [vmem:[%s593 + $0x18] sm:$0xf]
        %v1388 = vld [vmem:[%s593 + $0x1c] sm:$0xf]
        %v1389 = vld [vmem:[%s593 + $0x20] sm:$0xf]
        %v1390 = vld [vmem:[%s593 + $0x24] sm:$0xf]
        %v1391 = vld [vmem:[%s593 + $0x28] sm:$0xf]
        %v1392 = vld [vmem:[%s593 + $0x2c] sm:$0xf]
        %v1393 = vld [vmem:[%s593 + $0x30] sm:$0xf]
        %v1394 = vld [vmem:[%s593 + $0x34] sm:$0xf]
        %v1395 = vld [vmem:[%s593 + $0x38] sm:$0xf]
        %v1396 = vld [vmem:[%s593 + $0x3c] sm:$0xf]
        %v1397 = vld [vmem:[%s593 + $0x40] sm:$0xf]
        %v1398 = vld [vmem:[%s593 + $0x44] sm:$0xf]
        %v1399 = vld [vmem:[%s593 + $0x48] sm:$0xf]
        %v1400 = vld [vmem:[%s593 + $0x4c] sm:$0xf]
        %v1401 = vld [vmem:[%s593 + $0x50] sm:$0xf]
        %v1402 = vld [vmem:[%s593 + $0x54] sm:$0xf]
        %v1403 = vld [vmem:[%s593 + $0x58] sm:$0xf]
        %v1404 = vld [vmem:[%s593 + $0x5c] sm:$0xf]
        %v1405 = vld [vmem:[%s593 + $0x60] sm:$0xf]
        %v1406 = vld [vmem:[%s593 + $0x64] sm:$0xf]
        %v1407 = vld [vmem:[%s593 + $0x68] sm:$0xf]
        %v1408 = vld [vmem:[%s593 + $0x6c] sm:$0xf]
        %v1409 = vld [vmem:[%s593 + $0x70] sm:$0xf]
        %v1410 = vld [vmem:[%s593 + $0x74] sm:$0xf]
        %v1411 = vld [vmem:[%s593 + $0x78] sm:$0xf]
        %v1412 = vld [vmem:[%s593 + $0x7c] sm:$0xf]
        %v1413 = vmul.f32 %v1072, %v1380
        %v1414 = vadd.f32 %v1413, %v1074
        %v1415 = vstv %s625
        %v1416 = vmul.f32 %v1415, %v1414
        %v1419 = vunpack.c.l.s4 1966171168
        %v1420 = vunpack.c.0.s8 %v1419
        %v1421 = vlaneseq
        %v1422 = vshrl.u32 %v1421, 7
        %v1423 = vsub.s32 %v1420, %v1422
        %v1424 = vrot.slane %v630, %v1423
        %v1425 = vcombine.high %v1424, %v1424
        %v1427 = vunpack.c.l.s4 1966171168
        %v1428 = vunpack.c.0.s8 %v1427
        %v1429 = vlaneseq
        %v1430 = vshrl.u32 %v1429, 7
        %v1431 = vsub.s32 %v1428, %v1430
        %v1432 = vrot.slane %v1424, %v1431
        %v1434 = vunpack.c.l.s4 1966171168
        %v1435 = vunpack.c.0.s8 %v1434
        %v1436 = vlaneseq
        %v1437 = vshrl.u32 %v1436, 7
        %v1438 = vsub.s32 %v1435, %v1437
        %v1439 = vrot.slane %v1425, %v1438
        %v1474 = vunpack.c.l.b16 %v1381
        %v1475 = vunpack.c.l.b16 %v1382
        %v1476 = vunpack.c.l.b16 %v1383
        %v1477 = vunpack.c.l.b16 %v1384
        %v1478 = vunpack.c.l.b16 %v1385
        %v1479 = vunpack.c.l.b16 %v1386
        %v1480 = vunpack.c.l.b16 %v1387
        %v1481 = vunpack.c.l.b16 %v1388
        %v1482 = vunpack.c.l.b16 %v1389
        %v1483 = vunpack.c.l.b16 %v1390
        %v1484 = vunpack.c.l.b16 %v1391
        %v1485 = vunpack.c.l.b16 %v1392
        %v1486 = vunpack.c.l.b16 %v1393
        %v1487 = vunpack.c.l.b16 %v1394
        %v1488 = vunpack.c.l.b16 %v1395
        %v1489 = vunpack.c.l.b16 %v1396
        %v1490 = vunpack.c.l.b16 %v1397
        %v1491 = vunpack.c.l.b16 %v1398
        %v1492 = vunpack.c.l.b16 %v1399
        %v1493 = vunpack.c.l.b16 %v1400
        %v1494 = vunpack.c.l.b16 %v1401
        %v1495 = vunpack.c.l.b16 %v1402
        %v1496 = vunpack.c.l.b16 %v1403
        %v1497 = vunpack.c.l.b16 %v1404
        %v1498 = vunpack.c.l.b16 %v1405
        %v1499 = vunpack.c.l.b16 %v1406
        %v1500 = vunpack.c.l.b16 %v1407
        %v1501 = vunpack.c.l.b16 %v1408
        %v1502 = vunpack.c.l.b16 %v1409
        %v1503 = vunpack.c.l.b16 %v1410
        %v1504 = vunpack.c.l.b16 %v1411
        %v1505 = vunpack.c.l.b16 %v1412
        %v1506 = vpack.c.b16 %v1475, %v1474
        %v1507 = vpack.c.b16 %v1477, %v1476
        %v1508 = vpack.c.b16 %v1479, %v1478
        %v1509 = vpack.c.b16 %v1481, %v1480
        %v1510 = vpack.c.b16 %v1483, %v1482
        %v1511 = vpack.c.b16 %v1485, %v1484
        %v1512 = vpack.c.b16 %v1487, %v1486
        %v1513 = vpack.c.b16 %v1489, %v1488
        %v1514 = vpack.c.b16 %v1491, %v1490
        %v1515 = vpack.c.b16 %v1493, %v1492
        %v1516 = vpack.c.b16 %v1495, %v1494
        %v1517 = vpack.c.b16 %v1497, %v1496
        %v1518 = vpack.c.b16 %v1499, %v1498
        %v1519 = vpack.c.b16 %v1501, %v1500
        %v1520 = vpack.c.b16 %v1503, %v1502
        %v1521 = vpack.c.b16 %v1505, %v1504
        %1538 = vmatprep.subr.bf16.mxu0 0
        %1539 = vmatpush1.bf16.msra.mxu0 %v1506
        %1540 = vmatprep.subr.bf16.mxu0 0
        %1541 = vmatpush1.bf16.msra.mxu0 %v1507
        %1542 = vmatprep.subr.bf16.mxu0 0
        %1543 = vmatpush1.bf16.msra.mxu0 %v1508
        %1544 = vmatprep.subr.bf16.mxu0 0
        %1545 = vmatpush1.bf16.msra.mxu0 %v1509
        %1546 = vmatprep.subr.bf16.mxu0 0
        %1547 = vmatpush1.bf16.msra.mxu0 %v1510
        %1548 = vmatprep.subr.bf16.mxu0 0
        %1549 = vmatpush1.bf16.msra.mxu0 %v1511
        %1550 = vmatprep.subr.bf16.mxu0 0
        %1551 = vmatpush1.bf16.msra.mxu0 %v1512
        %1552 = vmatprep.subr.bf16.mxu0 0
        %1553 = vmatpush1.bf16.msra.mxu0 %v1513
        %1554 = vmatprep.subr.bf16.mxu0 0
        %1555 = vmatpush1.bf16.msra.mxu0 %v1514
        %1556 = vmatprep.subr.bf16.mxu0 0
        %1557 = vmatpush1.bf16.msra.mxu0 %v1515
        %1558 = vmatprep.subr.bf16.mxu0 0
        %1559 = vmatpush1.bf16.msra.mxu0 %v1516
        %1560 = vmatprep.subr.bf16.mxu0 0
        %1561 = vmatpush1.bf16.msra.mxu0 %v1517
        %1562 = vmatprep.subr.bf16.mxu0 0
        %1563 = vmatpush1.bf16.msra.mxu0 %v1518
        %1564 = vmatprep.subr.bf16.mxu0 0
        %1565 = vmatpush1.bf16.msra.mxu0 %v1519
        %1566 = vmatprep.subr.bf16.mxu0 0
        %1567 = vmatpush1.bf16.msra.mxu0 %v1520
        %1568 = vmatprep.subr.bf16.mxu0 0
        %1569 = vmatpush1.bf16.msra.mxu0 %v1521
        %1570 = vmatprep.mubr.bf16.mxu0 %v1439
        %1571 = vmatmul.mubr.bf16.gmra.mrb[0].mxu0 %v1432
        %v1572 = vpop.f32.mrb[0].mxu0
        %v1573 = vadd.f32 %v1416, %v1572
        %v1574 = vpop.f32.mrb[0].mxu0
        %v1575 = vpop.f32.mrb[0].mxu0
        %v1576 = vpop.f32.mrb[0].mxu0
        %1577 = vdwg.mxu0
        %v1578 = vstv %s618
        %v1579 = vadd.f32 %v1573, %v1578
        %1581 = vset.pattern.permute.xlu0 0
        %1582 = vperm.xlu0 %1581, %v633
        %v1583 = vpop.permute.xlu0 %1582
        %1586 = vset.pattern.permute.xlu0 0
        %1587 = vperm.xlu0 %1586, %v634
        %v1588 = vpop.permute.xlu0 %1587
        %v1590 = vlaneseq
        %v1591 = vshrl.u32 %v1590, 7
        %v1592 = vsub.s32 0, %v1591
        %v1593 = vrot.slane %v1579, %v1592
        %v1594 = vmul.f32 %v1583, %v1593
        %v1595 = vmul.f32 %v1588, %v1593
        %v1596 = vadd.f32 %v1594, 0.0
        %v1597 = vadd.f32 %v1595, 0.0
        %1598 = vset.pattern.permute.xlu0 1
        %1599 = vperm.xlu0 %1598, %v633
        %v1600 = vpop.permute.xlu0 %1599
        %1602 = vset.pattern.permute.xlu0 1
        %1603 = vperm.xlu0 %1602, %v634
        %v1604 = vpop.permute.xlu0 %1603
        %v1606 = vmul.f32 %v1600, %v1593
        %v1607 = vmul.f32 %v1604, %v1593
        %1610 = vrot.lane.b32.xlu0 %v1606, 120
        %v1611 = vpop.permute.xlu0 %1610
        %1612 = vrot.lane.b32.xlu0 %v1607, 120
        %v1613 = vpop.permute.xlu0 %1612
        %v1616 = vadd.f32 %v1596, %v1611
        %v1617 = vadd.f32 %v1597, %v1613
        %1618 = vset.pattern.permute.xlu0 2
        %1619 = vperm.xlu0 %1618, %v633
        %v1620 = vpop.permute.xlu0 %1619
        %1622 = vset.pattern.permute.xlu0 2
        %1623 = vperm.xlu0 %1622, %v634
        %v1624 = vpop.permute.xlu0 %1623
        %v1626 = vmul.f32 %v1620, %v1593
        %v1627 = vmul.f32 %v1624, %v1593
        %1630 = vrot.lane.b32.xlu0 %v1626, 112
        %v1631 = vpop.permute.xlu0 %1630
        %1632 = vrot.lane.b32.xlu0 %v1627, 112
        %v1633 = vpop.permute.xlu0 %1632
        %v1636 = vadd.f32 %v1616, %v1631
        %v1637 = vadd.f32 %v1617, %v1633
        %1638 = vset.pattern.permute.xlu0 3
        %1639 = vperm.xlu0 %1638, %v633
        %v1640 = vpop.permute.xlu0 %1639
        %1642 = vset.pattern.permute.xlu0 3
        %1643 = vperm.xlu0 %1642, %v634
        %v1644 = vpop.permute.xlu0 %1643
        %v1646 = vmul.f32 %v1640, %v1593
        %v1647 = vmul.f32 %v1644, %v1593
        %1650 = vrot.lane.b32.xlu0 %v1646, 104
        %v1651 = vpop.permute.xlu0 %1650
        %1652 = vrot.lane.b32.xlu0 %v1647, 104
        %v1653 = vpop.permute.xlu0 %1652
        %v1656 = vadd.f32 %v1636, %v1651
        %v1657 = vadd.f32 %v1637, %v1653
        %1658 = vset.pattern.permute.xlu0 4
        %1659 = vperm.xlu0 %1658, %v633
        %v1660 = vpop.permute.xlu0 %1659
        %1662 = vset.pattern.permute.xlu0 4
        %1663 = vperm.xlu0 %1662, %v634
        %v1664 = vpop.permute.xlu0 %1663
        %v1666 = vmul.f32 %v1660, %v1593
        %v1667 = vmul.f32 %v1664, %v1593
        %1670 = vrot.lane.b32.xlu0 %v1666, 96
        %v1671 = vpop.permute.xlu0 %1670
        %1672 = vrot.lane.b32.xlu0 %v1667, 96
        %v1673 = vpop.permute.xlu0 %1672
        %v1676 = vadd.f32 %v1656, %v1671
        %v1677 = vadd.f32 %v1657, %v1673
        %1678 = vset.pattern.permute.xlu0 5
        %1679 = vperm.xlu0 %1678, %v633
        %v1680 = vpop.permute.xlu0 %1679
        %1682 = vset.pattern.permute.xlu0 5
        %1683 = vperm.xlu0 %1682, %v634
        %v1684 = vpop.permute.xlu0 %1683
        %v1686 = vmul.f32 %v1680, %v1593
        %v1687 = vmul.f32 %v1684, %v1593
        %1690 = vrot.lane.b32.xlu0 %v1686, 88
        %v1691 = vpop.permute.xlu0 %1690
        %1692 = vrot.lane.b32.xlu0 %v1687, 88
        %v1693 = vpop.permute.xlu0 %1692
        %v1696 = vadd.f32 %v1676, %v1691
        %v1697 = vadd.f32 %v1677, %v1693
        %1698 = vset.pattern.permute.xlu0 6
        %1699 = vperm.xlu0 %1698, %v633
        %v1700 = vpop.permute.xlu0 %1699
        %1702 = vset.pattern.permute.xlu0 6
        %1703 = vperm.xlu0 %1702, %v634
        %v1704 = vpop.permute.xlu0 %1703
        %v1706 = vmul.f32 %v1700, %v1593
        %v1707 = vmul.f32 %v1704, %v1593
        %1710 = vrot.lane.b32.xlu0 %v1706, 80
        %v1711 = vpop.permute.xlu0 %1710
        %1712 = vrot.lane.b32.xlu0 %v1707, 80
        %v1713 = vpop.permute.xlu0 %1712
        %v1716 = vadd.f32 %v1696, %v1711
        %v1717 = vadd.f32 %v1697, %v1713
        %1718 = vset.pattern.permute.xlu0 7
        %1719 = vperm.xlu0 %1718, %v633
        %v1720 = vpop.permute.xlu0 %1719
        %1722 = vset.pattern.permute.xlu0 7
        %1723 = vperm.xlu0 %1722, %v634
        %v1724 = vpop.permute.xlu0 %1723
        %v1726 = vmul.f32 %v1720, %v1593
        %v1727 = vmul.f32 %v1724, %v1593
        %1730 = vrot.lane.b32.xlu0 %v1726, 72
        %v1731 = vpop.permute.xlu0 %1730
        %1732 = vrot.lane.b32.xlu0 %v1727, 72
        %v1733 = vpop.permute.xlu0 %1732
        %v1736 = vadd.f32 %v1716, %v1731
        %v1737 = vadd.f32 %v1717, %v1733
        %vm1738 = vcmask 64512
        %v1740 = vsel %vm1738, %v1736, 0
        %v1743 = vsel %vm1738, %v1737, 0
        %1745 = vmatprep.subr.mxu0 0.0
        %1746 = vmatpush1.msra.mxu0 %v635
        %1747 = vmatprep.subr.mxu0 0.0
        %1748 = vmatpush1.msra.mxu0 0.0
        %1749 = vmatprep.subr.mxu0 0.0
        %1750 = vmatpush1.msra.mxu0 0.0
        %1751 = vmatprep.subr.mxu0 0.0
        %1752 = vmatpush1.msra.mxu0 0.0
        %1753 = vmatprep.subr.mxu0 0.0
        %1754 = vmatpush1.msra.mxu0 0.0
        %1755 = vmatprep.subr.mxu0 0.0
        %1756 = vmatpush1.msra.mxu0 0.0
        %1757 = vmatprep.subr.mxu0 0.0
        %1758 = vmatpush1.msra.mxu0 0.0
        %1759 = vmatprep.subr.mxu0 0.0
        %1760 = vmatpush1.msra.mxu0 0.0
        %1761 = vmatprep.subr.mxu0 0.0
        %1762 = vmatpush1.msra.mxu0 0.0
        %1763 = vmatprep.subr.mxu0 0.0
        %1764 = vmatpush1.msra.mxu0 0.0
        %1765 = vmatprep.subr.mxu0 0.0
        %1766 = vmatpush1.msra.mxu0 0.0
        %1767 = vmatprep.subr.mxu0 0.0
        %1768 = vmatpush1.msra.mxu0 0.0
        %1769 = vmatprep.subr.mxu0 0.0
        %1770 = vmatpush1.msra.mxu0 0.0
        %1771 = vmatprep.subr.mxu0 0.0
        %1772 = vmatpush1.msra.mxu0 0.0
        %1773 = vmatprep.subr.mxu0 0.0
        %1774 = vmatpush1.msra.mxu0 0.0
        %1775 = vmatprep.subr.mxu0 0.0
        %1776 = vmatpush1.msra.mxu0 0.0
        %1777 = vmatprep.subr.mxu0 0.0
        %1778 = vmatpush1.msra.mxu0 0.0
        %1779 = vmatprep.subr.mxu0 0.0
        %1780 = vmatpush1.msra.mxu0 0.0
        %1781 = vmatprep.subr.mxu0 0.0
        %1782 = vmatpush1.msra.mxu0 0.0
        %1783 = vmatprep.subr.mxu0 0.0
        %1784 = vmatpush1.msra.mxu0 0.0
        %1785 = vmatprep.subr.mxu0 0.0
        %1786 = vmatpush1.msra.mxu0 0.0
        %1787 = vmatprep.subr.mxu0 0.0
        %1788 = vmatpush1.msra.mxu0 0.0
        %1789 = vmatprep.subr.mxu0 0.0
        %1790 = vmatpush1.msra.mxu0 0.0
        %1791 = vmatprep.subr.mxu0 0.0
        %1792 = vmatpush1.msra.mxu0 0.0
        %1793 = vmatprep.subr.mxu0 0.0
        %1794 = vmatpush1.msra.mxu0 0.0
        %1795 = vmatprep.subr.mxu0 0.0
        %1796 = vmatpush1.msra.mxu0 0.0
        %1797 = vmatprep.subr.mxu0 0.0
        %1798 = vmatpush1.msra.mxu0 0.0
        %1799 = vmatprep.subr.mxu0 0.0
        %1800 = vmatpush1.msra.mxu0 0.0
        %1801 = vmatprep.subr.mxu0 0.0
        %1802 = vmatpush1.msra.mxu0 0.0
        %1803 = vmatprep.subr.mxu0 0.0
        %1804 = vmatpush1.msra.mxu0 0.0
        %1805 = vmatprep.subr.mxu0 0.0
        %1806 = vmatpush1.msra.mxu0 0.0
        %1807 = vmatprep.subr.mxu0 0.0
        %1808 = vmatpush1.msra.mxu0 0.0
        %1809 = vmatprep.mubr.f32.mxu0 0.0
        %1810 = vmatmul.mubr.f32.gmra.mrb[0].mxu0 %v1740
        %v1811 = vpop.f32.mrb[0].mxu0
        %v1812 = vadd.f32 0.0, %v1811
        %v1813 = vpop.f32.mrb[0].mxu0
        %1814 = vmatprep.mubr.f32.mxu0 0.0
        %1815 = vmatmul.mubr.f32.gmra.mrb[0].mxu0 %v1743
        %v1816 = vpop.f32.mrb[0].mxu0
        %v1817 = vadd.f32 0.0, %v1816
        %v1818 = vpop.f32.mrb[0].mxu0
        %1819 = vdwg.mxu0
        %v1820 = vld [vmem:[%s600] sm:$0xff]
        %v1821 = vld [vmem:[%s600 + $0x8] sm:$0xff]
        %v1822 = vld [vmem:[%s600 + $0x10] sm:$0xff]
        %v1823 = vld [vmem:[%s600 + $0x18] sm:$0xff]
        %v1824 = vld [vmem:[%s600 + $0x20] sm:$0xff]
        %v1825 = vld [vmem:[%s600 + $0x28] sm:$0xff]
        %v1826 = vld [vmem:[%s600 + $0x30] sm:$0xff]
        %v1827 = vld [vmem:[%s600 + $0x38] sm:$0xff]
        %v1828 = vld [vmem:[%s600 + $0x40] sm:$0xff]
        %v1829 = vld [vmem:[%s600 + $0x48] sm:$0xff]
        %v1830 = vld [vmem:[%s600 + $0x50] sm:$0xff]
        %v1831 = vld [vmem:[%s600 + $0x58] sm:$0xff]
        %v1832 = vld [vmem:[%s600 + $0x60] sm:$0xff]
        %v1833 = vld [vmem:[%s600 + $0x68] sm:$0xff]
        %v1834 = vld [vmem:[%s600 + $0x70] sm:$0xff]
        %v1835 = vld [vmem:[%s600 + $0x78] sm:$0xff]
        %v1852 = vunpack.c.l.b16 %v1820
        %v1853 = vunpack.c.h.b16 %v1820
        %v1854 = vunpack.c.l.b16 %v1821
        %v1855 = vunpack.c.h.b16 %v1821
        %v1856 = vunpack.c.l.b16 %v1822
        %v1857 = vunpack.c.h.b16 %v1822
        %v1858 = vunpack.c.l.b16 %v1823
        %v1859 = vunpack.c.h.b16 %v1823
        %v1860 = vunpack.c.l.b16 %v1824
        %v1861 = vunpack.c.h.b16 %v1824
        %v1862 = vunpack.c.l.b16 %v1825
        %v1863 = vunpack.c.h.b16 %v1825
        %v1864 = vunpack.c.l.b16 %v1826
        %v1865 = vunpack.c.h.b16 %v1826
        %v1866 = vunpack.c.l.b16 %v1827
        %v1867 = vunpack.c.h.b16 %v1827
        %v1868 = vunpack.c.l.b16 %v1828
        %v1869 = vunpack.c.h.b16 %v1828
        %v1870 = vunpack.c.l.b16 %v1829
        %v1871 = vunpack.c.h.b16 %v1829
        %v1872 = vunpack.c.l.b16 %v1830
        %v1873 = vunpack.c.h.b16 %v1830
        %v1874 = vunpack.c.l.b16 %v1831
        %v1875 = vunpack.c.h.b16 %v1831
        %v1876 = vunpack.c.l.b16 %v1832
        %v1877 = vunpack.c.h.b16 %v1832
        %v1878 = vunpack.c.l.b16 %v1833
        %v1879 = vunpack.c.h.b16 %v1833
        %v1880 = vunpack.c.l.b16 %v1834
        %v1881 = vunpack.c.h.b16 %v1834
        %v1882 = vunpack.c.l.b16 %v1835
        %v1883 = vunpack.c.h.b16 %v1835
        %v1884 = vpack.c.b16 %v1854, %v1852
        %v1885 = vpack.c.b16 %v1855, %v1853
        %v1886 = vpack.c.b16 %v1858, %v1856
        %v1887 = vpack.c.b16 %v1859, %v1857
        %v1888 = vpack.c.b16 %v1862, %v1860
        %v1889 = vpack.c.b16 %v1863, %v1861
        %v1890 = vpack.c.b16 %v1866, %v1864
        %v1891 = vpack.c.b16 %v1867, %v1865
        %v1892 = vpack.c.b16 %v1870, %v1868
        %v1893 = vpack.c.b16 %v1871, %v1869
        %v1894 = vpack.c.b16 %v1874, %v1872
        %v1895 = vpack.c.b16 %v1875, %v1873
        %v1896 = vpack.c.b16 %v1878, %v1876
        %v1897 = vpack.c.b16 %v1879, %v1877
        %v1898 = vpack.c.b16 %v1882, %v1880
        %v1899 = vpack.c.b16 %v1883, %v1881
        %1916 = vmatprep.subr.bf16.mxu0 %v1885
        %1917 = vmatpush1.bf16.msra.mxu0 %v1884
        %1918 = vmatprep.subr.bf16.mxu0 %v1887
        %1919 = vmatpush1.bf16.msra.mxu0 %v1886
        %1920 = vmatprep.subr.bf16.mxu0 %v1889
        %1921 = vmatpush1.bf16.msra.mxu0 %v1888
        %1922 = vmatprep.subr.bf16.mxu0 %v1891
        %1923 = vmatpush1.bf16.msra.mxu0 %v1890
        %1924 = vmatprep.subr.bf16.mxu0 %v1893
        %1925 = vmatpush1.bf16.msra.mxu0 %v1892
        %1926 = vmatprep.subr.bf16.mxu0 %v1895
        %1927 = vmatpush1.bf16.msra.mxu0 %v1894
        %1928 = vmatprep.subr.bf16.mxu0 %v1897
        %1929 = vmatpush1.bf16.msra.mxu0 %v1896
        %1930 = vmatprep.subr.bf16.mxu0 %v1899
        %1931 = vmatpush1.bf16.msra.mxu0 %v1898
        %1932 = vmatprep.subr.bf16.mxu0 0
        %1933 = vmatpush1.bf16.msra.mxu0 0
        %1934 = vmatprep.subr.bf16.mxu0 0
        %1935 = vmatpush1.bf16.msra.mxu0 0
        %1936 = vmatprep.subr.bf16.mxu0 0
        %1937 = vmatpush1.bf16.msra.mxu0 0
        %1938 = vmatprep.subr.bf16.mxu0 0
        %1939 = vmatpush1.bf16.msra.mxu0 0
        %1940 = vmatprep.subr.bf16.mxu0 0
        %1941 = vmatpush1.bf16.msra.mxu0 0
        %1942 = vmatprep.subr.bf16.mxu0 0
        %1943 = vmatpush1.bf16.msra.mxu0 0
        %1944 = vmatprep.subr.bf16.mxu0 0
        %1945 = vmatpush1.bf16.msra.mxu0 0
        %1946 = vmatprep.subr.bf16.mxu0 0
        %1947 = vmatpush1.bf16.msra.mxu0 0
        %1948 = vmatprep.mubr.bf16.mxu0 0
        %1949 = vmatmul.mubr.bf16.gmra.mrb[0].mxu0 %v631
        %v1950 = vpop.f32.mrb[0].mxu0
        %v1951 = vadd.f32 0.0, %v1950
        %v1952 = vpop.f32.mrb[0].mxu0
        %v1953 = vadd.f32 0.0, %v1952
        %v1954 = vpop.f32.mrb[0].mxu0
        %v1955 = vpop.f32.mrb[0].mxu0
        %1956 = vdwg.mxu0
        %v1957 = vstv %s622
        %v1958 = vadd.f32 %v1812, %v1957
        %v1959 = vstv %s626
        %v1960 = vmul.f32 %v1959, %v1958
        %v1961 = vadd.f32 %v1951, %v1960
        %v1962 = vstv %s619
        %v1963 = vadd.f32 %v1961, %v1962
        %1965 = vset.pattern.permute.xlu0 0
        %1966 = vperm.xlu0 %1965, %v636
        %v1967 = vpop.permute.xlu0 %1966
        %1970 = vset.pattern.permute.xlu0 0
        %1971 = vperm.xlu0 %1970, %v637
        %v1972 = vpop.permute.xlu0 %1971
        %1975 = vset.pattern.permute.xlu0 0
        %1976 = vperm.xlu0 %1975, %v638
        %v1977 = vpop.permute.xlu0 %1976
        %1980 = vset.pattern.permute.xlu0 0
        %1981 = vperm.xlu0 %1980, %v639
        %v1982 = vpop.permute.xlu0 %1981
        %v1984 = vlaneseq
        %v1985 = vshrl.u32 %v1984, 7
        %v1986 = vsub.s32 0, %v1985
        %v1987 = vrot.slane %v1963, %v1986
        %v1988 = vmul.f32 %v1967, %v1987
        %v1989 = vmul.f32 %v1972, %v1987
        %v1990 = vmul.f32 %v1977, %v1987
        %v1991 = vmul.f32 %v1982, %v1987
        %v1992 = vadd.f32 %v1988, 0.0
        %v1993 = vadd.f32 %v1989, 0.0
        %v1994 = vadd.f32 %v1990, 0.0
        %v1995 = vadd.f32 %v1991, 0.0
        %v1997 = vrot.slane %v1960, 1
        %1998 = vrot.lane.b32.xlu0 %v1997, 16
        %v1999 = vpop.permute.xlu0 %1998
        %v2001 = vadd.f32 %v1951, %v1999
        %v2002 = vadd.f32 %v2001, %v1962
        %2003 = vset.pattern.permute.xlu0 1
        %2004 = vperm.xlu0 %2003, %v636
        %v2005 = vpop.permute.xlu0 %2004
        %2007 = vset.pattern.permute.xlu0 1
        %2008 = vperm.xlu0 %2007, %v637
        %v2009 = vpop.permute.xlu0 %2008
        %2011 = vset.pattern.permute.xlu0 1
        %2012 = vperm.xlu0 %2011, %v638
        %v2013 = vpop.permute.xlu0 %2012
        %2015 = vset.pattern.permute.xlu0 1
        %2016 = vperm.xlu0 %2015, %v639
        %v2017 = vpop.permute.xlu0 %2016
        %v2019 = vlaneseq
        %v2020 = vshrl.u32 %v2019, 7
        %v2021 = vsub.s32 0, %v2020
        %v2022 = vrot.slane %v2002, %v2021
        %v2023 = vmul.f32 %v2005, %v2022
        %v2024 = vmul.f32 %v2009, %v2022
        %v2025 = vmul.f32 %v2013, %v2022
        %v2026 = vmul.f32 %v2017, %v2022
        %2031 = vrot.lane.b32.xlu0 %v2023, 112
        %v2032 = vpop.permute.xlu0 %2031
        %2033 = vrot.lane.b32.xlu0 %v2024, 112
        %v2034 = vpop.permute.xlu0 %2033
        %2035 = vrot.lane.b32.xlu0 %v2025, 112
        %v2036 = vpop.permute.xlu0 %2035
        %2037 = vrot.lane.b32.xlu0 %v2026, 112
        %v2038 = vpop.permute.xlu0 %2037
        %v2043 = vadd.f32 %v1992, %v2032
        %v2044 = vadd.f32 %v1993, %v2034
        %v2045 = vadd.f32 %v1994, %v2036
        %v2046 = vadd.f32 %v1995, %v2038
        %v2047 = vrot.slane %v1960, 2
        %2048 = vrot.lane.b32.xlu0 %v2047, 32
        %v2049 = vpop.permute.xlu0 %2048
        %v2051 = vadd.f32 %v1951, %v2049
        %v2052 = vadd.f32 %v2051, %v1962
        %2053 = vset.pattern.permute.xlu0 2
        %2054 = vperm.xlu0 %2053, %v636
        %v2055 = vpop.permute.xlu0 %2054
        %2057 = vset.pattern.permute.xlu0 2
        %2058 = vperm.xlu0 %2057, %v637
        %v2059 = vpop.permute.xlu0 %2058
        %2061 = vset.pattern.permute.xlu0 2
        %2062 = vperm.xlu0 %2061, %v638
        %v2063 = vpop.permute.xlu0 %2062
        %2065 = vset.pattern.permute.xlu0 2
        %2066 = vperm.xlu0 %2065, %v639
        %v2067 = vpop.permute.xlu0 %2066
        %v2069 = vlaneseq
        %v2070 = vshrl.u32 %v2069, 7
        %v2071 = vsub.s32 0, %v2070
        %v2072 = vrot.slane %v2052, %v2071
        %v2073 = vmul.f32 %v2055, %v2072
        %v2074 = vmul.f32 %v2059, %v2072
        %v2075 = vmul.f32 %v2063, %v2072
        %v2076 = vmul.f32 %v2067, %v2072
        %2081 = vrot.lane.b32.xlu0 %v2073, 96
        %v2082 = vpop.permute.xlu0 %2081
        %2083 = vrot.lane.b32.xlu0 %v2074, 96
        %v2084 = vpop.permute.xlu0 %2083
        %2085 = vrot.lane.b32.xlu0 %v2075, 96
        %v2086 = vpop.permute.xlu0 %2085
        %2087 = vrot.lane.b32.xlu0 %v2076, 96
        %v2088 = vpop.permute.xlu0 %2087
        %v2093 = vadd.f32 %v2043, %v2082
        %v2094 = vadd.f32 %v2044, %v2084
        %v2095 = vadd.f32 %v2045, %v2086
        %v2096 = vadd.f32 %v2046, %v2088
        %v2097 = vrot.slane %v1960, 3
        %2098 = vrot.lane.b32.xlu0 %v2097, 48
        %v2099 = vpop.permute.xlu0 %2098
        %v2101 = vadd.f32 %v1951, %v2099
        %v2102 = vadd.f32 %v2101, %v1962
        %2103 = vset.pattern.permute.xlu0 3
        %2104 = vperm.xlu0 %2103, %v636
        %v2105 = vpop.permute.xlu0 %2104
        %2107 = vset.pattern.permute.xlu0 3
        %2108 = vperm.xlu0 %2107, %v637
        %v2109 = vpop.permute.xlu0 %2108
        %2111 = vset.pattern.permute.xlu0 3
        %2112 = vperm.xlu0 %2111, %v638
        %v2113 = vpop.permute.xlu0 %2112
        %2115 = vset.pattern.permute.xlu0 3
        %2116 = vperm.xlu0 %2115, %v639
        %v2117 = vpop.permute.xlu0 %2116
        %v2119 = vlaneseq
        %v2120 = vshrl.u32 %v2119, 7
        %v2121 = vsub.s32 0, %v2120
        %v2122 = vrot.slane %v2102, %v2121
        %v2123 = vmul.f32 %v2105, %v2122
        %v2124 = vmul.f32 %v2109, %v2122
        %v2125 = vmul.f32 %v2113, %v2122
        %v2126 = vmul.f32 %v2117, %v2122
        %2131 = vrot.lane.b32.xlu0 %v2123, 80
        %v2132 = vpop.permute.xlu0 %2131
        %2133 = vrot.lane.b32.xlu0 %v2124, 80
        %v2134 = vpop.permute.xlu0 %2133
        %2135 = vrot.lane.b32.xlu0 %v2125, 80
        %v2136 = vpop.permute.xlu0 %2135
        %2137 = vrot.lane.b32.xlu0 %v2126, 80
        %v2138 = vpop.permute.xlu0 %2137
        %v2143 = vadd.f32 %v2093, %v2132
        %v2144 = vadd.f32 %v2094, %v2134
        %v2145 = vadd.f32 %v2095, %v2136
        %v2146 = vadd.f32 %v2096, %v2138
        %v2147 = vrot.slane %v1960, 4
        %2148 = vrot.lane.b32.xlu0 %v2147, 64
        %v2149 = vpop.permute.xlu0 %2148
        %v2151 = vadd.f32 %v1951, %v2149
        %v2152 = vadd.f32 %v2151, %v1962
        %2153 = vset.pattern.permute.xlu0 4
        %2154 = vperm.xlu0 %2153, %v636
        %v2155 = vpop.permute.xlu0 %2154
        %2157 = vset.pattern.permute.xlu0 4
        %2158 = vperm.xlu0 %2157, %v637
        %v2159 = vpop.permute.xlu0 %2158
        %2161 = vset.pattern.permute.xlu0 4
        %2162 = vperm.xlu0 %2161, %v638
        %v2163 = vpop.permute.xlu0 %2162
        %2165 = vset.pattern.permute.xlu0 4
        %2166 = vperm.xlu0 %2165, %v639
        %v2167 = vpop.permute.xlu0 %2166
        %v2169 = vlaneseq
        %v2170 = vshrl.u32 %v2169, 7
        %v2171 = vsub.s32 0, %v2170
        %v2172 = vrot.slane %v2152, %v2171
        %v2173 = vmul.f32 %v2155, %v2172
        %v2174 = vmul.f32 %v2159, %v2172
        %v2175 = vmul.f32 %v2163, %v2172
        %v2176 = vmul.f32 %v2167, %v2172
        %2181 = vrot.lane.b32.xlu0 %v2173, 64
        %v2182 = vpop.permute.xlu0 %2181
        %2183 = vrot.lane.b32.xlu0 %v2174, 64
        %v2184 = vpop.permute.xlu0 %2183
        %2185 = vrot.lane.b32.xlu0 %v2175, 64
        %v2186 = vpop.permute.xlu0 %2185
        %2187 = vrot.lane.b32.xlu0 %v2176, 64
        %v2188 = vpop.permute.xlu0 %2187
        %v2193 = vadd.f32 %v2143, %v2182
        %v2194 = vadd.f32 %v2144, %v2184
        %v2195 = vadd.f32 %v2145, %v2186
        %v2196 = vadd.f32 %v2146, %v2188
        %v2197 = vrot.slane %v1960, 5
        %2198 = vrot.lane.b32.xlu0 %v2197, 80
        %v2199 = vpop.permute.xlu0 %2198
        %v2201 = vadd.f32 %v1951, %v2199
        %v2202 = vadd.f32 %v2201, %v1962
        %2203 = vset.pattern.permute.xlu0 5
        %2204 = vperm.xlu0 %2203, %v636
        %v2205 = vpop.permute.xlu0 %2204
        %2207 = vset.pattern.permute.xlu0 5
        %2208 = vperm.xlu0 %2207, %v637
        %v2209 = vpop.permute.xlu0 %2208
        %2211 = vset.pattern.permute.xlu0 5
        %2212 = vperm.xlu0 %2211, %v638
        %v2213 = vpop.permute.xlu0 %2212
        %2215 = vset.pattern.permute.xlu0 5
        %2216 = vperm.xlu0 %2215, %v639
        %v2217 = vpop.permute.xlu0 %2216
        %v2219 = vlaneseq
        %v2220 = vshrl.u32 %v2219, 7
        %v2221 = vsub.s32 0, %v2220
        %v2222 = vrot.slane %v2202, %v2221
        %v2223 = vmul.f32 %v2205, %v2222
        %v2224 = vmul.f32 %v2209, %v2222
        %v2225 = vmul.f32 %v2213, %v2222
        %v2226 = vmul.f32 %v2217, %v2222
        %2231 = vrot.lane.b32.xlu0 %v2223, 48
        %v2232 = vpop.permute.xlu0 %2231
        %2233 = vrot.lane.b32.xlu0 %v2224, 48
        %v2234 = vpop.permute.xlu0 %2233
        %2235 = vrot.lane.b32.xlu0 %v2225, 48
        %v2236 = vpop.permute.xlu0 %2235
        %2237 = vrot.lane.b32.xlu0 %v2226, 48
        %v2238 = vpop.permute.xlu0 %2237
        %v2243 = vadd.f32 %v2193, %v2232
        %v2244 = vadd.f32 %v2194, %v2234
        %v2245 = vadd.f32 %v2195, %v2236
        %v2246 = vadd.f32 %v2196, %v2238
        %v2247 = vrot.slane %v1960, 6
        %2248 = vrot.lane.b32.xlu0 %v2247, 96
        %v2249 = vpop.permute.xlu0 %2248
        %v2251 = vadd.f32 %v1951, %v2249
        %v2252 = vadd.f32 %v2251, %v1962
        %2253 = vset.pattern.permute.xlu0 6
        %2254 = vperm.xlu0 %2253, %v636
        %v2255 = vpop.permute.xlu0 %2254
        %2257 = vset.pattern.permute.xlu0 6
        %2258 = vperm.xlu0 %2257, %v637
        %v2259 = vpop.permute.xlu0 %2258
        %2261 = vset.pattern.permute.xlu0 6
        %2262 = vperm.xlu0 %2261, %v638
        %v2263 = vpop.permute.xlu0 %2262
        %2265 = vset.pattern.permute.xlu0 6
        %2266 = vperm.xlu0 %2265, %v639
        %v2267 = vpop.permute.xlu0 %2266
        %v2269 = vlaneseq
        %v2270 = vshrl.u32 %v2269, 7
        %v2271 = vsub.s32 0, %v2270
        %v2272 = vrot.slane %v2252, %v2271
        %v2273 = vmul.f32 %v2255, %v2272
        %v2274 = vmul.f32 %v2259, %v2272
        %v2275 = vmul.f32 %v2263, %v2272
        %v2276 = vmul.f32 %v2267, %v2272
        %2281 = vrot.lane.b32.xlu0 %v2273, 32
        %v2282 = vpop.permute.xlu0 %2281
        %2283 = vrot.lane.b32.xlu0 %v2274, 32
        %v2284 = vpop.permute.xlu0 %2283
        %2285 = vrot.lane.b32.xlu0 %v2275, 32
        %v2286 = vpop.permute.xlu0 %2285
        %2287 = vrot.lane.b32.xlu0 %v2276, 32
        %v2288 = vpop.permute.xlu0 %2287
        %v2293 = vadd.f32 %v2243, %v2282
        %v2294 = vadd.f32 %v2244, %v2284
        %v2295 = vadd.f32 %v2245, %v2286
        %v2296 = vadd.f32 %v2246, %v2288
        %v2297 = vrot.slane %v1960, 7
        %2298 = vrot.lane.b32.xlu0 %v2297, 112
        %v2299 = vpop.permute.xlu0 %2298
        %v2301 = vadd.f32 %v1951, %v2299
        %v2302 = vadd.f32 %v2301, %v1962
        %2303 = vset.pattern.permute.xlu0 7
        %2304 = vperm.xlu0 %2303, %v636
        %v2305 = vpop.permute.xlu0 %2304
        %2307 = vset.pattern.permute.xlu0 7
        %2308 = vperm.xlu0 %2307, %v637
        %v2309 = vpop.permute.xlu0 %2308
        %2311 = vset.pattern.permute.xlu0 7
        %2312 = vperm.xlu0 %2311, %v638
        %v2313 = vpop.permute.xlu0 %2312
        %2315 = vset.pattern.permute.xlu0 7
        %2316 = vperm.xlu0 %2315, %v639
        %v2317 = vpop.permute.xlu0 %2316
        %v2319 = vlaneseq
        %v2320 = vshrl.u32 %v2319, 7
        %v2321 = vsub.s32 0, %v2320
        %v2322 = vrot.slane %v2302, %v2321
        %v2323 = vmul.f32 %v2305, %v2322
        %v2324 = vmul.f32 %v2309, %v2322
        %v2325 = vmul.f32 %v2313, %v2322
        %v2326 = vmul.f32 %v2317, %v2322
        %2331 = vrot.lane.b32.xlu0 %v2323, 16
        %v2332 = vpop.permute.xlu0 %2331
        %2333 = vrot.lane.b32.xlu0 %v2324, 16
        %v2334 = vpop.permute.xlu0 %2333
        %2335 = vrot.lane.b32.xlu0 %v2325, 16
        %v2336 = vpop.permute.xlu0 %2335
        %2337 = vrot.lane.b32.xlu0 %v2326, 16
        %v2338 = vpop.permute.xlu0 %2337
        %v2343 = vadd.f32 %v2293, %v2332
        %v2344 = vadd.f32 %v2294, %v2334
        %v2345 = vadd.f32 %v2295, %v2336
        %v2346 = vadd.f32 %v2296, %v2338
        %v2347 = vadd.f32 %v1817, %v1957
        %v2348 = vmul.f32 %v1959, %v2347
        %v2349 = vadd.f32 %v1953, %v2348
        %v2350 = vadd.f32 %v2349, %v1962
        %2351 = vset.pattern.permute.xlu0 8
        %2352 = vperm.xlu0 %2351, %v636
        %v2353 = vpop.permute.xlu0 %2352
        %2355 = vset.pattern.permute.xlu0 8
        %2356 = vperm.xlu0 %2355, %v637
        %v2357 = vpop.permute.xlu0 %2356
        %2359 = vset.pattern.permute.xlu0 8
        %2360 = vperm.xlu0 %2359, %v638
        %v2361 = vpop.permute.xlu0 %2360
        %2363 = vset.pattern.permute.xlu0 8
        %2364 = vperm.xlu0 %2363, %v639
        %v2365 = vpop.permute.xlu0 %2364
        %v2367 = vlaneseq
        %v2368 = vshrl.u32 %v2367, 7
        %v2369 = vsub.s32 0, %v2368
        %v2370 = vrot.slane %v2350, %v2369
        %v2371 = vmul.f32 %v2353, %v2370
        %v2372 = vmul.f32 %v2357, %v2370
        %v2373 = vmul.f32 %v2361, %v2370
        %v2374 = vmul.f32 %v2365, %v2370
        %v2375 = vadd.f32 %v2343, %v2371
        %v2376 = vadd.f32 %v2344, %v2372
        %v2377 = vadd.f32 %v2345, %v2373
        %v2378 = vadd.f32 %v2346, %v2374
        %v2380 = vrot.slane %v2348, 1
        %2381 = vrot.lane.b32.xlu0 %v2380, 16
        %v2382 = vpop.permute.xlu0 %2381
        %v2384 = vadd.f32 %v1953, %v2382
        %v2385 = vadd.f32 %v2384, %v1962
        %2386 = vset.pattern.permute.xlu0 9
        %2387 = vperm.xlu0 %2386, %v636
        %v2388 = vpop.permute.xlu0 %2387
        %2390 = vset.pattern.permute.xlu0 9
        %2391 = vperm.xlu0 %2390, %v637
        %v2392 = vpop.permute.xlu0 %2391
        %2394 = vset.pattern.permute.xlu0 9
        %2395 = vperm.xlu0 %2394, %v638
        %v2396 = vpop.permute.xlu0 %2395
        %2398 = vset.pattern.permute.xlu0 9
        %2399 = vperm.xlu0 %2398, %v639
        %v2400 = vpop.permute.xlu0 %2399
        %v2402 = vlaneseq
        %v2403 = vshrl.u32 %v2402, 7
        %v2404 = vsub.s32 0, %v2403
        %v2405 = vrot.slane %v2385, %v2404
        %v2406 = vmul.f32 %v2388, %v2405
        %v2407 = vmul.f32 %v2392, %v2405
        %v2408 = vmul.f32 %v2396, %v2405
        %v2409 = vmul.f32 %v2400, %v2405
        %2414 = vrot.lane.b32.xlu0 %v2406, 112
        %v2415 = vpop.permute.xlu0 %2414
        %2416 = vrot.lane.b32.xlu0 %v2407, 112
        %v2417 = vpop.permute.xlu0 %2416
        %2418 = vrot.lane.b32.xlu0 %v2408, 112
        %v2419 = vpop.permute.xlu0 %2418
        %2420 = vrot.lane.b32.xlu0 %v2409, 112
        %v2421 = vpop.permute.xlu0 %2420
        %v2426 = vadd.f32 %v2375, %v2415
        %v2427 = vadd.f32 %v2376, %v2417
        %v2428 = vadd.f32 %v2377, %v2419
        %v2429 = vadd.f32 %v2378, %v2421
        %v2430 = vrot.slane %v2348, 2
        %2431 = vrot.lane.b32.xlu0 %v2430, 32
        %v2432 = vpop.permute.xlu0 %2431
        %v2434 = vadd.f32 %v1953, %v2432
        %v2435 = vadd.f32 %v2434, %v1962
        %2436 = vset.pattern.permute.xlu0 10
        %2437 = vperm.xlu0 %2436, %v636
        %v2438 = vpop.permute.xlu0 %2437
        %2440 = vset.pattern.permute.xlu0 10
        %2441 = vperm.xlu0 %2440, %v637
        %v2442 = vpop.permute.xlu0 %2441
        %2444 = vset.pattern.permute.xlu0 10
        %2445 = vperm.xlu0 %2444, %v638
        %v2446 = vpop.permute.xlu0 %2445
        %2448 = vset.pattern.permute.xlu0 10
        %2449 = vperm.xlu0 %2448, %v639
        %v2450 = vpop.permute.xlu0 %2449
        %v2452 = vlaneseq
        %v2453 = vshrl.u32 %v2452, 7
        %v2454 = vsub.s32 0, %v2453
        %v2455 = vrot.slane %v2435, %v2454
        %v2456 = vmul.f32 %v2438, %v2455
        %v2457 = vmul.f32 %v2442, %v2455
        %v2458 = vmul.f32 %v2446, %v2455
        %v2459 = vmul.f32 %v2450, %v2455
        %2464 = vrot.lane.b32.xlu0 %v2456, 96
        %v2465 = vpop.permute.xlu0 %2464
        %2466 = vrot.lane.b32.xlu0 %v2457, 96
        %v2467 = vpop.permute.xlu0 %2466
        %2468 = vrot.lane.b32.xlu0 %v2458, 96
        %v2469 = vpop.permute.xlu0 %2468
        %2470 = vrot.lane.b32.xlu0 %v2459, 96
        %v2471 = vpop.permute.xlu0 %2470
        %v2476 = vadd.f32 %v2426, %v2465
        %v2477 = vadd.f32 %v2427, %v2467
        %v2478 = vadd.f32 %v2428, %v2469
        %v2479 = vadd.f32 %v2429, %v2471
        %v2480 = vrot.slane %v2348, 3
        %2481 = vrot.lane.b32.xlu0 %v2480, 48
        %v2482 = vpop.permute.xlu0 %2481
        %v2484 = vadd.f32 %v1953, %v2482
        %v2485 = vadd.f32 %v2484, %v1962
        %2486 = vset.pattern.permute.xlu0 11
        %2487 = vperm.xlu0 %2486, %v636
        %v2488 = vpop.permute.xlu0 %2487
        %2490 = vset.pattern.permute.xlu0 11
        %2491 = vperm.xlu0 %2490, %v637
        %v2492 = vpop.permute.xlu0 %2491
        %2494 = vset.pattern.permute.xlu0 11
        %2495 = vperm.xlu0 %2494, %v638
        %v2496 = vpop.permute.xlu0 %2495
        %2498 = vset.pattern.permute.xlu0 11
        %2499 = vperm.xlu0 %2498, %v639
        %v2500 = vpop.permute.xlu0 %2499
        %v2502 = vlaneseq
        %v2503 = vshrl.u32 %v2502, 7
        %v2504 = vsub.s32 0, %v2503
        %v2505 = vrot.slane %v2485, %v2504
        %v2506 = vmul.f32 %v2488, %v2505
        %v2507 = vmul.f32 %v2492, %v2505
        %v2508 = vmul.f32 %v2496, %v2505
        %v2509 = vmul.f32 %v2500, %v2505
        %2514 = vrot.lane.b32.xlu0 %v2506, 80
        %v2515 = vpop.permute.xlu0 %2514
        %2516 = vrot.lane.b32.xlu0 %v2507, 80
        %v2517 = vpop.permute.xlu0 %2516
        %2518 = vrot.lane.b32.xlu0 %v2508, 80
        %v2519 = vpop.permute.xlu0 %2518
        %2520 = vrot.lane.b32.xlu0 %v2509, 80
        %v2521 = vpop.permute.xlu0 %2520
        %v2526 = vadd.f32 %v2476, %v2515
        %v2527 = vadd.f32 %v2477, %v2517
        %v2528 = vadd.f32 %v2478, %v2519
        %v2529 = vadd.f32 %v2479, %v2521
        %v2530 = vrot.slane %v2348, 4
        %2531 = vrot.lane.b32.xlu0 %v2530, 64
        %v2532 = vpop.permute.xlu0 %2531
        %v2534 = vadd.f32 %v1953, %v2532
        %v2535 = vadd.f32 %v2534, %v1962
        %2536 = vset.pattern.permute.xlu0 12
        %2537 = vperm.xlu0 %2536, %v636
        %v2538 = vpop.permute.xlu0 %2537
        %2540 = vset.pattern.permute.xlu0 12
        %2541 = vperm.xlu0 %2540, %v637
        %v2542 = vpop.permute.xlu0 %2541
        %2544 = vset.pattern.permute.xlu0 12
        %2545 = vperm.xlu0 %2544, %v638
        %v2546 = vpop.permute.xlu0 %2545
        %2548 = vset.pattern.permute.xlu0 12
        %2549 = vperm.xlu0 %2548, %v639
        %v2550 = vpop.permute.xlu0 %2549
        %v2552 = vlaneseq
        %v2553 = vshrl.u32 %v2552, 7
        %v2554 = vsub.s32 0, %v2553
        %v2555 = vrot.slane %v2535, %v2554
        %v2556 = vmul.f32 %v2538, %v2555
        %v2557 = vmul.f32 %v2542, %v2555
        %v2558 = vmul.f32 %v2546, %v2555
        %v2559 = vmul.f32 %v2550, %v2555
        %2564 = vrot.lane.b32.xlu0 %v2556, 64
        %v2565 = vpop.permute.xlu0 %2564
        %2566 = vrot.lane.b32.xlu0 %v2557, 64
        %v2567 = vpop.permute.xlu0 %2566
        %2568 = vrot.lane.b32.xlu0 %v2558, 64
        %v2569 = vpop.permute.xlu0 %2568
        %2570 = vrot.lane.b32.xlu0 %v2559, 64
        %v2571 = vpop.permute.xlu0 %2570
        %v2576 = vadd.f32 %v2526, %v2565
        %v2577 = vadd.f32 %v2527, %v2567
        %v2578 = vadd.f32 %v2528, %v2569
        %v2579 = vadd.f32 %v2529, %v2571
        %v2580 = vrot.slane %v2348, 5
        %2581 = vrot.lane.b32.xlu0 %v2580, 80
        %v2582 = vpop.permute.xlu0 %2581
        %v2584 = vadd.f32 %v1953, %v2582
        %v2585 = vadd.f32 %v2584, %v1962
        %2586 = vset.pattern.permute.xlu0 13
        %2587 = vperm.xlu0 %2586, %v636
        %v2588 = vpop.permute.xlu0 %2587
        %2590 = vset.pattern.permute.xlu0 13
        %2591 = vperm.xlu0 %2590, %v637
        %v2592 = vpop.permute.xlu0 %2591
        %2594 = vset.pattern.permute.xlu0 13
        %2595 = vperm.xlu0 %2594, %v638
        %v2596 = vpop.permute.xlu0 %2595
        %2598 = vset.pattern.permute.xlu0 13
        %2599 = vperm.xlu0 %2598, %v639
        %v2600 = vpop.permute.xlu0 %2599
        %v2602 = vlaneseq
        %v2603 = vshrl.u32 %v2602, 7
        %v2604 = vsub.s32 0, %v2603
        %v2605 = vrot.slane %v2585, %v2604
        %v2606 = vmul.f32 %v2588, %v2605
        %v2607 = vmul.f32 %v2592, %v2605
        %v2608 = vmul.f32 %v2596, %v2605
        %v2609 = vmul.f32 %v2600, %v2605
        %2614 = vrot.lane.b32.xlu0 %v2606, 48
        %v2615 = vpop.permute.xlu0 %2614
        %2616 = vrot.lane.b32.xlu0 %v2607, 48
        %v2617 = vpop.permute.xlu0 %2616
        %2618 = vrot.lane.b32.xlu0 %v2608, 48
        %v2619 = vpop.permute.xlu0 %2618
        %2620 = vrot.lane.b32.xlu0 %v2609, 48
        %v2621 = vpop.permute.xlu0 %2620
        %v2626 = vadd.f32 %v2576, %v2615
        %v2627 = vadd.f32 %v2577, %v2617
        %v2628 = vadd.f32 %v2578, %v2619
        %v2629 = vadd.f32 %v2579, %v2621
        %v2630 = vrot.slane %v2348, 6
        %2631 = vrot.lane.b32.xlu0 %v2630, 96
        %v2632 = vpop.permute.xlu0 %2631
        %v2634 = vadd.f32 %v1953, %v2632
        %v2635 = vadd.f32 %v2634, %v1962
        %2636 = vset.pattern.permute.xlu0 14
        %2637 = vperm.xlu0 %2636, %v636
        %v2638 = vpop.permute.xlu0 %2637
        %2640 = vset.pattern.permute.xlu0 14
        %2641 = vperm.xlu0 %2640, %v637
        %v2642 = vpop.permute.xlu0 %2641
        %2644 = vset.pattern.permute.xlu0 14
        %2645 = vperm.xlu0 %2644, %v638
        %v2646 = vpop.permute.xlu0 %2645
        %2648 = vset.pattern.permute.xlu0 14
        %2649 = vperm.xlu0 %2648, %v639
        %v2650 = vpop.permute.xlu0 %2649
        %v2652 = vlaneseq
        %v2653 = vshrl.u32 %v2652, 7
        %v2654 = vsub.s32 0, %v2653
        %v2655 = vrot.slane %v2635, %v2654
        %v2656 = vmul.f32 %v2638, %v2655
        %v2657 = vmul.f32 %v2642, %v2655
        %v2658 = vmul.f32 %v2646, %v2655
        %v2659 = vmul.f32 %v2650, %v2655
        %2664 = vrot.lane.b32.xlu0 %v2656, 32
        %v2665 = vpop.permute.xlu0 %2664
        %2666 = vrot.lane.b32.xlu0 %v2657, 32
        %v2667 = vpop.permute.xlu0 %2666
        %2668 = vrot.lane.b32.xlu0 %v2658, 32
        %v2669 = vpop.permute.xlu0 %2668
        %2670 = vrot.lane.b32.xlu0 %v2659, 32
        %v2671 = vpop.permute.xlu0 %2670
        %v2676 = vadd.f32 %v2626, %v2665
        %v2677 = vadd.f32 %v2627, %v2667
        %v2678 = vadd.f32 %v2628, %v2669
        %v2679 = vadd.f32 %v2629, %v2671
        %v2680 = vrot.slane %v2348, 7
        %2681 = vrot.lane.b32.xlu0 %v2680, 112
        %v2682 = vpop.permute.xlu0 %2681
        %v2684 = vadd.f32 %v1953, %v2682
        %v2685 = vadd.f32 %v2684, %v1962
        %2686 = vset.pattern.permute.xlu0 15
        %2687 = vperm.xlu0 %2686, %v636
        %v2688 = vpop.permute.xlu0 %2687
        %2690 = vset.pattern.permute.xlu0 15
        %2691 = vperm.xlu0 %2690, %v637
        %v2692 = vpop.permute.xlu0 %2691
        %2694 = vset.pattern.permute.xlu0 15
        %2695 = vperm.xlu0 %2694, %v638
        %v2696 = vpop.permute.xlu0 %2695
        %2698 = vset.pattern.permute.xlu0 15
        %2699 = vperm.xlu0 %2698, %v639
        %v2700 = vpop.permute.xlu0 %2699
        %v2702 = vlaneseq
        %v2703 = vshrl.u32 %v2702, 7
        %v2704 = vsub.s32 0, %v2703
        %v2705 = vrot.slane %v2685, %v2704
        %v2706 = vmul.f32 %v2688, %v2705
        %v2707 = vmul.f32 %v2692, %v2705
        %v2708 = vmul.f32 %v2696, %v2705
        %v2709 = vmul.f32 %v2700, %v2705
        %2714 = vrot.lane.b32.xlu0 %v2706, 16
        %v2715 = vpop.permute.xlu0 %2714
        %2716 = vrot.lane.b32.xlu0 %v2707, 16
        %v2717 = vpop.permute.xlu0 %2716
        %2718 = vrot.lane.b32.xlu0 %v2708, 16
        %v2719 = vpop.permute.xlu0 %2718
        %2720 = vrot.lane.b32.xlu0 %v2709, 16
        %v2721 = vpop.permute.xlu0 %2720
        %v2726 = vadd.f32 %v2676, %v2715
        %v2727 = vadd.f32 %v2677, %v2717
        %v2728 = vadd.f32 %v2678, %v2719
        %v2729 = vadd.f32 %v2679, %v2721
        %vm2730 = vcmask 130048
        %v2732 = vsel %vm2730, %v2726, 0
        %v2735 = vsel %vm2730, %v2727, 0
        %v2738 = vsel %vm2730, %v2728, 0
        %v2741 = vsel %vm2730, %v2729, 0
        %2743 = vmatprep.subr.mxu0 0.0
        %2744 = vmatpush1.msra.mxu0 %v640
        %2745 = vmatprep.subr.mxu0 0.0
        %2746 = vmatpush1.msra.mxu0 %v641
        %2747 = vmatprep.subr.mxu0 0.0
        %2748 = vmatpush1.msra.mxu0 0.0
        %2749 = vmatprep.subr.mxu0 0.0
        %2750 = vmatpush1.msra.mxu0 0.0
        %2751 = vmatprep.subr.mxu0 0.0
        %2752 = vmatpush1.msra.mxu0 0.0
        %2753 = vmatprep.subr.mxu0 0.0
        %2754 = vmatpush1.msra.mxu0 0.0
        %2755 = vmatprep.subr.mxu0 0.0
        %2756 = vmatpush1.msra.mxu0 0.0
        %2757 = vmatprep.subr.mxu0 0.0
        %2758 = vmatpush1.msra.mxu0 0.0
        %2759 = vmatprep.subr.mxu0 0.0
        %2760 = vmatpush1.msra.mxu0 0.0
        %2761 = vmatprep.subr.mxu0 0.0
        %2762 = vmatpush1.msra.mxu0 0.0
        %2763 = vmatprep.subr.mxu0 0.0
        %2764 = vmatpush1.msra.mxu0 0.0
        %2765 = vmatprep.subr.mxu0 0.0
        %2766 = vmatpush1.msra.mxu0 0.0
        %2767 = vmatprep.subr.mxu0 0.0
        %2768 = vmatpush1.msra.mxu0 0.0
        %2769 = vmatprep.subr.mxu0 0.0
        %2770 = vmatpush1.msra.mxu0 0.0
        %2771 = vmatprep.subr.mxu0 0.0
        %2772 = vmatpush1.msra.mxu0 0.0
        %2773 = vmatprep.subr.mxu0 0.0
        %2774 = vmatpush1.msra.mxu0 0.0
        %2775 = vmatprep.subr.mxu0 0.0
        %2776 = vmatpush1.msra.mxu0 0.0
        %2777 = vmatprep.subr.mxu0 0.0
        %2778 = vmatpush1.msra.mxu0 0.0
        %2779 = vmatprep.subr.mxu0 0.0
        %2780 = vmatpush1.msra.mxu0 0.0
        %2781 = vmatprep.subr.mxu0 0.0
        %2782 = vmatpush1.msra.mxu0 0.0
        %2783 = vmatprep.subr.mxu0 0.0
        %2784 = vmatpush1.msra.mxu0 0.0
        %2785 = vmatprep.subr.mxu0 0.0
        %2786 = vmatpush1.msra.mxu0 0.0
        %2787 = vmatprep.subr.mxu0 0.0
        %2788 = vmatpush1.msra.mxu0 0.0
        %2789 = vmatprep.subr.mxu0 0.0
        %2790 = vmatpush1.msra.mxu0 0.0
        %2791 = vmatprep.subr.mxu0 0.0
        %2792 = vmatpush1.msra.mxu0 0.0
        %2793 = vmatprep.subr.mxu0 0.0
        %2794 = vmatpush1.msra.mxu0 0.0
        %2795 = vmatprep.subr.mxu0 0.0
        %2796 = vmatpush1.msra.mxu0 0.0
        %2797 = vmatprep.subr.mxu0 0.0
        %2798 = vmatpush1.msra.mxu0 0.0
        %2799 = vmatprep.subr.mxu0 0.0
        %2800 = vmatpush1.msra.mxu0 0.0
        %2801 = vmatprep.subr.mxu0 0.0
        %2802 = vmatpush1.msra.mxu0 0.0
        %2803 = vmatprep.subr.mxu0 0.0
        %2804 = vmatpush1.msra.mxu0 0.0
        %2805 = vmatprep.subr.mxu0 0.0
        %2806 = vmatpush1.msra.mxu0 0.0
        %2807 = vmatprep.mubr.f32.mxu0 0.0
        %2808 = vmatmul.mubr.f32.gmra.mrb[0].mxu0 %v2732
        %v2809 = vpop.f32.mrb[0].mxu0
        %v2810 = vadd.f32 0.0, %v2809
        %v2811 = vpop.f32.mrb[0].mxu0
        %2812 = vmatprep.mubr.f32.mxu0 0.0
        %2813 = vmatmul.mubr.f32.gmra.mrb[0].mxu0 %v2735
        %v2814 = vpop.f32.mrb[0].mxu0
        %v2815 = vadd.f32 0.0, %v2814
        %v2816 = vpop.f32.mrb[0].mxu0
        %2817 = vmatprep.mubr.f32.mxu0 0.0
        %2818 = vmatmul.mubr.f32.gmra.mrb[0].mxu0 %v2738
        %v2819 = vpop.f32.mrb[0].mxu0
        %v2820 = vadd.f32 0.0, %v2819
        %v2821 = vpop.f32.mrb[0].mxu0
        %2822 = vmatprep.mubr.f32.mxu0 0.0
        %2823 = vmatmul.mubr.f32.gmra.mrb[0].mxu0 %v2741
        %v2824 = vpop.f32.mrb[0].mxu0
        %v2825 = vadd.f32 0.0, %v2824
        %v2826 = vpop.f32.mrb[0].mxu0
        %2827 = vdwg.mxu0
        %v2828 = vld [vmem:[%s607] sm:$0xff]
        %v2829 = vld [vmem:[%s607 + $0x8] sm:$0xff]
        %v2830 = vld [vmem:[%s607 + $0x10] sm:$0xff]
        %v2831 = vld [vmem:[%s607 + $0x18] sm:$0xff]
        %v2832 = vld [vmem:[%s607 + $0x20] sm:$0xff]
        %v2833 = vld [vmem:[%s607 + $0x28] sm:$0xff]
        %v2834 = vld [vmem:[%s607 + $0x30] sm:$0xff]
        %v2835 = vld [vmem:[%s607 + $0x38] sm:$0xff]
        %v2836 = vld [vmem:[%s607 + $0x40] sm:$0xff]
        %v2837 = vld [vmem:[%s607 + $0x48] sm:$0xff]
        %v2838 = vld [vmem:[%s607 + $0x50] sm:$0xff]
        %v2839 = vld [vmem:[%s607 + $0x58] sm:$0xff]
        %v2840 = vld [vmem:[%s607 + $0x60] sm:$0xff]
        %v2841 = vld [vmem:[%s607 + $0x68] sm:$0xff]
        %v2842 = vld [vmem:[%s607 + $0x70] sm:$0xff]
        %v2843 = vld [vmem:[%s607 + $0x78] sm:$0xff]
        %v2844 = vld [vmem:[%s607 + $0x80] sm:$0xff]
        %v2845 = vld [vmem:[%s607 + $0x88] sm:$0xff]
        %v2846 = vld [vmem:[%s607 + $0x90] sm:$0xff]
        %v2847 = vld [vmem:[%s607 + $0x98] sm:$0xff]
        %v2848 = vld [vmem:[%s607 + $0xa0] sm:$0xff]
        %v2849 = vld [vmem:[%s607 + $0xa8] sm:$0xff]
        %v2850 = vld [vmem:[%s607 + $0xb0] sm:$0xff]
        %v2851 = vld [vmem:[%s607 + $0xb8] sm:$0xff]
        %v2852 = vld [vmem:[%s607 + $0xc0] sm:$0xff]
        %v2853 = vld [vmem:[%s607 + $0xc8] sm:$0xff]
        %v2854 = vld [vmem:[%s607 + $0xd0] sm:$0xff]
        %v2855 = vld [vmem:[%s607 + $0xd8] sm:$0xff]
        %v2856 = vld [vmem:[%s607 + $0xe0] sm:$0xff]
        %v2857 = vld [vmem:[%s607 + $0xe8] sm:$0xff]
        %v2858 = vld [vmem:[%s607 + $0xf0] sm:$0xff]
        %v2859 = vld [vmem:[%s607 + $0xf8] sm:$0xff]
        %v2892 = vunpack.c.l.b16 %v2828
        %v2893 = vunpack.c.h.b16 %v2828
        %v2894 = vunpack.c.l.b16 %v2829
        %v2895 = vunpack.c.h.b16 %v2829
        %v2896 = vunpack.c.l.b16 %v2830
        %v2897 = vunpack.c.h.b16 %v2830
        %v2898 = vunpack.c.l.b16 %v2831
        %v2899 = vunpack.c.h.b16 %v2831
        %v2900 = vunpack.c.l.b16 %v2832
        %v2901 = vunpack.c.h.b16 %v2832
        %v2902 = vunpack.c.l.b16 %v2833
        %v2903 = vunpack.c.h.b16 %v2833
        %v2904 = vunpack.c.l.b16 %v2834
        %v2905 = vunpack.c.h.b16 %v2834
        %v2906 = vunpack.c.l.b16 %v2835
        %v2907 = vunpack.c.h.b16 %v2835
        %v2908 = vunpack.c.l.b16 %v2836
        %v2909 = vunpack.c.h.b16 %v2836
        %v2910 = vunpack.c.l.b16 %v2837
        %v2911 = vunpack.c.h.b16 %v2837
        %v2912 = vunpack.c.l.b16 %v2838
        %v2913 = vunpack.c.h.b16 %v2838
        %v2914 = vunpack.c.l.b16 %v2839
        %v2915 = vunpack.c.h.b16 %v2839
        %v2916 = vunpack.c.l.b16 %v2840
        %v2917 = vunpack.c.h.b16 %v2840
        %v2918 = vunpack.c.l.b16 %v2841
        %v2919 = vunpack.c.h.b16 %v2841
        %v2920 = vunpack.c.l.b16 %v2842
        %v2921 = vunpack.c.h.b16 %v2842
        %v2922 = vunpack.c.l.b16 %v2843
        %v2923 = vunpack.c.h.b16 %v2843
        %v2924 = vunpack.c.l.b16 %v2844
        %v2925 = vunpack.c.h.b16 %v2844
        %v2926 = vunpack.c.l.b16 %v2845
        %v2927 = vunpack.c.h.b16 %v2845
        %v2928 = vunpack.c.l.b16 %v2846
        %v2929 = vunpack.c.h.b16 %v2846
        %v2930 = vunpack.c.l.b16 %v2847
        %v2931 = vunpack.c.h.b16 %v2847
        %v2932 = vunpack.c.l.b16 %v2848
        %v2933 = vunpack.c.h.b16 %v2848
        %v2934 = vunpack.c.l.b16 %v2849
        %v2935 = vunpack.c.h.b16 %v2849
        %v2936 = vunpack.c.l.b16 %v2850
        %v2937 = vunpack.c.h.b16 %v2850
        %v2938 = vunpack.c.l.b16 %v2851
        %v2939 = vunpack.c.h.b16 %v2851
        %v2940 = vunpack.c.l.b16 %v2852
        %v2941 = vunpack.c.h.b16 %v2852
        %v2942 = vunpack.c.l.b16 %v2853
        %v2943 = vunpack.c.h.b16 %v2853
        %v2944 = vunpack.c.l.b16 %v2854
        %v2945 = vunpack.c.h.b16 %v2854
        %v2946 = vunpack.c.l.b16 %v2855
        %v2947 = vunpack.c.h.b16 %v2855
        %v2948 = vunpack.c.l.b16 %v2856
        %v2949 = vunpack.c.h.b16 %v2856
        %v2950 = vunpack.c.l.b16 %v2857
        %v2951 = vunpack.c.h.b16 %v2857
        %v2952 = vunpack.c.l.b16 %v2858
        %v2953 = vunpack.c.h.b16 %v2858
        %v2954 = vunpack.c.l.b16 %v2859
        %v2955 = vunpack.c.h.b16 %v2859
        %v2956 = vpack.c.b16 %v2900, %v2892
        %v2957 = vpack.c.b16 %v2901, %v2893
        %v2958 = vpack.c.b16 %v2902, %v2894
        %v2959 = vpack.c.b16 %v2903, %v2895
        %v2960 = vpack.c.b16 %v2904, %v2896
        %v2961 = vpack.c.b16 %v2905, %v2897
        %v2962 = vpack.c.b16 %v2906, %v2898
        %v2963 = vpack.c.b16 %v2907, %v2899
        %v2964 = vpack.c.b16 %v2916, %v2908
        %v2965 = vpack.c.b16 %v2917, %v2909
        %v2966 = vpack.c.b16 %v2918, %v2910
        %v2967 = vpack.c.b16 %v2919, %v2911
        %v2968 = vpack.c.b16 %v2920, %v2912
        %v2969 = vpack.c.b16 %v2921, %v2913
        %v2970 = vpack.c.b16 %v2922, %v2914
        %v2971 = vpack.c.b16 %v2923, %v2915
        %v2972 = vpack.c.b16 %v2932, %v2924
        %v2973 = vpack.c.b16 %v2933, %v2925
        %v2974 = vpack.c.b16 %v2934, %v2926
        %v2975 = vpack.c.b16 %v2935, %v2927
        %v2976 = vpack.c.b16 %v2936, %v2928
        %v2977 = vpack.c.b16 %v2937, %v2929
        %v2978 = vpack.c.b16 %v2938, %v2930
        %v2979 = vpack.c.b16 %v2939, %v2931
        %v2980 = vpack.c.b16 %v2948, %v2940
        %v2981 = vpack.c.b16 %v2949, %v2941
        %v2982 = vpack.c.b16 %v2950, %v2942
        %v2983 = vpack.c.b16 %v2951, %v2943
        %v2984 = vpack.c.b16 %v2952, %v2944
        %v2985 = vpack.c.b16 %v2953, %v2945
        %v2986 = vpack.c.b16 %v2954, %v2946
        %v2987 = vpack.c.b16 %v2955, %v2947
        %vm3020 = vcmask 523264
        %v3022 = vsel %vm3020, %v632, 0
        %3024 = vmatprep.subr.bf16.mxu0 %v2957
        %3025 = vmatpush1.bf16.msra.mxu0 %v2956
        %3026 = vmatprep.subr.bf16.mxu0 %v2965
        %3027 = vmatpush1.bf16.msra.mxu0 %v2964
        %3028 = vmatprep.subr.bf16.mxu0 %v2973
        %3029 = vmatpush1.bf16.msra.mxu0 %v2972
        %3030 = vmatprep.subr.bf16.mxu0 %v2981
        %3031 = vmatpush1.bf16.msra.mxu0 %v2980
        %3032 = vmatprep.subr.bf16.mxu0 0
        %3033 = vmatpush1.bf16.msra.mxu0 0
        %3034 = vmatprep.subr.bf16.mxu0 0
        %3035 = vmatpush1.bf16.msra.mxu0 0
        %3036 = vmatprep.subr.bf16.mxu0 0
        %3037 = vmatpush1.bf16.msra.mxu0 0
        %3038 = vmatprep.subr.bf16.mxu0 0
        %3039 = vmatpush1.bf16.msra.mxu0 0
        %3040 = vmatprep.subr.bf16.mxu0 0
        %3041 = vmatpush1.bf16.msra.mxu0 0
        %3042 = vmatprep.subr.bf16.mxu0 0
        %3043 = vmatpush1.bf16.msra.mxu0 0
        %3044 = vmatprep.subr.bf16.mxu0 0
        %3045 = vmatpush1.bf16.msra.mxu0 0
        %3046 = vmatprep.subr.bf16.mxu0 0
        %3047 = vmatpush1.bf16.msra.mxu0 0
        %3048 = vmatprep.subr.bf16.mxu0 0
        %3049 = vmatpush1.bf16.msra.mxu0 0
        %3050 = vmatprep.subr.bf16.mxu0 0
        %3051 = vmatpush1.bf16.msra.mxu0 0
        %3052 = vmatprep.subr.bf16.mxu0 0
        %3053 = vmatpush1.bf16.msra.mxu0 0
        %3054 = vmatprep.subr.bf16.mxu0 0
        %3055 = vmatpush1.bf16.msra.mxu0 0
        %3056 = vmatprep.mubr.bf16.mxu0 0
        %3057 = vmatmul.mubr.bf16.gmra.mrb[0].mxu0 %v3022
        %v3058 = vpop.f32.mrb[0].mxu0
        %v3059 = vadd.f32 0.0, %v3058
        %v3060 = vpop.f32.mrb[0].mxu0
        %v3061 = vadd.f32 0.0, %v3060
        %v3062 = vpop.f32.mrb[0].mxu0
        %v3063 = vpop.f32.mrb[0].mxu0
        %3064 = vdwg.mxu0
        %3065 = vmatprep.subr.bf16.mxu0 %v2959
        %3066 = vmatpush1.bf16.msra.mxu0 %v2958
        %3067 = vmatprep.subr.bf16.mxu0 %v2967
        %3068 = vmatpush1.bf16.msra.mxu0 %v2966
        %3069 = vmatprep.subr.bf16.mxu0 %v2975
        %3070 = vmatpush1.bf16.msra.mxu0 %v2974
        %3071 = vmatprep.subr.bf16.mxu0 %v2983
        %3072 = vmatpush1.bf16.msra.mxu0 %v2982
        %3073 = vmatprep.subr.bf16.mxu0 0
        %3074 = vmatpush1.bf16.msra.mxu0 0
        %3075 = vmatprep.subr.bf16.mxu0 0
        %3076 = vmatpush1.bf16.msra.mxu0 0
        %3077 = vmatprep.subr.bf16.mxu0 0
        %3078 = vmatpush1.bf16.msra.mxu0 0
        %3079 = vmatprep.subr.bf16.mxu0 0
        %3080 = vmatpush1.bf16.msra.mxu0 0
        %3081 = vmatprep.subr.bf16.mxu0 0
        %3082 = vmatpush1.bf16.msra.mxu0 0
        %3083 = vmatprep.subr.bf16.mxu0 0
        %3084 = vmatpush1.bf16.msra.mxu0 0
        %3085 = vmatprep.subr.bf16.mxu0 0
        %3086 = vmatpush1.bf16.msra.mxu0 0
        %3087 = vmatprep.subr.bf16.mxu0 0
        %3088 = vmatpush1.bf16.msra.mxu0 0
        %3089 = vmatprep.subr.bf16.mxu0 0
        %3090 = vmatpush1.bf16.msra.mxu0 0
        %3091 = vmatprep.subr.bf16.mxu0 0
        %3092 = vmatpush1.bf16.msra.mxu0 0
        %3093 = vmatprep.subr.bf16.mxu0 0
        %3094 = vmatpush1.bf16.msra.mxu0 0
        %3095 = vmatprep.subr.bf16.mxu0 0
        %3096 = vmatpush1.bf16.msra.mxu0 0
        %3097 = vmatprep.mubr.bf16.mxu0 0
        %3098 = vmatmul.mubr.bf16.gmra.mrb[0].mxu0 %v3022
        %v3099 = vpop.f32.mrb[0].mxu0
        %v3100 = vadd.f32 0.0, %v3099
        %v3101 = vpop.f32.mrb[0].mxu0
        %v3102 = vadd.f32 0.0, %v3101
        %v3103 = vpop.f32.mrb[0].mxu0
        %v3104 = vpop.f32.mrb[0].mxu0
        %3105 = vdwg.mxu0
        %3106 = vmatprep.subr.bf16.mxu0 %v2961
        %3107 = vmatpush1.bf16.msra.mxu0 %v2960
        %3108 = vmatprep.subr.bf16.mxu0 %v2969
        %3109 = vmatpush1.bf16.msra.mxu0 %v2968
        %3110 = vmatprep.subr.bf16.mxu0 %v2977
        %3111 = vmatpush1.bf16.msra.mxu0 %v2976
        %3112 = vmatprep.subr.bf16.mxu0 %v2985
        %3113 = vmatpush1.bf16.msra.mxu0 %v2984
        %3114 = vmatprep.subr.bf16.mxu0 0
        %3115 = vmatpush1.bf16.msra.mxu0 0
        %3116 = vmatprep.subr.bf16.mxu0 0
        %3117 = vmatpush1.bf16.msra.mxu0 0
        %3118 = vmatprep.subr.bf16.mxu0 0
        %3119 = vmatpush1.bf16.msra.mxu0 0
        %3120 = vmatprep.subr.bf16.mxu0 0
        %3121 = vmatpush1.bf16.msra.mxu0 0
        %3122 = vmatprep.subr.bf16.mxu0 0
        %3123 = vmatpush1.bf16.msra.mxu0 0
        %3124 = vmatprep.subr.bf16.mxu0 0
        %3125 = vmatpush1.bf16.msra.mxu0 0
        %3126 = vmatprep.subr.bf16.mxu0 0
        %3127 = vmatpush1.bf16.msra.mxu0 0
        %3128 = vmatprep.subr.bf16.mxu0 0
        %3129 = vmatpush1.bf16.msra.mxu0 0
        %3130 = vmatprep.subr.bf16.mxu0 0
        %3131 = vmatpush1.bf16.msra.mxu0 0
        %3132 = vmatprep.subr.bf16.mxu0 0
        %3133 = vmatpush1.bf16.msra.mxu0 0
        %3134 = vmatprep.subr.bf16.mxu0 0
        %3135 = vmatpush1.bf16.msra.mxu0 0
        %3136 = vmatprep.subr.bf16.mxu0 0
        %3137 = vmatpush1.bf16.msra.mxu0 0
        %3138 = vmatprep.mubr.bf16.mxu0 0
        %3139 = vmatmul.mubr.bf16.gmra.mrb[0].mxu0 %v3022
        %v3140 = vpop.f32.mrb[0].mxu0
        %v3141 = vadd.f32 0.0, %v3140
        %v3142 = vpop.f32.mrb[0].mxu0
        %v3143 = vadd.f32 0.0, %v3142
        %v3144 = vpop.f32.mrb[0].mxu0
        %v3145 = vpop.f32.mrb[0].mxu0
        %3146 = vdwg.mxu0
        %3147 = vmatprep.subr.bf16.mxu0 %v2963
        %3148 = vmatpush1.bf16.msra.mxu0 %v2962
        %3149 = vmatprep.subr.bf16.mxu0 %v2971
        %3150 = vmatpush1.bf16.msra.mxu0 %v2970
        %3151 = vmatprep.subr.bf16.mxu0 %v2979
        %3152 = vmatpush1.bf16.msra.mxu0 %v2978
        %3153 = vmatprep.subr.bf16.mxu0 %v2987
        %3154 = vmatpush1.bf16.msra.mxu0 %v2986
        %3155 = vmatprep.subr.bf16.mxu0 0
        %3156 = vmatpush1.bf16.msra.mxu0 0
        %3157 = vmatprep.subr.bf16.mxu0 0
        %3158 = vmatpush1.bf16.msra.mxu0 0
        %3159 = vmatprep.subr.bf16.mxu0 0
        %3160 = vmatpush1.bf16.msra.mxu0 0
        %3161 = vmatprep.subr.bf16.mxu0 0
        %3162 = vmatpush1.bf16.msra.mxu0 0
        %3163 = vmatprep.subr.bf16.mxu0 0
        %3164 = vmatpush1.bf16.msra.mxu0 0
        %3165 = vmatprep.subr.bf16.mxu0 0
        %3166 = vmatpush1.bf16.msra.mxu0 0
        %3167 = vmatprep.subr.bf16.mxu0 0
        %3168 = vmatpush1.bf16.msra.mxu0 0
        %3169 = vmatprep.subr.bf16.mxu0 0
        %3170 = vmatpush1.bf16.msra.mxu0 0
        %3171 = vmatprep.subr.bf16.mxu0 0
        %3172 = vmatpush1.bf16.msra.mxu0 0
        %3173 = vmatprep.subr.bf16.mxu0 0
        %3174 = vmatpush1.bf16.msra.mxu0 0
        %3175 = vmatprep.subr.bf16.mxu0 0
        %3176 = vmatpush1.bf16.msra.mxu0 0
        %3177 = vmatprep.subr.bf16.mxu0 0
        %3178 = vmatpush1.bf16.msra.mxu0 0
        %3179 = vmatprep.mubr.bf16.mxu0 0
        %3180 = vmatmul.mubr.bf16.gmra.mrb[0].mxu0 %v3022
        %v3181 = vpop.f32.mrb[0].mxu0
        %v3182 = vadd.f32 0.0, %v3181
        %v3183 = vpop.f32.mrb[0].mxu0
        %v3184 = vadd.f32 0.0, %v3183
        %v3185 = vpop.f32.mrb[0].mxu0
        %v3186 = vpop.f32.mrb[0].mxu0
        %3187 = vdwg.mxu0
        %v3188 = vadd.f32 %v2810, %v1957
        %v3189 = vstv %s627
        %v3190 = vmul.f32 %v3189, %v3188
        %v3191 = vadd.f32 %v3059, %v3190
        %v3192 = vstv %s620
        %v3193 = vadd.f32 %v3191, %v3192
        %v3194 = vlaneseq
        %vm3195 = vcmp.ge.s32.totalorder %v3194, 0
        %vm3196 = vcmp.lt.s32.totalorder %v3194, 32
        %vm3197 = vmand %vm3195, %vm3196
        %3198 = vst.msk [vmem:[%s613] sm:$0x1] %vm3197, %v3193
        %v3200 = vrot.slane %v3190, 1
        %3201 = vrot.lane.b32.xlu0 %v3200, 32
        %v3202 = vpop.permute.xlu0 %3201
        %v3204 = vadd.f32 %v3059, %v3202
        %v3205 = vadd.f32 %v3204, %v3192
        %vm3206 = vcmp.ge.s32.totalorder %v3194, 32
        %vm3207 = vcmp.lt.s32.totalorder %v3194, 64
        %vm3208 = vmand %vm3206, %vm3207
        %3209 = vst.msk [vmem:[%s613] sm:$0x1] %vm3208, %v3205
        %v3210 = vrot.slane %v3190, 2
        %3211 = vrot.lane.b32.xlu0 %v3210, 64
        %v3212 = vpop.permute.xlu0 %3211
        %v3214 = vadd.f32 %v3059, %v3212
        %v3215 = vadd.f32 %v3214, %v3192
        %vm3216 = vcmp.ge.s32.totalorder %v3194, 64
        %vm3217 = vcmp.lt.s32.totalorder %v3194, 96
        %vm3218 = vmand %vm3216, %vm3217
        %3219 = vst.msk [vmem:[%s613] sm:$0x1] %vm3218, %v3215
        %v3220 = vrot.slane %v3190, 3
        %3221 = vrot.lane.b32.xlu0 %v3220, 96
        %v3222 = vpop.permute.xlu0 %3221
        %v3224 = vadd.f32 %v3059, %v3222
        %v3225 = vadd.f32 %v3224, %v3192
        %vm3226 = vcmp.ge.s32.totalorder %v3194, 96
        %vm3227 = vcmp.lt.s32.totalorder %v3194, 128
        %vm3228 = vmand %vm3226, %vm3227
        %3229 = vst.msk [vmem:[%s613] sm:$0x1] %vm3228, %v3225
        %v3230 = vrot.slane %v3190, 4
        %v3232 = vadd.f32 %v3061, %v3230
        %v3233 = vadd.f32 %v3232, %v3192
        %3234 = vst.msk [vmem:[%s613 + $0x1] sm:$0x1] %vm3197, %v3233
        %v3235 = vrot.slane %v3190, 5
        %3236 = vrot.lane.b32.xlu0 %v3235, 32
        %v3237 = vpop.permute.xlu0 %3236
        %v3239 = vadd.f32 %v3061, %v3237
        %v3240 = vadd.f32 %v3239, %v3192
        %3241 = vst.msk [vmem:[%s613 + $0x1] sm:$0x1] %vm3208, %v3240
        %v3242 = vrot.slane %v3190, 6
        %3243 = vrot.lane.b32.xlu0 %v3242, 64
        %v3244 = vpop.permute.xlu0 %3243
        %v3246 = vadd.f32 %v3061, %v3244
        %v3247 = vadd.f32 %v3246, %v3192
        %3248 = vst.msk [vmem:[%s613 + $0x1] sm:$0x1] %vm3218, %v3247
        %v3249 = vrot.slane %v3190, 7
        %3250 = vrot.lane.b32.xlu0 %v3249, 96
        %v3251 = vpop.permute.xlu0 %3250
        %v3253 = vadd.f32 %v3061, %v3251
        %v3254 = vadd.f32 %v3253, %v3192
        %3255 = vst.msk [vmem:[%s613 + $0x1] sm:$0x1] %vm3228, %v3254
        %v3256 = vadd.f32 %v2815, %v1957
        %v3257 = vmul.f32 %v3189, %v3256
        %v3258 = vadd.f32 %v3100, %v3257
        %v3259 = vadd.f32 %v3258, %v3192
        %3260 = vst.msk [vmem:[%s613 + $0x2] sm:$0x1] %vm3197, %v3259
        %v3262 = vrot.slane %v3257, 1
        %3263 = vrot.lane.b32.xlu0 %v3262, 32
        %v3264 = vpop.permute.xlu0 %3263
        %v3266 = vadd.f32 %v3100, %v3264
        %v3267 = vadd.f32 %v3266, %v3192
        %3268 = vst.msk [vmem:[%s613 + $0x2] sm:$0x1] %vm3208, %v3267
        %v3269 = vrot.slane %v3257, 2
        %3270 = vrot.lane.b32.xlu0 %v3269, 64
        %v3271 = vpop.permute.xlu0 %3270
        %v3273 = vadd.f32 %v3100, %v3271
        %v3274 = vadd.f32 %v3273, %v3192
        %3275 = vst.msk [vmem:[%s613 + $0x2] sm:$0x1] %vm3218, %v3274
        %v3276 = vrot.slane %v3257, 3
        %3277 = vrot.lane.b32.xlu0 %v3276, 96
        %v3278 = vpop.permute.xlu0 %3277
        %v3280 = vadd.f32 %v3100, %v3278
        %v3281 = vadd.f32 %v3280, %v3192
        %3282 = vst.msk [vmem:[%s613 + $0x2] sm:$0x1] %vm3228, %v3281
        %v3283 = vrot.slane %v3257, 4
        %v3285 = vadd.f32 %v3102, %v3283
        %v3286 = vadd.f32 %v3285, %v3192
        %3287 = vst.msk [vmem:[%s613 + $0x3] sm:$0x1] %vm3197, %v3286
        %v3288 = vrot.slane %v3257, 5
        %3289 = vrot.lane.b32.xlu0 %v3288, 32
        %v3290 = vpop.permute.xlu0 %3289
        %v3292 = vadd.f32 %v3102, %v3290
        %v3293 = vadd.f32 %v3292, %v3192
        %3294 = vst.msk [vmem:[%s613 + $0x3] sm:$0x1] %vm3208, %v3293
        %v3295 = vrot.slane %v3257, 6
        %3296 = vrot.lane.b32.xlu0 %v3295, 64
        %v3297 = vpop.permute.xlu0 %3296
        %v3299 = vadd.f32 %v3102, %v3297
        %v3300 = vadd.f32 %v3299, %v3192
        %3301 = vst.msk [vmem:[%s613 + $0x3] sm:$0x1] %vm3218, %v3300
        %v3302 = vrot.slane %v3257, 7
        %3303 = vrot.lane.b32.xlu0 %v3302, 96
        %v3304 = vpop.permute.xlu0 %3303
        %v3306 = vadd.f32 %v3102, %v3304
        %v3307 = vadd.f32 %v3306, %v3192
        %3308 = vst.msk [vmem:[%s613 + $0x3] sm:$0x1] %vm3228, %v3307
        %v3309 = vadd.f32 %v2820, %v1957
        %v3310 = vmul.f32 %v3189, %v3309
        %v3311 = vadd.f32 %v3141, %v3310
        %v3312 = vadd.f32 %v3311, %v3192
        %3313 = vst.msk [vmem:[%s613 + $0x4] sm:$0x1] %vm3197, %v3312
        %v3315 = vrot.slane %v3310, 1
        %3316 = vrot.lane.b32.xlu0 %v3315, 32
        %v3317 = vpop.permute.xlu0 %3316
        %v3319 = vadd.f32 %v3141, %v3317
        %v3320 = vadd.f32 %v3319, %v3192
        %3321 = vst.msk [vmem:[%s613 + $0x4] sm:$0x1] %vm3208, %v3320
        %v3322 = vrot.slane %v3310, 2
        %3323 = vrot.lane.b32.xlu0 %v3322, 64
        %v3324 = vpop.permute.xlu0 %3323
        %v3326 = vadd.f32 %v3141, %v3324
        %v3327 = vadd.f32 %v3326, %v3192
        %3328 = vst.msk [vmem:[%s613 + $0x4] sm:$0x1] %vm3218, %v3327
        %v3329 = vrot.slane %v3310, 3
        %3330 = vrot.lane.b32.xlu0 %v3329, 96
        %v3331 = vpop.permute.xlu0 %3330
        %v3333 = vadd.f32 %v3141, %v3331
        %v3334 = vadd.f32 %v3333, %v3192
        %3335 = vst.msk [vmem:[%s613 + $0x4] sm:$0x1] %vm3228, %v3334
        %v3336 = vrot.slane %v3310, 4
        %v3338 = vadd.f32 %v3143, %v3336
        %v3339 = vadd.f32 %v3338, %v3192
        %3340 = vst.msk [vmem:[%s613 + $0x5] sm:$0x1] %vm3197, %v3339
        %v3341 = vrot.slane %v3310, 5
        %3342 = vrot.lane.b32.xlu0 %v3341, 32
        %v3343 = vpop.permute.xlu0 %3342
        %v3345 = vadd.f32 %v3143, %v3343
        %v3346 = vadd.f32 %v3345, %v3192
        %3347 = vst.msk [vmem:[%s613 + $0x5] sm:$0x1] %vm3208, %v3346
        %v3348 = vrot.slane %v3310, 6
        %3349 = vrot.lane.b32.xlu0 %v3348, 64
        %v3350 = vpop.permute.xlu0 %3349
        %v3352 = vadd.f32 %v3143, %v3350
        %v3353 = vadd.f32 %v3352, %v3192
        %3354 = vst.msk [vmem:[%s613 + $0x5] sm:$0x1] %vm3218, %v3353
        %v3355 = vrot.slane %v3310, 7
        %3356 = vrot.lane.b32.xlu0 %v3355, 96
        %v3357 = vpop.permute.xlu0 %3356
        %v3359 = vadd.f32 %v3143, %v3357
        %v3360 = vadd.f32 %v3359, %v3192
        %3361 = vst.msk [vmem:[%s613 + $0x5] sm:$0x1] %vm3228, %v3360
        %v3362 = vadd.f32 %v2825, %v1957
        %v3363 = vmul.f32 %v3189, %v3362
        %v3364 = vadd.f32 %v3182, %v3363
        %v3365 = vadd.f32 %v3364, %v3192
        %3366 = vst.msk [vmem:[%s613 + $0x6] sm:$0x1] %vm3197, %v3365
        %v3368 = vrot.slane %v3363, 1
        %3369 = vrot.lane.b32.xlu0 %v3368, 32
        %v3370 = vpop.permute.xlu0 %3369
        %v3372 = vadd.f32 %v3182, %v3370
        %v3373 = vadd.f32 %v3372, %v3192
        %3374 = vst.msk [vmem:[%s613 + $0x6] sm:$0x1] %vm3208, %v3373
        %v3375 = vrot.slane %v3363, 2
        %3376 = vrot.lane.b32.xlu0 %v3375, 64
        %v3377 = vpop.permute.xlu0 %3376
        %v3379 = vadd.f32 %v3182, %v3377
        %v3380 = vadd.f32 %v3379, %v3192
        %3381 = vst.msk [vmem:[%s613 + $0x6] sm:$0x1] %vm3218, %v3380
        %v3382 = vrot.slane %v3363, 3
        %3383 = vrot.lane.b32.xlu0 %v3382, 96
        %v3384 = vpop.permute.xlu0 %3383
        %v3386 = vadd.f32 %v3182, %v3384
        %v3387 = vadd.f32 %v3386, %v3192
        %3388 = vst.msk [vmem:[%s613 + $0x6] sm:$0x1] %vm3228, %v3387
        %v3389 = vrot.slane %v3363, 4
        %v3391 = vadd.f32 %v3184, %v3389
        %v3392 = vadd.f32 %v3391, %v3192
        %3393 = vst.msk [vmem:[%s613 + $0x7] sm:$0x1] %vm3197, %v3392
        %v3394 = vrot.slane %v3363, 5
        %3395 = vrot.lane.b32.xlu0 %v3394, 32
        %v3396 = vpop.permute.xlu0 %3395
        %v3398 = vadd.f32 %v3184, %v3396
        %v3399 = vadd.f32 %v3398, %v3192
        %3400 = vst.msk [vmem:[%s613 + $0x7] sm:$0x1] %vm3208, %v3399
        %v3401 = vrot.slane %v3363, 6
        %3402 = vrot.lane.b32.xlu0 %v3401, 64
        %v3403 = vpop.permute.xlu0 %3402
        %v3405 = vadd.f32 %v3184, %v3403
        %v3406 = vadd.f32 %v3405, %v3192
        %3407 = vst.msk [vmem:[%s613 + $0x7] sm:$0x1] %vm3218, %v3406
        %v3408 = vrot.slane %v3363, 7
        %3409 = vrot.lane.b32.xlu0 %v3408, 96
        %v3410 = vpop.permute.xlu0 %3409
        %v3412 = vadd.f32 %v3184, %v3410
        %v3413 = vadd.f32 %v3412, %v3192
        %3414 = vst.msk [vmem:[%s613 + $0x7] sm:$0x1] %vm3228, %v3413
        %s3415 = scalar_lea.vmem %s579, 256
        %v3416 = vld [vmem:[%s3415] sm:$0xf]
        %v3417 = vld [vmem:[%s3415 + $0x4] sm:$0xf]
        %v3418 = vld [vmem:[%s3415 + $0x8] sm:$0xf]
        %v3419 = vld [vmem:[%s3415 + $0xc] sm:$0xf]
        %v3420 = vld [vmem:[%s3415 + $0x10] sm:$0xf]
        %v3421 = vld [vmem:[%s3415 + $0x14] sm:$0xf]
        %v3422 = vld [vmem:[%s3415 + $0x18] sm:$0xf]
        %v3423 = vld [vmem:[%s3415 + $0x1c] sm:$0xf]
        %v3424 = vld [vmem:[%s3415 + $0x20] sm:$0xf]
        %v3425 = vld [vmem:[%s3415 + $0x24] sm:$0xf]
        %v3426 = vld [vmem:[%s3415 + $0x28] sm:$0xf]
        %v3427 = vld [vmem:[%s3415 + $0x2c] sm:$0xf]
        %v3428 = vld [vmem:[%s3415 + $0x30] sm:$0xf]
        %v3429 = vld [vmem:[%s3415 + $0x34] sm:$0xf]
        %v3430 = vld [vmem:[%s3415 + $0x38] sm:$0xf]
        %v3431 = vld [vmem:[%s3415 + $0x3c] sm:$0xf]
        %v3432 = vld [vmem:[%s3415 + $0x40] sm:$0xf]
        %v3433 = vld [vmem:[%s3415 + $0x44] sm:$0xf]
        %v3434 = vld [vmem:[%s3415 + $0x48] sm:$0xf]
        %v3435 = vld [vmem:[%s3415 + $0x4c] sm:$0xf]
        %v3436 = vld [vmem:[%s3415 + $0x50] sm:$0xf]
        %v3437 = vld [vmem:[%s3415 + $0x54] sm:$0xf]
        %v3438 = vld [vmem:[%s3415 + $0x58] sm:$0xf]
        %v3439 = vld [vmem:[%s3415 + $0x5c] sm:$0xf]
        %v3440 = vld [vmem:[%s3415 + $0x60] sm:$0xf]
        %v3441 = vld [vmem:[%s3415 + $0x64] sm:$0xf]
        %v3442 = vld [vmem:[%s3415 + $0x68] sm:$0xf]
        %v3443 = vld [vmem:[%s3415 + $0x6c] sm:$0xf]
        %v3444 = vld [vmem:[%s3415 + $0x70] sm:$0xf]
        %v3445 = vld [vmem:[%s3415 + $0x74] sm:$0xf]
        %v3446 = vld [vmem:[%s3415 + $0x78] sm:$0xf]
        %v3447 = vld [vmem:[%s3415 + $0x7c] sm:$0xf]
        %v3448 = vld [vmem:[%s3415 + $0x80] sm:$0xf]
        %v3449 = vld [vmem:[%s3415 + $0x84] sm:$0xf]
        %v3450 = vld [vmem:[%s3415 + $0x88] sm:$0xf]
        %v3451 = vld [vmem:[%s3415 + $0x8c] sm:$0xf]
        %v3452 = vld [vmem:[%s3415 + $0x90] sm:$0xf]
        %v3453 = vld [vmem:[%s3415 + $0x94] sm:$0xf]
        %v3454 = vld [vmem:[%s3415 + $0x98] sm:$0xf]
        %v3455 = vld [vmem:[%s3415 + $0x9c] sm:$0xf]
        %v3456 = vld [vmem:[%s3415 + $0xa0] sm:$0xf]
        %v3457 = vld [vmem:[%s3415 + $0xa4] sm:$0xf]
        %v3458 = vld [vmem:[%s3415 + $0xa8] sm:$0xf]
        %v3459 = vld [vmem:[%s3415 + $0xac] sm:$0xf]
        %v3460 = vld [vmem:[%s3415 + $0xb0] sm:$0xf]
        %v3461 = vld [vmem:[%s3415 + $0xb4] sm:$0xf]
        %v3462 = vld [vmem:[%s3415 + $0xb8] sm:$0xf]
        %v3463 = vld [vmem:[%s3415 + $0xbc] sm:$0xf]
        %v3464 = vld [vmem:[%s3415 + $0xc0] sm:$0xf]
        %v3465 = vld [vmem:[%s3415 + $0xc4] sm:$0xf]
        %v3466 = vld [vmem:[%s3415 + $0xc8] sm:$0xf]
        %v3467 = vld [vmem:[%s3415 + $0xcc] sm:$0xf]
        %v3468 = vld [vmem:[%s3415 + $0xd0] sm:$0xf]
        %v3469 = vld [vmem:[%s3415 + $0xd4] sm:$0xf]
        %v3470 = vld [vmem:[%s3415 + $0xd8] sm:$0xf]
        %v3471 = vld [vmem:[%s3415 + $0xdc] sm:$0xf]
        %v3472 = vld [vmem:[%s3415 + $0xe0] sm:$0xf]
        %v3473 = vld [vmem:[%s3415 + $0xe4] sm:$0xf]
        %v3474 = vld [vmem:[%s3415 + $0xe8] sm:$0xf]
        %v3475 = vld [vmem:[%s3415 + $0xec] sm:$0xf]
        %v3476 = vld [vmem:[%s3415 + $0xf0] sm:$0xf]
        %v3477 = vld [vmem:[%s3415 + $0xf4] sm:$0xf]
        %v3478 = vld [vmem:[%s3415 + $0xf8] sm:$0xf]
        %v3479 = vld [vmem:[%s3415 + $0xfc] sm:$0xf]
        %v3544 = vunpack.c.l.b16 %v3416
        %v3545 = vunpack.c.l.b16 %v3417
        %v3546 = vunpack.c.l.b16 %v3418
        %v3547 = vunpack.c.l.b16 %v3419
        %v3548 = vunpack.c.l.b16 %v3420
        %v3549 = vunpack.c.l.b16 %v3421
        %v3550 = vunpack.c.l.b16 %v3422
        %v3551 = vunpack.c.l.b16 %v3423
        %v3552 = vunpack.c.l.b16 %v3424
        %v3553 = vunpack.c.l.b16 %v3425
        %v3554 = vunpack.c.l.b16 %v3426
        %v3555 = vunpack.c.l.b16 %v3427
        %v3556 = vunpack.c.l.b16 %v3428
        %v3557 = vunpack.c.l.b16 %v3429
        %v3558 = vunpack.c.l.b16 %v3430
        %v3559 = vunpack.c.l.b16 %v3431
        %v3560 = vunpack.c.l.b16 %v3432
        %v3561 = vunpack.c.l.b16 %v3433
        %v3562 = vunpack.c.l.b16 %v3434
        %v3563 = vunpack.c.l.b16 %v3435
        %v3564 = vunpack.c.l.b16 %v3436
        %v3565 = vunpack.c.l.b16 %v3437
        %v3566 = vunpack.c.l.b16 %v3438
        %v3567 = vunpack.c.l.b16 %v3439
        %v3568 = vunpack.c.l.b16 %v3440
        %v3569 = vunpack.c.l.b16 %v3441
        %v3570 = vunpack.c.l.b16 %v3442
        %v3571 = vunpack.c.l.b16 %v3443
        %v3572 = vunpack.c.l.b16 %v3444
        %v3573 = vunpack.c.l.b16 %v3445
        %v3574 = vunpack.c.l.b16 %v3446
        %v3575 = vunpack.c.l.b16 %v3447
        %v3576 = vunpack.c.l.b16 %v3448
        %v3577 = vunpack.c.l.b16 %v3449
        %v3578 = vunpack.c.l.b16 %v3450
        %v3579 = vunpack.c.l.b16 %v3451
        %v3580 = vunpack.c.l.b16 %v3452
        %v3581 = vunpack.c.l.b16 %v3453
        %v3582 = vunpack.c.l.b16 %v3454
        %v3583 = vunpack.c.l.b16 %v3455
        %v3584 = vunpack.c.l.b16 %v3456
        %v3585 = vunpack.c.l.b16 %v3457
        %v3586 = vunpack.c.l.b16 %v3458
        %v3587 = vunpack.c.l.b16 %v3459
        %v3588 = vunpack.c.l.b16 %v3460
        %v3589 = vunpack.c.l.b16 %v3461
        %v3590 = vunpack.c.l.b16 %v3462
        %v3591 = vunpack.c.l.b16 %v3463
        %v3592 = vunpack.c.l.b16 %v3464
        %v3593 = vunpack.c.l.b16 %v3465
        %v3594 = vunpack.c.l.b16 %v3466
        %v3595 = vunpack.c.l.b16 %v3467
        %v3596 = vunpack.c.l.b16 %v3468
        %v3597 = vunpack.c.l.b16 %v3469
        %v3598 = vunpack.c.l.b16 %v3470
        %v3599 = vunpack.c.l.b16 %v3471
        %v3600 = vunpack.c.l.b16 %v3472
        %v3601 = vunpack.c.l.b16 %v3473
        %v3602 = vunpack.c.l.b16 %v3474
        %v3603 = vunpack.c.l.b16 %v3475
        %v3604 = vunpack.c.l.b16 %v3476
        %v3605 = vunpack.c.l.b16 %v3477
        %v3606 = vunpack.c.l.b16 %v3478
        %v3607 = vunpack.c.l.b16 %v3479
        %v3608 = vpack.c.b16 %v3545, %v3544
        %v3609 = vpack.c.b16 %v3547, %v3546
        %v3610 = vpack.c.b16 %v3549, %v3548
        %v3611 = vpack.c.b16 %v3551, %v3550
        %v3612 = vpack.c.b16 %v3553, %v3552
        %v3613 = vpack.c.b16 %v3555, %v3554
        %v3614 = vpack.c.b16 %v3557, %v3556
        %v3615 = vpack.c.b16 %v3559, %v3558
        %v3616 = vpack.c.b16 %v3561, %v3560
        %v3617 = vpack.c.b16 %v3563, %v3562
        %v3618 = vpack.c.b16 %v3565, %v3564
        %v3619 = vpack.c.b16 %v3567, %v3566
        %v3620 = vpack.c.b16 %v3569, %v3568
        %v3621 = vpack.c.b16 %v3571, %v3570
        %v3622 = vpack.c.b16 %v3573, %v3572
        %v3623 = vpack.c.b16 %v3575, %v3574
        %v3624 = vpack.c.b16 %v3577, %v3576
        %v3625 = vpack.c.b16 %v3579, %v3578
        %v3626 = vpack.c.b16 %v3581, %v3580
        %v3627 = vpack.c.b16 %v3583, %v3582
        %v3628 = vpack.c.b16 %v3585, %v3584
        %v3629 = vpack.c.b16 %v3587, %v3586
        %v3630 = vpack.c.b16 %v3589, %v3588
        %v3631 = vpack.c.b16 %v3591, %v3590
        %v3632 = vpack.c.b16 %v3593, %v3592
        %v3633 = vpack.c.b16 %v3595, %v3594
        %v3634 = vpack.c.b16 %v3597, %v3596
        %v3635 = vpack.c.b16 %v3599, %v3598
        %v3636 = vpack.c.b16 %v3601, %v3600
        %v3637 = vpack.c.b16 %v3603, %v3602
        %v3638 = vpack.c.b16 %v3605, %v3604
        %v3639 = vpack.c.b16 %v3607, %v3606
        %3672 = vmatprep.subr.bf16.mxu0 0
        %3673 = vmatpush1.bf16.msra.mxu0 %v3608
        %3674 = vmatprep.subr.bf16.mxu0 0
        %3675 = vmatpush1.bf16.msra.mxu0 %v3609
        %3676 = vmatprep.subr.bf16.mxu0 0
        %3677 = vmatpush1.bf16.msra.mxu0 %v3610
        %3678 = vmatprep.subr.bf16.mxu0 0
        %3679 = vmatpush1.bf16.msra.mxu0 %v3611
        %3680 = vmatprep.subr.bf16.mxu0 0
        %3681 = vmatpush1.bf16.msra.mxu0 %v3612
        %3682 = vmatprep.subr.bf16.mxu0 0
        %3683 = vmatpush1.bf16.msra.mxu0 %v3613
        %3684 = vmatprep.subr.bf16.mxu0 0
        %3685 = vmatpush1.bf16.msra.mxu0 %v3614
        %3686 = vmatprep.subr.bf16.mxu0 0
        %3687 = vmatpush1.bf16.msra.mxu0 %v3615
        %3688 = vmatprep.subr.bf16.mxu0 0
        %3689 = vmatpush1.bf16.msra.mxu0 %v3616
        %3690 = vmatprep.subr.bf16.mxu0 0
        %3691 = vmatpush1.bf16.msra.mxu0 %v3617
        %3692 = vmatprep.subr.bf16.mxu0 0
        %3693 = vmatpush1.bf16.msra.mxu0 %v3618
        %3694 = vmatprep.subr.bf16.mxu0 0
        %3695 = vmatpush1.bf16.msra.mxu0 %v3619
        %3696 = vmatprep.subr.bf16.mxu0 0
        %3697 = vmatpush1.bf16.msra.mxu0 %v3620
        %3698 = vmatprep.subr.bf16.mxu0 0
        %3699 = vmatpush1.bf16.msra.mxu0 %v3621
        %3700 = vmatprep.subr.bf16.mxu0 0
        %3701 = vmatpush1.bf16.msra.mxu0 %v3622
        %3702 = vmatprep.subr.bf16.mxu0 0
        %3703 = vmatpush1.bf16.msra.mxu0 %v3623
        %3704 = vmatprep.mubr.bf16.mxu0 %v729
        %3705 = vmatmul.mubr.bf16.gmra.mrb[0].mxu0 %v722
        %v3706 = vpop.f32.mrb[0].mxu0
        %v3707 = vadd.f32 %v706, %v3706
        %v3708 = vpop.f32.mrb[0].mxu0
        %v3709 = vpop.f32.mrb[0].mxu0
        %v3710 = vpop.f32.mrb[0].mxu0
        %3711 = vdwg.mxu0
        %3712 = vmatprep.subr.bf16.mxu0 0
        %3713 = vmatpush1.bf16.msra.mxu0 %v3624
        %3714 = vmatprep.subr.bf16.mxu0 0
        %3715 = vmatpush1.bf16.msra.mxu0 %v3625
        %3716 = vmatprep.subr.bf16.mxu0 0
        %3717 = vmatpush1.bf16.msra.mxu0 %v3626
        %3718 = vmatprep.subr.bf16.mxu0 0
        %3719 = vmatpush1.bf16.msra.mxu0 %v3627
        %3720 = vmatprep.subr.bf16.mxu0 0
        %3721 = vmatpush1.bf16.msra.mxu0 %v3628
        %3722 = vmatprep.subr.bf16.mxu0 0
        %3723 = vmatpush1.bf16.msra.mxu0 %v3629
        %3724 = vmatprep.subr.bf16.mxu0 0
        %3725 = vmatpush1.bf16.msra.mxu0 %v3630
        %3726 = vmatprep.subr.bf16.mxu0 0
        %3727 = vmatpush1.bf16.msra.mxu0 %v3631
        %3728 = vmatprep.subr.bf16.mxu0 0
        %3729 = vmatpush1.bf16.msra.mxu0 %v3632
        %3730 = vmatprep.subr.bf16.mxu0 0
        %3731 = vmatpush1.bf16.msra.mxu0 %v3633
        %3732 = vmatprep.subr.bf16.mxu0 0
        %3733 = vmatpush1.bf16.msra.mxu0 %v3634
        %3734 = vmatprep.subr.bf16.mxu0 0
        %3735 = vmatpush1.bf16.msra.mxu0 %v3635
        %3736 = vmatprep.subr.bf16.mxu0 0
        %3737 = vmatpush1.bf16.msra.mxu0 %v3636
        %3738 = vmatprep.subr.bf16.mxu0 0
        %3739 = vmatpush1.bf16.msra.mxu0 %v3637
        %3740 = vmatprep.subr.bf16.mxu0 0
        %3741 = vmatpush1.bf16.msra.mxu0 %v3638
        %3742 = vmatprep.subr.bf16.mxu0 0
        %3743 = vmatpush1.bf16.msra.mxu0 %v3639
        %3744 = vmatprep.mubr.bf16.mxu0 %v731
        %3745 = vmatmul.mubr.bf16.gmra.mrb[0].mxu0 %v730
        %v3746 = vpop.f32.mrb[0].mxu0
        %v3747 = vadd.f32 %v3707, %v3746
        %v3748 = vpop.f32.mrb[0].mxu0
        %v3749 = vpop.f32.mrb[0].mxu0
        %v3750 = vpop.f32.mrb[0].mxu0
        %3751 = vdwg.mxu0
        %s3752 = scalar_lea.vmem %s586, 256
        %v3753 = vld [vmem:[%s3752] sm:$0xf]
        %v3754 = vld [vmem:[%s3752 + $0x4] sm:$0xf]
        %v3755 = vld [vmem:[%s3752 + $0x8] sm:$0xf]
        %v3756 = vld [vmem:[%s3752 + $0xc] sm:$0xf]
        %v3757 = vld [vmem:[%s3752 + $0x10] sm:$0xf]
        %v3758 = vld [vmem:[%s3752 + $0x14] sm:$0xf]
        %v3759 = vld [vmem:[%s3752 + $0x18] sm:$0xf]
        %v3760 = vld [vmem:[%s3752 + $0x1c] sm:$0xf]
        %v3761 = vld [vmem:[%s3752 + $0x20] sm:$0xf]
        %v3762 = vld [vmem:[%s3752 + $0x24] sm:$0xf]
        %v3763 = vld [vmem:[%s3752 + $0x28] sm:$0xf]
        %v3764 = vld [vmem:[%s3752 + $0x2c] sm:$0xf]
        %v3765 = vld [vmem:[%s3752 + $0x30] sm:$0xf]
        %v3766 = vld [vmem:[%s3752 + $0x34] sm:$0xf]
        %v3767 = vld [vmem:[%s3752 + $0x38] sm:$0xf]
        %v3768 = vld [vmem:[%s3752 + $0x3c] sm:$0xf]
        %v3769 = vld [vmem:[%s3752 + $0x40] sm:$0xf]
        %v3770 = vld [vmem:[%s3752 + $0x44] sm:$0xf]
        %v3771 = vld [vmem:[%s3752 + $0x48] sm:$0xf]
        %v3772 = vld [vmem:[%s3752 + $0x4c] sm:$0xf]
        %v3773 = vld [vmem:[%s3752 + $0x50] sm:$0xf]
        %v3774 = vld [vmem:[%s3752 + $0x54] sm:$0xf]
        %v3775 = vld [vmem:[%s3752 + $0x58] sm:$0xf]
        %v3776 = vld [vmem:[%s3752 + $0x5c] sm:$0xf]
        %v3777 = vld [vmem:[%s3752 + $0x60] sm:$0xf]
        %v3778 = vld [vmem:[%s3752 + $0x64] sm:$0xf]
        %v3779 = vld [vmem:[%s3752 + $0x68] sm:$0xf]
        %v3780 = vld [vmem:[%s3752 + $0x6c] sm:$0xf]
        %v3781 = vld [vmem:[%s3752 + $0x70] sm:$0xf]
        %v3782 = vld [vmem:[%s3752 + $0x74] sm:$0xf]
        %v3783 = vld [vmem:[%s3752 + $0x78] sm:$0xf]
        %v3784 = vld [vmem:[%s3752 + $0x7c] sm:$0xf]
        %v3785 = vld [vmem:[%s3752 + $0x80] sm:$0xf]
        %v3786 = vld [vmem:[%s3752 + $0x84] sm:$0xf]
        %v3787 = vld [vmem:[%s3752 + $0x88] sm:$0xf]
        %v3788 = vld [vmem:[%s3752 + $0x8c] sm:$0xf]
        %v3789 = vld [vmem:[%s3752 + $0x90] sm:$0xf]
        %v3790 = vld [vmem:[%s3752 + $0x94] sm:$0xf]
        %v3791 = vld [vmem:[%s3752 + $0x98] sm:$0xf]
        %v3792 = vld [vmem:[%s3752 + $0x9c] sm:$0xf]
        %v3793 = vld [vmem:[%s3752 + $0xa0] sm:$0xf]
        %v3794 = vld [vmem:[%s3752 + $0xa4] sm:$0xf]
        %v3795 = vld [vmem:[%s3752 + $0xa8] sm:$0xf]
        %v3796 = vld [vmem:[%s3752 + $0xac] sm:$0xf]
        %v3797 = vld [vmem:[%s3752 + $0xb0] sm:$0xf]
        %v3798 = vld [vmem:[%s3752 + $0xb4] sm:$0xf]
        %v3799 = vld [vmem:[%s3752 + $0xb8] sm:$0xf]
        %v3800 = vld [vmem:[%s3752 + $0xbc] sm:$0xf]
        %v3801 = vld [vmem:[%s3752 + $0xc0] sm:$0xf]
        %v3802 = vld [vmem:[%s3752 + $0xc4] sm:$0xf]
        %v3803 = vld [vmem:[%s3752 + $0xc8] sm:$0xf]
        %v3804 = vld [vmem:[%s3752 + $0xcc] sm:$0xf]
        %v3805 = vld [vmem:[%s3752 + $0xd0] sm:$0xf]
        %v3806 = vld [vmem:[%s3752 + $0xd4] sm:$0xf]
        %v3807 = vld [vmem:[%s3752 + $0xd8] sm:$0xf]
        %v3808 = vld [vmem:[%s3752 + $0xdc] sm:$0xf]
        %v3809 = vld [vmem:[%s3752 + $0xe0] sm:$0xf]
        %v3810 = vld [vmem:[%s3752 + $0xe4] sm:$0xf]
        %v3811 = vld [vmem:[%s3752 + $0xe8] sm:$0xf]
        %v3812 = vld [vmem:[%s3752 + $0xec] sm:$0xf]
        %v3813 = vld [vmem:[%s3752 + $0xf0] sm:$0xf]
        %v3814 = vld [vmem:[%s3752 + $0xf4] sm:$0xf]
        %v3815 = vld [vmem:[%s3752 + $0xf8] sm:$0xf]
        %v3816 = vld [vmem:[%s3752 + $0xfc] sm:$0xf]
        %v3817 = vmul.f32 %v1072, %v3747
        %v3818 = vadd.f32 %v3817, %v1074
        %v3819 = vmul.f32 %v1076, %v3818
        %v3884 = vunpack.c.l.b16 %v3753
        %v3885 = vunpack.c.l.b16 %v3754
        %v3886 = vunpack.c.l.b16 %v3755
        %v3887 = vunpack.c.l.b16 %v3756
        %v3888 = vunpack.c.l.b16 %v3757
        %v3889 = vunpack.c.l.b16 %v3758
        %v3890 = vunpack.c.l.b16 %v3759
        %v3891 = vunpack.c.l.b16 %v3760
        %v3892 = vunpack.c.l.b16 %v3761
        %v3893 = vunpack.c.l.b16 %v3762
        %v3894 = vunpack.c.l.b16 %v3763
        %v3895 = vunpack.c.l.b16 %v3764
        %v3896 = vunpack.c.l.b16 %v3765
        %v3897 = vunpack.c.l.b16 %v3766
        %v3898 = vunpack.c.l.b16 %v3767
        %v3899 = vunpack.c.l.b16 %v3768
        %v3900 = vunpack.c.l.b16 %v3769
        %v3901 = vunpack.c.l.b16 %v3770
        %v3902 = vunpack.c.l.b16 %v3771
        %v3903 = vunpack.c.l.b16 %v3772
        %v3904 = vunpack.c.l.b16 %v3773
        %v3905 = vunpack.c.l.b16 %v3774
        %v3906 = vunpack.c.l.b16 %v3775
        %v3907 = vunpack.c.l.b16 %v3776
        %v3908 = vunpack.c.l.b16 %v3777
        %v3909 = vunpack.c.l.b16 %v3778
        %v3910 = vunpack.c.l.b16 %v3779
        %v3911 = vunpack.c.l.b16 %v3780
        %v3912 = vunpack.c.l.b16 %v3781
        %v3913 = vunpack.c.l.b16 %v3782
        %v3914 = vunpack.c.l.b16 %v3783
        %v3915 = vunpack.c.l.b16 %v3784
        %v3916 = vunpack.c.l.b16 %v3785
        %v3917 = vunpack.c.l.b16 %v3786
        %v3918 = vunpack.c.l.b16 %v3787
        %v3919 = vunpack.c.l.b16 %v3788
        %v3920 = vunpack.c.l.b16 %v3789
        %v3921 = vunpack.c.l.b16 %v3790
        %v3922 = vunpack.c.l.b16 %v3791
        %v3923 = vunpack.c.l.b16 %v3792
        %v3924 = vunpack.c.l.b16 %v3793
        %v3925 = vunpack.c.l.b16 %v3794
        %v3926 = vunpack.c.l.b16 %v3795
        %v3927 = vunpack.c.l.b16 %v3796
        %v3928 = vunpack.c.l.b16 %v3797
        %v3929 = vunpack.c.l.b16 %v3798
        %v3930 = vunpack.c.l.b16 %v3799
        %v3931 = vunpack.c.l.b16 %v3800
        %v3932 = vunpack.c.l.b16 %v3801
        %v3933 = vunpack.c.l.b16 %v3802
        %v3934 = vunpack.c.l.b16 %v3803
        %v3935 = vunpack.c.l.b16 %v3804
        %v3936 = vunpack.c.l.b16 %v3805
        %v3937 = vunpack.c.l.b16 %v3806
        %v3938 = vunpack.c.l.b16 %v3807
        %v3939 = vunpack.c.l.b16 %v3808
        %v3940 = vunpack.c.l.b16 %v3809
        %v3941 = vunpack.c.l.b16 %v3810
        %v3942 = vunpack.c.l.b16 %v3811
        %v3943 = vunpack.c.l.b16 %v3812
        %v3944 = vunpack.c.l.b16 %v3813
        %v3945 = vunpack.c.l.b16 %v3814
        %v3946 = vunpack.c.l.b16 %v3815
        %v3947 = vunpack.c.l.b16 %v3816
        %v3948 = vpack.c.b16 %v3885, %v3884
        %v3949 = vpack.c.b16 %v3887, %v3886
        %v3950 = vpack.c.b16 %v3889, %v3888
        %v3951 = vpack.c.b16 %v3891, %v3890
        %v3952 = vpack.c.b16 %v3893, %v3892
        %v3953 = vpack.c.b16 %v3895, %v3894
        %v3954 = vpack.c.b16 %v3897, %v3896
        %v3955 = vpack.c.b16 %v3899, %v3898
        %v3956 = vpack.c.b16 %v3901, %v3900
        %v3957 = vpack.c.b16 %v3903, %v3902
        %v3958 = vpack.c.b16 %v3905, %v3904
        %v3959 = vpack.c.b16 %v3907, %v3906
        %v3960 = vpack.c.b16 %v3909, %v3908
        %v3961 = vpack.c.b16 %v3911, %v3910
        %v3962 = vpack.c.b16 %v3913, %v3912
        %v3963 = vpack.c.b16 %v3915, %v3914
        %v3964 = vpack.c.b16 %v3917, %v3916
        %v3965 = vpack.c.b16 %v3919, %v3918
        %v3966 = vpack.c.b16 %v3921, %v3920
        %v3967 = vpack.c.b16 %v3923, %v3922
        %v3968 = vpack.c.b16 %v3925, %v3924
        %v3969 = vpack.c.b16 %v3927, %v3926
        %v3970 = vpack.c.b16 %v3929, %v3928
        %v3971 = vpack.c.b16 %v3931, %v3930
        %v3972 = vpack.c.b16 %v3933, %v3932
        %v3973 = vpack.c.b16 %v3935, %v3934
        %v3974 = vpack.c.b16 %v3937, %v3936
        %v3975 = vpack.c.b16 %v3939, %v3938
        %v3976 = vpack.c.b16 %v3941, %v3940
        %v3977 = vpack.c.b16 %v3943, %v3942
        %v3978 = vpack.c.b16 %v3945, %v3944
        %v3979 = vpack.c.b16 %v3947, %v3946
        %4012 = vmatprep.subr.bf16.mxu0 0
        %4013 = vmatpush1.bf16.msra.mxu0 %v3948
        %4014 = vmatprep.subr.bf16.mxu0 0
        %4015 = vmatpush1.bf16.msra.mxu0 %v3949
        %4016 = vmatprep.subr.bf16.mxu0 0
        %4017 = vmatpush1.bf16.msra.mxu0 %v3950
        %4018 = vmatprep.subr.bf16.mxu0 0
        %4019 = vmatpush1.bf16.msra.mxu0 %v3951
        %4020 = vmatprep.subr.bf16.mxu0 0
        %4021 = vmatpush1.bf16.msra.mxu0 %v3952
        %4022 = vmatprep.subr.bf16.mxu0 0
        %4023 = vmatpush1.bf16.msra.mxu0 %v3953
        %4024 = vmatprep.subr.bf16.mxu0 0
        %4025 = vmatpush1.bf16.msra.mxu0 %v3954
        %4026 = vmatprep.subr.bf16.mxu0 0
        %4027 = vmatpush1.bf16.msra.mxu0 %v3955
        %4028 = vmatprep.subr.bf16.mxu0 0
        %4029 = vmatpush1.bf16.msra.mxu0 %v3956
        %4030 = vmatprep.subr.bf16.mxu0 0
        %4031 = vmatpush1.bf16.msra.mxu0 %v3957
        %4032 = vmatprep.subr.bf16.mxu0 0
        %4033 = vmatpush1.bf16.msra.mxu0 %v3958
        %4034 = vmatprep.subr.bf16.mxu0 0
        %4035 = vmatpush1.bf16.msra.mxu0 %v3959
        %4036 = vmatprep.subr.bf16.mxu0 0
        %4037 = vmatpush1.bf16.msra.mxu0 %v3960
        %4038 = vmatprep.subr.bf16.mxu0 0
        %4039 = vmatpush1.bf16.msra.mxu0 %v3961
        %4040 = vmatprep.subr.bf16.mxu0 0
        %4041 = vmatpush1.bf16.msra.mxu0 %v3962
        %4042 = vmatprep.subr.bf16.mxu0 0
        %4043 = vmatpush1.bf16.msra.mxu0 %v3963
        %4044 = vmatprep.mubr.bf16.mxu0 %v1100
        %4045 = vmatmul.mubr.bf16.gmra.mrb[0].mxu0 %v1093
        %v4046 = vpop.f32.mrb[0].mxu0
        %v4047 = vadd.f32 %v3819, %v4046
        %v4048 = vpop.f32.mrb[0].mxu0
        %v4049 = vpop.f32.mrb[0].mxu0
        %v4050 = vpop.f32.mrb[0].mxu0
        %4051 = vdwg.mxu0
        %4052 = vmatprep.subr.bf16.mxu0 0
        %4053 = vmatpush1.bf16.msra.mxu0 %v3964
        %4054 = vmatprep.subr.bf16.mxu0 0
        %4055 = vmatpush1.bf16.msra.mxu0 %v3965
        %4056 = vmatprep.subr.bf16.mxu0 0
        %4057 = vmatpush1.bf16.msra.mxu0 %v3966
        %4058 = vmatprep.subr.bf16.mxu0 0
        %4059 = vmatpush1.bf16.msra.mxu0 %v3967
        %4060 = vmatprep.subr.bf16.mxu0 0
        %4061 = vmatpush1.bf16.msra.mxu0 %v3968
        %4062 = vmatprep.subr.bf16.mxu0 0
        %4063 = vmatpush1.bf16.msra.mxu0 %v3969
        %4064 = vmatprep.subr.bf16.mxu0 0
        %4065 = vmatpush1.bf16.msra.mxu0 %v3970
        %4066 = vmatprep.subr.bf16.mxu0 0
        %4067 = vmatpush1.bf16.msra.mxu0 %v3971
        %4068 = vmatprep.subr.bf16.mxu0 0
        %4069 = vmatpush1.bf16.msra.mxu0 %v3972
        %4070 = vmatprep.subr.bf16.mxu0 0
        %4071 = vmatpush1.bf16.msra.mxu0 %v3973
        %4072 = vmatprep.subr.bf16.mxu0 0
        %4073 = vmatpush1.bf16.msra.mxu0 %v3974
        %4074 = vmatprep.subr.bf16.mxu0 0
        %4075 = vmatpush1.bf16.msra.mxu0 %v3975
        %4076 = vmatprep.subr.bf16.mxu0 0
        %4077 = vmatpush1.bf16.msra.mxu0 %v3976
        %4078 = vmatprep.subr.bf16.mxu0 0
        %4079 = vmatpush1.bf16.msra.mxu0 %v3977
        %4080 = vmatprep.subr.bf16.mxu0 0
        %4081 = vmatpush1.bf16.msra.mxu0 %v3978
        %4082 = vmatprep.subr.bf16.mxu0 0
        %4083 = vmatpush1.bf16.msra.mxu0 %v3979
        %4084 = vmatprep.mubr.bf16.mxu0 %v1102
        %4085 = vmatmul.mubr.bf16.gmra.mrb[0].mxu0 %v1101
        %v4086 = vpop.f32.mrb[0].mxu0
        %v4087 = vadd.f32 %v4047, %v4086
        %v4088 = vpop.f32.mrb[0].mxu0
        %v4089 = vpop.f32.mrb[0].mxu0
        %v4090 = vpop.f32.mrb[0].mxu0
        %4091 = vdwg.mxu0
        %v4092 = vadd.f32 %v4087, %v1379
        %s4093 = scalar_lea.vmem %s593, 128
        %v4094 = vld [vmem:[%s4093] sm:$0xf]
        %v4095 = vld [vmem:[%s4093 + $0x4] sm:$0xf]
        %v4096 = vld [vmem:[%s4093 + $0x8] sm:$0xf]
        %v4097 = vld [vmem:[%s4093 + $0xc] sm:$0xf]
        %v4098 = vld [vmem:[%s4093 + $0x10] sm:$0xf]
        %v4099 = vld [vmem:[%s4093 + $0x14] sm:$0xf]
        %v4100 = vld [vmem:[%s4093 + $0x18] sm:$0xf]
        %v4101 = vld [vmem:[%s4093 + $0x1c] sm:$0xf]
        %v4102 = vld [vmem:[%s4093 + $0x20] sm:$0xf]
        %v4103 = vld [vmem:[%s4093 + $0x24] sm:$0xf]
        %v4104 = vld [vmem:[%s4093 + $0x28] sm:$0xf]
        %v4105 = vld [vmem:[%s4093 + $0x2c] sm:$0xf]
        %v4106 = vld [vmem:[%s4093 + $0x30] sm:$0xf]
        %v4107 = vld [vmem:[%s4093 + $0x34] sm:$0xf]
        %v4108 = vld [vmem:[%s4093 + $0x38] sm:$0xf]
        %v4109 = vld [vmem:[%s4093 + $0x3c] sm:$0xf]
        %v4110 = vld [vmem:[%s4093 + $0x40] sm:$0xf]
        %v4111 = vld [vmem:[%s4093 + $0x44] sm:$0xf]
        %v4112 = vld [vmem:[%s4093 + $0x48] sm:$0xf]
        %v4113 = vld [vmem:[%s4093 + $0x4c] sm:$0xf]
        %v4114 = vld [vmem:[%s4093 + $0x50] sm:$0xf]
        %v4115 = vld [vmem:[%s4093 + $0x54] sm:$0xf]
        %v4116 = vld [vmem:[%s4093 + $0x58] sm:$0xf]
        %v4117 = vld [vmem:[%s4093 + $0x5c] sm:$0xf]
        %v4118 = vld [vmem:[%s4093 + $0x60] sm:$0xf]
        %v4119 = vld [vmem:[%s4093 + $0x64] sm:$0xf]
        %v4120 = vld [vmem:[%s4093 + $0x68] sm:$0xf]
        %v4121 = vld [vmem:[%s4093 + $0x6c] sm:$0xf]
        %v4122 = vld [vmem:[%s4093 + $0x70] sm:$0xf]
        %v4123 = vld [vmem:[%s4093 + $0x74] sm:$0xf]
        %v4124 = vld [vmem:[%s4093 + $0x78] sm:$0xf]
        %v4125 = vld [vmem:[%s4093 + $0x7c] sm:$0xf]
        %v4126 = vmul.f32 %v1072, %v4092
        %v4127 = vadd.f32 %v4126, %v1074
        %v4128 = vmul.f32 %v1415, %v4127
        %v4161 = vunpack.c.l.b16 %v4094
        %v4162 = vunpack.c.l.b16 %v4095
        %v4163 = vunpack.c.l.b16 %v4096
        %v4164 = vunpack.c.l.b16 %v4097
        %v4165 = vunpack.c.l.b16 %v4098
        %v4166 = vunpack.c.l.b16 %v4099
        %v4167 = vunpack.c.l.b16 %v4100
        %v4168 = vunpack.c.l.b16 %v4101
        %v4169 = vunpack.c.l.b16 %v4102
        %v4170 = vunpack.c.l.b16 %v4103
        %v4171 = vunpack.c.l.b16 %v4104
        %v4172 = vunpack.c.l.b16 %v4105
        %v4173 = vunpack.c.l.b16 %v4106
        %v4174 = vunpack.c.l.b16 %v4107
        %v4175 = vunpack.c.l.b16 %v4108
        %v4176 = vunpack.c.l.b16 %v4109
        %v4177 = vunpack.c.l.b16 %v4110
        %v4178 = vunpack.c.l.b16 %v4111
        %v4179 = vunpack.c.l.b16 %v4112
        %v4180 = vunpack.c.l.b16 %v4113
        %v4181 = vunpack.c.l.b16 %v4114
        %v4182 = vunpack.c.l.b16 %v4115
        %v4183 = vunpack.c.l.b16 %v4116
        %v4184 = vunpack.c.l.b16 %v4117
        %v4185 = vunpack.c.l.b16 %v4118
        %v4186 = vunpack.c.l.b16 %v4119
        %v4187 = vunpack.c.l.b16 %v4120
        %v4188 = vunpack.c.l.b16 %v4121
        %v4189 = vunpack.c.l.b16 %v4122
        %v4190 = vunpack.c.l.b16 %v4123
        %v4191 = vunpack.c.l.b16 %v4124
        %v4192 = vunpack.c.l.b16 %v4125
        %v4193 = vpack.c.b16 %v4162, %v4161
        %v4194 = vpack.c.b16 %v4164, %v4163
        %v4195 = vpack.c.b16 %v4166, %v4165
        %v4196 = vpack.c.b16 %v4168, %v4167
        %v4197 = vpack.c.b16 %v4170, %v4169
        %v4198 = vpack.c.b16 %v4172, %v4171
        %v4199 = vpack.c.b16 %v4174, %v4173
        %v4200 = vpack.c.b16 %v4176, %v4175
        %v4201 = vpack.c.b16 %v4178, %v4177
        %v4202 = vpack.c.b16 %v4180, %v4179
        %v4203 = vpack.c.b16 %v4182, %v4181
        %v4204 = vpack.c.b16 %v4184, %v4183
        %v4205 = vpack.c.b16 %v4186, %v4185
        %v4206 = vpack.c.b16 %v4188, %v4187
        %v4207 = vpack.c.b16 %v4190, %v4189
        %v4208 = vpack.c.b16 %v4192, %v4191
        %4225 = vmatprep.subr.bf16.mxu0 0
        %4226 = vmatpush1.bf16.msra.mxu0 %v4193
        %4227 = vmatprep.subr.bf16.mxu0 0
        %4228 = vmatpush1.bf16.msra.mxu0 %v4194
        %4229 = vmatprep.subr.bf16.mxu0 0
        %4230 = vmatpush1.bf16.msra.mxu0 %v4195
        %4231 = vmatprep.subr.bf16.mxu0 0
        %4232 = vmatpush1.bf16.msra.mxu0 %v4196
        %4233 = vmatprep.subr.bf16.mxu0 0
        %4234 = vmatpush1.bf16.msra.mxu0 %v4197
        %4235 = vmatprep.subr.bf16.mxu0 0
        %4236 = vmatpush1.bf16.msra.mxu0 %v4198
        %4237 = vmatprep.subr.bf16.mxu0 0
        %4238 = vmatpush1.bf16.msra.mxu0 %v4199
        %4239 = vmatprep.subr.bf16.mxu0 0
        %4240 = vmatpush1.bf16.msra.mxu0 %v4200
        %4241 = vmatprep.subr.bf16.mxu0 0
        %4242 = vmatpush1.bf16.msra.mxu0 %v4201
        %4243 = vmatprep.subr.bf16.mxu0 0
        %4244 = vmatpush1.bf16.msra.mxu0 %v4202
        %4245 = vmatprep.subr.bf16.mxu0 0
        %4246 = vmatpush1.bf16.msra.mxu0 %v4203
        %4247 = vmatprep.subr.bf16.mxu0 0
        %4248 = vmatpush1.bf16.msra.mxu0 %v4204
        %4249 = vmatprep.subr.bf16.mxu0 0
        %4250 = vmatpush1.bf16.msra.mxu0 %v4205
        %4251 = vmatprep.subr.bf16.mxu0 0
        %4252 = vmatpush1.bf16.msra.mxu0 %v4206
        %4253 = vmatprep.subr.bf16.mxu0 0
        %4254 = vmatpush1.bf16.msra.mxu0 %v4207
        %4255 = vmatprep.subr.bf16.mxu0 0
        %4256 = vmatpush1.bf16.msra.mxu0 %v4208
        %4257 = vmatprep.mubr.bf16.mxu0 %v1439
        %4258 = vmatmul.mubr.bf16.gmra.mrb[0].mxu0 %v1432
        %v4259 = vpop.f32.mrb[0].mxu0
        %v4260 = vadd.f32 %v4128, %v4259
        %v4261 = vpop.f32.mrb[0].mxu0
        %v4262 = vpop.f32.mrb[0].mxu0
        %v4263 = vpop.f32.mrb[0].mxu0
        %4264 = vdwg.mxu0
        %v4265 = vadd.f32 %v4260, %v1578
        %v4266 = vlaneseq
        %v4267 = vshrl.u32 %v4266, 7
        %v4268 = vsub.s32 0, %v4267
        %v4269 = vrot.slane %v4265, %v4268
        %v4270 = vmul.f32 %v1583, %v4269
        %v4271 = vmul.f32 %v1588, %v4269
        %v4272 = vadd.f32 %v4270, 0.0
        %v4273 = vadd.f32 %v4271, 0.0
        %v4274 = vmul.f32 %v1600, %v4269
        %v4275 = vmul.f32 %v1604, %v4269
        %4278 = vrot.lane.b32.xlu0 %v4274, 120
        %v4279 = vpop.permute.xlu0 %4278
        %4280 = vrot.lane.b32.xlu0 %v4275, 120
        %v4281 = vpop.permute.xlu0 %4280
        %v4284 = vadd.f32 %v4272, %v4279
        %v4285 = vadd.f32 %v4273, %v4281
        %v4286 = vmul.f32 %v1620, %v4269
        %v4287 = vmul.f32 %v1624, %v4269
        %4290 = vrot.lane.b32.xlu0 %v4286, 112
        %v4291 = vpop.permute.xlu0 %4290
        %4292 = vrot.lane.b32.xlu0 %v4287, 112
        %v4293 = vpop.permute.xlu0 %4292
        %v4296 = vadd.f32 %v4284, %v4291
        %v4297 = vadd.f32 %v4285, %v4293
        %v4298 = vmul.f32 %v1640, %v4269
        %v4299 = vmul.f32 %v1644, %v4269
        %4302 = vrot.lane.b32.xlu0 %v4298, 104
        %v4303 = vpop.permute.xlu0 %4302
        %4304 = vrot.lane.b32.xlu0 %v4299, 104
        %v4305 = vpop.permute.xlu0 %4304
        %v4308 = vadd.f32 %v4296, %v4303
        %v4309 = vadd.f32 %v4297, %v4305
        %v4310 = vmul.f32 %v1660, %v4269
        %v4311 = vmul.f32 %v1664, %v4269
        %4314 = vrot.lane.b32.xlu0 %v4310, 96
        %v4315 = vpop.permute.xlu0 %4314
        %4316 = vrot.lane.b32.xlu0 %v4311, 96
        %v4317 = vpop.permute.xlu0 %4316
        %v4320 = vadd.f32 %v4308, %v4315
        %v4321 = vadd.f32 %v4309, %v4317
        %v4322 = vmul.f32 %v1680, %v4269
        %v4323 = vmul.f32 %v1684, %v4269
        %4326 = vrot.lane.b32.xlu0 %v4322, 88
        %v4327 = vpop.permute.xlu0 %4326
        %4328 = vrot.lane.b32.xlu0 %v4323, 88
        %v4329 = vpop.permute.xlu0 %4328
        %v4332 = vadd.f32 %v4320, %v4327
        %v4333 = vadd.f32 %v4321, %v4329
        %v4334 = vmul.f32 %v1700, %v4269
        %v4335 = vmul.f32 %v1704, %v4269
        %4338 = vrot.lane.b32.xlu0 %v4334, 80
        %v4339 = vpop.permute.xlu0 %4338
        %4340 = vrot.lane.b32.xlu0 %v4335, 80
        %v4341 = vpop.permute.xlu0 %4340
        %v4344 = vadd.f32 %v4332, %v4339
        %v4345 = vadd.f32 %v4333, %v4341
        %v4346 = vmul.f32 %v1720, %v4269
        %v4347 = vmul.f32 %v1724, %v4269
        %4350 = vrot.lane.b32.xlu0 %v4346, 72
        %v4351 = vpop.permute.xlu0 %4350
        %4352 = vrot.lane.b32.xlu0 %v4347, 72
        %v4353 = vpop.permute.xlu0 %4352
        %v4356 = vadd.f32 %v4344, %v4351
        %v4357 = vadd.f32 %v4345, %v4353
        %v4359 = vsel %vm1738, %v4356, 0
        %v4362 = vsel %vm1738, %v4357, 0
        %4364 = vmatprep.subr.mxu0 0.0
        %4365 = vmatpush1.msra.mxu0 %v635
        %4366 = vmatprep.subr.mxu0 0.0
        %4367 = vmatpush1.msra.mxu0 0.0
        %4368 = vmatprep.subr.mxu0 0.0
        %4369 = vmatpush1.msra.mxu0 0.0
        %4370 = vmatprep.subr.mxu0 0.0
        %4371 = vmatpush1.msra.mxu0 0.0
        %4372 = vmatprep.subr.mxu0 0.0
        %4373 = vmatpush1.msra.mxu0 0.0
        %4374 = vmatprep.subr.mxu0 0.0
        %4375 = vmatpush1.msra.mxu0 0.0
        %4376 = vmatprep.subr.mxu0 0.0
        %4377 = vmatpush1.msra.mxu0 0.0
        %4378 = vmatprep.subr.mxu0 0.0
        %4379 = vmatpush1.msra.mxu0 0.0
        %4380 = vmatprep.subr.mxu0 0.0
        %4381 = vmatpush1.msra.mxu0 0.0
        %4382 = vmatprep.subr.mxu0 0.0
        %4383 = vmatpush1.msra.mxu0 0.0
        %4384 = vmatprep.subr.mxu0 0.0
        %4385 = vmatpush1.msra.mxu0 0.0
        %4386 = vmatprep.subr.mxu0 0.0
        %4387 = vmatpush1.msra.mxu0 0.0
        %4388 = vmatprep.subr.mxu0 0.0
        %4389 = vmatpush1.msra.mxu0 0.0
        %4390 = vmatprep.subr.mxu0 0.0
        %4391 = vmatpush1.msra.mxu0 0.0
        %4392 = vmatprep.subr.mxu0 0.0
        %4393 = vmatpush1.msra.mxu0 0.0
        %4394 = vmatprep.subr.mxu0 0.0
        %4395 = vmatpush1.msra.mxu0 0.0
        %4396 = vmatprep.subr.mxu0 0.0
        %4397 = vmatpush1.msra.mxu0 0.0
        %4398 = vmatprep.subr.mxu0 0.0
        %4399 = vmatpush1.msra.mxu0 0.0
        %4400 = vmatprep.subr.mxu0 0.0
        %4401 = vmatpush1.msra.mxu0 0.0
        %4402 = vmatprep.subr.mxu0 0.0
        %4403 = vmatpush1.msra.mxu0 0.0
        %4404 = vmatprep.subr.mxu0 0.0
        %4405 = vmatpush1.msra.mxu0 0.0
        %4406 = vmatprep.subr.mxu0 0.0
        %4407 = vmatpush1.msra.mxu0 0.0
        %4408 = vmatprep.subr.mxu0 0.0
        %4409 = vmatpush1.msra.mxu0 0.0
        %4410 = vmatprep.subr.mxu0 0.0
        %4411 = vmatpush1.msra.mxu0 0.0
        %4412 = vmatprep.subr.mxu0 0.0
        %4413 = vmatpush1.msra.mxu0 0.0
        %4414 = vmatprep.subr.mxu0 0.0
        %4415 = vmatpush1.msra.mxu0 0.0
        %4416 = vmatprep.subr.mxu0 0.0
        %4417 = vmatpush1.msra.mxu0 0.0
        %4418 = vmatprep.subr.mxu0 0.0
        %4419 = vmatpush1.msra.mxu0 0.0
        %4420 = vmatprep.subr.mxu0 0.0
        %4421 = vmatpush1.msra.mxu0 0.0
        %4422 = vmatprep.subr.mxu0 0.0
        %4423 = vmatpush1.msra.mxu0 0.0
        %4424 = vmatprep.subr.mxu0 0.0
        %4425 = vmatpush1.msra.mxu0 0.0
        %4426 = vmatprep.subr.mxu0 0.0
        %4427 = vmatpush1.msra.mxu0 0.0
        %4428 = vmatprep.mubr.f32.mxu0 0.0
        %4429 = vmatmul.mubr.f32.gmra.mrb[0].mxu0 %v4359
        %v4430 = vpop.f32.mrb[0].mxu0
        %v4431 = vadd.f32 0.0, %v4430
        %v4432 = vpop.f32.mrb[0].mxu0
        %4433 = vmatprep.mubr.f32.mxu0 0.0
        %4434 = vmatmul.mubr.f32.gmra.mrb[0].mxu0 %v4362
        %v4435 = vpop.f32.mrb[0].mxu0
        %v4436 = vadd.f32 0.0, %v4435
        %v4437 = vpop.f32.mrb[0].mxu0
        %4438 = vdwg.mxu0
        %s4439 = scalar_lea.vmem %s600, 128
        %v4440 = vld [vmem:[%s4439] sm:$0xff]
        %v4441 = vld [vmem:[%s4439 + $0x8] sm:$0xff]
        %v4442 = vld [vmem:[%s4439 + $0x10] sm:$0xff]
        %v4443 = vld [vmem:[%s4439 + $0x18] sm:$0xff]
        %v4444 = vld [vmem:[%s4439 + $0x20] sm:$0xff]
        %v4445 = vld [vmem:[%s4439 + $0x28] sm:$0xff]
        %v4446 = vld [vmem:[%s4439 + $0x30] sm:$0xff]
        %v4447 = vld [vmem:[%s4439 + $0x38] sm:$0xff]
        %v4448 = vld [vmem:[%s4439 + $0x40] sm:$0xff]
        %v4449 = vld [vmem:[%s4439 + $0x48] sm:$0xff]
        %v4450 = vld [vmem:[%s4439 + $0x50] sm:$0xff]
        %v4451 = vld [vmem:[%s4439 + $0x58] sm:$0xff]
        %v4452 = vld [vmem:[%s4439 + $0x60] sm:$0xff]
        %v4453 = vld [vmem:[%s4439 + $0x68] sm:$0xff]
        %v4454 = vld [vmem:[%s4439 + $0x70] sm:$0xff]
        %v4455 = vld [vmem:[%s4439 + $0x78] sm:$0xff]
        %v4472 = vunpack.c.l.b16 %v4440
        %v4473 = vunpack.c.h.b16 %v4440
        %v4474 = vunpack.c.l.b16 %v4441
        %v4475 = vunpack.c.h.b16 %v4441
        %v4476 = vunpack.c.l.b16 %v4442
        %v4477 = vunpack.c.h.b16 %v4442
        %v4478 = vunpack.c.l.b16 %v4443
        %v4479 = vunpack.c.h.b16 %v4443
        %v4480 = vunpack.c.l.b16 %v4444
        %v4481 = vunpack.c.h.b16 %v4444
        %v4482 = vunpack.c.l.b16 %v4445
        %v4483 = vunpack.c.h.b16 %v4445
        %v4484 = vunpack.c.l.b16 %v4446
        %v4485 = vunpack.c.h.b16 %v4446
        %v4486 = vunpack.c.l.b16 %v4447
        %v4487 = vunpack.c.h.b16 %v4447
        %v4488 = vunpack.c.l.b16 %v4448
        %v4489 = vunpack.c.h.b16 %v4448
        %v4490 = vunpack.c.l.b16 %v4449
        %v4491 = vunpack.c.h.b16 %v4449
        %v4492 = vunpack.c.l.b16 %v4450
        %v4493 = vunpack.c.h.b16 %v4450
        %v4494 = vunpack.c.l.b16 %v4451
        %v4495 = vunpack.c.h.b16 %v4451
        %v4496 = vunpack.c.l.b16 %v4452
        %v4497 = vunpack.c.h.b16 %v4452
        %v4498 = vunpack.c.l.b16 %v4453
        %v4499 = vunpack.c.h.b16 %v4453
        %v4500 = vunpack.c.l.b16 %v4454
        %v4501 = vunpack.c.h.b16 %v4454
        %v4502 = vunpack.c.l.b16 %v4455
        %v4503 = vunpack.c.h.b16 %v4455
        %v4504 = vpack.c.b16 %v4474, %v4472
        %v4505 = vpack.c.b16 %v4475, %v4473
        %v4506 = vpack.c.b16 %v4478, %v4476
        %v4507 = vpack.c.b16 %v4479, %v4477
        %v4508 = vpack.c.b16 %v4482, %v4480
        %v4509 = vpack.c.b16 %v4483, %v4481
        %v4510 = vpack.c.b16 %v4486, %v4484
        %v4511 = vpack.c.b16 %v4487, %v4485
        %v4512 = vpack.c.b16 %v4490, %v4488
        %v4513 = vpack.c.b16 %v4491, %v4489
        %v4514 = vpack.c.b16 %v4494, %v4492
        %v4515 = vpack.c.b16 %v4495, %v4493
        %v4516 = vpack.c.b16 %v4498, %v4496
        %v4517 = vpack.c.b16 %v4499, %v4497
        %v4518 = vpack.c.b16 %v4502, %v4500
        %v4519 = vpack.c.b16 %v4503, %v4501
        %4536 = vmatprep.subr.bf16.mxu0 %v4505
        %4537 = vmatpush1.bf16.msra.mxu0 %v4504
        %4538 = vmatprep.subr.bf16.mxu0 %v4507
        %4539 = vmatpush1.bf16.msra.mxu0 %v4506
        %4540 = vmatprep.subr.bf16.mxu0 %v4509
        %4541 = vmatpush1.bf16.msra.mxu0 %v4508
        %4542 = vmatprep.subr.bf16.mxu0 %v4511
        %4543 = vmatpush1.bf16.msra.mxu0 %v4510
        %4544 = vmatprep.subr.bf16.mxu0 %v4513
        %4545 = vmatpush1.bf16.msra.mxu0 %v4512
        %4546 = vmatprep.subr.bf16.mxu0 %v4515
        %4547 = vmatpush1.bf16.msra.mxu0 %v4514
        %4548 = vmatprep.subr.bf16.mxu0 %v4517
        %4549 = vmatpush1.bf16.msra.mxu0 %v4516
        %4550 = vmatprep.subr.bf16.mxu0 %v4519
        %4551 = vmatpush1.bf16.msra.mxu0 %v4518
        %4552 = vmatprep.subr.bf16.mxu0 0
        %4553 = vmatpush1.bf16.msra.mxu0 0
        %4554 = vmatprep.subr.bf16.mxu0 0
        %4555 = vmatpush1.bf16.msra.mxu0 0
        %4556 = vmatprep.subr.bf16.mxu0 0
        %4557 = vmatpush1.bf16.msra.mxu0 0
        %4558 = vmatprep.subr.bf16.mxu0 0
        %4559 = vmatpush1.bf16.msra.mxu0 0
        %4560 = vmatprep.subr.bf16.mxu0 0
        %4561 = vmatpush1.bf16.msra.mxu0 0
        %4562 = vmatprep.subr.bf16.mxu0 0
        %4563 = vmatpush1.bf16.msra.mxu0 0
        %4564 = vmatprep.subr.bf16.mxu0 0
        %4565 = vmatpush1.bf16.msra.mxu0 0
        %4566 = vmatprep.subr.bf16.mxu0 0
        %4567 = vmatpush1.bf16.msra.mxu0 0
        %4568 = vmatprep.mubr.bf16.mxu0 0
        %4569 = vmatmul.mubr.bf16.gmra.mrb[0].mxu0 %v631
        %v4570 = vpop.f32.mrb[0].mxu0
        %v4571 = vadd.f32 0.0, %v4570
        %v4572 = vpop.f32.mrb[0].mxu0
        %v4573 = vadd.f32 0.0, %v4572
        %v4574 = vpop.f32.mrb[0].mxu0
        %v4575 = vpop.f32.mrb[0].mxu0
        %4576 = vdwg.mxu0
        %v4577 = vadd.f32 %v4431, %v1957
        %v4578 = vmul.f32 %v1959, %v4577
        %v4579 = vadd.f32 %v4571, %v4578
        %v4580 = vadd.f32 %v4579, %v1962
        %v4581 = vlaneseq
        %v4582 = vshrl.u32 %v4581, 7
        %v4583 = vsub.s32 0, %v4582
        %v4584 = vrot.slane %v4580, %v4583
        %v4585 = vmul.f32 %v1967, %v4584
        %v4586 = vmul.f32 %v1972, %v4584
        %v4587 = vmul.f32 %v1977, %v4584
        %v4588 = vmul.f32 %v1982, %v4584
        %v4589 = vadd.f32 %v4585, 0.0
        %v4590 = vadd.f32 %v4586, 0.0
        %v4591 = vadd.f32 %v4587, 0.0
        %v4592 = vadd.f32 %v4588, 0.0
        %v4594 = vrot.slane %v4578, 1
        %4595 = vrot.lane.b32.xlu0 %v4594, 16
        %v4596 = vpop.permute.xlu0 %4595
        %v4598 = vadd.f32 %v4571, %v4596
        %v4599 = vadd.f32 %v4598, %v1962
        %v4600 = vlaneseq
        %v4601 = vshrl.u32 %v4600, 7
        %v4602 = vsub.s32 0, %v4601
        %v4603 = vrot.slane %v4599, %v4602
        %v4604 = vmul.f32 %v2005, %v4603
        %v4605 = vmul.f32 %v2009, %v4603
        %v4606 = vmul.f32 %v2013, %v4603
        %v4607 = vmul.f32 %v2017, %v4603
        %4612 = vrot.lane.b32.xlu0 %v4604, 112
        %v4613 = vpop.permute.xlu0 %4612
        %4614 = vrot.lane.b32.xlu0 %v4605, 112
        %v4615 = vpop.permute.xlu0 %4614
        %4616 = vrot.lane.b32.xlu0 %v4606, 112
        %v4617 = vpop.permute.xlu0 %4616
        %4618 = vrot.lane.b32.xlu0 %v4607, 112
        %v4619 = vpop.permute.xlu0 %4618
        %v4624 = vadd.f32 %v4589, %v4613
        %v4625 = vadd.f32 %v4590, %v4615
        %v4626 = vadd.f32 %v4591, %v4617
        %v4627 = vadd.f32 %v4592, %v4619
        %v4628 = vrot.slane %v4578, 2
        %4629 = vrot.lane.b32.xlu0 %v4628, 32
        %v4630 = vpop.permute.xlu0 %4629
        %v4632 = vadd.f32 %v4571, %v4630
        %v4633 = vadd.f32 %v4632, %v1962
        %v4634 = vlaneseq
        %v4635 = vshrl.u32 %v4634, 7
        %v4636 = vsub.s32 0, %v4635
        %v4637 = vrot.slane %v4633, %v4636
        %v4638 = vmul.f32 %v2055, %v4637
        %v4639 = vmul.f32 %v2059, %v4637
        %v4640 = vmul.f32 %v2063, %v4637
        %v4641 = vmul.f32 %v2067, %v4637
        %4646 = vrot.lane.b32.xlu0 %v4638, 96
        %v4647 = vpop.permute.xlu0 %4646
        %4648 = vrot.lane.b32.xlu0 %v4639, 96
        %v4649 = vpop.permute.xlu0 %4648
        %4650 = vrot.lane.b32.xlu0 %v4640, 96
        %v4651 = vpop.permute.xlu0 %4650
        %4652 = vrot.lane.b32.xlu0 %v4641, 96
        %v4653 = vpop.permute.xlu0 %4652
        %v4658 = vadd.f32 %v4624, %v4647
        %v4659 = vadd.f32 %v4625, %v4649
        %v4660 = vadd.f32 %v4626, %v4651
        %v4661 = vadd.f32 %v4627, %v4653
        %v4662 = vrot.slane %v4578, 3
        %4663 = vrot.lane.b32.xlu0 %v4662, 48
        %v4664 = vpop.permute.xlu0 %4663
        %v4666 = vadd.f32 %v4571, %v4664
        %v4667 = vadd.f32 %v4666, %v1962
        %v4668 = vlaneseq
        %v4669 = vshrl.u32 %v4668, 7
        %v4670 = vsub.s32 0, %v4669
        %v4671 = vrot.slane %v4667, %v4670
        %v4672 = vmul.f32 %v2105, %v4671
        %v4673 = vmul.f32 %v2109, %v4671
        %v4674 = vmul.f32 %v2113, %v4671
        %v4675 = vmul.f32 %v2117, %v4671
        %4680 = vrot.lane.b32.xlu0 %v4672, 80
        %v4681 = vpop.permute.xlu0 %4680
        %4682 = vrot.lane.b32.xlu0 %v4673, 80
        %v4683 = vpop.permute.xlu0 %4682
        %4684 = vrot.lane.b32.xlu0 %v4674, 80
        %v4685 = vpop.permute.xlu0 %4684
        %4686 = vrot.lane.b32.xlu0 %v4675, 80
        %v4687 = vpop.permute.xlu0 %4686
        %v4692 = vadd.f32 %v4658, %v4681
        %v4693 = vadd.f32 %v4659, %v4683
        %v4694 = vadd.f32 %v4660, %v4685
        %v4695 = vadd.f32 %v4661, %v4687
        %v4696 = vrot.slane %v4578, 4
        %4697 = vrot.lane.b32.xlu0 %v4696, 64
        %v4698 = vpop.permute.xlu0 %4697
        %v4700 = vadd.f32 %v4571, %v4698
        %v4701 = vadd.f32 %v4700, %v1962
        %v4702 = vlaneseq
        %v4703 = vshrl.u32 %v4702, 7
        %v4704 = vsub.s32 0, %v4703
        %v4705 = vrot.slane %v4701, %v4704
        %v4706 = vmul.f32 %v2155, %v4705
        %v4707 = vmul.f32 %v2159, %v4705
        %v4708 = vmul.f32 %v2163, %v4705
        %v4709 = vmul.f32 %v2167, %v4705
        %4714 = vrot.lane.b32.xlu0 %v4706, 64
        %v4715 = vpop.permute.xlu0 %4714
        %4716 = vrot.lane.b32.xlu0 %v4707, 64
        %v4717 = vpop.permute.xlu0 %4716
        %4718 = vrot.lane.b32.xlu0 %v4708, 64
        %v4719 = vpop.permute.xlu0 %4718
        %4720 = vrot.lane.b32.xlu0 %v4709, 64
        %v4721 = vpop.permute.xlu0 %4720
        %v4726 = vadd.f32 %v4692, %v4715
        %v4727 = vadd.f32 %v4693, %v4717
        %v4728 = vadd.f32 %v4694, %v4719
        %v4729 = vadd.f32 %v4695, %v4721
        %v4730 = vrot.slane %v4578, 5
        %4731 = vrot.lane.b32.xlu0 %v4730, 80
        %v4732 = vpop.permute.xlu0 %4731
        %v4734 = vadd.f32 %v4571, %v4732
        %v4735 = vadd.f32 %v4734, %v1962
        %v4736 = vlaneseq
        %v4737 = vshrl.u32 %v4736, 7
        %v4738 = vsub.s32 0, %v4737
        %v4739 = vrot.slane %v4735, %v4738
        %v4740 = vmul.f32 %v2205, %v4739
        %v4741 = vmul.f32 %v2209, %v4739
        %v4742 = vmul.f32 %v2213, %v4739
        %v4743 = vmul.f32 %v2217, %v4739
        %4748 = vrot.lane.b32.xlu0 %v4740, 48
        %v4749 = vpop.permute.xlu0 %4748
        %4750 = vrot.lane.b32.xlu0 %v4741, 48
        %v4751 = vpop.permute.xlu0 %4750
        %4752 = vrot.lane.b32.xlu0 %v4742, 48
        %v4753 = vpop.permute.xlu0 %4752
        %4754 = vrot.lane.b32.xlu0 %v4743, 48
        %v4755 = vpop.permute.xlu0 %4754
        %v4760 = vadd.f32 %v4726, %v4749
        %v4761 = vadd.f32 %v4727, %v4751
        %v4762 = vadd.f32 %v4728, %v4753
        %v4763 = vadd.f32 %v4729, %v4755
        %v4764 = vrot.slane %v4578, 6
        %4765 = vrot.lane.b32.xlu0 %v4764, 96
        %v4766 = vpop.permute.xlu0 %4765
        %v4768 = vadd.f32 %v4571, %v4766
        %v4769 = vadd.f32 %v4768, %v1962
        %v4770 = vlaneseq
        %v4771 = vshrl.u32 %v4770, 7
        %v4772 = vsub.s32 0, %v4771
        %v4773 = vrot.slane %v4769, %v4772
        %v4774 = vmul.f32 %v2255, %v4773
        %v4775 = vmul.f32 %v2259, %v4773
        %v4776 = vmul.f32 %v2263, %v4773
        %v4777 = vmul.f32 %v2267, %v4773
        %4782 = vrot.lane.b32.xlu0 %v4774, 32
        %v4783 = vpop.permute.xlu0 %4782
        %4784 = vrot.lane.b32.xlu0 %v4775, 32
        %v4785 = vpop.permute.xlu0 %4784
        %4786 = vrot.lane.b32.xlu0 %v4776, 32
        %v4787 = vpop.permute.xlu0 %4786
        %4788 = vrot.lane.b32.xlu0 %v4777, 32
        %v4789 = vpop.permute.xlu0 %4788
        %v4794 = vadd.f32 %v4760, %v4783
        %v4795 = vadd.f32 %v4761, %v4785
        %v4796 = vadd.f32 %v4762, %v4787
        %v4797 = vadd.f32 %v4763, %v4789
        %v4798 = vrot.slane %v4578, 7
        %4799 = vrot.lane.b32.xlu0 %v4798, 112
        %v4800 = vpop.permute.xlu0 %4799
        %v4802 = vadd.f32 %v4571, %v4800
        %v4803 = vadd.f32 %v4802, %v1962
        %v4804 = vlaneseq
        %v4805 = vshrl.u32 %v4804, 7
        %v4806 = vsub.s32 0, %v4805
        %v4807 = vrot.slane %v4803, %v4806
        %v4808 = vmul.f32 %v2305, %v4807
        %v4809 = vmul.f32 %v2309, %v4807
        %v4810 = vmul.f32 %v2313, %v4807
        %v4811 = vmul.f32 %v2317, %v4807
        %4816 = vrot.lane.b32.xlu0 %v4808, 16
        %v4817 = vpop.permute.xlu0 %4816
        %4818 = vrot.lane.b32.xlu0 %v4809, 16
        %v4819 = vpop.permute.xlu0 %4818
        %4820 = vrot.lane.b32.xlu0 %v4810, 16
        %v4821 = vpop.permute.xlu0 %4820
        %4822 = vrot.lane.b32.xlu0 %v4811, 16
        %v4823 = vpop.permute.xlu0 %4822
        %v4828 = vadd.f32 %v4794, %v4817
        %v4829 = vadd.f32 %v4795, %v4819
        %v4830 = vadd.f32 %v4796, %v4821
        %v4831 = vadd.f32 %v4797, %v4823
        %v4832 = vadd.f32 %v4436, %v1957
        %v4833 = vmul.f32 %v1959, %v4832
        %v4834 = vadd.f32 %v4573, %v4833
        %v4835 = vadd.f32 %v4834, %v1962
        %v4836 = vlaneseq
        %v4837 = vshrl.u32 %v4836, 7
        %v4838 = vsub.s32 0, %v4837
        %v4839 = vrot.slane %v4835, %v4838
        %v4840 = vmul.f32 %v2353, %v4839
        %v4841 = vmul.f32 %v2357, %v4839
        %v4842 = vmul.f32 %v2361, %v4839
        %v4843 = vmul.f32 %v2365, %v4839
        %v4844 = vadd.f32 %v4828, %v4840
        %v4845 = vadd.f32 %v4829, %v4841
        %v4846 = vadd.f32 %v4830, %v4842
        %v4847 = vadd.f32 %v4831, %v4843
        %v4849 = vrot.slane %v4833, 1
        %4850 = vrot.lane.b32.xlu0 %v4849, 16
        %v4851 = vpop.permute.xlu0 %4850
        %v4853 = vadd.f32 %v4573, %v4851
        %v4854 = vadd.f32 %v4853, %v1962
        %v4855 = vlaneseq
        %v4856 = vshrl.u32 %v4855, 7
        %v4857 = vsub.s32 0, %v4856
        %v4858 = vrot.slane %v4854, %v4857
        %v4859 = vmul.f32 %v2388, %v4858
        %v4860 = vmul.f32 %v2392, %v4858
        %v4861 = vmul.f32 %v2396, %v4858
        %v4862 = vmul.f32 %v2400, %v4858
        %4867 = vrot.lane.b32.xlu0 %v4859, 112
        %v4868 = vpop.permute.xlu0 %4867
        %4869 = vrot.lane.b32.xlu0 %v4860, 112
        %v4870 = vpop.permute.xlu0 %4869
        %4871 = vrot.lane.b32.xlu0 %v4861, 112
        %v4872 = vpop.permute.xlu0 %4871
        %4873 = vrot.lane.b32.xlu0 %v4862, 112
        %v4874 = vpop.permute.xlu0 %4873
        %v4879 = vadd.f32 %v4844, %v4868
        %v4880 = vadd.f32 %v4845, %v4870
        %v4881 = vadd.f32 %v4846, %v4872
        %v4882 = vadd.f32 %v4847, %v4874
        %v4883 = vrot.slane %v4833, 2
        %4884 = vrot.lane.b32.xlu0 %v4883, 32
        %v4885 = vpop.permute.xlu0 %4884
        %v4887 = vadd.f32 %v4573, %v4885
        %v4888 = vadd.f32 %v4887, %v1962
        %v4889 = vlaneseq
        %v4890 = vshrl.u32 %v4889, 7
        %v4891 = vsub.s32 0, %v4890
        %v4892 = vrot.slane %v4888, %v4891
        %v4893 = vmul.f32 %v2438, %v4892
        %v4894 = vmul.f32 %v2442, %v4892
        %v4895 = vmul.f32 %v2446, %v4892
        %v4896 = vmul.f32 %v2450, %v4892
        %4901 = vrot.lane.b32.xlu0 %v4893, 96
        %v4902 = vpop.permute.xlu0 %4901
        %4903 = vrot.lane.b32.xlu0 %v4894, 96
        %v4904 = vpop.permute.xlu0 %4903
        %4905 = vrot.lane.b32.xlu0 %v4895, 96
        %v4906 = vpop.permute.xlu0 %4905
        %4907 = vrot.lane.b32.xlu0 %v4896, 96
        %v4908 = vpop.permute.xlu0 %4907
        %v4913 = vadd.f32 %v4879, %v4902
        %v4914 = vadd.f32 %v4880, %v4904
        %v4915 = vadd.f32 %v4881, %v4906
        %v4916 = vadd.f32 %v4882, %v4908
        %v4917 = vrot.slane %v4833, 3
        %4918 = vrot.lane.b32.xlu0 %v4917, 48
        %v4919 = vpop.permute.xlu0 %4918
        %v4921 = vadd.f32 %v4573, %v4919
        %v4922 = vadd.f32 %v4921, %v1962
        %v4923 = vlaneseq
        %v4924 = vshrl.u32 %v4923, 7
        %v4925 = vsub.s32 0, %v4924
        %v4926 = vrot.slane %v4922, %v4925
        %v4927 = vmul.f32 %v2488, %v4926
        %v4928 = vmul.f32 %v2492, %v4926
        %v4929 = vmul.f32 %v2496, %v4926
        %v4930 = vmul.f32 %v2500, %v4926
        %4935 = vrot.lane.b32.xlu0 %v4927, 80
        %v4936 = vpop.permute.xlu0 %4935
        %4937 = vrot.lane.b32.xlu0 %v4928, 80
        %v4938 = vpop.permute.xlu0 %4937
        %4939 = vrot.lane.b32.xlu0 %v4929, 80
        %v4940 = vpop.permute.xlu0 %4939
        %4941 = vrot.lane.b32.xlu0 %v4930, 80
        %v4942 = vpop.permute.xlu0 %4941
        %v4947 = vadd.f32 %v4913, %v4936
        %v4948 = vadd.f32 %v4914, %v4938
        %v4949 = vadd.f32 %v4915, %v4940
        %v4950 = vadd.f32 %v4916, %v4942
        %v4951 = vrot.slane %v4833, 4
        %4952 = vrot.lane.b32.xlu0 %v4951, 64
        %v4953 = vpop.permute.xlu0 %4952
        %v4955 = vadd.f32 %v4573, %v4953
        %v4956 = vadd.f32 %v4955, %v1962
        %v4957 = vlaneseq
        %v4958 = vshrl.u32 %v4957, 7
        %v4959 = vsub.s32 0, %v4958
        %v4960 = vrot.slane %v4956, %v4959
        %v4961 = vmul.f32 %v2538, %v4960
        %v4962 = vmul.f32 %v2542, %v4960
        %v4963 = vmul.f32 %v2546, %v4960
        %v4964 = vmul.f32 %v2550, %v4960
        %4969 = vrot.lane.b32.xlu0 %v4961, 64
        %v4970 = vpop.permute.xlu0 %4969
        %4971 = vrot.lane.b32.xlu0 %v4962, 64
        %v4972 = vpop.permute.xlu0 %4971
        %4973 = vrot.lane.b32.xlu0 %v4963, 64
        %v4974 = vpop.permute.xlu0 %4973
        %4975 = vrot.lane.b32.xlu0 %v4964, 64
        %v4976 = vpop.permute.xlu0 %4975
        %v4981 = vadd.f32 %v4947, %v4970
        %v4982 = vadd.f32 %v4948, %v4972
        %v4983 = vadd.f32 %v4949, %v4974
        %v4984 = vadd.f32 %v4950, %v4976
        %v4985 = vrot.slane %v4833, 5
        %4986 = vrot.lane.b32.xlu0 %v4985, 80
        %v4987 = vpop.permute.xlu0 %4986
        %v4989 = vadd.f32 %v4573, %v4987
        %v4990 = vadd.f32 %v4989, %v1962
        %v4991 = vlaneseq
        %v4992 = vshrl.u32 %v4991, 7
        %v4993 = vsub.s32 0, %v4992
        %v4994 = vrot.slane %v4990, %v4993
        %v4995 = vmul.f32 %v2588, %v4994
        %v4996 = vmul.f32 %v2592, %v4994
        %v4997 = vmul.f32 %v2596, %v4994
        %v4998 = vmul.f32 %v2600, %v4994
        %5003 = vrot.lane.b32.xlu0 %v4995, 48
        %v5004 = vpop.permute.xlu0 %5003
        %5005 = vrot.lane.b32.xlu0 %v4996, 48
        %v5006 = vpop.permute.xlu0 %5005
        %5007 = vrot.lane.b32.xlu0 %v4997, 48
        %v5008 = vpop.permute.xlu0 %5007
        %5009 = vrot.lane.b32.xlu0 %v4998, 48
        %v5010 = vpop.permute.xlu0 %5009
        %v5015 = vadd.f32 %v4981, %v5004
        %v5016 = vadd.f32 %v4982, %v5006
        %v5017 = vadd.f32 %v4983, %v5008
        %v5018 = vadd.f32 %v4984, %v5010
        %v5019 = vrot.slane %v4833, 6
        %5020 = vrot.lane.b32.xlu0 %v5019, 96
        %v5021 = vpop.permute.xlu0 %5020
        %v5023 = vadd.f32 %v4573, %v5021
        %v5024 = vadd.f32 %v5023, %v1962
        %v5025 = vlaneseq
        %v5026 = vshrl.u32 %v5025, 7
        %v5027 = vsub.s32 0, %v5026
        %v5028 = vrot.slane %v5024, %v5027
        %v5029 = vmul.f32 %v2638, %v5028
        %v5030 = vmul.f32 %v2642, %v5028
        %v5031 = vmul.f32 %v2646, %v5028
        %v5032 = vmul.f32 %v2650, %v5028
        %5037 = vrot.lane.b32.xlu0 %v5029, 32
        %v5038 = vpop.permute.xlu0 %5037
        %5039 = vrot.lane.b32.xlu0 %v5030, 32
        %v5040 = vpop.permute.xlu0 %5039
        %5041 = vrot.lane.b32.xlu0 %v5031, 32
        %v5042 = vpop.permute.xlu0 %5041
        %5043 = vrot.lane.b32.xlu0 %v5032, 32
        %v5044 = vpop.permute.xlu0 %5043
        %v5049 = vadd.f32 %v5015, %v5038
        %v5050 = vadd.f32 %v5016, %v5040
        %v5051 = vadd.f32 %v5017, %v5042
        %v5052 = vadd.f32 %v5018, %v5044
        %v5053 = vrot.slane %v4833, 7
        %5054 = vrot.lane.b32.xlu0 %v5053, 112
        %v5055 = vpop.permute.xlu0 %5054
        %v5057 = vadd.f32 %v4573, %v5055
        %v5058 = vadd.f32 %v5057, %v1962
        %v5059 = vlaneseq
        %v5060 = vshrl.u32 %v5059, 7
        %v5061 = vsub.s32 0, %v5060
        %v5062 = vrot.slane %v5058, %v5061
        %v5063 = vmul.f32 %v2688, %v5062
        %v5064 = vmul.f32 %v2692, %v5062
        %v5065 = vmul.f32 %v2696, %v5062
        %v5066 = vmul.f32 %v2700, %v5062
        %5071 = vrot.lane.b32.xlu0 %v5063, 16
        %v5072 = vpop.permute.xlu0 %5071
        %5073 = vrot.lane.b32.xlu0 %v5064, 16
        %v5074 = vpop.permute.xlu0 %5073
        %5075 = vrot.lane.b32.xlu0 %v5065, 16
        %v5076 = vpop.permute.xlu0 %5075
        %5077 = vrot.lane.b32.xlu0 %v5066, 16
        %v5078 = vpop.permute.xlu0 %5077
        %v5083 = vadd.f32 %v5049, %v5072
        %v5084 = vadd.f32 %v5050, %v5074
        %v5085 = vadd.f32 %v5051, %v5076
        %v5086 = vadd.f32 %v5052, %v5078
        %v5088 = vsel %vm2730, %v5083, 0
        %v5091 = vsel %vm2730, %v5084, 0
        %v5094 = vsel %vm2730, %v5085, 0
        %v5097 = vsel %vm2730, %v5086, 0
        %5099 = vmatprep.subr.mxu0 0.0
        %5100 = vmatpush1.msra.mxu0 %v640
        %5101 = vmatprep.subr.mxu0 0.0
        %5102 = vmatpush1.msra.mxu0 %v641
        %5103 = vmatprep.subr.mxu0 0.0
        %5104 = vmatpush1.msra.mxu0 0.0
        %5105 = vmatprep.subr.mxu0 0.0
        %5106 = vmatpush1.msra.mxu0 0.0
        %5107 = vmatprep.subr.mxu0 0.0
        %5108 = vmatpush1.msra.mxu0 0.0
        %5109 = vmatprep.subr.mxu0 0.0
        %5110 = vmatpush1.msra.mxu0 0.0
        %5111 = vmatprep.subr.mxu0 0.0
        %5112 = vmatpush1.msra.mxu0 0.0
        %5113 = vmatprep.subr.mxu0 0.0
        %5114 = vmatpush1.msra.mxu0 0.0
        %5115 = vmatprep.subr.mxu0 0.0
        %5116 = vmatpush1.msra.mxu0 0.0
        %5117 = vmatprep.subr.mxu0 0.0
        %5118 = vmatpush1.msra.mxu0 0.0
        %5119 = vmatprep.subr.mxu0 0.0
        %5120 = vmatpush1.msra.mxu0 0.0
        %5121 = vmatprep.subr.mxu0 0.0
        %5122 = vmatpush1.msra.mxu0 0.0
        %5123 = vmatprep.subr.mxu0 0.0
        %5124 = vmatpush1.msra.mxu0 0.0
        %5125 = vmatprep.subr.mxu0 0.0
        %5126 = vmatpush1.msra.mxu0 0.0
        %5127 = vmatprep.subr.mxu0 0.0
        %5128 = vmatpush1.msra.mxu0 0.0
        %5129 = vmatprep.subr.mxu0 0.0
        %5130 = vmatpush1.msra.mxu0 0.0
        %5131 = vmatprep.subr.mxu0 0.0
        %5132 = vmatpush1.msra.mxu0 0.0
        %5133 = vmatprep.subr.mxu0 0.0
        %5134 = vmatpush1.msra.mxu0 0.0
        %5135 = vmatprep.subr.mxu0 0.0
        %5136 = vmatpush1.msra.mxu0 0.0
        %5137 = vmatprep.subr.mxu0 0.0
        %5138 = vmatpush1.msra.mxu0 0.0
        %5139 = vmatprep.subr.mxu0 0.0
        %5140 = vmatpush1.msra.mxu0 0.0
        %5141 = vmatprep.subr.mxu0 0.0
        %5142 = vmatpush1.msra.mxu0 0.0
        %5143 = vmatprep.subr.mxu0 0.0
        %5144 = vmatpush1.msra.mxu0 0.0
        %5145 = vmatprep.subr.mxu0 0.0
        %5146 = vmatpush1.msra.mxu0 0.0
        %5147 = vmatprep.subr.mxu0 0.0
        %5148 = vmatpush1.msra.mxu0 0.0
        %5149 = vmatprep.subr.mxu0 0.0
        %5150 = vmatpush1.msra.mxu0 0.0
        %5151 = vmatprep.subr.mxu0 0.0
        %5152 = vmatpush1.msra.mxu0 0.0
        %5153 = vmatprep.subr.mxu0 0.0
        %5154 = vmatpush1.msra.mxu0 0.0
        %5155 = vmatprep.subr.mxu0 0.0
        %5156 = vmatpush1.msra.mxu0 0.0
        %5157 = vmatprep.subr.mxu0 0.0
        %5158 = vmatpush1.msra.mxu0 0.0
        %5159 = vmatprep.subr.mxu0 0.0
        %5160 = vmatpush1.msra.mxu0 0.0
        %5161 = vmatprep.subr.mxu0 0.0
        %5162 = vmatpush1.msra.mxu0 0.0
        %5163 = vmatprep.mubr.f32.mxu0 0.0
        %5164 = vmatmul.mubr.f32.gmra.mrb[0].mxu0 %v5088
        %v5165 = vpop.f32.mrb[0].mxu0
        %v5166 = vadd.f32 0.0, %v5165
        %v5167 = vpop.f32.mrb[0].mxu0
        %5168 = vmatprep.mubr.f32.mxu0 0.0
        %5169 = vmatmul.mubr.f32.gmra.mrb[0].mxu0 %v5091
        %v5170 = vpop.f32.mrb[0].mxu0
        %v5171 = vadd.f32 0.0, %v5170
        %v5172 = vpop.f32.mrb[0].mxu0
        %5173 = vmatprep.mubr.f32.mxu0 0.0
        %5174 = vmatmul.mubr.f32.gmra.mrb[0].mxu0 %v5094
        %v5175 = vpop.f32.mrb[0].mxu0
        %v5176 = vadd.f32 0.0, %v5175
        %v5177 = vpop.f32.mrb[0].mxu0
        %5178 = vmatprep.mubr.f32.mxu0 0.0
        %5179 = vmatmul.mubr.f32.gmra.mrb[0].mxu0 %v5097
        %v5180 = vpop.f32.mrb[0].mxu0
        %v5181 = vadd.f32 0.0, %v5180
        %v5182 = vpop.f32.mrb[0].mxu0
        %5183 = vdwg.mxu0
        %s5184 = scalar_lea.vmem %s607, 256
        %v5185 = vld [vmem:[%s5184] sm:$0xff]
        %v5186 = vld [vmem:[%s5184 + $0x8] sm:$0xff]
        %v5187 = vld [vmem:[%s5184 + $0x10] sm:$0xff]
        %v5188 = vld [vmem:[%s5184 + $0x18] sm:$0xff]
        %v5189 = vld [vmem:[%s5184 + $0x20] sm:$0xff]
        %v5190 = vld [vmem:[%s5184 + $0x28] sm:$0xff]
        %v5191 = vld [vmem:[%s5184 + $0x30] sm:$0xff]
        %v5192 = vld [vmem:[%s5184 + $0x38] sm:$0xff]
        %v5193 = vld [vmem:[%s5184 + $0x40] sm:$0xff]
        %v5194 = vld [vmem:[%s5184 + $0x48] sm:$0xff]
        %v5195 = vld [vmem:[%s5184 + $0x50] sm:$0xff]
        %v5196 = vld [vmem:[%s5184 + $0x58] sm:$0xff]
        %v5197 = vld [vmem:[%s5184 + $0x60] sm:$0xff]
        %v5198 = vld [vmem:[%s5184 + $0x68] sm:$0xff]
        %v5199 = vld [vmem:[%s5184 + $0x70] sm:$0xff]
        %v5200 = vld [vmem:[%s5184 + $0x78] sm:$0xff]
        %v5201 = vld [vmem:[%s5184 + $0x80] sm:$0xff]
        %v5202 = vld [vmem:[%s5184 + $0x88] sm:$0xff]
        %v5203 = vld [vmem:[%s5184 + $0x90] sm:$0xff]
        %v5204 = vld [vmem:[%s5184 + $0x98] sm:$0xff]
        %v5205 = vld [vmem:[%s5184 + $0xa0] sm:$0xff]
        %v5206 = vld [vmem:[%s5184 + $0xa8] sm:$0xff]
        %v5207 = vld [vmem:[%s5184 + $0xb0] sm:$0xff]
        %v5208 = vld [vmem:[%s5184 + $0xb8] sm:$0xff]
        %v5209 = vld [vmem:[%s5184 + $0xc0] sm:$0xff]
        %v5210 = vld [vmem:[%s5184 + $0xc8] sm:$0xff]
        %v5211 = vld [vmem:[%s5184 + $0xd0] sm:$0xff]
        %v5212 = vld [vmem:[%s5184 + $0xd8] sm:$0xff]
        %v5213 = vld [vmem:[%s5184 + $0xe0] sm:$0xff]
        %v5214 = vld [vmem:[%s5184 + $0xe8] sm:$0xff]
        %v5215 = vld [vmem:[%s5184 + $0xf0] sm:$0xff]
        %v5216 = vld [vmem:[%s5184 + $0xf8] sm:$0xff]
        %v5249 = vunpack.c.l.b16 %v5185
        %v5250 = vunpack.c.h.b16 %v5185
        %v5251 = vunpack.c.l.b16 %v5186
        %v5252 = vunpack.c.h.b16 %v5186
        %v5253 = vunpack.c.l.b16 %v5187
        %v5254 = vunpack.c.h.b16 %v5187
        %v5255 = vunpack.c.l.b16 %v5188
        %v5256 = vunpack.c.h.b16 %v5188
        %v5257 = vunpack.c.l.b16 %v5189
        %v5258 = vunpack.c.h.b16 %v5189
        %v5259 = vunpack.c.l.b16 %v5190
        %v5260 = vunpack.c.h.b16 %v5190
        %v5261 = vunpack.c.l.b16 %v5191
        %v5262 = vunpack.c.h.b16 %v5191
        %v5263 = vunpack.c.l.b16 %v5192
        %v5264 = vunpack.c.h.b16 %v5192
        %v5265 = vunpack.c.l.b16 %v5193
        %v5266 = vunpack.c.h.b16 %v5193
        %v5267 = vunpack.c.l.b16 %v5194
        %v5268 = vunpack.c.h.b16 %v5194
        %v5269 = vunpack.c.l.b16 %v5195
        %v5270 = vunpack.c.h.b16 %v5195
        %v5271 = vunpack.c.l.b16 %v5196
        %v5272 = vunpack.c.h.b16 %v5196
        %v5273 = vunpack.c.l.b16 %v5197
        %v5274 = vunpack.c.h.b16 %v5197
        %v5275 = vunpack.c.l.b16 %v5198
        %v5276 = vunpack.c.h.b16 %v5198
        %v5277 = vunpack.c.l.b16 %v5199
        %v5278 = vunpack.c.h.b16 %v5199
        %v5279 = vunpack.c.l.b16 %v5200
        %v5280 = vunpack.c.h.b16 %v5200
        %v5281 = vunpack.c.l.b16 %v5201
        %v5282 = vunpack.c.h.b16 %v5201
        %v5283 = vunpack.c.l.b16 %v5202
        %v5284 = vunpack.c.h.b16 %v5202
        %v5285 = vunpack.c.l.b16 %v5203
        %v5286 = vunpack.c.h.b16 %v5203
        %v5287 = vunpack.c.l.b16 %v5204
        %v5288 = vunpack.c.h.b16 %v5204
        %v5289 = vunpack.c.l.b16 %v5205
        %v5290 = vunpack.c.h.b16 %v5205
        %v5291 = vunpack.c.l.b16 %v5206
        %v5292 = vunpack.c.h.b16 %v5206
        %v5293 = vunpack.c.l.b16 %v5207
        %v5294 = vunpack.c.h.b16 %v5207
        %v5295 = vunpack.c.l.b16 %v5208
        %v5296 = vunpack.c.h.b16 %v5208
        %v5297 = vunpack.c.l.b16 %v5209
        %v5298 = vunpack.c.h.b16 %v5209
        %v5299 = vunpack.c.l.b16 %v5210
        %v5300 = vunpack.c.h.b16 %v5210
        %v5301 = vunpack.c.l.b16 %v5211
        %v5302 = vunpack.c.h.b16 %v5211
        %v5303 = vunpack.c.l.b16 %v5212
        %v5304 = vunpack.c.h.b16 %v5212
        %v5305 = vunpack.c.l.b16 %v5213
        %v5306 = vunpack.c.h.b16 %v5213
        %v5307 = vunpack.c.l.b16 %v5214
        %v5308 = vunpack.c.h.b16 %v5214
        %v5309 = vunpack.c.l.b16 %v5215
        %v5310 = vunpack.c.h.b16 %v5215
        %v5311 = vunpack.c.l.b16 %v5216
        %v5312 = vunpack.c.h.b16 %v5216
        %v5313 = vpack.c.b16 %v5257, %v5249
        %v5314 = vpack.c.b16 %v5258, %v5250
        %v5315 = vpack.c.b16 %v5259, %v5251
        %v5316 = vpack.c.b16 %v5260, %v5252
        %v5317 = vpack.c.b16 %v5261, %v5253
        %v5318 = vpack.c.b16 %v5262, %v5254
        %v5319 = vpack.c.b16 %v5263, %v5255
        %v5320 = vpack.c.b16 %v5264, %v5256
        %v5321 = vpack.c.b16 %v5273, %v5265
        %v5322 = vpack.c.b16 %v5274, %v5266
        %v5323 = vpack.c.b16 %v5275, %v5267
        %v5324 = vpack.c.b16 %v5276, %v5268
        %v5325 = vpack.c.b16 %v5277, %v5269
        %v5326 = vpack.c.b16 %v5278, %v5270
        %v5327 = vpack.c.b16 %v5279, %v5271
        %v5328 = vpack.c.b16 %v5280, %v5272
        %v5329 = vpack.c.b16 %v5289, %v5281
        %v5330 = vpack.c.b16 %v5290, %v5282
        %v5331 = vpack.c.b16 %v5291, %v5283
        %v5332 = vpack.c.b16 %v5292, %v5284
        %v5333 = vpack.c.b16 %v5293, %v5285
        %v5334 = vpack.c.b16 %v5294, %v5286
        %v5335 = vpack.c.b16 %v5295, %v5287
        %v5336 = vpack.c.b16 %v5296, %v5288
        %v5337 = vpack.c.b16 %v5305, %v5297
        %v5338 = vpack.c.b16 %v5306, %v5298
        %v5339 = vpack.c.b16 %v5307, %v5299
        %v5340 = vpack.c.b16 %v5308, %v5300
        %v5341 = vpack.c.b16 %v5309, %v5301
        %v5342 = vpack.c.b16 %v5310, %v5302
        %v5343 = vpack.c.b16 %v5311, %v5303
        %v5344 = vpack.c.b16 %v5312, %v5304
        %5377 = vmatprep.subr.bf16.mxu0 %v5314
        %5378 = vmatpush1.bf16.msra.mxu0 %v5313
        %5379 = vmatprep.subr.bf16.mxu0 %v5322
        %5380 = vmatpush1.bf16.msra.mxu0 %v5321
        %5381 = vmatprep.subr.bf16.mxu0 %v5330
        %5382 = vmatpush1.bf16.msra.mxu0 %v5329
        %5383 = vmatprep.subr.bf16.mxu0 %v5338
        %5384 = vmatpush1.bf16.msra.mxu0 %v5337
        %5385 = vmatprep.subr.bf16.mxu0 0
        %5386 = vmatpush1.bf16.msra.mxu0 0
        %5387 = vmatprep.subr.bf16.mxu0 0
        %5388 = vmatpush1.bf16.msra.mxu0 0
        %5389 = vmatprep.subr.bf16.mxu0 0
        %5390 = vmatpush1.bf16.msra.mxu0 0
        %5391 = vmatprep.subr.bf16.mxu0 0
        %5392 = vmatpush1.bf16.msra.mxu0 0
        %5393 = vmatprep.subr.bf16.mxu0 0
        %5394 = vmatpush1.bf16.msra.mxu0 0
        %5395 = vmatprep.subr.bf16.mxu0 0
        %5396 = vmatpush1.bf16.msra.mxu0 0
        %5397 = vmatprep.subr.bf16.mxu0 0
        %5398 = vmatpush1.bf16.msra.mxu0 0
        %5399 = vmatprep.subr.bf16.mxu0 0
        %5400 = vmatpush1.bf16.msra.mxu0 0
        %5401 = vmatprep.subr.bf16.mxu0 0
        %5402 = vmatpush1.bf16.msra.mxu0 0
        %5403 = vmatprep.subr.bf16.mxu0 0
        %5404 = vmatpush1.bf16.msra.mxu0 0
        %5405 = vmatprep.subr.bf16.mxu0 0
        %5406 = vmatpush1.bf16.msra.mxu0 0
        %5407 = vmatprep.subr.bf16.mxu0 0
        %5408 = vmatpush1.bf16.msra.mxu0 0
        %5409 = vmatprep.mubr.bf16.mxu0 0
        %5410 = vmatmul.mubr.bf16.gmra.mrb[0].mxu0 %v3022
        %v5411 = vpop.f32.mrb[0].mxu0
        %v5412 = vadd.f32 0.0, %v5411
        %v5413 = vpop.f32.mrb[0].mxu0
        %v5414 = vadd.f32 0.0, %v5413
        %v5415 = vpop.f32.mrb[0].mxu0
        %v5416 = vpop.f32.mrb[0].mxu0
        %5417 = vdwg.mxu0
        %5418 = vmatprep.subr.bf16.mxu0 %v5316
        %5419 = vmatpush1.bf16.msra.mxu0 %v5315
        %5420 = vmatprep.subr.bf16.mxu0 %v5324
        %5421 = vmatpush1.bf16.msra.mxu0 %v5323
        %5422 = vmatprep.subr.bf16.mxu0 %v5332
        %5423 = vmatpush1.bf16.msra.mxu0 %v5331
        %5424 = vmatprep.subr.bf16.mxu0 %v5340
        %5425 = vmatpush1.bf16.msra.mxu0 %v5339
        %5426 = vmatprep.subr.bf16.mxu0 0
        %5427 = vmatpush1.bf16.msra.mxu0 0
        %5428 = vmatprep.subr.bf16.mxu0 0
        %5429 = vmatpush1.bf16.msra.mxu0 0
        %5430 = vmatprep.subr.bf16.mxu0 0
        %5431 = vmatpush1.bf16.msra.mxu0 0
        %5432 = vmatprep.subr.bf16.mxu0 0
        %5433 = vmatpush1.bf16.msra.mxu0 0
        %5434 = vmatprep.subr.bf16.mxu0 0
        %5435 = vmatpush1.bf16.msra.mxu0 0
        %5436 = vmatprep.subr.bf16.mxu0 0
        %5437 = vmatpush1.bf16.msra.mxu0 0
        %5438 = vmatprep.subr.bf16.mxu0 0
        %5439 = vmatpush1.bf16.msra.mxu0 0
        %5440 = vmatprep.subr.bf16.mxu0 0
        %5441 = vmatpush1.bf16.msra.mxu0 0
        %5442 = vmatprep.subr.bf16.mxu0 0
        %5443 = vmatpush1.bf16.msra.mxu0 0
        %5444 = vmatprep.subr.bf16.mxu0 0
        %5445 = vmatpush1.bf16.msra.mxu0 0
        %5446 = vmatprep.subr.bf16.mxu0 0
        %5447 = vmatpush1.bf16.msra.mxu0 0
        %5448 = vmatprep.subr.bf16.mxu0 0
        %5449 = vmatpush1.bf16.msra.mxu0 0
        %5450 = vmatprep.mubr.bf16.mxu0 0
        %5451 = vmatmul.mubr.bf16.gmra.mrb[0].mxu0 %v3022
        %v5452 = vpop.f32.mrb[0].mxu0
        %v5453 = vadd.f32 0.0, %v5452
        %v5454 = vpop.f32.mrb[0].mxu0
        %v5455 = vadd.f32 0.0, %v5454
        %v5456 = vpop.f32.mrb[0].mxu0
        %v5457 = vpop.f32.mrb[0].mxu0
        %5458 = vdwg.mxu0
        %5459 = vmatprep.subr.bf16.mxu0 %v5318
        %5460 = vmatpush1.bf16.msra.mxu0 %v5317
        %5461 = vmatprep.subr.bf16.mxu0 %v5326
        %5462 = vmatpush1.bf16.msra.mxu0 %v5325
        %5463 = vmatprep.subr.bf16.mxu0 %v5334
        %5464 = vmatpush1.bf16.msra.mxu0 %v5333
        %5465 = vmatprep.subr.bf16.mxu0 %v5342
        %5466 = vmatpush1.bf16.msra.mxu0 %v5341
        %5467 = vmatprep.subr.bf16.mxu0 0
        %5468 = vmatpush1.bf16.msra.mxu0 0
        %5469 = vmatprep.subr.bf16.mxu0 0
        %5470 = vmatpush1.bf16.msra.mxu0 0
        %5471 = vmatprep.subr.bf16.mxu0 0
        %5472 = vmatpush1.bf16.msra.mxu0 0
        %5473 = vmatprep.subr.bf16.mxu0 0
        %5474 = vmatpush1.bf16.msra.mxu0 0
        %5475 = vmatprep.subr.bf16.mxu0 0
        %5476 = vmatpush1.bf16.msra.mxu0 0
        %5477 = vmatprep.subr.bf16.mxu0 0
        %5478 = vmatpush1.bf16.msra.mxu0 0
        %5479 = vmatprep.subr.bf16.mxu0 0
        %5480 = vmatpush1.bf16.msra.mxu0 0
        %5481 = vmatprep.subr.bf16.mxu0 0
        %5482 = vmatpush1.bf16.msra.mxu0 0
        %5483 = vmatprep.subr.bf16.mxu0 0
        %5484 = vmatpush1.bf16.msra.mxu0 0
        %5485 = vmatprep.subr.bf16.mxu0 0
        %5486 = vmatpush1.bf16.msra.mxu0 0
        %5487 = vmatprep.subr.bf16.mxu0 0
        %5488 = vmatpush1.bf16.msra.mxu0 0
        %5489 = vmatprep.subr.bf16.mxu0 0
        %5490 = vmatpush1.bf16.msra.mxu0 0
        %5491 = vmatprep.mubr.bf16.mxu0 0
        %5492 = vmatmul.mubr.bf16.gmra.mrb[0].mxu0 %v3022
        %v5493 = vpop.f32.mrb[0].mxu0
        %v5494 = vadd.f32 0.0, %v5493
        %v5495 = vpop.f32.mrb[0].mxu0
        %v5496 = vadd.f32 0.0, %v5495
        %v5497 = vpop.f32.mrb[0].mxu0
        %v5498 = vpop.f32.mrb[0].mxu0
        %5499 = vdwg.mxu0
        %5500 = vmatprep.subr.bf16.mxu0 %v5320
        %5501 = vmatpush1.bf16.msra.mxu0 %v5319
        %5502 = vmatprep.subr.bf16.mxu0 %v5328
        %5503 = vmatpush1.bf16.msra.mxu0 %v5327
        %5504 = vmatprep.subr.bf16.mxu0 %v5336
        %5505 = vmatpush1.bf16.msra.mxu0 %v5335
        %5506 = vmatprep.subr.bf16.mxu0 %v5344
        %5507 = vmatpush1.bf16.msra.mxu0 %v5343
        %5508 = vmatprep.subr.bf16.mxu0 0
        %5509 = vmatpush1.bf16.msra.mxu0 0
        %5510 = vmatprep.subr.bf16.mxu0 0
        %5511 = vmatpush1.bf16.msra.mxu0 0
        %5512 = vmatprep.subr.bf16.mxu0 0
        %5513 = vmatpush1.bf16.msra.mxu0 0
        %5514 = vmatprep.subr.bf16.mxu0 0
        %5515 = vmatpush1.bf16.msra.mxu0 0
        %5516 = vmatprep.subr.bf16.mxu0 0
        %5517 = vmatpush1.bf16.msra.mxu0 0
        %5518 = vmatprep.subr.bf16.mxu0 0
        %5519 = vmatpush1.bf16.msra.mxu0 0
        %5520 = vmatprep.subr.bf16.mxu0 0
        %5521 = vmatpush1.bf16.msra.mxu0 0
        %5522 = vmatprep.subr.bf16.mxu0 0
        %5523 = vmatpush1.bf16.msra.mxu0 0
        %5524 = vmatprep.subr.bf16.mxu0 0
        %5525 = vmatpush1.bf16.msra.mxu0 0
        %5526 = vmatprep.subr.bf16.mxu0 0
        %5527 = vmatpush1.bf16.msra.mxu0 0
        %5528 = vmatprep.subr.bf16.mxu0 0
        %5529 = vmatpush1.bf16.msra.mxu0 0
        %5530 = vmatprep.subr.bf16.mxu0 0
        %5531 = vmatpush1.bf16.msra.mxu0 0
        %5532 = vmatprep.mubr.bf16.mxu0 0
        %5533 = vmatmul.mubr.bf16.gmra.mrb[0].mxu0 %v3022
        %v5534 = vpop.f32.mrb[0].mxu0
        %v5535 = vadd.f32 0.0, %v5534
        %v5536 = vpop.f32.mrb[0].mxu0
        %v5537 = vadd.f32 0.0, %v5536
        %v5538 = vpop.f32.mrb[0].mxu0
        %v5539 = vpop.f32.mrb[0].mxu0
        %5540 = vdwg.mxu0
        %v5541 = vadd.f32 %v5166, %v1957
        %v5542 = vmul.f32 %v3189, %v5541
        %v5543 = vadd.f32 %v5412, %v5542
        %v5544 = vadd.f32 %v5543, %v3192
        %s5545 = scalar_lea.vmem %s613, 8
        %5546 = vst.msk [vmem:[%s5545] sm:$0x1] %vm3197, %v5544
        %v5548 = vrot.slane %v5542, 1
        %5549 = vrot.lane.b32.xlu0 %v5548, 32
        %v5550 = vpop.permute.xlu0 %5549
        %v5552 = vadd.f32 %v5412, %v5550
        %v5553 = vadd.f32 %v5552, %v3192
        %5554 = vst.msk [vmem:[%s5545] sm:$0x1] %vm3208, %v5553
        %v5555 = vrot.slane %v5542, 2
        %5556 = vrot.lane.b32.xlu0 %v5555, 64
        %v5557 = vpop.permute.xlu0 %5556
        %v5559 = vadd.f32 %v5412, %v5557
        %v5560 = vadd.f32 %v5559, %v3192
        %5561 = vst.msk [vmem:[%s5545] sm:$0x1] %vm3218, %v5560
        %v5562 = vrot.slane %v5542, 3
        %5563 = vrot.lane.b32.xlu0 %v5562, 96
        %v5564 = vpop.permute.xlu0 %5563
        %v5566 = vadd.f32 %v5412, %v5564
        %v5567 = vadd.f32 %v5566, %v3192
        %5568 = vst.msk [vmem:[%s5545] sm:$0x1] %vm3228, %v5567
        %v5569 = vrot.slane %v5542, 4
        %v5571 = vadd.f32 %v5414, %v5569
        %v5572 = vadd.f32 %v5571, %v3192
        %5573 = vst.msk [vmem:[%s5545 + $0x1] sm:$0x1] %vm3197, %v5572
        %v5574 = vrot.slane %v5542, 5
        %5575 = vrot.lane.b32.xlu0 %v5574, 32
        %v5576 = vpop.permute.xlu0 %5575
        %v5578 = vadd.f32 %v5414, %v5576
        %v5579 = vadd.f32 %v5578, %v3192
        %5580 = vst.msk [vmem:[%s5545 + $0x1] sm:$0x1] %vm3208, %v5579
        %v5581 = vrot.slane %v5542, 6
        %5582 = vrot.lane.b32.xlu0 %v5581, 64
        %v5583 = vpop.permute.xlu0 %5582
        %v5585 = vadd.f32 %v5414, %v5583
        %v5586 = vadd.f32 %v5585, %v3192
        %5587 = vst.msk [vmem:[%s5545 + $0x1] sm:$0x1] %vm3218, %v5586
        %v5588 = vrot.slane %v5542, 7
        %5589 = vrot.lane.b32.xlu0 %v5588, 96
        %v5590 = vpop.permute.xlu0 %5589
        %v5592 = vadd.f32 %v5414, %v5590
        %v5593 = vadd.f32 %v5592, %v3192
        %5594 = vst.msk [vmem:[%s5545 + $0x1] sm:$0x1] %vm3228, %v5593
        %v5595 = vadd.f32 %v5171, %v1957
        %v5596 = vmul.f32 %v3189, %v5595
        %v5597 = vadd.f32 %v5453, %v5596
        %v5598 = vadd.f32 %v5597, %v3192
        %5599 = vst.msk [vmem:[%s5545 + $0x2] sm:$0x1] %vm3197, %v5598
        %v5601 = vrot.slane %v5596, 1
        %5602 = vrot.lane.b32.xlu0 %v5601, 32
        %v5603 = vpop.permute.xlu0 %5602
        %v5605 = vadd.f32 %v5453, %v5603
        %v5606 = vadd.f32 %v5605, %v3192
        %5607 = vst.msk [vmem:[%s5545 + $0x2] sm:$0x1] %vm3208, %v5606
        %v5608 = vrot.slane %v5596, 2
        %5609 = vrot.lane.b32.xlu0 %v5608, 64
        %v5610 = vpop.permute.xlu0 %5609
        %v5612 = vadd.f32 %v5453, %v5610
        %v5613 = vadd.f32 %v5612, %v3192
        %5614 = vst.msk [vmem:[%s5545 + $0x2] sm:$0x1] %vm3218, %v5613
        %v5615 = vrot.slane %v5596, 3
        %5616 = vrot.lane.b32.xlu0 %v5615, 96
        %v5617 = vpop.permute.xlu0 %5616
        %v5619 = vadd.f32 %v5453, %v5617
        %v5620 = vadd.f32 %v5619, %v3192
        %5621 = vst.msk [vmem:[%s5545 + $0x2] sm:$0x1] %vm3228, %v5620
        %v5622 = vrot.slane %v5596, 4
        %v5624 = vadd.f32 %v5455, %v5622
        %v5625 = vadd.f32 %v5624, %v3192
        %5626 = vst.msk [vmem:[%s5545 + $0x3] sm:$0x1] %vm3197, %v5625
        %v5627 = vrot.slane %v5596, 5
        %5628 = vrot.lane.b32.xlu0 %v5627, 32
        %v5629 = vpop.permute.xlu0 %5628
        %v5631 = vadd.f32 %v5455, %v5629
        %v5632 = vadd.f32 %v5631, %v3192
        %5633 = vst.msk [vmem:[%s5545 + $0x3] sm:$0x1] %vm3208, %v5632
        %v5634 = vrot.slane %v5596, 6
        %5635 = vrot.lane.b32.xlu0 %v5634, 64
        %v5636 = vpop.permute.xlu0 %5635
        %v5638 = vadd.f32 %v5455, %v5636
        %v5639 = vadd.f32 %v5638, %v3192
        %5640 = vst.msk [vmem:[%s5545 + $0x3] sm:$0x1] %vm3218, %v5639
        %v5641 = vrot.slane %v5596, 7
        %5642 = vrot.lane.b32.xlu0 %v5641, 96
        %v5643 = vpop.permute.xlu0 %5642
        %v5645 = vadd.f32 %v5455, %v5643
        %v5646 = vadd.f32 %v5645, %v3192
        %5647 = vst.msk [vmem:[%s5545 + $0x3] sm:$0x1] %vm3228, %v5646
        %v5648 = vadd.f32 %v5176, %v1957
        %v5649 = vmul.f32 %v3189, %v5648
        %v5650 = vadd.f32 %v5494, %v5649
        %v5651 = vadd.f32 %v5650, %v3192
        %5652 = vst.msk [vmem:[%s5545 + $0x4] sm:$0x1] %vm3197, %v5651
        %v5654 = vrot.slane %v5649, 1
        %5655 = vrot.lane.b32.xlu0 %v5654, 32
        %v5656 = vpop.permute.xlu0 %5655
        %v5658 = vadd.f32 %v5494, %v5656
        %v5659 = vadd.f32 %v5658, %v3192
        %5660 = vst.msk [vmem:[%s5545 + $0x4] sm:$0x1] %vm3208, %v5659
        %v5661 = vrot.slane %v5649, 2
        %5662 = vrot.lane.b32.xlu0 %v5661, 64
        %v5663 = vpop.permute.xlu0 %5662
        %v5665 = vadd.f32 %v5494, %v5663
        %v5666 = vadd.f32 %v5665, %v3192
        %5667 = vst.msk [vmem:[%s5545 + $0x4] sm:$0x1] %vm3218, %v5666
        %v5668 = vrot.slane %v5649, 3
        %5669 = vrot.lane.b32.xlu0 %v5668, 96
        %v5670 = vpop.permute.xlu0 %5669
        %v5672 = vadd.f32 %v5494, %v5670
        %v5673 = vadd.f32 %v5672, %v3192
        %5674 = vst.msk [vmem:[%s5545 + $0x4] sm:$0x1] %vm3228, %v5673
        %v5675 = vrot.slane %v5649, 4
        %v5677 = vadd.f32 %v5496, %v5675
        %v5678 = vadd.f32 %v5677, %v3192
        %5679 = vst.msk [vmem:[%s5545 + $0x5] sm:$0x1] %vm3197, %v5678
        %v5680 = vrot.slane %v5649, 5
        %5681 = vrot.lane.b32.xlu0 %v5680, 32
        %v5682 = vpop.permute.xlu0 %5681
        %v5684 = vadd.f32 %v5496, %v5682
        %v5685 = vadd.f32 %v5684, %v3192
        %5686 = vst.msk [vmem:[%s5545 + $0x5] sm:$0x1] %vm3208, %v5685
        %v5687 = vrot.slane %v5649, 6
        %5688 = vrot.lane.b32.xlu0 %v5687, 64
        %v5689 = vpop.permute.xlu0 %5688
        %v5691 = vadd.f32 %v5496, %v5689
        %v5692 = vadd.f32 %v5691, %v3192
        %5693 = vst.msk [vmem:[%s5545 + $0x5] sm:$0x1] %vm3218, %v5692
        %v5694 = vrot.slane %v5649, 7
        %5695 = vrot.lane.b32.xlu0 %v5694, 96
        %v5696 = vpop.permute.xlu0 %5695
        %v5698 = vadd.f32 %v5496, %v5696
        %v5699 = vadd.f32 %v5698, %v3192
        %5700 = vst.msk [vmem:[%s5545 + $0x5] sm:$0x1] %vm3228, %v5699
        %v5701 = vadd.f32 %v5181, %v1957
        %v5702 = vmul.f32 %v3189, %v5701
        %v5703 = vadd.f32 %v5535, %v5702
        %v5704 = vadd.f32 %v5703, %v3192
        %5705 = vst.msk [vmem:[%s5545 + $0x6] sm:$0x1] %vm3197, %v5704
        %v5707 = vrot.slane %v5702, 1
        %5708 = vrot.lane.b32.xlu0 %v5707, 32
        %v5709 = vpop.permute.xlu0 %5708
        %v5711 = vadd.f32 %v5535, %v5709
        %v5712 = vadd.f32 %v5711, %v3192
        %5713 = vst.msk [vmem:[%s5545 + $0x6] sm:$0x1] %vm3208, %v5712
        %v5714 = vrot.slane %v5702, 2
        %5715 = vrot.lane.b32.xlu0 %v5714, 64
        %v5716 = vpop.permute.xlu0 %5715
        %v5718 = vadd.f32 %v5535, %v5716
        %v5719 = vadd.f32 %v5718, %v3192
        %5720 = vst.msk [vmem:[%s5545 + $0x6] sm:$0x1] %vm3218, %v5719
        %v5721 = vrot.slane %v5702, 3
        %5722 = vrot.lane.b32.xlu0 %v5721, 96
        %v5723 = vpop.permute.xlu0 %5722
        %v5725 = vadd.f32 %v5535, %v5723
        %v5726 = vadd.f32 %v5725, %v3192
        %5727 = vst.msk [vmem:[%s5545 + $0x6] sm:$0x1] %vm3228, %v5726
        %v5728 = vrot.slane %v5702, 4
        %v5730 = vadd.f32 %v5537, %v5728
        %v5731 = vadd.f32 %v5730, %v3192
        %5732 = vst.msk [vmem:[%s5545 + $0x7] sm:$0x1] %vm3197, %v5731
        %v5733 = vrot.slane %v5702, 5
        %5734 = vrot.lane.b32.xlu0 %v5733, 32
        %v5735 = vpop.permute.xlu0 %5734
        %v5737 = vadd.f32 %v5537, %v5735
        %v5738 = vadd.f32 %v5737, %v3192
        %5739 = vst.msk [vmem:[%s5545 + $0x7] sm:$0x1] %vm3208, %v5738
        %v5740 = vrot.slane %v5702, 6
        %5741 = vrot.lane.b32.xlu0 %v5740, 64
        %v5742 = vpop.permute.xlu0 %5741
        %v5744 = vadd.f32 %v5537, %v5742
        %v5745 = vadd.f32 %v5744, %v3192
        %5746 = vst.msk [vmem:[%s5545 + $0x7] sm:$0x1] %vm3218, %v5745
        %v5747 = vrot.slane %v5702, 7
        %5748 = vrot.lane.b32.xlu0 %v5747, 96
        %v5749 = vpop.permute.xlu0 %5748
        %v5751 = vadd.f32 %v5537, %v5749
        %v5752 = vadd.f32 %v5751, %v3192
        %5753 = vst.msk [vmem:[%s5545 + $0x7] sm:$0x1] %vm3228, %v5752
        %s5754 = smul.u32 2, %s27
        %p5755 = scmp.lt.s32.totalorder %s5754, 3
        %s5756 = scalar_select %p5755, %s5754, 3
        %s5757 = smul.addr %s5756, 8
        %s5758 = scalar_lea.vmem %s15, %s5757
        // Predicated region
        $region85: #{fcn_head_forward.1} parent=79 // pred_check
          %p5759 = pneg %p385
        $region86: #{fcn_head_forward.1} parent=79 // pred_check_branch
          %5761 = sbr.rel (%p5759) target = $region88
        $region87: #{fcn_head_forward.1} parent=79 // pred_region
          %s5762 = smul.u32 2, %s27
        $region88: #{fcn_head_forward.1} parent=79 // pred_fallthru
          _
      $region80: #{fcn_head_forward.1} parent=5 // pred_fallthru
        _
      %p5763 = scmp.le.s32.totalorder 2, %s22
      // Predicated region
      $region89: #{fcn_head_forward.1} parent=5 // pred_check
        %p5764 = pneg %p5763
      $region90: #{fcn_head_forward.1} parent=5 // pred_check_branch
        %5766 = sbr.rel (%p5764) target = $region92
      $region91: #{fcn_head_forward.1} parent=5 // pred_region
        %s5767 = ssub.s32 %s22, 2
        // Predicated region
        $region93: #{fcn_head_forward.1} parent=91 // pred_check
          %p5768 = pneg %p391
        $region94: #{fcn_head_forward.1} parent=91 // pred_check_branch
          %5770 = sbr.rel (%p5768) target = $region96
        $region95: #{fcn_head_forward.1} parent=91 // pred_region
          %s5771 = smul.u32 2, %s28
          %p5772 = scmp.lt.s32.totalorder %s5771, 3
          %s5773 = scalar_select %p5772, %s5771, 3
          %s5774 = smul.addr %s5773, 8
          %s5775 = scalar_lea.vmem %s15, %s5774
        $region96: #{fcn_head_forward.1} parent=91 // pred_fallthru
          _
      $region92: #{fcn_head_forward.1} parent=5 // pred_fallthru
        _
    $region6: #{fcn_head_forward.1} parent=1 // loop_footer
      %s26 = sadd.s32 1, %s22
    $region7: #{fcn_head_forward.1} parent=1 // loop_footer_branch
      %21 = sbr.rel target = $region3
    $region8: #{fcn_head_forward.1} parent=1 // loop_exit
      _
    %5776 = vsyncpa [#allocation3], 1
    %s5777 = scalar_lea.sflag [#allocation3], 1
    %5778 = vsyncpa %s5777, 1

</llo_original>
